<compile_context>
chip_gen: v7x
topology: tpu7x:2x2x1
jax: 0.10.0
libtpu: 0.0.40
codegen_flags: <defaults>
</compile_context>

<pallas_src>
import jax
import jax.numpy as jnp
from jax import lax
from jax.experimental import pallas as pl
from jax.experimental.pallas import tpu as pltpu

H = W = 32              # input spatial (forced by Linear(16*16*16, 10))
CIN = 3
COUT = 16               # num_of_filters
K = 5                   # kernel_size, padding = 2
KPAD = 128              # im2col contraction: 75 taps + 1 bias column + zero pad -> 128
POOL_HW = 16            # 32 / 2
S = POOL_HW * POOL_HW   # 256 pooled spatial positions per image
FEAT = S * COUT         # 4096
NCLASS = 10
JROWS = COUT * NCLASS   # 160 rows of the rearranged linear weight (j = c*10 + o)


def convnet2_fused_kernel(p_ref, wc_ref, wl_ref, mask_ref, sfold_ref, bl_ref, o_ref):
    """Fused conv(im2col matmul) + bias + ReLU + 2x2 maxpool + Linear, whole batch.

    p_ref    : (n*H*W, KPAD)    im2col patches, row = (b*256 + h'*16 + w')*4 + (h_lo*2 + w_lo)
                                (+ ones column for the conv bias, zero pad to 128)
    wc_ref   : (KPAD, COUT)     conv weight rows (ky, kx, cin) + bias row + zero rows
    wl_ref   : (JROWS, S)       linear weight, row j = c*NCLASS + o, col s = h'*16 + w'
    mask_ref : (JROWS, COUT)    mask[j, c2] = (j // NCLASS == c2)
    sfold_ref: (NCLASS, JROWS)  sfold[o, j] = (j %  NCLASS == o)
    bl_ref   : (NCLASS, 1)      linear bias (column)
    o_ref    : (NCLASS, n)      logits, one column per batch element
    """
    n = o_ref.shape[1]

    # conv + bias + ReLU: one (n*1024, 128) @ (128, 16) MXU matmul for the whole batch.
    acc = jnp.dot(p_ref[...], wc_ref[...],
                  preferred_element_type=jnp.float32)          # (n*1024, 16)
    acc = jnp.maximum(acc, 0.0)

    # 2x2 / stride-2 max pool.  Rows were pre-grouped per pool window in the wrapper, so a
    # single reshape (minor dim COUT unchanged -> no lane relayout) + max finishes the pool.
    pooled = jnp.max(acc.reshape(n * S, 4, COUT), axis=1)      # (n*256, 16), row = b*256 + s

    # Linear: logits[b, o] = sum_{s,c} pooled[b*256+s, c] * w_lin[o, c*256+s] + b_lin[o]
    # per batch: M = WL(160,256) @ P_b(256,16); pick the "diagonal" c-entries with a 0/1
    # mask + lane reduce, fold the 16 per-channel contributions per class with a (10,160)
    # 0/1 matmul.  Only plain matmuls / elementwise ops / axis reductions.
    for b in range(n):                                         # n is a static Python int
        p_b = pooled[b * S:(b + 1) * S, :]                                     # (256, 16)
        m_b = jnp.dot(wl_ref[...], p_b, preferred_element_type=jnp.float32)    # (160, 16)
        d_b = jnp.sum(m_b * mask_ref[...], axis=1, keepdims=True)              # (160, 1)
        o_ref[:, b:b + 1] = (jnp.dot(sfold_ref[...], d_b,
                                     preferred_element_type=jnp.float32)
                             + bl_ref[...])                                    # (10, 1)


@jax.jit
def convnet2_forward(x_nchw, w_conv, b_conv, w_lin, b_lin):
    n = x_nchw.shape[0]

    # ---- glue: NCHW -> NHWC, pad=2, im2col with pool-window-grouped rows ----
    x_nhwc = jnp.transpose(x_nchw, (0, 2, 3, 1))
    xp = jnp.pad(x_nhwc, ((0, 0), (2, 2), (2, 2), (0, 0)))
    taps = [xp[:, ky:ky + H, kx:kx + W, :] for ky in range(K) for kx in range(K)]
    patches = jnp.stack(taps, axis=3).reshape(n, H, W, K * K * CIN)     # (n,32,32,75)
    # reorder rows so each 2x2 pool window occupies 4 consecutive rows:
    # row = (b*256 + h'*16 + w')*4 + (h_lo*2 + w_lo)
    patches = patches.reshape(n, POOL_HW, 2, POOL_HW, 2, K * K * CIN)
    patches = jnp.transpose(patches, (0, 1, 3, 2, 4, 5)).reshape(n * H * W, K * K * CIN)
    patches = jnp.concatenate(
        [patches,
         jnp.ones((n * H * W, 1), jnp.float32),
         jnp.zeros((n * H * W, KPAD - K * K * CIN - 1), jnp.float32)], axis=1)  # (2048, 128)

    # conv weight OIHW -> rows (ky, kx, cin) matching the tap order, + bias row + zero rows
    wc = jnp.transpose(w_conv, (2, 3, 1, 0)).reshape(K * K * CIN, COUT)
    wc = jnp.concatenate(
        [wc, b_conv.reshape(1, COUT),
         jnp.zeros((KPAD - K * K * CIN - 1, COUT), jnp.float32)], axis=0)       # (128, 16)

    # linear weight (out, in) with `in` = c*256 + h'*16 + w'  ->  (160, 256), row j = c*10 + o
    wl3 = w_lin.reshape(NCLASS, COUT, S)                        # [o, c, s]
    wlst = jnp.transpose(wl3, (1, 0, 2)).reshape(JROWS, S)      # [c*10 + o, s]

    # constant 0/1 helpers for the in-kernel diagonal extraction / class fold
    jj = jnp.arange(JROWS)
    mask = (jj[:, None] // NCLASS
            == jnp.arange(COUT)[None, :]).astype(jnp.float32)                   # (160, 16)
    sfold = (jnp.arange(NCLASS)[:, None]
             == (jj % NCLASS)[None, :]).astype(jnp.float32)                     # (10, 160)
    bl = b_lin.reshape(NCLASS, 1)

    flops = (2 * (n * H * W) * KPAD * COUT
             + n * (2 * JROWS * S * COUT + 2 * NCLASS * JROWS))
    bytes_accessed = 4 * (n * H * W * KPAD + KPAD * COUT + JROWS * S
                          + JROWS * COUT + NCLASS * JROWS + NCLASS + NCLASS * n)

    logits_t = pl.pallas_call(
        convnet2_fused_kernel,
        out_shape=jax.ShapeDtypeStruct((NCLASS, n), jnp.float32),
        grid=(1,),
        in_specs=[
            pl.BlockSpec((n * H * W, KPAD), lambda i: (0, 0)),
            pl.BlockSpec((KPAD, COUT), lambda i: (0, 0)),
            pl.BlockSpec((JROWS, S), lambda i: (0, 0)),
            pl.BlockSpec((JROWS, COUT), lambda i: (0, 0)),
            pl.BlockSpec((NCLASS, JROWS), lambda i: (0, 0)),
            pl.BlockSpec((NCLASS, 1), lambda i: (0, 0)),
        ],
        out_specs=pl.BlockSpec((NCLASS, n), lambda i: (0, 0)),
        compiler_params=pltpu.CompilerParams(dimension_semantics=("arbitrary",)),
        cost_estimate=pl.CostEstimate(flops=flops, transcendentals=0,
                                      bytes_accessed=bytes_accessed),
    )(patches, wc, wlst, mask, sfold, bl)

    return logits_t.T                                            # (n, 10), glue transpose


def reference(x, w_conv, b_conv, w_lin, b_lin):
    """Pure-JAX reference matching PyTorch semantics (NCHW)."""
    y = lax.conv_general_dilated(x, w_conv, (1, 1), ((2, 2), (2, 2)),
                                 dimension_numbers=('NCHW', 'OIHW', 'NCHW'))
    y = jnp.maximum(y + b_conv.reshape(1, -1, 1, 1), 0.0)
    y = lax.reduce_window(y, -jnp.inf, lax.max, (1, 1, 2, 2), (1, 1, 2, 2), 'VALID')
    return y.reshape(x.shape[0], -1) @ w_lin.T + b_lin


if __name__ == "__main__":
    key = jax.random.PRNGKey(0)
    kx, kw1, kb1, kw2, kb2 = jax.random.split(key, 5)
    # batch=2; channels/spatial are fixed by the module (3x32x32 input -> Linear(4096, 10)).
    x = jax.random.normal(kx, (2, CIN, H, W), jnp.float32)
    # Deterministic synthetic parameters (PyTorch-convention shapes).
    w_conv = jax.random.normal(kw1, (COUT, CIN, K, K), jnp.float32) * 0.1   # OIHW
    b_conv = jax.random.normal(kb1, (COUT,), jnp.float32) * 0.1
    w_lin = jax.random.normal(kw2, (NCLASS, FEAT), jnp.float32) * 0.02      # (out, in)
    b_lin = jax.random.normal(kb2, (NCLASS,), jnp.float32) * 0.1

    out = convnet2_forward(x, w_conv, b_conv, w_lin, b_lin)
    out = jax.block_until_ready(out)
    ref = reference(x, w_conv, b_conv, w_lin, b_lin)
    assert out.shape == (2, NCLASS)
    assert jnp.allclose(out, ref, atol=1e-3, rtol=1e-3)
    print("KERNEL_OK")
</pallas_src>

<mosaic_0001>
module attributes {stable_mosaic.version = 11 : i64} {
  func.func @convnet2_fused_kernel(%arg0: i32, %arg1: memref<2048x128xf32, #tpu.memory_space<vmem>>, %arg2: memref<128x16xf32, #tpu.memory_space<vmem>>, %arg3: memref<160x256xf32, #tpu.memory_space<vmem>>, %arg4: memref<160x16xf32, #tpu.memory_space<vmem>>, %arg5: memref<10x160xf32, #tpu.memory_space<vmem>>, %arg6: memref<10x1xf32, #tpu.memory_space<vmem>>, %arg7: memref<10x2xf32, #tpu.memory_space<vmem>>) attributes {dimension_semantics = [#tpu.dimension_semantics<arbitrary>], iteration_bounds = array<i64: 1>, scalar_prefetch = 0 : i64, scratch_operands = 0 : i64, tpu.core_type = #tpu.core_type<tc>, window_params = [{pipeline_mode = #tpu.pipeline_mode<synchronous>, transform_indices = @transform_0, window_bounds = array<i64: 2048, 128>}, {pipeline_mode = #tpu.pipeline_mode<synchronous>, transform_indices = @transform_1, window_bounds = array<i64: 128, 16>}, {pipeline_mode = #tpu.pipeline_mode<synchronous>, transform_indices = @transform_2, window_bounds = array<i64: 160, 256>}, {pipeline_mode = #tpu.pipeline_mode<synchronous>, transform_indices = @transform_3, window_bounds = array<i64: 160, 16>}, {pipeline_mode = #tpu.pipeline_mode<synchronous>, transform_indices = @transform_4, window_bounds = array<i64: 10, 160>}, {pipeline_mode = #tpu.pipeline_mode<synchronous>, transform_indices = @transform_5, window_bounds = array<i64: 10, 1>}, {pipeline_mode = #tpu.pipeline_mode<synchronous>, transform_indices = @transform_6, window_bounds = array<i64: 10, 2>}]} {
    %c0 = arith.constant 0 : index
    %c0_0 = arith.constant 0 : index
    %0 = vector.load %arg1[%c0, %c0_0] : memref<2048x128xf32, #tpu.memory_space<vmem>>, vector<2048x128xf32>
    %c0_1 = arith.constant 0 : index
    %c0_2 = arith.constant 0 : index
    %1 = vector.load %arg2[%c0_1, %c0_2] : memref<128x16xf32, #tpu.memory_space<vmem>>, vector<128x16xf32>
    %cst = arith.constant dense<0.000000e+00> : vector<2048x16xf32>
    %2 = tpu.matmul %0, %1, %cst {dimension_numbers = #tpu.dot_dimension_numbers<[1], [0], [0], [1], [0, 0, 1, 1], [], []>} : vector<2048x128xf32>, vector<128x16xf32>, vector<2048x16xf32> -> vector<2048x16xf32>
    %cst_3 = arith.constant 0.000000e+00 : f32
    %3 = vector.broadcast %cst_3 : f32 to vector<2048x16xf32>
    %4 = arith.maximumf %2, %3 : vector<2048x16xf32>
    %5 = vector.shape_cast %4 : vector<2048x16xf32> to vector<512x4x16xf32>
    %cst_4 = arith.constant dense<0xFF800000> : vector<512x16xf32>
    %6 = vector.multi_reduction <maximumf>, %5, %cst_4 [1] : vector<512x4x16xf32> to vector<512x16xf32>
    %7 = vector.extract_strided_slice %6 {offsets = [0, 0], sizes = [256, 16], strides = [1, 1]} : vector<512x16xf32> to vector<256x16xf32>
    %c0_5 = arith.constant 0 : index
    %c0_6 = arith.constant 0 : index
    %8 = vector.load %arg3[%c0_5, %c0_6] : memref<160x256xf32, #tpu.memory_space<vmem>>, vector<160x256xf32>
    %cst_7 = arith.constant dense<0.000000e+00> : vector<160x16xf32>
    %9 = tpu.matmul %8, %7, %cst_7 {dimension_numbers = #tpu.dot_dimension_numbers<[1], [0], [0], [1], [0, 0, 1, 1], [], []>} : vector<160x256xf32>, vector<256x16xf32>, vector<160x16xf32> -> vector<160x16xf32>
    %c0_8 = arith.constant 0 : index
    %c0_9 = arith.constant 0 : index
    %10 = vector.load %arg4[%c0_8, %c0_9] : memref<160x16xf32, #tpu.memory_space<vmem>>, vector<160x16xf32>
    %11 = arith.mulf %9, %10 : vector<160x16xf32>
    %cst_10 = arith.constant dense<0.000000e+00> : vector<160xf32>
    %12 = vector.multi_reduction <add>, %11, %cst_10 [1] : vector<160x16xf32> to vector<160xf32>
    %13 = vector.shape_cast %12 : vector<160xf32> to vector<160x1xf32>
    %c0_11 = arith.constant 0 : index
    %c0_12 = arith.constant 0 : index
    %14 = vector.load %arg5[%c0_11, %c0_12] : memref<10x160xf32, #tpu.memory_space<vmem>>, vector<10x160xf32>
    %cst_13 = arith.constant dense<0.000000e+00> : vector<10x1xf32>
    %15 = tpu.matmul %14, %13, %cst_13 {dimension_numbers = #tpu.dot_dimension_numbers<[1], [0], [0], [1], [0, 0, 1, 1], [], []>} : vector<10x160xf32>, vector<160x1xf32>, vector<10x1xf32> -> vector<10x1xf32>
    %c0_14 = arith.constant 0 : index
    %c0_15 = arith.constant 0 : index
    %16 = vector.load %arg6[%c0_14, %c0_15] : memref<10x1xf32, #tpu.memory_space<vmem>>, vector<10x1xf32>
    %17 = arith.addf %15, %16 : vector<10x1xf32>
    %c0_16 = arith.constant 0 : index
    %c0_17 = arith.constant 0 : index
    %18 = vector.load %arg7[%c0_16, %c0_17] : memref<10x2xf32, #tpu.memory_space<vmem>>, vector<10x1xf32>
    tpu.vector_store %arg7[%c0_16, %c0_17], %17 {strides = array<i32>} : memref<10x2xf32, #tpu.memory_space<vmem>>, vector<10x1xf32>,
    %19 = vector.extract_strided_slice %6 {offsets = [256, 0], sizes = [256, 16], strides = [1, 1]} : vector<512x16xf32> to vector<256x16xf32>
    %c0_18 = arith.constant 0 : index
    %c0_19 = arith.constant 0 : index
    %20 = vector.load %arg3[%c0_18, %c0_19] : memref<160x256xf32, #tpu.memory_space<vmem>>, vector<160x256xf32>
    %cst_20 = arith.constant dense<0.000000e+00> : vector<160x16xf32>
    %21 = tpu.matmul %20, %19, %cst_20 {dimension_numbers = #tpu.dot_dimension_numbers<[1], [0], [0], [1], [0, 0, 1, 1], [], []>} : vector<160x256xf32>, vector<256x16xf32>, vector<160x16xf32> -> vector<160x16xf32>
    %c0_21 = arith.constant 0 : index
    %c0_22 = arith.constant 0 : index
    %22 = vector.load %arg4[%c0_21, %c0_22] : memref<160x16xf32, #tpu.memory_space<vmem>>, vector<160x16xf32>
    %23 = arith.mulf %21, %22 : vector<160x16xf32>
    %cst_23 = arith.constant dense<0.000000e+00> : vector<160xf32>
    %24 = vector.multi_reduction <add>, %23, %cst_23 [1] : vector<160x16xf32> to vector<160xf32>
    %25 = vector.shape_cast %24 : vector<160xf32> to vector<160x1xf32>
    %c0_24 = arith.constant 0 : index
    %c0_25 = arith.constant 0 : index
    %26 = vector.load %arg5[%c0_24, %c0_25] : memref<10x160xf32, #tpu.memory_space<vmem>>, vector<10x160xf32>
    %cst_26 = arith.constant dense<0.000000e+00> : vector<10x1xf32>
    %27 = tpu.matmul %26, %25, %cst_26 {dimension_numbers = #tpu.dot_dimension_numbers<[1], [0], [0], [1], [0, 0, 1, 1], [], []>} : vector<10x160xf32>, vector<160x1xf32>, vector<10x1xf32> -> vector<10x1xf32>
    %c0_27 = arith.constant 0 : index
    %c0_28 = arith.constant 0 : index
    %28 = vector.load %arg6[%c0_27, %c0_28] : memref<10x1xf32, #tpu.memory_space<vmem>>, vector<10x1xf32>
    %29 = arith.addf %27, %28 : vector<10x1xf32>
    %c0_29 = arith.constant 0 : index
    %c1 = arith.constant 1 : index
    %30 = vector.load %arg7[%c0_29, %c1] : memref<10x2xf32, #tpu.memory_space<vmem>>, vector<10x1xf32>
    tpu.vector_store %arg7[%c0_29, %c1], %29 {strides = array<i32>} : memref<10x2xf32, #tpu.memory_space<vmem>>, vector<10x1xf32>,
    return
  }
  func.func @transform_0(%arg0: i32) -> (i32, i32) {
    %c0_i32 = arith.constant 0 : i32
    %c0_i32_0 = arith.constant 0 : i32
    %c0_i32_1 = arith.constant 0 : i32
    return %c0_i32, %c0_i32_0 : i32, i32
  }
  func.func @transform_1(%arg0: i32) -> (i32, i32) {
    %c0_i32 = arith.constant 0 : i32
    %c0_i32_0 = arith.constant 0 : i32
    %c0_i32_1 = arith.constant 0 : i32
    return %c0_i32, %c0_i32_0 : i32, i32
  }
  func.func @transform_2(%arg0: i32) -> (i32, i32) {
    %c0_i32 = arith.constant 0 : i32
    %c0_i32_0 = arith.constant 0 : i32
    %c0_i32_1 = arith.constant 0 : i32
    return %c0_i32, %c0_i32_0 : i32, i32
  }
  func.func @transform_3(%arg0: i32) -> (i32, i32) {
    %c0_i32 = arith.constant 0 : i32
    %c0_i32_0 = arith.constant 0 : i32
    %c0_i32_1 = arith.constant 0 : i32
    return %c0_i32, %c0_i32_0 : i32, i32
  }
  func.func @transform_4(%arg0: i32) -> (i32, i32) {
    %c0_i32 = arith.constant 0 : i32
    %c0_i32_0 = arith.constant 0 : i32
    %c0_i32_1 = arith.constant 0 : i32
    return %c0_i32, %c0_i32_0 : i32, i32
  }
  func.func @transform_5(%arg0: i32) -> (i32, i32) {
    %c0_i32 = arith.constant 0 : i32
    %c0_i32_0 = arith.constant 0 : i32
    %c0_i32_1 = arith.constant 0 : i32
    return %c0_i32, %c0_i32_0 : i32, i32
  }
  func.func @transform_6(%arg0: i32) -> (i32, i32) {
    %c0_i32 = arith.constant 0 : i32
    %c0_i32_0 = arith.constant 0 : i32
    %c0_i32_1 = arith.constant 0 : i32
    return %c0_i32, %c0_i32_0 : i32, i32
  }
}

</mosaic_0001>

<llo_original>
// kernel: convnet2_forward.1
$region0: #{convnet2_forward.1}
  #allocation0 [shape = 'u32[]', space=smem, size = 0x4, offset = 0x4, fixed_abs, tag = 'smem constant byte address 0x4 - core index']
  #allocation1 [shape = 'u32[144,128]{1,0:T(1,128)}', space=vmem, size = 0x12000, scoped, tag = 'internal scratch']
  %s0 = inlined_call_operand.vmem [shape: f32[2048,128], index: 0, kind: input, shape index: {}]
  %s1 = inlined_call_operand.vmem [shape: f32[128,16], index: 1, kind: input, shape index: {}]
  %s2 = inlined_call_operand.vmem [shape: f32[160,256], index: 2, kind: input, shape index: {}]
  %s3 = inlined_call_operand.vmem [shape: f32[160,16], index: 3, kind: input, shape index: {}]
  %s4 = inlined_call_operand.vmem [shape: f32[10,160], index: 4, kind: input, shape index: {}]
  %s5 = inlined_call_operand.vmem [shape: f32[10,1], index: 5, kind: input, shape index: {}]
  %s6 = inlined_call_operand.vmem [shape: f32[10,2], index: 6, kind: output, shape index: {}]
  %s7 = sld [smem:[#allocation0]]
  $region34: #{convnet2_forward.1} parent=0
    _
  %s9 = ssub.s32 1, %s7
  %s10 = scalar_select 0, %s9, %s7
  // Predicated region
  $region2: #{convnet2_forward.1} parent=0 // pred_check
    _
  $region3: #{convnet2_forward.1} parent=0 // pred_check_branch
    %12 = sbr.rel (0) target = $region5
  $region4: #{convnet2_forward.1} parent=0 // pred_region
    _
  $region5: #{convnet2_forward.1} parent=0 // pred_fallthru
    _
  // Predicated region
  $region6: #{convnet2_forward.1} parent=0 // pred_check
    _
  $region7: #{convnet2_forward.1} parent=0 // pred_check_branch
    %14 = sbr.rel (0) target = $region9
  $region8: #{convnet2_forward.1} parent=0 // pred_region
    _
  $region9: #{convnet2_forward.1} parent=0 // pred_fallthru
    _
  // Predicated region
  $region10: #{convnet2_forward.1} parent=0 // pred_check
    _
  $region11: #{convnet2_forward.1} parent=0 // pred_check_branch
    %16 = sbr.rel (0) target = $region13
  $region12: #{convnet2_forward.1} parent=0 // pred_region
    _
  $region13: #{convnet2_forward.1} parent=0 // pred_fallthru
    _
  // Predicated region
  $region14: #{convnet2_forward.1} parent=0 // pred_check
    _
  $region15: #{convnet2_forward.1} parent=0 // pred_check_branch
    %18 = sbr.rel (0) target = $region17
  $region16: #{convnet2_forward.1} parent=0 // pred_region
    _
  $region17: #{convnet2_forward.1} parent=0 // pred_fallthru
    _
  // Predicated region
  $region18: #{convnet2_forward.1} parent=0 // pred_check
    _
  $region19: #{convnet2_forward.1} parent=0 // pred_check_branch
    %20 = sbr.rel (0) target = $region21
  $region20: #{convnet2_forward.1} parent=0 // pred_region
    _
  $region21: #{convnet2_forward.1} parent=0 // pred_fallthru
    _
  // Predicated region
  $region22: #{convnet2_forward.1} parent=0 // pred_check
    _
  $region23: #{convnet2_forward.1} parent=0 // pred_check_branch
    %22 = sbr.rel (0) target = $region25
  $region24: #{convnet2_forward.1} parent=0 // pred_region
    _
  $region25: #{convnet2_forward.1} parent=0 // pred_fallthru
    _
  %v23 = vld [vmem:[%s0] sm:$0xff]
  %v24 = vld [vmem:[%s0 + $0x8] sm:$0xff]
  %v25 = vld [vmem:[%s0 + $0x10] sm:$0xff]
  %v26 = vld [vmem:[%s0 + $0x18] sm:$0xff]
  %v27 = vld [vmem:[%s0 + $0x20] sm:$0xff]
  %v28 = vld [vmem:[%s0 + $0x28] sm:$0xff]
  %v29 = vld [vmem:[%s0 + $0x30] sm:$0xff]
  %v30 = vld [vmem:[%s0 + $0x38] sm:$0xff]
  %v31 = vld [vmem:[%s0 + $0x40] sm:$0xff]
  %v32 = vld [vmem:[%s0 + $0x48] sm:$0xff]
  %v33 = vld [vmem:[%s0 + $0x50] sm:$0xff]
  %v34 = vld [vmem:[%s0 + $0x58] sm:$0xff]
  %v35 = vld [vmem:[%s0 + $0x60] sm:$0xff]
  %v36 = vld [vmem:[%s0 + $0x68] sm:$0xff]
  %v37 = vld [vmem:[%s0 + $0x70] sm:$0xff]
  %v38 = vld [vmem:[%s0 + $0x78] sm:$0xff]
  %v39 = vld [vmem:[%s0 + $0x80] sm:$0xff]
  %v40 = vld [vmem:[%s0 + $0x88] sm:$0xff]
  %v41 = vld [vmem:[%s0 + $0x90] sm:$0xff]
  %v42 = vld [vmem:[%s0 + $0x98] sm:$0xff]
  %v43 = vld [vmem:[%s0 + $0xa0] sm:$0xff]
  %v44 = vld [vmem:[%s0 + $0xa8] sm:$0xff]
  %v45 = vld [vmem:[%s0 + $0xb0] sm:$0xff]
  %v46 = vld [vmem:[%s0 + $0xb8] sm:$0xff]
  %v47 = vld [vmem:[%s0 + $0xc0] sm:$0xff]
  %v48 = vld [vmem:[%s0 + $0xc8] sm:$0xff]
  %v49 = vld [vmem:[%s0 + $0xd0] sm:$0xff]
  %v50 = vld [vmem:[%s0 + $0xd8] sm:$0xff]
  %v51 = vld [vmem:[%s0 + $0xe0] sm:$0xff]
  %v52 = vld [vmem:[%s0 + $0xe8] sm:$0xff]
  %v53 = vld [vmem:[%s0 + $0xf0] sm:$0xff]
  %v54 = vld [vmem:[%s0 + $0xf8] sm:$0xff]
  %v55 = vld [vmem:[%s0 + $0x100] sm:$0xff]
  %v56 = vld [vmem:[%s0 + $0x108] sm:$0xff]
  %v57 = vld [vmem:[%s0 + $0x110] sm:$0xff]
  %v58 = vld [vmem:[%s0 + $0x118] sm:$0xff]
  %v59 = vld [vmem:[%s0 + $0x120] sm:$0xff]
  %v60 = vld [vmem:[%s0 + $0x128] sm:$0xff]
  %v61 = vld [vmem:[%s0 + $0x130] sm:$0xff]
  %v62 = vld [vmem:[%s0 + $0x138] sm:$0xff]
  %v63 = vld [vmem:[%s0 + $0x140] sm:$0xff]
  %v64 = vld [vmem:[%s0 + $0x148] sm:$0xff]
  %v65 = vld [vmem:[%s0 + $0x150] sm:$0xff]
  %v66 = vld [vmem:[%s0 + $0x158] sm:$0xff]
  %v67 = vld [vmem:[%s0 + $0x160] sm:$0xff]
  %v68 = vld [vmem:[%s0 + $0x168] sm:$0xff]
  %v69 = vld [vmem:[%s0 + $0x170] sm:$0xff]
  %v70 = vld [vmem:[%s0 + $0x178] sm:$0xff]
  %v71 = vld [vmem:[%s0 + $0x180] sm:$0xff]
  %v72 = vld [vmem:[%s0 + $0x188] sm:$0xff]
  %v73 = vld [vmem:[%s0 + $0x190] sm:$0xff]
  %v74 = vld [vmem:[%s0 + $0x198] sm:$0xff]
  %v75 = vld [vmem:[%s0 + $0x1a0] sm:$0xff]
  %v76 = vld [vmem:[%s0 + $0x1a8] sm:$0xff]
  %v77 = vld [vmem:[%s0 + $0x1b0] sm:$0xff]
  %v78 = vld [vmem:[%s0 + $0x1b8] sm:$0xff]
  %v79 = vld [vmem:[%s0 + $0x1c0] sm:$0xff]
  %v80 = vld [vmem:[%s0 + $0x1c8] sm:$0xff]
  %v81 = vld [vmem:[%s0 + $0x1d0] sm:$0xff]
  %v82 = vld [vmem:[%s0 + $0x1d8] sm:$0xff]
  %v83 = vld [vmem:[%s0 + $0x1e0] sm:$0xff]
  %v84 = vld [vmem:[%s0 + $0x1e8] sm:$0xff]
  %v85 = vld [vmem:[%s0 + $0x1f0] sm:$0xff]
  %v86 = vld [vmem:[%s0 + $0x1f8] sm:$0xff]
  %v87 = vld [vmem:[%s0 + $0x200] sm:$0xff]
  %v88 = vld [vmem:[%s0 + $0x208] sm:$0xff]
  %v89 = vld [vmem:[%s0 + $0x210] sm:$0xff]
  %v90 = vld [vmem:[%s0 + $0x218] sm:$0xff]
  %v91 = vld [vmem:[%s0 + $0x220] sm:$0xff]
  %v92 = vld [vmem:[%s0 + $0x228] sm:$0xff]
  %v93 = vld [vmem:[%s0 + $0x230] sm:$0xff]
  %v94 = vld [vmem:[%s0 + $0x238] sm:$0xff]
  %v95 = vld [vmem:[%s0 + $0x240] sm:$0xff]
  %v96 = vld [vmem:[%s0 + $0x248] sm:$0xff]
  %v97 = vld [vmem:[%s0 + $0x250] sm:$0xff]
  %v98 = vld [vmem:[%s0 + $0x258] sm:$0xff]
  %v99 = vld [vmem:[%s0 + $0x260] sm:$0xff]
  %v100 = vld [vmem:[%s0 + $0x268] sm:$0xff]
  %v101 = vld [vmem:[%s0 + $0x270] sm:$0xff]
  %v102 = vld [vmem:[%s0 + $0x278] sm:$0xff]
  %v103 = vld [vmem:[%s0 + $0x280] sm:$0xff]
  %v104 = vld [vmem:[%s0 + $0x288] sm:$0xff]
  %v105 = vld [vmem:[%s0 + $0x290] sm:$0xff]
  %v106 = vld [vmem:[%s0 + $0x298] sm:$0xff]
  %v107 = vld [vmem:[%s0 + $0x2a0] sm:$0xff]
  %v108 = vld [vmem:[%s0 + $0x2a8] sm:$0xff]
  %v109 = vld [vmem:[%s0 + $0x2b0] sm:$0xff]
  %v110 = vld [vmem:[%s0 + $0x2b8] sm:$0xff]
  %v111 = vld [vmem:[%s0 + $0x2c0] sm:$0xff]
  %v112 = vld [vmem:[%s0 + $0x2c8] sm:$0xff]
  %v113 = vld [vmem:[%s0 + $0x2d0] sm:$0xff]
  %v114 = vld [vmem:[%s0 + $0x2d8] sm:$0xff]
  %v115 = vld [vmem:[%s0 + $0x2e0] sm:$0xff]
  %v116 = vld [vmem:[%s0 + $0x2e8] sm:$0xff]
  %v117 = vld [vmem:[%s0 + $0x2f0] sm:$0xff]
  %v118 = vld [vmem:[%s0 + $0x2f8] sm:$0xff]
  %v119 = vld [vmem:[%s0 + $0x300] sm:$0xff]
  %v120 = vld [vmem:[%s0 + $0x308] sm:$0xff]
  %v121 = vld [vmem:[%s0 + $0x310] sm:$0xff]
  %v122 = vld [vmem:[%s0 + $0x318] sm:$0xff]
  %v123 = vld [vmem:[%s0 + $0x320] sm:$0xff]
  %v124 = vld [vmem:[%s0 + $0x328] sm:$0xff]
  %v125 = vld [vmem:[%s0 + $0x330] sm:$0xff]
  %v126 = vld [vmem:[%s0 + $0x338] sm:$0xff]
  %v127 = vld [vmem:[%s0 + $0x340] sm:$0xff]
  %v128 = vld [vmem:[%s0 + $0x348] sm:$0xff]
  %v129 = vld [vmem:[%s0 + $0x350] sm:$0xff]
  %v130 = vld [vmem:[%s0 + $0x358] sm:$0xff]
  %v131 = vld [vmem:[%s0 + $0x360] sm:$0xff]
  %v132 = vld [vmem:[%s0 + $0x368] sm:$0xff]
  %v133 = vld [vmem:[%s0 + $0x370] sm:$0xff]
  %v134 = vld [vmem:[%s0 + $0x378] sm:$0xff]
  %v135 = vld [vmem:[%s0 + $0x380] sm:$0xff]
  %v136 = vld [vmem:[%s0 + $0x388] sm:$0xff]
  %v137 = vld [vmem:[%s0 + $0x390] sm:$0xff]
  %v138 = vld [vmem:[%s0 + $0x398] sm:$0xff]
  %v139 = vld [vmem:[%s0 + $0x3a0] sm:$0xff]
  %v140 = vld [vmem:[%s0 + $0x3a8] sm:$0xff]
  %v141 = vld [vmem:[%s0 + $0x3b0] sm:$0xff]
  %v142 = vld [vmem:[%s0 + $0x3b8] sm:$0xff]
  %v143 = vld [vmem:[%s0 + $0x3c0] sm:$0xff]
  %v144 = vld [vmem:[%s0 + $0x3c8] sm:$0xff]
  %v145 = vld [vmem:[%s0 + $0x3d0] sm:$0xff]
  %v146 = vld [vmem:[%s0 + $0x3d8] sm:$0xff]
  %v147 = vld [vmem:[%s0 + $0x3e0] sm:$0xff]
  %v148 = vld [vmem:[%s0 + $0x3e8] sm:$0xff]
  %v149 = vld [vmem:[%s0 + $0x3f0] sm:$0xff]
  %v150 = vld [vmem:[%s0 + $0x3f8] sm:$0xff]
  %v151 = vld [vmem:[%s0 + $0x400] sm:$0xff]
  %v152 = vld [vmem:[%s0 + $0x408] sm:$0xff]
  %v153 = vld [vmem:[%s0 + $0x410] sm:$0xff]
  %v154 = vld [vmem:[%s0 + $0x418] sm:$0xff]
  %v155 = vld [vmem:[%s0 + $0x420] sm:$0xff]
  %v156 = vld [vmem:[%s0 + $0x428] sm:$0xff]
  %v157 = vld [vmem:[%s0 + $0x430] sm:$0xff]
  %v158 = vld [vmem:[%s0 + $0x438] sm:$0xff]
  %v159 = vld [vmem:[%s0 + $0x440] sm:$0xff]
  %v160 = vld [vmem:[%s0 + $0x448] sm:$0xff]
  %v161 = vld [vmem:[%s0 + $0x450] sm:$0xff]
  %v162 = vld [vmem:[%s0 + $0x458] sm:$0xff]
  %v163 = vld [vmem:[%s0 + $0x460] sm:$0xff]
  %v164 = vld [vmem:[%s0 + $0x468] sm:$0xff]
  %v165 = vld [vmem:[%s0 + $0x470] sm:$0xff]
  %v166 = vld [vmem:[%s0 + $0x478] sm:$0xff]
  %v167 = vld [vmem:[%s0 + $0x480] sm:$0xff]
  %v168 = vld [vmem:[%s0 + $0x488] sm:$0xff]
  %v169 = vld [vmem:[%s0 + $0x490] sm:$0xff]
  %v170 = vld [vmem:[%s0 + $0x498] sm:$0xff]
  %v171 = vld [vmem:[%s0 + $0x4a0] sm:$0xff]
  %v172 = vld [vmem:[%s0 + $0x4a8] sm:$0xff]
  %v173 = vld [vmem:[%s0 + $0x4b0] sm:$0xff]
  %v174 = vld [vmem:[%s0 + $0x4b8] sm:$0xff]
  %v175 = vld [vmem:[%s0 + $0x4c0] sm:$0xff]
  %v176 = vld [vmem:[%s0 + $0x4c8] sm:$0xff]
  %v177 = vld [vmem:[%s0 + $0x4d0] sm:$0xff]
  %v178 = vld [vmem:[%s0 + $0x4d8] sm:$0xff]
  %v179 = vld [vmem:[%s0 + $0x4e0] sm:$0xff]
  %v180 = vld [vmem:[%s0 + $0x4e8] sm:$0xff]
  %v181 = vld [vmem:[%s0 + $0x4f0] sm:$0xff]
  %v182 = vld [vmem:[%s0 + $0x4f8] sm:$0xff]
  %v183 = vld [vmem:[%s0 + $0x500] sm:$0xff]
  %v184 = vld [vmem:[%s0 + $0x508] sm:$0xff]
  %v185 = vld [vmem:[%s0 + $0x510] sm:$0xff]
  %v186 = vld [vmem:[%s0 + $0x518] sm:$0xff]
  %v187 = vld [vmem:[%s0 + $0x520] sm:$0xff]
  %v188 = vld [vmem:[%s0 + $0x528] sm:$0xff]
  %v189 = vld [vmem:[%s0 + $0x530] sm:$0xff]
  %v190 = vld [vmem:[%s0 + $0x538] sm:$0xff]
  %v191 = vld [vmem:[%s0 + $0x540] sm:$0xff]
  %v192 = vld [vmem:[%s0 + $0x548] sm:$0xff]
  %v193 = vld [vmem:[%s0 + $0x550] sm:$0xff]
  %v194 = vld [vmem:[%s0 + $0x558] sm:$0xff]
  %v195 = vld [vmem:[%s0 + $0x560] sm:$0xff]
  %v196 = vld [vmem:[%s0 + $0x568] sm:$0xff]
  %v197 = vld [vmem:[%s0 + $0x570] sm:$0xff]
  %v198 = vld [vmem:[%s0 + $0x578] sm:$0xff]
  %v199 = vld [vmem:[%s0 + $0x580] sm:$0xff]
  %v200 = vld [vmem:[%s0 + $0x588] sm:$0xff]
  %v201 = vld [vmem:[%s0 + $0x590] sm:$0xff]
  %v202 = vld [vmem:[%s0 + $0x598] sm:$0xff]
  %v203 = vld [vmem:[%s0 + $0x5a0] sm:$0xff]
  %v204 = vld [vmem:[%s0 + $0x5a8] sm:$0xff]
  %v205 = vld [vmem:[%s0 + $0x5b0] sm:$0xff]
  %v206 = vld [vmem:[%s0 + $0x5b8] sm:$0xff]
  %v207 = vld [vmem:[%s0 + $0x5c0] sm:$0xff]
  %v208 = vld [vmem:[%s0 + $0x5c8] sm:$0xff]
  %v209 = vld [vmem:[%s0 + $0x5d0] sm:$0xff]
  %v210 = vld [vmem:[%s0 + $0x5d8] sm:$0xff]
  %v211 = vld [vmem:[%s0 + $0x5e0] sm:$0xff]
  %v212 = vld [vmem:[%s0 + $0x5e8] sm:$0xff]
  %v213 = vld [vmem:[%s0 + $0x5f0] sm:$0xff]
  %v214 = vld [vmem:[%s0 + $0x5f8] sm:$0xff]
  %v215 = vld [vmem:[%s0 + $0x600] sm:$0xff]
  %v216 = vld [vmem:[%s0 + $0x608] sm:$0xff]
  %v217 = vld [vmem:[%s0 + $0x610] sm:$0xff]
  %v218 = vld [vmem:[%s0 + $0x618] sm:$0xff]
  %v219 = vld [vmem:[%s0 + $0x620] sm:$0xff]
  %v220 = vld [vmem:[%s0 + $0x628] sm:$0xff]
  %v221 = vld [vmem:[%s0 + $0x630] sm:$0xff]
  %v222 = vld [vmem:[%s0 + $0x638] sm:$0xff]
  %v223 = vld [vmem:[%s0 + $0x640] sm:$0xff]
  %v224 = vld [vmem:[%s0 + $0x648] sm:$0xff]
  %v225 = vld [vmem:[%s0 + $0x650] sm:$0xff]
  %v226 = vld [vmem:[%s0 + $0x658] sm:$0xff]
  %v227 = vld [vmem:[%s0 + $0x660] sm:$0xff]
  %v228 = vld [vmem:[%s0 + $0x668] sm:$0xff]
  %v229 = vld [vmem:[%s0 + $0x670] sm:$0xff]
  %v230 = vld [vmem:[%s0 + $0x678] sm:$0xff]
  %v231 = vld [vmem:[%s0 + $0x680] sm:$0xff]
  %v232 = vld [vmem:[%s0 + $0x688] sm:$0xff]
  %v233 = vld [vmem:[%s0 + $0x690] sm:$0xff]
  %v234 = vld [vmem:[%s0 + $0x698] sm:$0xff]
  %v235 = vld [vmem:[%s0 + $0x6a0] sm:$0xff]
  %v236 = vld [vmem:[%s0 + $0x6a8] sm:$0xff]
  %v237 = vld [vmem:[%s0 + $0x6b0] sm:$0xff]
  %v238 = vld [vmem:[%s0 + $0x6b8] sm:$0xff]
  %v239 = vld [vmem:[%s0 + $0x6c0] sm:$0xff]
  %v240 = vld [vmem:[%s0 + $0x6c8] sm:$0xff]
  %v241 = vld [vmem:[%s0 + $0x6d0] sm:$0xff]
  %v242 = vld [vmem:[%s0 + $0x6d8] sm:$0xff]
  %v243 = vld [vmem:[%s0 + $0x6e0] sm:$0xff]
  %v244 = vld [vmem:[%s0 + $0x6e8] sm:$0xff]
  %v245 = vld [vmem:[%s0 + $0x6f0] sm:$0xff]
  %v246 = vld [vmem:[%s0 + $0x6f8] sm:$0xff]
  %v247 = vld [vmem:[%s0 + $0x700] sm:$0xff]
  %v248 = vld [vmem:[%s0 + $0x708] sm:$0xff]
  %v249 = vld [vmem:[%s0 + $0x710] sm:$0xff]
  %v250 = vld [vmem:[%s0 + $0x718] sm:$0xff]
  %v251 = vld [vmem:[%s0 + $0x720] sm:$0xff]
  %v252 = vld [vmem:[%s0 + $0x728] sm:$0xff]
  %v253 = vld [vmem:[%s0 + $0x730] sm:$0xff]
  %v254 = vld [vmem:[%s0 + $0x738] sm:$0xff]
  %v255 = vld [vmem:[%s0 + $0x740] sm:$0xff]
  %v256 = vld [vmem:[%s0 + $0x748] sm:$0xff]
  %v257 = vld [vmem:[%s0 + $0x750] sm:$0xff]
  %v258 = vld [vmem:[%s0 + $0x758] sm:$0xff]
  %v259 = vld [vmem:[%s0 + $0x760] sm:$0xff]
  %v260 = vld [vmem:[%s0 + $0x768] sm:$0xff]
  %v261 = vld [vmem:[%s0 + $0x770] sm:$0xff]
  %v262 = vld [vmem:[%s0 + $0x778] sm:$0xff]
  %v263 = vld [vmem:[%s0 + $0x780] sm:$0xff]
  %v264 = vld [vmem:[%s0 + $0x788] sm:$0xff]
  %v265 = vld [vmem:[%s0 + $0x790] sm:$0xff]
  %v266 = vld [vmem:[%s0 + $0x798] sm:$0xff]
  %v267 = vld [vmem:[%s0 + $0x7a0] sm:$0xff]
  %v268 = vld [vmem:[%s0 + $0x7a8] sm:$0xff]
  %v269 = vld [vmem:[%s0 + $0x7b0] sm:$0xff]
  %v270 = vld [vmem:[%s0 + $0x7b8] sm:$0xff]
  %v271 = vld [vmem:[%s0 + $0x7c0] sm:$0xff]
  %v272 = vld [vmem:[%s0 + $0x7c8] sm:$0xff]
  %v273 = vld [vmem:[%s0 + $0x7d0] sm:$0xff]
  %v274 = vld [vmem:[%s0 + $0x7d8] sm:$0xff]
  %v275 = vld [vmem:[%s0 + $0x7e0] sm:$0xff]
  %v276 = vld [vmem:[%s0 + $0x7e8] sm:$0xff]
  %v277 = vld [vmem:[%s0 + $0x7f0] sm:$0xff]
  %v278 = vld [vmem:[%s0 + $0x7f8] sm:$0xff]
  %v279 = vld [vmem:[%s1] sm:$0xff]
  %v280 = vld [vmem:[%s1 + $0x8] sm:$0xff]
  %v281 = vld [vmem:[%s1 + $0x10] sm:$0xff]
  %v282 = vld [vmem:[%s1 + $0x18] sm:$0xff]
  %v283 = vld [vmem:[%s1 + $0x20] sm:$0xff]
  %v284 = vld [vmem:[%s1 + $0x28] sm:$0xff]
  %v285 = vld [vmem:[%s1 + $0x30] sm:$0xff]
  %v286 = vld [vmem:[%s1 + $0x38] sm:$0xff]
  %v287 = vld [vmem:[%s1 + $0x40] sm:$0xff]
  %v288 = vld [vmem:[%s1 + $0x48] sm:$0xff]
  %v289 = vld [vmem:[%s1 + $0x50] sm:$0xff]
  %v290 = vld [vmem:[%s1 + $0x58] sm:$0xff]
  %v291 = vld [vmem:[%s1 + $0x60] sm:$0xff]
  %v292 = vld [vmem:[%s1 + $0x68] sm:$0xff]
  %v293 = vld [vmem:[%s1 + $0x70] sm:$0xff]
  %v294 = vld [vmem:[%s1 + $0x78] sm:$0xff]
  %295 = vmatprep.subr.mxu0 0.0
  %296 = vmatpush1.msra.mxu0 %v279
  %297 = vmatprep.subr.mxu0 0.0
  %298 = vmatpush1.msra.mxu0 %v280
  %299 = vmatprep.subr.mxu0 0.0
  %300 = vmatpush1.msra.mxu0 %v281
  %301 = vmatprep.subr.mxu0 0.0
  %302 = vmatpush1.msra.mxu0 %v282
  %303 = vmatprep.subr.mxu0 0.0
  %304 = vmatpush1.msra.mxu0 %v283
  %305 = vmatprep.subr.mxu0 0.0
  %306 = vmatpush1.msra.mxu0 %v284
  %307 = vmatprep.subr.mxu0 0.0
  %308 = vmatpush1.msra.mxu0 %v285
  %309 = vmatprep.subr.mxu0 0.0
  %310 = vmatpush1.msra.mxu0 %v286
  %311 = vmatprep.subr.mxu0 0.0
  %312 = vmatpush1.msra.mxu0 %v287
  %313 = vmatprep.subr.mxu0 0.0
  %314 = vmatpush1.msra.mxu0 %v288
  %315 = vmatprep.subr.mxu0 0.0
  %316 = vmatpush1.msra.mxu0 %v289
  %317 = vmatprep.subr.mxu0 0.0
  %318 = vmatpush1.msra.mxu0 %v290
  %319 = vmatprep.subr.mxu0 0.0
  %320 = vmatpush1.msra.mxu0 %v291
  %321 = vmatprep.subr.mxu0 0.0
  %322 = vmatpush1.msra.mxu0 %v292
  %323 = vmatprep.subr.mxu0 0.0
  %324 = vmatpush1.msra.mxu0 %v293
  %325 = vmatprep.subr.mxu0 0.0
  %326 = vmatpush1.msra.mxu0 %v294
  %327 = vmatprep.subr.mxu0 0.0
  %328 = vmatpush1.msra.mxu0 0.0
  %329 = vmatprep.subr.mxu0 0.0
  %330 = vmatpush1.msra.mxu0 0.0
  %331 = vmatprep.subr.mxu0 0.0
  %332 = vmatpush1.msra.mxu0 0.0
  %333 = vmatprep.subr.mxu0 0.0
  %334 = vmatpush1.msra.mxu0 0.0
  %335 = vmatprep.subr.mxu0 0.0
  %336 = vmatpush1.msra.mxu0 0.0
  %337 = vmatprep.subr.mxu0 0.0
  %338 = vmatpush1.msra.mxu0 0.0
  %339 = vmatprep.subr.mxu0 0.0
  %340 = vmatpush1.msra.mxu0 0.0
  %341 = vmatprep.subr.mxu0 0.0
  %342 = vmatpush1.msra.mxu0 0.0
  %343 = vmatprep.subr.mxu0 0.0
  %344 = vmatpush1.msra.mxu0 0.0
  %345 = vmatprep.subr.mxu0 0.0
  %346 = vmatpush1.msra.mxu0 0.0
  %347 = vmatprep.subr.mxu0 0.0
  %348 = vmatpush1.msra.mxu0 0.0
  %349 = vmatprep.subr.mxu0 0.0
  %350 = vmatpush1.msra.mxu0 0.0
  %351 = vmatprep.subr.mxu0 0.0
  %352 = vmatpush1.msra.mxu0 0.0
  %353 = vmatprep.subr.mxu0 0.0
  %354 = vmatpush1.msra.mxu0 0.0
  %355 = vmatprep.subr.mxu0 0.0
  %356 = vmatpush1.msra.mxu0 0.0
  %357 = vmatprep.subr.mxu0 0.0
  %358 = vmatpush1.msra.mxu0 0.0
  %359 = vmatprep.mubr.f32.mxu0 0.0
  %360 = vmatmul.mubr.f32.gmra.mrb[0].mxu0 %v23
  %v361 = vpop.f32.mrb[0].mxu0
  %v362 = vadd.f32 0.0, %v361
  %v363 = vpop.f32.mrb[0].mxu0
  %364 = vmatprep.mubr.f32.mxu0 0.0
  %365 = vmatmul.mubr.f32.gmra.mrb[0].mxu0 %v24
  %v366 = vpop.f32.mrb[0].mxu0
  %v367 = vadd.f32 0.0, %v366
  %v368 = vpop.f32.mrb[0].mxu0
  %369 = vmatprep.mubr.f32.mxu0 0.0
  %370 = vmatmul.mubr.f32.gmra.mrb[0].mxu0 %v25
  %v371 = vpop.f32.mrb[0].mxu0
  %v372 = vadd.f32 0.0, %v371
  %v373 = vpop.f32.mrb[0].mxu0
  %374 = vmatprep.mubr.f32.mxu0 0.0
  %375 = vmatmul.mubr.f32.gmra.mrb[0].mxu0 %v26
  %v376 = vpop.f32.mrb[0].mxu0
  %v377 = vadd.f32 0.0, %v376
  %v378 = vpop.f32.mrb[0].mxu0
  %379 = vmatprep.mubr.f32.mxu0 0.0
  %380 = vmatmul.mubr.f32.gmra.mrb[0].mxu0 %v27
  %v381 = vpop.f32.mrb[0].mxu0
  %v382 = vadd.f32 0.0, %v381
  %v383 = vpop.f32.mrb[0].mxu0
  %384 = vmatprep.mubr.f32.mxu0 0.0
  %385 = vmatmul.mubr.f32.gmra.mrb[0].mxu0 %v28
  %v386 = vpop.f32.mrb[0].mxu0
  %v387 = vadd.f32 0.0, %v386
  %v388 = vpop.f32.mrb[0].mxu0
  %389 = vmatprep.mubr.f32.mxu0 0.0
  %390 = vmatmul.mubr.f32.gmra.mrb[0].mxu0 %v29
  %v391 = vpop.f32.mrb[0].mxu0
  %v392 = vadd.f32 0.0, %v391
  %v393 = vpop.f32.mrb[0].mxu0
  %394 = vmatprep.mubr.f32.mxu0 0.0
  %395 = vmatmul.mubr.f32.gmra.mrb[0].mxu0 %v30
  %v396 = vpop.f32.mrb[0].mxu0
  %v397 = vadd.f32 0.0, %v396
  %v398 = vpop.f32.mrb[0].mxu0
  %399 = vmatprep.mubr.f32.mxu0 0.0
  %400 = vmatmul.mubr.f32.gmra.mrb[0].mxu0 %v31
  %v401 = vpop.f32.mrb[0].mxu0
  %v402 = vadd.f32 0.0, %v401
  %v403 = vpop.f32.mrb[0].mxu0
  %404 = vmatprep.mubr.f32.mxu0 0.0
  %405 = vmatmul.mubr.f32.gmra.mrb[0].mxu0 %v32
  %v406 = vpop.f32.mrb[0].mxu0
  %v407 = vadd.f32 0.0, %v406
  %v408 = vpop.f32.mrb[0].mxu0
  %409 = vmatprep.mubr.f32.mxu0 0.0
  %410 = vmatmul.mubr.f32.gmra.mrb[0].mxu0 %v33
  %v411 = vpop.f32.mrb[0].mxu0
  %v412 = vadd.f32 0.0, %v411
  %v413 = vpop.f32.mrb[0].mxu0
  %414 = vmatprep.mubr.f32.mxu0 0.0
  %415 = vmatmul.mubr.f32.gmra.mrb[0].mxu0 %v34
  %v416 = vpop.f32.mrb[0].mxu0
  %v417 = vadd.f32 0.0, %v416
  %v418 = vpop.f32.mrb[0].mxu0
  %419 = vmatprep.mubr.f32.mxu0 0.0
  %420 = vmatmul.mubr.f32.gmra.mrb[0].mxu0 %v35
  %v421 = vpop.f32.mrb[0].mxu0
  %v422 = vadd.f32 0.0, %v421
  %v423 = vpop.f32.mrb[0].mxu0
  %424 = vmatprep.mubr.f32.mxu0 0.0
  %425 = vmatmul.mubr.f32.gmra.mrb[0].mxu0 %v36
  %v426 = vpop.f32.mrb[0].mxu0
  %v427 = vadd.f32 0.0, %v426
  %v428 = vpop.f32.mrb[0].mxu0
  %429 = vmatprep.mubr.f32.mxu0 0.0
  %430 = vmatmul.mubr.f32.gmra.mrb[0].mxu0 %v37
  %v431 = vpop.f32.mrb[0].mxu0
  %v432 = vadd.f32 0.0, %v431
  %v433 = vpop.f32.mrb[0].mxu0
  %434 = vmatprep.mubr.f32.mxu0 0.0
  %435 = vmatmul.mubr.f32.gmra.mrb[0].mxu0 %v38
  %v436 = vpop.f32.mrb[0].mxu0
  %v437 = vadd.f32 0.0, %v436
  %v438 = vpop.f32.mrb[0].mxu0
  %439 = vmatprep.mubr.f32.mxu0 0.0
  %440 = vmatmul.mubr.f32.gmra.mrb[0].mxu0 %v39
  %v441 = vpop.f32.mrb[0].mxu0
  %v442 = vadd.f32 0.0, %v441
  %v443 = vpop.f32.mrb[0].mxu0
  %444 = vmatprep.mubr.f32.mxu0 0.0
  %445 = vmatmul.mubr.f32.gmra.mrb[0].mxu0 %v40
  %v446 = vpop.f32.mrb[0].mxu0
  %v447 = vadd.f32 0.0, %v446
  %v448 = vpop.f32.mrb[0].mxu0
  %449 = vmatprep.mubr.f32.mxu0 0.0
  %450 = vmatmul.mubr.f32.gmra.mrb[0].mxu0 %v41
  %v451 = vpop.f32.mrb[0].mxu0
  %v452 = vadd.f32 0.0, %v451
  %v453 = vpop.f32.mrb[0].mxu0
  %454 = vmatprep.mubr.f32.mxu0 0.0
  %455 = vmatmul.mubr.f32.gmra.mrb[0].mxu0 %v42
  %v456 = vpop.f32.mrb[0].mxu0
  %v457 = vadd.f32 0.0, %v456
  %v458 = vpop.f32.mrb[0].mxu0
  %459 = vmatprep.mubr.f32.mxu0 0.0
  %460 = vmatmul.mubr.f32.gmra.mrb[0].mxu0 %v43
  %v461 = vpop.f32.mrb[0].mxu0
  %v462 = vadd.f32 0.0, %v461
  %v463 = vpop.f32.mrb[0].mxu0
  %464 = vmatprep.mubr.f32.mxu0 0.0
  %465 = vmatmul.mubr.f32.gmra.mrb[0].mxu0 %v44
  %v466 = vpop.f32.mrb[0].mxu0
  %v467 = vadd.f32 0.0, %v466
  %v468 = vpop.f32.mrb[0].mxu0
  %469 = vmatprep.mubr.f32.mxu0 0.0
  %470 = vmatmul.mubr.f32.gmra.mrb[0].mxu0 %v45
  %v471 = vpop.f32.mrb[0].mxu0
  %v472 = vadd.f32 0.0, %v471
  %v473 = vpop.f32.mrb[0].mxu0
  %474 = vmatprep.mubr.f32.mxu0 0.0
  %475 = vmatmul.mubr.f32.gmra.mrb[0].mxu0 %v46
  %v476 = vpop.f32.mrb[0].mxu0
  %v477 = vadd.f32 0.0, %v476
  %v478 = vpop.f32.mrb[0].mxu0
  %479 = vmatprep.mubr.f32.mxu0 0.0
  %480 = vmatmul.mubr.f32.gmra.mrb[0].mxu0 %v47
  %v481 = vpop.f32.mrb[0].mxu0
  %v482 = vadd.f32 0.0, %v481
  %v483 = vpop.f32.mrb[0].mxu0
  %484 = vmatprep.mubr.f32.mxu0 0.0
  %485 = vmatmul.mubr.f32.gmra.mrb[0].mxu0 %v48
  %v486 = vpop.f32.mrb[0].mxu0
  %v487 = vadd.f32 0.0, %v486
  %v488 = vpop.f32.mrb[0].mxu0
  %489 = vmatprep.mubr.f32.mxu0 0.0
  %490 = vmatmul.mubr.f32.gmra.mrb[0].mxu0 %v49
  %v491 = vpop.f32.mrb[0].mxu0
  %v492 = vadd.f32 0.0, %v491
  %v493 = vpop.f32.mrb[0].mxu0
  %494 = vmatprep.mubr.f32.mxu0 0.0
  %495 = vmatmul.mubr.f32.gmra.mrb[0].mxu0 %v50
  %v496 = vpop.f32.mrb[0].mxu0
  %v497 = vadd.f32 0.0, %v496
  %v498 = vpop.f32.mrb[0].mxu0
  %499 = vmatprep.mubr.f32.mxu0 0.0
  %500 = vmatmul.mubr.f32.gmra.mrb[0].mxu0 %v51
  %v501 = vpop.f32.mrb[0].mxu0
  %v502 = vadd.f32 0.0, %v501
  %v503 = vpop.f32.mrb[0].mxu0
  %504 = vmatprep.mubr.f32.mxu0 0.0
  %505 = vmatmul.mubr.f32.gmra.mrb[0].mxu0 %v52
  %v506 = vpop.f32.mrb[0].mxu0
  %v507 = vadd.f32 0.0, %v506
  %v508 = vpop.f32.mrb[0].mxu0
  %509 = vmatprep.mubr.f32.mxu0 0.0
  %510 = vmatmul.mubr.f32.gmra.mrb[0].mxu0 %v53
  %v511 = vpop.f32.mrb[0].mxu0
  %v512 = vadd.f32 0.0, %v511
  %v513 = vpop.f32.mrb[0].mxu0
  %514 = vmatprep.mubr.f32.mxu0 0.0
  %515 = vmatmul.mubr.f32.gmra.mrb[0].mxu0 %v54
  %v516 = vpop.f32.mrb[0].mxu0
  %v517 = vadd.f32 0.0, %v516
  %v518 = vpop.f32.mrb[0].mxu0
  %519 = vmatprep.mubr.f32.mxu0 0.0
  %520 = vmatmul.mubr.f32.gmra.mrb[0].mxu0 %v55
  %v521 = vpop.f32.mrb[0].mxu0
  %v522 = vadd.f32 0.0, %v521
  %v523 = vpop.f32.mrb[0].mxu0
  %524 = vmatprep.mubr.f32.mxu0 0.0
  %525 = vmatmul.mubr.f32.gmra.mrb[0].mxu0 %v56
  %v526 = vpop.f32.mrb[0].mxu0
  %v527 = vadd.f32 0.0, %v526
  %v528 = vpop.f32.mrb[0].mxu0
  %529 = vmatprep.mubr.f32.mxu0 0.0
  %530 = vmatmul.mubr.f32.gmra.mrb[0].mxu0 %v57
  %v531 = vpop.f32.mrb[0].mxu0
  %v532 = vadd.f32 0.0, %v531
  %v533 = vpop.f32.mrb[0].mxu0
  %534 = vmatprep.mubr.f32.mxu0 0.0
  %535 = vmatmul.mubr.f32.gmra.mrb[0].mxu0 %v58
  %v536 = vpop.f32.mrb[0].mxu0
  %v537 = vadd.f32 0.0, %v536
  %v538 = vpop.f32.mrb[0].mxu0
  %539 = vmatprep.mubr.f32.mxu0 0.0
  %540 = vmatmul.mubr.f32.gmra.mrb[0].mxu0 %v59
  %v541 = vpop.f32.mrb[0].mxu0
  %v542 = vadd.f32 0.0, %v541
  %v543 = vpop.f32.mrb[0].mxu0
  %544 = vmatprep.mubr.f32.mxu0 0.0
  %545 = vmatmul.mubr.f32.gmra.mrb[0].mxu0 %v60
  %v546 = vpop.f32.mrb[0].mxu0
  %v547 = vadd.f32 0.0, %v546
  %v548 = vpop.f32.mrb[0].mxu0
  %549 = vmatprep.mubr.f32.mxu0 0.0
  %550 = vmatmul.mubr.f32.gmra.mrb[0].mxu0 %v61
  %v551 = vpop.f32.mrb[0].mxu0
  %v552 = vadd.f32 0.0, %v551
  %v553 = vpop.f32.mrb[0].mxu0
  %554 = vmatprep.mubr.f32.mxu0 0.0
  %555 = vmatmul.mubr.f32.gmra.mrb[0].mxu0 %v62
  %v556 = vpop.f32.mrb[0].mxu0
  %v557 = vadd.f32 0.0, %v556
  %v558 = vpop.f32.mrb[0].mxu0
  %559 = vmatprep.mubr.f32.mxu0 0.0
  %560 = vmatmul.mubr.f32.gmra.mrb[0].mxu0 %v63
  %v561 = vpop.f32.mrb[0].mxu0
  %v562 = vadd.f32 0.0, %v561
  %v563 = vpop.f32.mrb[0].mxu0
  %564 = vmatprep.mubr.f32.mxu0 0.0
  %565 = vmatmul.mubr.f32.gmra.mrb[0].mxu0 %v64
  %v566 = vpop.f32.mrb[0].mxu0
  %v567 = vadd.f32 0.0, %v566
  %v568 = vpop.f32.mrb[0].mxu0
  %569 = vmatprep.mubr.f32.mxu0 0.0
  %570 = vmatmul.mubr.f32.gmra.mrb[0].mxu0 %v65
  %v571 = vpop.f32.mrb[0].mxu0
  %v572 = vadd.f32 0.0, %v571
  %v573 = vpop.f32.mrb[0].mxu0
  %574 = vmatprep.mubr.f32.mxu0 0.0
  %575 = vmatmul.mubr.f32.gmra.mrb[0].mxu0 %v66
  %v576 = vpop.f32.mrb[0].mxu0
  %v577 = vadd.f32 0.0, %v576
  %v578 = vpop.f32.mrb[0].mxu0
  %579 = vmatprep.mubr.f32.mxu0 0.0
  %580 = vmatmul.mubr.f32.gmra.mrb[0].mxu0 %v67
  %v581 = vpop.f32.mrb[0].mxu0
  %v582 = vadd.f32 0.0, %v581
  %v583 = vpop.f32.mrb[0].mxu0
  %584 = vmatprep.mubr.f32.mxu0 0.0
  %585 = vmatmul.mubr.f32.gmra.mrb[0].mxu0 %v68
  %v586 = vpop.f32.mrb[0].mxu0
  %v587 = vadd.f32 0.0, %v586
  %v588 = vpop.f32.mrb[0].mxu0
  %589 = vmatprep.mubr.f32.mxu0 0.0
  %590 = vmatmul.mubr.f32.gmra.mrb[0].mxu0 %v69
  %v591 = vpop.f32.mrb[0].mxu0
  %v592 = vadd.f32 0.0, %v591
  %v593 = vpop.f32.mrb[0].mxu0
  %594 = vmatprep.mubr.f32.mxu0 0.0
  %595 = vmatmul.mubr.f32.gmra.mrb[0].mxu0 %v70
  %v596 = vpop.f32.mrb[0].mxu0
  %v597 = vadd.f32 0.0, %v596
  %v598 = vpop.f32.mrb[0].mxu0
  %599 = vmatprep.mubr.f32.mxu0 0.0
  %600 = vmatmul.mubr.f32.gmra.mrb[0].mxu0 %v71
  %v601 = vpop.f32.mrb[0].mxu0
  %v602 = vadd.f32 0.0, %v601
  %v603 = vpop.f32.mrb[0].mxu0
  %604 = vmatprep.mubr.f32.mxu0 0.0
  %605 = vmatmul.mubr.f32.gmra.mrb[0].mxu0 %v72
  %v606 = vpop.f32.mrb[0].mxu0
  %v607 = vadd.f32 0.0, %v606
  %v608 = vpop.f32.mrb[0].mxu0
  %609 = vmatprep.mubr.f32.mxu0 0.0
  %610 = vmatmul.mubr.f32.gmra.mrb[0].mxu0 %v73
  %v611 = vpop.f32.mrb[0].mxu0
  %v612 = vadd.f32 0.0, %v611
  %v613 = vpop.f32.mrb[0].mxu0
  %614 = vmatprep.mubr.f32.mxu0 0.0
  %615 = vmatmul.mubr.f32.gmra.mrb[0].mxu0 %v74
  %v616 = vpop.f32.mrb[0].mxu0
  %v617 = vadd.f32 0.0, %v616
  %v618 = vpop.f32.mrb[0].mxu0
  %619 = vmatprep.mubr.f32.mxu0 0.0
  %620 = vmatmul.mubr.f32.gmra.mrb[0].mxu0 %v75
  %v621 = vpop.f32.mrb[0].mxu0
  %v622 = vadd.f32 0.0, %v621
  %v623 = vpop.f32.mrb[0].mxu0
  %624 = vmatprep.mubr.f32.mxu0 0.0
  %625 = vmatmul.mubr.f32.gmra.mrb[0].mxu0 %v76
  %v626 = vpop.f32.mrb[0].mxu0
  %v627 = vadd.f32 0.0, %v626
  %v628 = vpop.f32.mrb[0].mxu0
  %629 = vmatprep.mubr.f32.mxu0 0.0
  %630 = vmatmul.mubr.f32.gmra.mrb[0].mxu0 %v77
  %v631 = vpop.f32.mrb[0].mxu0
  %v632 = vadd.f32 0.0, %v631
  %v633 = vpop.f32.mrb[0].mxu0
  %634 = vmatprep.mubr.f32.mxu0 0.0
  %635 = vmatmul.mubr.f32.gmra.mrb[0].mxu0 %v78
  %v636 = vpop.f32.mrb[0].mxu0
  %v637 = vadd.f32 0.0, %v636
  %v638 = vpop.f32.mrb[0].mxu0
  %639 = vmatprep.mubr.f32.mxu0 0.0
  %640 = vmatmul.mubr.f32.gmra.mrb[0].mxu0 %v79
  %v641 = vpop.f32.mrb[0].mxu0
  %v642 = vadd.f32 0.0, %v641
  %v643 = vpop.f32.mrb[0].mxu0
  %644 = vmatprep.mubr.f32.mxu0 0.0
  %645 = vmatmul.mubr.f32.gmra.mrb[0].mxu0 %v80
  %v646 = vpop.f32.mrb[0].mxu0
  %v647 = vadd.f32 0.0, %v646
  %v648 = vpop.f32.mrb[0].mxu0
  %649 = vmatprep.mubr.f32.mxu0 0.0
  %650 = vmatmul.mubr.f32.gmra.mrb[0].mxu0 %v81
  %v651 = vpop.f32.mrb[0].mxu0
  %v652 = vadd.f32 0.0, %v651
  %v653 = vpop.f32.mrb[0].mxu0
  %654 = vmatprep.mubr.f32.mxu0 0.0
  %655 = vmatmul.mubr.f32.gmra.mrb[0].mxu0 %v82
  %v656 = vpop.f32.mrb[0].mxu0
  %v657 = vadd.f32 0.0, %v656
  %v658 = vpop.f32.mrb[0].mxu0
  %659 = vmatprep.mubr.f32.mxu0 0.0
  %660 = vmatmul.mubr.f32.gmra.mrb[0].mxu0 %v83
  %v661 = vpop.f32.mrb[0].mxu0
  %v662 = vadd.f32 0.0, %v661
  %v663 = vpop.f32.mrb[0].mxu0
  %664 = vmatprep.mubr.f32.mxu0 0.0
  %665 = vmatmul.mubr.f32.gmra.mrb[0].mxu0 %v84
  %v666 = vpop.f32.mrb[0].mxu0
  %v667 = vadd.f32 0.0, %v666
  %v668 = vpop.f32.mrb[0].mxu0
  %669 = vmatprep.mubr.f32.mxu0 0.0
  %670 = vmatmul.mubr.f32.gmra.mrb[0].mxu0 %v85
  %v671 = vpop.f32.mrb[0].mxu0
  %v672 = vadd.f32 0.0, %v671
  %v673 = vpop.f32.mrb[0].mxu0
  %674 = vmatprep.mubr.f32.mxu0 0.0
  %675 = vmatmul.mubr.f32.gmra.mrb[0].mxu0 %v86
  %v676 = vpop.f32.mrb[0].mxu0
  %v677 = vadd.f32 0.0, %v676
  %v678 = vpop.f32.mrb[0].mxu0
  %679 = vmatprep.mubr.f32.mxu0 0.0
  %680 = vmatmul.mubr.f32.gmra.mrb[0].mxu0 %v87
  %v681 = vpop.f32.mrb[0].mxu0
  %v682 = vadd.f32 0.0, %v681
  %v683 = vpop.f32.mrb[0].mxu0
  %684 = vmatprep.mubr.f32.mxu0 0.0
  %685 = vmatmul.mubr.f32.gmra.mrb[0].mxu0 %v88
  %v686 = vpop.f32.mrb[0].mxu0
  %v687 = vadd.f32 0.0, %v686
  %v688 = vpop.f32.mrb[0].mxu0
  %689 = vmatprep.mubr.f32.mxu0 0.0
  %690 = vmatmul.mubr.f32.gmra.mrb[0].mxu0 %v89
  %v691 = vpop.f32.mrb[0].mxu0
  %v692 = vadd.f32 0.0, %v691
  %v693 = vpop.f32.mrb[0].mxu0
  %694 = vmatprep.mubr.f32.mxu0 0.0
  %695 = vmatmul.mubr.f32.gmra.mrb[0].mxu0 %v90
  %v696 = vpop.f32.mrb[0].mxu0
  %v697 = vadd.f32 0.0, %v696
  %v698 = vpop.f32.mrb[0].mxu0
  %699 = vmatprep.mubr.f32.mxu0 0.0
  %700 = vmatmul.mubr.f32.gmra.mrb[0].mxu0 %v91
  %v701 = vpop.f32.mrb[0].mxu0
  %v702 = vadd.f32 0.0, %v701
  %v703 = vpop.f32.mrb[0].mxu0
  %704 = vmatprep.mubr.f32.mxu0 0.0
  %705 = vmatmul.mubr.f32.gmra.mrb[0].mxu0 %v92
  %v706 = vpop.f32.mrb[0].mxu0
  %v707 = vadd.f32 0.0, %v706
  %v708 = vpop.f32.mrb[0].mxu0
  %709 = vmatprep.mubr.f32.mxu0 0.0
  %710 = vmatmul.mubr.f32.gmra.mrb[0].mxu0 %v93
  %v711 = vpop.f32.mrb[0].mxu0
  %v712 = vadd.f32 0.0, %v711
  %v713 = vpop.f32.mrb[0].mxu0
  %714 = vmatprep.mubr.f32.mxu0 0.0
  %715 = vmatmul.mubr.f32.gmra.mrb[0].mxu0 %v94
  %v716 = vpop.f32.mrb[0].mxu0
  %v717 = vadd.f32 0.0, %v716
  %v718 = vpop.f32.mrb[0].mxu0
  %719 = vmatprep.mubr.f32.mxu0 0.0
  %720 = vmatmul.mubr.f32.gmra.mrb[0].mxu0 %v95
  %v721 = vpop.f32.mrb[0].mxu0
  %v722 = vadd.f32 0.0, %v721
  %v723 = vpop.f32.mrb[0].mxu0
  %724 = vmatprep.mubr.f32.mxu0 0.0
  %725 = vmatmul.mubr.f32.gmra.mrb[0].mxu0 %v96
  %v726 = vpop.f32.mrb[0].mxu0
  %v727 = vadd.f32 0.0, %v726
  %v728 = vpop.f32.mrb[0].mxu0
  %729 = vmatprep.mubr.f32.mxu0 0.0
  %730 = vmatmul.mubr.f32.gmra.mrb[0].mxu0 %v97
  %v731 = vpop.f32.mrb[0].mxu0
  %v732 = vadd.f32 0.0, %v731
  %v733 = vpop.f32.mrb[0].mxu0
  %734 = vmatprep.mubr.f32.mxu0 0.0
  %735 = vmatmul.mubr.f32.gmra.mrb[0].mxu0 %v98
  %v736 = vpop.f32.mrb[0].mxu0
  %v737 = vadd.f32 0.0, %v736
  %v738 = vpop.f32.mrb[0].mxu0
  %739 = vmatprep.mubr.f32.mxu0 0.0
  %740 = vmatmul.mubr.f32.gmra.mrb[0].mxu0 %v99
  %v741 = vpop.f32.mrb[0].mxu0
  %v742 = vadd.f32 0.0, %v741
  %v743 = vpop.f32.mrb[0].mxu0
  %744 = vmatprep.mubr.f32.mxu0 0.0
  %745 = vmatmul.mubr.f32.gmra.mrb[0].mxu0 %v100
  %v746 = vpop.f32.mrb[0].mxu0
  %v747 = vadd.f32 0.0, %v746
  %v748 = vpop.f32.mrb[0].mxu0
  %749 = vmatprep.mubr.f32.mxu0 0.0
  %750 = vmatmul.mubr.f32.gmra.mrb[0].mxu0 %v101
  %v751 = vpop.f32.mrb[0].mxu0
  %v752 = vadd.f32 0.0, %v751
  %v753 = vpop.f32.mrb[0].mxu0
  %754 = vmatprep.mubr.f32.mxu0 0.0
  %755 = vmatmul.mubr.f32.gmra.mrb[0].mxu0 %v102
  %v756 = vpop.f32.mrb[0].mxu0
  %v757 = vadd.f32 0.0, %v756
  %v758 = vpop.f32.mrb[0].mxu0
  %759 = vmatprep.mubr.f32.mxu0 0.0
  %760 = vmatmul.mubr.f32.gmra.mrb[0].mxu0 %v103
  %v761 = vpop.f32.mrb[0].mxu0
  %v762 = vadd.f32 0.0, %v761
  %v763 = vpop.f32.mrb[0].mxu0
  %764 = vmatprep.mubr.f32.mxu0 0.0
  %765 = vmatmul.mubr.f32.gmra.mrb[0].mxu0 %v104
  %v766 = vpop.f32.mrb[0].mxu0
  %v767 = vadd.f32 0.0, %v766
  %v768 = vpop.f32.mrb[0].mxu0
  %769 = vmatprep.mubr.f32.mxu0 0.0
  %770 = vmatmul.mubr.f32.gmra.mrb[0].mxu0 %v105
  %v771 = vpop.f32.mrb[0].mxu0
  %v772 = vadd.f32 0.0, %v771
  %v773 = vpop.f32.mrb[0].mxu0
  %774 = vmatprep.mubr.f32.mxu0 0.0
  %775 = vmatmul.mubr.f32.gmra.mrb[0].mxu0 %v106
  %v776 = vpop.f32.mrb[0].mxu0
  %v777 = vadd.f32 0.0, %v776
  %v778 = vpop.f32.mrb[0].mxu0
  %779 = vmatprep.mubr.f32.mxu0 0.0
  %780 = vmatmul.mubr.f32.gmra.mrb[0].mxu0 %v107
  %v781 = vpop.f32.mrb[0].mxu0
  %v782 = vadd.f32 0.0, %v781
  %v783 = vpop.f32.mrb[0].mxu0
  %784 = vmatprep.mubr.f32.mxu0 0.0
  %785 = vmatmul.mubr.f32.gmra.mrb[0].mxu0 %v108
  %v786 = vpop.f32.mrb[0].mxu0
  %v787 = vadd.f32 0.0, %v786
  %v788 = vpop.f32.mrb[0].mxu0
  %789 = vmatprep.mubr.f32.mxu0 0.0
  %790 = vmatmul.mubr.f32.gmra.mrb[0].mxu0 %v109
  %v791 = vpop.f32.mrb[0].mxu0
  %v792 = vadd.f32 0.0, %v791
  %v793 = vpop.f32.mrb[0].mxu0
  %794 = vmatprep.mubr.f32.mxu0 0.0
  %795 = vmatmul.mubr.f32.gmra.mrb[0].mxu0 %v110
  %v796 = vpop.f32.mrb[0].mxu0
  %v797 = vadd.f32 0.0, %v796
  %v798 = vpop.f32.mrb[0].mxu0
  %799 = vmatprep.mubr.f32.mxu0 0.0
  %800 = vmatmul.mubr.f32.gmra.mrb[0].mxu0 %v111
  %v801 = vpop.f32.mrb[0].mxu0
  %v802 = vadd.f32 0.0, %v801
  %v803 = vpop.f32.mrb[0].mxu0
  %804 = vmatprep.mubr.f32.mxu0 0.0
  %805 = vmatmul.mubr.f32.gmra.mrb[0].mxu0 %v112
  %v806 = vpop.f32.mrb[0].mxu0
  %v807 = vadd.f32 0.0, %v806
  %v808 = vpop.f32.mrb[0].mxu0
  %809 = vmatprep.mubr.f32.mxu0 0.0
  %810 = vmatmul.mubr.f32.gmra.mrb[0].mxu0 %v113
  %v811 = vpop.f32.mrb[0].mxu0
  %v812 = vadd.f32 0.0, %v811
  %v813 = vpop.f32.mrb[0].mxu0
  %814 = vmatprep.mubr.f32.mxu0 0.0
  %815 = vmatmul.mubr.f32.gmra.mrb[0].mxu0 %v114
  %v816 = vpop.f32.mrb[0].mxu0
  %v817 = vadd.f32 0.0, %v816
  %v818 = vpop.f32.mrb[0].mxu0
  %819 = vmatprep.mubr.f32.mxu0 0.0
  %820 = vmatmul.mubr.f32.gmra.mrb[0].mxu0 %v115
  %v821 = vpop.f32.mrb[0].mxu0
  %v822 = vadd.f32 0.0, %v821
  %v823 = vpop.f32.mrb[0].mxu0
  %824 = vmatprep.mubr.f32.mxu0 0.0
  %825 = vmatmul.mubr.f32.gmra.mrb[0].mxu0 %v116
  %v826 = vpop.f32.mrb[0].mxu0
  %v827 = vadd.f32 0.0, %v826
  %v828 = vpop.f32.mrb[0].mxu0
  %829 = vmatprep.mubr.f32.mxu0 0.0
  %830 = vmatmul.mubr.f32.gmra.mrb[0].mxu0 %v117
  %v831 = vpop.f32.mrb[0].mxu0
  %v832 = vadd.f32 0.0, %v831
  %v833 = vpop.f32.mrb[0].mxu0
  %834 = vmatprep.mubr.f32.mxu0 0.0
  %835 = vmatmul.mubr.f32.gmra.mrb[0].mxu0 %v118
  %v836 = vpop.f32.mrb[0].mxu0
  %v837 = vadd.f32 0.0, %v836
  %v838 = vpop.f32.mrb[0].mxu0
  %839 = vmatprep.mubr.f32.mxu0 0.0
  %840 = vmatmul.mubr.f32.gmra.mrb[0].mxu0 %v119
  %v841 = vpop.f32.mrb[0].mxu0
  %v842 = vadd.f32 0.0, %v841
  %v843 = vpop.f32.mrb[0].mxu0
  %844 = vmatprep.mubr.f32.mxu0 0.0
  %845 = vmatmul.mubr.f32.gmra.mrb[0].mxu0 %v120
  %v846 = vpop.f32.mrb[0].mxu0
  %v847 = vadd.f32 0.0, %v846
  %v848 = vpop.f32.mrb[0].mxu0
  %849 = vmatprep.mubr.f32.mxu0 0.0
  %850 = vmatmul.mubr.f32.gmra.mrb[0].mxu0 %v121
  %v851 = vpop.f32.mrb[0].mxu0
  %v852 = vadd.f32 0.0, %v851
  %v853 = vpop.f32.mrb[0].mxu0
  %854 = vmatprep.mubr.f32.mxu0 0.0
  %855 = vmatmul.mubr.f32.gmra.mrb[0].mxu0 %v122
  %v856 = vpop.f32.mrb[0].mxu0
  %v857 = vadd.f32 0.0, %v856
  %v858 = vpop.f32.mrb[0].mxu0
  %859 = vmatprep.mubr.f32.mxu0 0.0
  %860 = vmatmul.mubr.f32.gmra.mrb[0].mxu0 %v123
  %v861 = vpop.f32.mrb[0].mxu0
  %v862 = vadd.f32 0.0, %v861
  %v863 = vpop.f32.mrb[0].mxu0
  %864 = vmatprep.mubr.f32.mxu0 0.0
  %865 = vmatmul.mubr.f32.gmra.mrb[0].mxu0 %v124
  %v866 = vpop.f32.mrb[0].mxu0
  %v867 = vadd.f32 0.0, %v866
  %v868 = vpop.f32.mrb[0].mxu0
  %869 = vmatprep.mubr.f32.mxu0 0.0
  %870 = vmatmul.mubr.f32.gmra.mrb[0].mxu0 %v125
  %v871 = vpop.f32.mrb[0].mxu0
  %v872 = vadd.f32 0.0, %v871
  %v873 = vpop.f32.mrb[0].mxu0
  %874 = vmatprep.mubr.f32.mxu0 0.0
  %875 = vmatmul.mubr.f32.gmra.mrb[0].mxu0 %v126
  %v876 = vpop.f32.mrb[0].mxu0
  %v877 = vadd.f32 0.0, %v876
  %v878 = vpop.f32.mrb[0].mxu0
  %879 = vmatprep.mubr.f32.mxu0 0.0
  %880 = vmatmul.mubr.f32.gmra.mrb[0].mxu0 %v127
  %v881 = vpop.f32.mrb[0].mxu0
  %v882 = vadd.f32 0.0, %v881
  %v883 = vpop.f32.mrb[0].mxu0
  %884 = vmatprep.mubr.f32.mxu0 0.0
  %885 = vmatmul.mubr.f32.gmra.mrb[0].mxu0 %v128
  %v886 = vpop.f32.mrb[0].mxu0
  %v887 = vadd.f32 0.0, %v886
  %v888 = vpop.f32.mrb[0].mxu0
  %889 = vmatprep.mubr.f32.mxu0 0.0
  %890 = vmatmul.mubr.f32.gmra.mrb[0].mxu0 %v129
  %v891 = vpop.f32.mrb[0].mxu0
  %v892 = vadd.f32 0.0, %v891
  %v893 = vpop.f32.mrb[0].mxu0
  %894 = vmatprep.mubr.f32.mxu0 0.0
  %895 = vmatmul.mubr.f32.gmra.mrb[0].mxu0 %v130
  %v896 = vpop.f32.mrb[0].mxu0
  %v897 = vadd.f32 0.0, %v896
  %v898 = vpop.f32.mrb[0].mxu0
  %899 = vmatprep.mubr.f32.mxu0 0.0
  %900 = vmatmul.mubr.f32.gmra.mrb[0].mxu0 %v131
  %v901 = vpop.f32.mrb[0].mxu0
  %v902 = vadd.f32 0.0, %v901
  %v903 = vpop.f32.mrb[0].mxu0
  %904 = vmatprep.mubr.f32.mxu0 0.0
  %905 = vmatmul.mubr.f32.gmra.mrb[0].mxu0 %v132
  %v906 = vpop.f32.mrb[0].mxu0
  %v907 = vadd.f32 0.0, %v906
  %v908 = vpop.f32.mrb[0].mxu0
  %909 = vmatprep.mubr.f32.mxu0 0.0
  %910 = vmatmul.mubr.f32.gmra.mrb[0].mxu0 %v133
  %v911 = vpop.f32.mrb[0].mxu0
  %v912 = vadd.f32 0.0, %v911
  %v913 = vpop.f32.mrb[0].mxu0
  %914 = vmatprep.mubr.f32.mxu0 0.0
  %915 = vmatmul.mubr.f32.gmra.mrb[0].mxu0 %v134
  %v916 = vpop.f32.mrb[0].mxu0
  %v917 = vadd.f32 0.0, %v916
  %v918 = vpop.f32.mrb[0].mxu0
  %919 = vmatprep.mubr.f32.mxu0 0.0
  %920 = vmatmul.mubr.f32.gmra.mrb[0].mxu0 %v135
  %v921 = vpop.f32.mrb[0].mxu0
  %v922 = vadd.f32 0.0, %v921
  %v923 = vpop.f32.mrb[0].mxu0
  %924 = vmatprep.mubr.f32.mxu0 0.0
  %925 = vmatmul.mubr.f32.gmra.mrb[0].mxu0 %v136
  %v926 = vpop.f32.mrb[0].mxu0
  %v927 = vadd.f32 0.0, %v926
  %v928 = vpop.f32.mrb[0].mxu0
  %929 = vmatprep.mubr.f32.mxu0 0.0
  %930 = vmatmul.mubr.f32.gmra.mrb[0].mxu0 %v137
  %v931 = vpop.f32.mrb[0].mxu0
  %v932 = vadd.f32 0.0, %v931
  %v933 = vpop.f32.mrb[0].mxu0
  %934 = vmatprep.mubr.f32.mxu0 0.0
  %935 = vmatmul.mubr.f32.gmra.mrb[0].mxu0 %v138
  %v936 = vpop.f32.mrb[0].mxu0
  %v937 = vadd.f32 0.0, %v936
  %v938 = vpop.f32.mrb[0].mxu0
  %939 = vmatprep.mubr.f32.mxu0 0.0
  %940 = vmatmul.mubr.f32.gmra.mrb[0].mxu0 %v139
  %v941 = vpop.f32.mrb[0].mxu0
  %v942 = vadd.f32 0.0, %v941
  %v943 = vpop.f32.mrb[0].mxu0
  %944 = vmatprep.mubr.f32.mxu0 0.0
  %945 = vmatmul.mubr.f32.gmra.mrb[0].mxu0 %v140
  %v946 = vpop.f32.mrb[0].mxu0
  %v947 = vadd.f32 0.0, %v946
  %v948 = vpop.f32.mrb[0].mxu0
  %949 = vmatprep.mubr.f32.mxu0 0.0
  %950 = vmatmul.mubr.f32.gmra.mrb[0].mxu0 %v141
  %v951 = vpop.f32.mrb[0].mxu0
  %v952 = vadd.f32 0.0, %v951
  %v953 = vpop.f32.mrb[0].mxu0
  %954 = vmatprep.mubr.f32.mxu0 0.0
  %955 = vmatmul.mubr.f32.gmra.mrb[0].mxu0 %v142
  %v956 = vpop.f32.mrb[0].mxu0
  %v957 = vadd.f32 0.0, %v956
  %v958 = vpop.f32.mrb[0].mxu0
  %959 = vmatprep.mubr.f32.mxu0 0.0
  %960 = vmatmul.mubr.f32.gmra.mrb[0].mxu0 %v143
  %v961 = vpop.f32.mrb[0].mxu0
  %v962 = vadd.f32 0.0, %v961
  %v963 = vpop.f32.mrb[0].mxu0
  %964 = vmatprep.mubr.f32.mxu0 0.0
  %965 = vmatmul.mubr.f32.gmra.mrb[0].mxu0 %v144
  %v966 = vpop.f32.mrb[0].mxu0
  %v967 = vadd.f32 0.0, %v966
  %v968 = vpop.f32.mrb[0].mxu0
  %969 = vmatprep.mubr.f32.mxu0 0.0
  %970 = vmatmul.mubr.f32.gmra.mrb[0].mxu0 %v145
  %v971 = vpop.f32.mrb[0].mxu0
  %v972 = vadd.f32 0.0, %v971
  %v973 = vpop.f32.mrb[0].mxu0
  %974 = vmatprep.mubr.f32.mxu0 0.0
  %975 = vmatmul.mubr.f32.gmra.mrb[0].mxu0 %v146
  %v976 = vpop.f32.mrb[0].mxu0
  %v977 = vadd.f32 0.0, %v976
  %v978 = vpop.f32.mrb[0].mxu0
  %979 = vmatprep.mubr.f32.mxu0 0.0
  %980 = vmatmul.mubr.f32.gmra.mrb[0].mxu0 %v147
  %v981 = vpop.f32.mrb[0].mxu0
  %v982 = vadd.f32 0.0, %v981
  %v983 = vpop.f32.mrb[0].mxu0
  %984 = vmatprep.mubr.f32.mxu0 0.0
  %985 = vmatmul.mubr.f32.gmra.mrb[0].mxu0 %v148
  %v986 = vpop.f32.mrb[0].mxu0
  %v987 = vadd.f32 0.0, %v986
  %v988 = vpop.f32.mrb[0].mxu0
  %989 = vmatprep.mubr.f32.mxu0 0.0
  %990 = vmatmul.mubr.f32.gmra.mrb[0].mxu0 %v149
  %v991 = vpop.f32.mrb[0].mxu0
  %v992 = vadd.f32 0.0, %v991
  %v993 = vpop.f32.mrb[0].mxu0
  %994 = vmatprep.mubr.f32.mxu0 0.0
  %995 = vmatmul.mubr.f32.gmra.mrb[0].mxu0 %v150
  %v996 = vpop.f32.mrb[0].mxu0
  %v997 = vadd.f32 0.0, %v996
  %v998 = vpop.f32.mrb[0].mxu0
  %999 = vmatprep.mubr.f32.mxu0 0.0
  %1000 = vmatmul.mubr.f32.gmra.mrb[0].mxu0 %v151
  %v1001 = vpop.f32.mrb[0].mxu0
  %v1002 = vadd.f32 0.0, %v1001
  %v1003 = vpop.f32.mrb[0].mxu0
  %1004 = vmatprep.mubr.f32.mxu0 0.0
  %1005 = vmatmul.mubr.f32.gmra.mrb[0].mxu0 %v152
  %v1006 = vpop.f32.mrb[0].mxu0
  %v1007 = vadd.f32 0.0, %v1006
  %v1008 = vpop.f32.mrb[0].mxu0
  %1009 = vmatprep.mubr.f32.mxu0 0.0
  %1010 = vmatmul.mubr.f32.gmra.mrb[0].mxu0 %v153
  %v1011 = vpop.f32.mrb[0].mxu0
  %v1012 = vadd.f32 0.0, %v1011
  %v1013 = vpop.f32.mrb[0].mxu0
  %1014 = vmatprep.mubr.f32.mxu0 0.0
  %1015 = vmatmul.mubr.f32.gmra.mrb[0].mxu0 %v154
  %v1016 = vpop.f32.mrb[0].mxu0
  %v1017 = vadd.f32 0.0, %v1016
  %v1018 = vpop.f32.mrb[0].mxu0
  %1019 = vmatprep.mubr.f32.mxu0 0.0
  %1020 = vmatmul.mubr.f32.gmra.mrb[0].mxu0 %v155
  %v1021 = vpop.f32.mrb[0].mxu0
  %v1022 = vadd.f32 0.0, %v1021
  %v1023 = vpop.f32.mrb[0].mxu0
  %1024 = vmatprep.mubr.f32.mxu0 0.0
  %1025 = vmatmul.mubr.f32.gmra.mrb[0].mxu0 %v156
  %v1026 = vpop.f32.mrb[0].mxu0
  %v1027 = vadd.f32 0.0, %v1026
  %v1028 = vpop.f32.mrb[0].mxu0
  %1029 = vmatprep.mubr.f32.mxu0 0.0
  %1030 = vmatmul.mubr.f32.gmra.mrb[0].mxu0 %v157
  %v1031 = vpop.f32.mrb[0].mxu0
  %v1032 = vadd.f32 0.0, %v1031
  %v1033 = vpop.f32.mrb[0].mxu0
  %1034 = vmatprep.mubr.f32.mxu0 0.0
  %1035 = vmatmul.mubr.f32.gmra.mrb[0].mxu0 %v158
  %v1036 = vpop.f32.mrb[0].mxu0
  %v1037 = vadd.f32 0.0, %v1036
  %v1038 = vpop.f32.mrb[0].mxu0
  %1039 = vmatprep.mubr.f32.mxu0 0.0
  %1040 = vmatmul.mubr.f32.gmra.mrb[0].mxu0 %v159
  %v1041 = vpop.f32.mrb[0].mxu0
  %v1042 = vadd.f32 0.0, %v1041
  %v1043 = vpop.f32.mrb[0].mxu0
  %1044 = vmatprep.mubr.f32.mxu0 0.0
  %1045 = vmatmul.mubr.f32.gmra.mrb[0].mxu0 %v160
  %v1046 = vpop.f32.mrb[0].mxu0
  %v1047 = vadd.f32 0.0, %v1046
  %v1048 = vpop.f32.mrb[0].mxu0
  %1049 = vmatprep.mubr.f32.mxu0 0.0
  %1050 = vmatmul.mubr.f32.gmra.mrb[0].mxu0 %v161
  %v1051 = vpop.f32.mrb[0].mxu0
  %v1052 = vadd.f32 0.0, %v1051
  %v1053 = vpop.f32.mrb[0].mxu0
  %1054 = vmatprep.mubr.f32.mxu0 0.0
  %1055 = vmatmul.mubr.f32.gmra.mrb[0].mxu0 %v162
  %v1056 = vpop.f32.mrb[0].mxu0
  %v1057 = vadd.f32 0.0, %v1056
  %v1058 = vpop.f32.mrb[0].mxu0
  %1059 = vmatprep.mubr.f32.mxu0 0.0
  %1060 = vmatmul.mubr.f32.gmra.mrb[0].mxu0 %v163
  %v1061 = vpop.f32.mrb[0].mxu0
  %v1062 = vadd.f32 0.0, %v1061
  %v1063 = vpop.f32.mrb[0].mxu0
  %1064 = vmatprep.mubr.f32.mxu0 0.0
  %1065 = vmatmul.mubr.f32.gmra.mrb[0].mxu0 %v164
  %v1066 = vpop.f32.mrb[0].mxu0
  %v1067 = vadd.f32 0.0, %v1066
  %v1068 = vpop.f32.mrb[0].mxu0
  %1069 = vmatprep.mubr.f32.mxu0 0.0
  %1070 = vmatmul.mubr.f32.gmra.mrb[0].mxu0 %v165
  %v1071 = vpop.f32.mrb[0].mxu0
  %v1072 = vadd.f32 0.0, %v1071
  %v1073 = vpop.f32.mrb[0].mxu0
  %1074 = vmatprep.mubr.f32.mxu0 0.0
  %1075 = vmatmul.mubr.f32.gmra.mrb[0].mxu0 %v166
  %v1076 = vpop.f32.mrb[0].mxu0
  %v1077 = vadd.f32 0.0, %v1076
  %v1078 = vpop.f32.mrb[0].mxu0
  %1079 = vmatprep.mubr.f32.mxu0 0.0
  %1080 = vmatmul.mubr.f32.gmra.mrb[0].mxu0 %v167
  %v1081 = vpop.f32.mrb[0].mxu0
  %v1082 = vadd.f32 0.0, %v1081
  %v1083 = vpop.f32.mrb[0].mxu0
  %1084 = vmatprep.mubr.f32.mxu0 0.0
  %1085 = vmatmul.mubr.f32.gmra.mrb[0].mxu0 %v168
  %v1086 = vpop.f32.mrb[0].mxu0
  %v1087 = vadd.f32 0.0, %v1086
  %v1088 = vpop.f32.mrb[0].mxu0
  %1089 = vmatprep.mubr.f32.mxu0 0.0
  %1090 = vmatmul.mubr.f32.gmra.mrb[0].mxu0 %v169
  %v1091 = vpop.f32.mrb[0].mxu0
  %v1092 = vadd.f32 0.0, %v1091
  %v1093 = vpop.f32.mrb[0].mxu0
  %1094 = vmatprep.mubr.f32.mxu0 0.0
  %1095 = vmatmul.mubr.f32.gmra.mrb[0].mxu0 %v170
  %v1096 = vpop.f32.mrb[0].mxu0
  %v1097 = vadd.f32 0.0, %v1096
  %v1098 = vpop.f32.mrb[0].mxu0
  %1099 = vmatprep.mubr.f32.mxu0 0.0
  %1100 = vmatmul.mubr.f32.gmra.mrb[0].mxu0 %v171
  %v1101 = vpop.f32.mrb[0].mxu0
  %v1102 = vadd.f32 0.0, %v1101
  %v1103 = vpop.f32.mrb[0].mxu0
  %1104 = vmatprep.mubr.f32.mxu0 0.0
  %1105 = vmatmul.mubr.f32.gmra.mrb[0].mxu0 %v172
  %v1106 = vpop.f32.mrb[0].mxu0
  %v1107 = vadd.f32 0.0, %v1106
  %v1108 = vpop.f32.mrb[0].mxu0
  %1109 = vmatprep.mubr.f32.mxu0 0.0
  %1110 = vmatmul.mubr.f32.gmra.mrb[0].mxu0 %v173
  %v1111 = vpop.f32.mrb[0].mxu0
  %v1112 = vadd.f32 0.0, %v1111
  %v1113 = vpop.f32.mrb[0].mxu0
  %1114 = vmatprep.mubr.f32.mxu0 0.0
  %1115 = vmatmul.mubr.f32.gmra.mrb[0].mxu0 %v174
  %v1116 = vpop.f32.mrb[0].mxu0
  %v1117 = vadd.f32 0.0, %v1116
  %v1118 = vpop.f32.mrb[0].mxu0
  %1119 = vmatprep.mubr.f32.mxu0 0.0
  %1120 = vmatmul.mubr.f32.gmra.mrb[0].mxu0 %v175
  %v1121 = vpop.f32.mrb[0].mxu0
  %v1122 = vadd.f32 0.0, %v1121
  %v1123 = vpop.f32.mrb[0].mxu0
  %1124 = vmatprep.mubr.f32.mxu0 0.0
  %1125 = vmatmul.mubr.f32.gmra.mrb[0].mxu0 %v176
  %v1126 = vpop.f32.mrb[0].mxu0
  %v1127 = vadd.f32 0.0, %v1126
  %v1128 = vpop.f32.mrb[0].mxu0
  %1129 = vmatprep.mubr.f32.mxu0 0.0
  %1130 = vmatmul.mubr.f32.gmra.mrb[0].mxu0 %v177
  %v1131 = vpop.f32.mrb[0].mxu0
  %v1132 = vadd.f32 0.0, %v1131
  %v1133 = vpop.f32.mrb[0].mxu0
  %1134 = vmatprep.mubr.f32.mxu0 0.0
  %1135 = vmatmul.mubr.f32.gmra.mrb[0].mxu0 %v178
  %v1136 = vpop.f32.mrb[0].mxu0
  %v1137 = vadd.f32 0.0, %v1136
  %v1138 = vpop.f32.mrb[0].mxu0
  %1139 = vmatprep.mubr.f32.mxu0 0.0
  %1140 = vmatmul.mubr.f32.gmra.mrb[0].mxu0 %v179
  %v1141 = vpop.f32.mrb[0].mxu0
  %v1142 = vadd.f32 0.0, %v1141
  %v1143 = vpop.f32.mrb[0].mxu0
  %1144 = vmatprep.mubr.f32.mxu0 0.0
  %1145 = vmatmul.mubr.f32.gmra.mrb[0].mxu0 %v180
  %v1146 = vpop.f32.mrb[0].mxu0
  %v1147 = vadd.f32 0.0, %v1146
  %v1148 = vpop.f32.mrb[0].mxu0
  %1149 = vmatprep.mubr.f32.mxu0 0.0
  %1150 = vmatmul.mubr.f32.gmra.mrb[0].mxu0 %v181
  %v1151 = vpop.f32.mrb[0].mxu0
  %v1152 = vadd.f32 0.0, %v1151
  %v1153 = vpop.f32.mrb[0].mxu0
  %1154 = vmatprep.mubr.f32.mxu0 0.0
  %1155 = vmatmul.mubr.f32.gmra.mrb[0].mxu0 %v182
  %v1156 = vpop.f32.mrb[0].mxu0
  %v1157 = vadd.f32 0.0, %v1156
  %v1158 = vpop.f32.mrb[0].mxu0
  %1159 = vmatprep.mubr.f32.mxu0 0.0
  %1160 = vmatmul.mubr.f32.gmra.mrb[0].mxu0 %v183
  %v1161 = vpop.f32.mrb[0].mxu0
  %v1162 = vadd.f32 0.0, %v1161
  %v1163 = vpop.f32.mrb[0].mxu0
  %1164 = vmatprep.mubr.f32.mxu0 0.0
  %1165 = vmatmul.mubr.f32.gmra.mrb[0].mxu0 %v184
  %v1166 = vpop.f32.mrb[0].mxu0
  %v1167 = vadd.f32 0.0, %v1166
  %v1168 = vpop.f32.mrb[0].mxu0
  %1169 = vmatprep.mubr.f32.mxu0 0.0
  %1170 = vmatmul.mubr.f32.gmra.mrb[0].mxu0 %v185
  %v1171 = vpop.f32.mrb[0].mxu0
  %v1172 = vadd.f32 0.0, %v1171
  %v1173 = vpop.f32.mrb[0].mxu0
  %1174 = vmatprep.mubr.f32.mxu0 0.0
  %1175 = vmatmul.mubr.f32.gmra.mrb[0].mxu0 %v186
  %v1176 = vpop.f32.mrb[0].mxu0
  %v1177 = vadd.f32 0.0, %v1176
  %v1178 = vpop.f32.mrb[0].mxu0
  %1179 = vmatprep.mubr.f32.mxu0 0.0
  %1180 = vmatmul.mubr.f32.gmra.mrb[0].mxu0 %v187
  %v1181 = vpop.f32.mrb[0].mxu0
  %v1182 = vadd.f32 0.0, %v1181
  %v1183 = vpop.f32.mrb[0].mxu0
  %1184 = vmatprep.mubr.f32.mxu0 0.0
  %1185 = vmatmul.mubr.f32.gmra.mrb[0].mxu0 %v188
  %v1186 = vpop.f32.mrb[0].mxu0
  %v1187 = vadd.f32 0.0, %v1186
  %v1188 = vpop.f32.mrb[0].mxu0
  %1189 = vmatprep.mubr.f32.mxu0 0.0
  %1190 = vmatmul.mubr.f32.gmra.mrb[0].mxu0 %v189
  %v1191 = vpop.f32.mrb[0].mxu0
  %v1192 = vadd.f32 0.0, %v1191
  %v1193 = vpop.f32.mrb[0].mxu0
  %1194 = vmatprep.mubr.f32.mxu0 0.0
  %1195 = vmatmul.mubr.f32.gmra.mrb[0].mxu0 %v190
  %v1196 = vpop.f32.mrb[0].mxu0
  %v1197 = vadd.f32 0.0, %v1196
  %v1198 = vpop.f32.mrb[0].mxu0
  %1199 = vmatprep.mubr.f32.mxu0 0.0
  %1200 = vmatmul.mubr.f32.gmra.mrb[0].mxu0 %v191
  %v1201 = vpop.f32.mrb[0].mxu0
  %v1202 = vadd.f32 0.0, %v1201
  %v1203 = vpop.f32.mrb[0].mxu0
  %1204 = vmatprep.mubr.f32.mxu0 0.0
  %1205 = vmatmul.mubr.f32.gmra.mrb[0].mxu0 %v192
  %v1206 = vpop.f32.mrb[0].mxu0
  %v1207 = vadd.f32 0.0, %v1206
  %v1208 = vpop.f32.mrb[0].mxu0
  %1209 = vmatprep.mubr.f32.mxu0 0.0
  %1210 = vmatmul.mubr.f32.gmra.mrb[0].mxu0 %v193
  %v1211 = vpop.f32.mrb[0].mxu0
  %v1212 = vadd.f32 0.0, %v1211
  %v1213 = vpop.f32.mrb[0].mxu0
  %1214 = vmatprep.mubr.f32.mxu0 0.0
  %1215 = vmatmul.mubr.f32.gmra.mrb[0].mxu0 %v194
  %v1216 = vpop.f32.mrb[0].mxu0
  %v1217 = vadd.f32 0.0, %v1216
  %v1218 = vpop.f32.mrb[0].mxu0
  %1219 = vmatprep.mubr.f32.mxu0 0.0
  %1220 = vmatmul.mubr.f32.gmra.mrb[0].mxu0 %v195
  %v1221 = vpop.f32.mrb[0].mxu0
  %v1222 = vadd.f32 0.0, %v1221
  %v1223 = vpop.f32.mrb[0].mxu0
  %1224 = vmatprep.mubr.f32.mxu0 0.0
  %1225 = vmatmul.mubr.f32.gmra.mrb[0].mxu0 %v196
  %v1226 = vpop.f32.mrb[0].mxu0
  %v1227 = vadd.f32 0.0, %v1226
  %v1228 = vpop.f32.mrb[0].mxu0
  %1229 = vmatprep.mubr.f32.mxu0 0.0
  %1230 = vmatmul.mubr.f32.gmra.mrb[0].mxu0 %v197
  %v1231 = vpop.f32.mrb[0].mxu0
  %v1232 = vadd.f32 0.0, %v1231
  %v1233 = vpop.f32.mrb[0].mxu0
  %1234 = vmatprep.mubr.f32.mxu0 0.0
  %1235 = vmatmul.mubr.f32.gmra.mrb[0].mxu0 %v198
  %v1236 = vpop.f32.mrb[0].mxu0
  %v1237 = vadd.f32 0.0, %v1236
  %v1238 = vpop.f32.mrb[0].mxu0
  %1239 = vmatprep.mubr.f32.mxu0 0.0
  %1240 = vmatmul.mubr.f32.gmra.mrb[0].mxu0 %v199
  %v1241 = vpop.f32.mrb[0].mxu0
  %v1242 = vadd.f32 0.0, %v1241
  %v1243 = vpop.f32.mrb[0].mxu0
  %1244 = vmatprep.mubr.f32.mxu0 0.0
  %1245 = vmatmul.mubr.f32.gmra.mrb[0].mxu0 %v200
  %v1246 = vpop.f32.mrb[0].mxu0
  %v1247 = vadd.f32 0.0, %v1246
  %v1248 = vpop.f32.mrb[0].mxu0
  %1249 = vmatprep.mubr.f32.mxu0 0.0
  %1250 = vmatmul.mubr.f32.gmra.mrb[0].mxu0 %v201
  %v1251 = vpop.f32.mrb[0].mxu0
  %v1252 = vadd.f32 0.0, %v1251
  %v1253 = vpop.f32.mrb[0].mxu0
  %1254 = vmatprep.mubr.f32.mxu0 0.0
  %1255 = vmatmul.mubr.f32.gmra.mrb[0].mxu0 %v202
  %v1256 = vpop.f32.mrb[0].mxu0
  %v1257 = vadd.f32 0.0, %v1256
  %v1258 = vpop.f32.mrb[0].mxu0
  %1259 = vmatprep.mubr.f32.mxu0 0.0
  %1260 = vmatmul.mubr.f32.gmra.mrb[0].mxu0 %v203
  %v1261 = vpop.f32.mrb[0].mxu0
  %v1262 = vadd.f32 0.0, %v1261
  %v1263 = vpop.f32.mrb[0].mxu0
  %1264 = vmatprep.mubr.f32.mxu0 0.0
  %1265 = vmatmul.mubr.f32.gmra.mrb[0].mxu0 %v204
  %v1266 = vpop.f32.mrb[0].mxu0
  %v1267 = vadd.f32 0.0, %v1266
  %v1268 = vpop.f32.mrb[0].mxu0
  %1269 = vmatprep.mubr.f32.mxu0 0.0
  %1270 = vmatmul.mubr.f32.gmra.mrb[0].mxu0 %v205
  %v1271 = vpop.f32.mrb[0].mxu0
  %v1272 = vadd.f32 0.0, %v1271
  %v1273 = vpop.f32.mrb[0].mxu0
  %1274 = vmatprep.mubr.f32.mxu0 0.0
  %1275 = vmatmul.mubr.f32.gmra.mrb[0].mxu0 %v206
  %v1276 = vpop.f32.mrb[0].mxu0
  %v1277 = vadd.f32 0.0, %v1276
  %v1278 = vpop.f32.mrb[0].mxu0
  %1279 = vmatprep.mubr.f32.mxu0 0.0
  %1280 = vmatmul.mubr.f32.gmra.mrb[0].mxu0 %v207
  %v1281 = vpop.f32.mrb[0].mxu0
  %v1282 = vadd.f32 0.0, %v1281
  %v1283 = vpop.f32.mrb[0].mxu0
  %1284 = vmatprep.mubr.f32.mxu0 0.0
  %1285 = vmatmul.mubr.f32.gmra.mrb[0].mxu0 %v208
  %v1286 = vpop.f32.mrb[0].mxu0
  %v1287 = vadd.f32 0.0, %v1286
  %v1288 = vpop.f32.mrb[0].mxu0
  %1289 = vmatprep.mubr.f32.mxu0 0.0
  %1290 = vmatmul.mubr.f32.gmra.mrb[0].mxu0 %v209
  %v1291 = vpop.f32.mrb[0].mxu0
  %v1292 = vadd.f32 0.0, %v1291
  %v1293 = vpop.f32.mrb[0].mxu0
  %1294 = vmatprep.mubr.f32.mxu0 0.0
  %1295 = vmatmul.mubr.f32.gmra.mrb[0].mxu0 %v210
  %v1296 = vpop.f32.mrb[0].mxu0
  %v1297 = vadd.f32 0.0, %v1296
  %v1298 = vpop.f32.mrb[0].mxu0
  %1299 = vmatprep.mubr.f32.mxu0 0.0
  %1300 = vmatmul.mubr.f32.gmra.mrb[0].mxu0 %v211
  %v1301 = vpop.f32.mrb[0].mxu0
  %v1302 = vadd.f32 0.0, %v1301
  %v1303 = vpop.f32.mrb[0].mxu0
  %1304 = vmatprep.mubr.f32.mxu0 0.0
  %1305 = vmatmul.mubr.f32.gmra.mrb[0].mxu0 %v212
  %v1306 = vpop.f32.mrb[0].mxu0
  %v1307 = vadd.f32 0.0, %v1306
  %v1308 = vpop.f32.mrb[0].mxu0
  %1309 = vmatprep.mubr.f32.mxu0 0.0
  %1310 = vmatmul.mubr.f32.gmra.mrb[0].mxu0 %v213
  %v1311 = vpop.f32.mrb[0].mxu0
  %v1312 = vadd.f32 0.0, %v1311
  %v1313 = vpop.f32.mrb[0].mxu0
  %1314 = vmatprep.mubr.f32.mxu0 0.0
  %1315 = vmatmul.mubr.f32.gmra.mrb[0].mxu0 %v214
  %v1316 = vpop.f32.mrb[0].mxu0
  %v1317 = vadd.f32 0.0, %v1316
  %v1318 = vpop.f32.mrb[0].mxu0
  %1319 = vmatprep.mubr.f32.mxu0 0.0
  %1320 = vmatmul.mubr.f32.gmra.mrb[0].mxu0 %v215
  %v1321 = vpop.f32.mrb[0].mxu0
  %v1322 = vadd.f32 0.0, %v1321
  %v1323 = vpop.f32.mrb[0].mxu0
  %1324 = vmatprep.mubr.f32.mxu0 0.0
  %1325 = vmatmul.mubr.f32.gmra.mrb[0].mxu0 %v216
  %v1326 = vpop.f32.mrb[0].mxu0
  %v1327 = vadd.f32 0.0, %v1326
  %v1328 = vpop.f32.mrb[0].mxu0
  %1329 = vmatprep.mubr.f32.mxu0 0.0
  %1330 = vmatmul.mubr.f32.gmra.mrb[0].mxu0 %v217
  %v1331 = vpop.f32.mrb[0].mxu0
  %v1332 = vadd.f32 0.0, %v1331
  %v1333 = vpop.f32.mrb[0].mxu0
  %1334 = vmatprep.mubr.f32.mxu0 0.0
  %1335 = vmatmul.mubr.f32.gmra.mrb[0].mxu0 %v218
  %v1336 = vpop.f32.mrb[0].mxu0
  %v1337 = vadd.f32 0.0, %v1336
  %v1338 = vpop.f32.mrb[0].mxu0
  %1339 = vmatprep.mubr.f32.mxu0 0.0
  %1340 = vmatmul.mubr.f32.gmra.mrb[0].mxu0 %v219
  %v1341 = vpop.f32.mrb[0].mxu0
  %v1342 = vadd.f32 0.0, %v1341
  %v1343 = vpop.f32.mrb[0].mxu0
  %1344 = vmatprep.mubr.f32.mxu0 0.0
  %1345 = vmatmul.mubr.f32.gmra.mrb[0].mxu0 %v220
  %v1346 = vpop.f32.mrb[0].mxu0
  %v1347 = vadd.f32 0.0, %v1346
  %v1348 = vpop.f32.mrb[0].mxu0
  %1349 = vmatprep.mubr.f32.mxu0 0.0
  %1350 = vmatmul.mubr.f32.gmra.mrb[0].mxu0 %v221
  %v1351 = vpop.f32.mrb[0].mxu0
  %v1352 = vadd.f32 0.0, %v1351
  %v1353 = vpop.f32.mrb[0].mxu0
  %1354 = vmatprep.mubr.f32.mxu0 0.0
  %1355 = vmatmul.mubr.f32.gmra.mrb[0].mxu0 %v222
  %v1356 = vpop.f32.mrb[0].mxu0
  %v1357 = vadd.f32 0.0, %v1356
  %v1358 = vpop.f32.mrb[0].mxu0
  %1359 = vmatprep.mubr.f32.mxu0 0.0
  %1360 = vmatmul.mubr.f32.gmra.mrb[0].mxu0 %v223
  %v1361 = vpop.f32.mrb[0].mxu0
  %v1362 = vadd.f32 0.0, %v1361
  %v1363 = vpop.f32.mrb[0].mxu0
  %1364 = vmatprep.mubr.f32.mxu0 0.0
  %1365 = vmatmul.mubr.f32.gmra.mrb[0].mxu0 %v224
  %v1366 = vpop.f32.mrb[0].mxu0
  %v1367 = vadd.f32 0.0, %v1366
  %v1368 = vpop.f32.mrb[0].mxu0
  %1369 = vmatprep.mubr.f32.mxu0 0.0
  %1370 = vmatmul.mubr.f32.gmra.mrb[0].mxu0 %v225
  %v1371 = vpop.f32.mrb[0].mxu0
  %v1372 = vadd.f32 0.0, %v1371
  %v1373 = vpop.f32.mrb[0].mxu0
  %1374 = vmatprep.mubr.f32.mxu0 0.0
  %1375 = vmatmul.mubr.f32.gmra.mrb[0].mxu0 %v226
  %v1376 = vpop.f32.mrb[0].mxu0
  %v1377 = vadd.f32 0.0, %v1376
  %v1378 = vpop.f32.mrb[0].mxu0
  %1379 = vmatprep.mubr.f32.mxu0 0.0
  %1380 = vmatmul.mubr.f32.gmra.mrb[0].mxu0 %v227
  %v1381 = vpop.f32.mrb[0].mxu0
  %v1382 = vadd.f32 0.0, %v1381
  %v1383 = vpop.f32.mrb[0].mxu0
  %1384 = vmatprep.mubr.f32.mxu0 0.0
  %1385 = vmatmul.mubr.f32.gmra.mrb[0].mxu0 %v228
  %v1386 = vpop.f32.mrb[0].mxu0
  %v1387 = vadd.f32 0.0, %v1386
  %v1388 = vpop.f32.mrb[0].mxu0
  %1389 = vmatprep.mubr.f32.mxu0 0.0
  %1390 = vmatmul.mubr.f32.gmra.mrb[0].mxu0 %v229
  %v1391 = vpop.f32.mrb[0].mxu0
  %v1392 = vadd.f32 0.0, %v1391
  %v1393 = vpop.f32.mrb[0].mxu0
  %1394 = vmatprep.mubr.f32.mxu0 0.0
  %1395 = vmatmul.mubr.f32.gmra.mrb[0].mxu0 %v230
  %v1396 = vpop.f32.mrb[0].mxu0
  %v1397 = vadd.f32 0.0, %v1396
  %v1398 = vpop.f32.mrb[0].mxu0
  %1399 = vmatprep.mubr.f32.mxu0 0.0
  %1400 = vmatmul.mubr.f32.gmra.mrb[0].mxu0 %v231
  %v1401 = vpop.f32.mrb[0].mxu0
  %v1402 = vadd.f32 0.0, %v1401
  %v1403 = vpop.f32.mrb[0].mxu0
  %1404 = vmatprep.mubr.f32.mxu0 0.0
  %1405 = vmatmul.mubr.f32.gmra.mrb[0].mxu0 %v232
  %v1406 = vpop.f32.mrb[0].mxu0
  %v1407 = vadd.f32 0.0, %v1406
  %v1408 = vpop.f32.mrb[0].mxu0
  %1409 = vmatprep.mubr.f32.mxu0 0.0
  %1410 = vmatmul.mubr.f32.gmra.mrb[0].mxu0 %v233
  %v1411 = vpop.f32.mrb[0].mxu0
  %v1412 = vadd.f32 0.0, %v1411
  %v1413 = vpop.f32.mrb[0].mxu0
  %1414 = vmatprep.mubr.f32.mxu0 0.0
  %1415 = vmatmul.mubr.f32.gmra.mrb[0].mxu0 %v234
  %v1416 = vpop.f32.mrb[0].mxu0
  %v1417 = vadd.f32 0.0, %v1416
  %v1418 = vpop.f32.mrb[0].mxu0
  %1419 = vmatprep.mubr.f32.mxu0 0.0
  %1420 = vmatmul.mubr.f32.gmra.mrb[0].mxu0 %v235
  %v1421 = vpop.f32.mrb[0].mxu0
  %v1422 = vadd.f32 0.0, %v1421
  %v1423 = vpop.f32.mrb[0].mxu0
  %1424 = vmatprep.mubr.f32.mxu0 0.0
  %1425 = vmatmul.mubr.f32.gmra.mrb[0].mxu0 %v236
  %v1426 = vpop.f32.mrb[0].mxu0
  %v1427 = vadd.f32 0.0, %v1426
  %v1428 = vpop.f32.mrb[0].mxu0
  %1429 = vmatprep.mubr.f32.mxu0 0.0
  %1430 = vmatmul.mubr.f32.gmra.mrb[0].mxu0 %v237
  %v1431 = vpop.f32.mrb[0].mxu0
  %v1432 = vadd.f32 0.0, %v1431
  %v1433 = vpop.f32.mrb[0].mxu0
  %1434 = vmatprep.mubr.f32.mxu0 0.0
  %1435 = vmatmul.mubr.f32.gmra.mrb[0].mxu0 %v238
  %v1436 = vpop.f32.mrb[0].mxu0
  %v1437 = vadd.f32 0.0, %v1436
  %v1438 = vpop.f32.mrb[0].mxu0
  %1439 = vmatprep.mubr.f32.mxu0 0.0
  %1440 = vmatmul.mubr.f32.gmra.mrb[0].mxu0 %v239
  %v1441 = vpop.f32.mrb[0].mxu0
  %v1442 = vadd.f32 0.0, %v1441
  %v1443 = vpop.f32.mrb[0].mxu0
  %1444 = vmatprep.mubr.f32.mxu0 0.0
  %1445 = vmatmul.mubr.f32.gmra.mrb[0].mxu0 %v240
  %v1446 = vpop.f32.mrb[0].mxu0
  %v1447 = vadd.f32 0.0, %v1446
  %v1448 = vpop.f32.mrb[0].mxu0
  %1449 = vmatprep.mubr.f32.mxu0 0.0
  %1450 = vmatmul.mubr.f32.gmra.mrb[0].mxu0 %v241
  %v1451 = vpop.f32.mrb[0].mxu0
  %v1452 = vadd.f32 0.0, %v1451
  %v1453 = vpop.f32.mrb[0].mxu0
  %1454 = vmatprep.mubr.f32.mxu0 0.0
  %1455 = vmatmul.mubr.f32.gmra.mrb[0].mxu0 %v242
  %v1456 = vpop.f32.mrb[0].mxu0
  %v1457 = vadd.f32 0.0, %v1456
  %v1458 = vpop.f32.mrb[0].mxu0
  %1459 = vmatprep.mubr.f32.mxu0 0.0
  %1460 = vmatmul.mubr.f32.gmra.mrb[0].mxu0 %v243
  %v1461 = vpop.f32.mrb[0].mxu0
  %v1462 = vadd.f32 0.0, %v1461
  %v1463 = vpop.f32.mrb[0].mxu0
  %1464 = vmatprep.mubr.f32.mxu0 0.0
  %1465 = vmatmul.mubr.f32.gmra.mrb[0].mxu0 %v244
  %v1466 = vpop.f32.mrb[0].mxu0
  %v1467 = vadd.f32 0.0, %v1466
  %v1468 = vpop.f32.mrb[0].mxu0
  %1469 = vmatprep.mubr.f32.mxu0 0.0
  %1470 = vmatmul.mubr.f32.gmra.mrb[0].mxu0 %v245
  %v1471 = vpop.f32.mrb[0].mxu0
  %v1472 = vadd.f32 0.0, %v1471
  %v1473 = vpop.f32.mrb[0].mxu0
  %1474 = vmatprep.mubr.f32.mxu0 0.0
  %1475 = vmatmul.mubr.f32.gmra.mrb[0].mxu0 %v246
  %v1476 = vpop.f32.mrb[0].mxu0
  %v1477 = vadd.f32 0.0, %v1476
  %v1478 = vpop.f32.mrb[0].mxu0
  %1479 = vmatprep.mubr.f32.mxu0 0.0
  %1480 = vmatmul.mubr.f32.gmra.mrb[0].mxu0 %v247
  %v1481 = vpop.f32.mrb[0].mxu0
  %v1482 = vadd.f32 0.0, %v1481
  %v1483 = vpop.f32.mrb[0].mxu0
  %1484 = vmatprep.mubr.f32.mxu0 0.0
  %1485 = vmatmul.mubr.f32.gmra.mrb[0].mxu0 %v248
  %v1486 = vpop.f32.mrb[0].mxu0
  %v1487 = vadd.f32 0.0, %v1486
  %v1488 = vpop.f32.mrb[0].mxu0
  %1489 = vmatprep.mubr.f32.mxu0 0.0
  %1490 = vmatmul.mubr.f32.gmra.mrb[0].mxu0 %v249
  %v1491 = vpop.f32.mrb[0].mxu0
  %v1492 = vadd.f32 0.0, %v1491
  %v1493 = vpop.f32.mrb[0].mxu0
  %1494 = vmatprep.mubr.f32.mxu0 0.0
  %1495 = vmatmul.mubr.f32.gmra.mrb[0].mxu0 %v250
  %v1496 = vpop.f32.mrb[0].mxu0
  %v1497 = vadd.f32 0.0, %v1496
  %v1498 = vpop.f32.mrb[0].mxu0
  %1499 = vmatprep.mubr.f32.mxu0 0.0
  %1500 = vmatmul.mubr.f32.gmra.mrb[0].mxu0 %v251
  %v1501 = vpop.f32.mrb[0].mxu0
  %v1502 = vadd.f32 0.0, %v1501
  %v1503 = vpop.f32.mrb[0].mxu0
  %1504 = vmatprep.mubr.f32.mxu0 0.0
  %1505 = vmatmul.mubr.f32.gmra.mrb[0].mxu0 %v252
  %v1506 = vpop.f32.mrb[0].mxu0
  %v1507 = vadd.f32 0.0, %v1506
  %v1508 = vpop.f32.mrb[0].mxu0
  %1509 = vmatprep.mubr.f32.mxu0 0.0
  %1510 = vmatmul.mubr.f32.gmra.mrb[0].mxu0 %v253
  %v1511 = vpop.f32.mrb[0].mxu0
  %v1512 = vadd.f32 0.0, %v1511
  %v1513 = vpop.f32.mrb[0].mxu0
  %1514 = vmatprep.mubr.f32.mxu0 0.0
  %1515 = vmatmul.mubr.f32.gmra.mrb[0].mxu0 %v254
  %v1516 = vpop.f32.mrb[0].mxu0
  %v1517 = vadd.f32 0.0, %v1516
  %v1518 = vpop.f32.mrb[0].mxu0
  %1519 = vmatprep.mubr.f32.mxu0 0.0
  %1520 = vmatmul.mubr.f32.gmra.mrb[0].mxu0 %v255
  %v1521 = vpop.f32.mrb[0].mxu0
  %v1522 = vadd.f32 0.0, %v1521
  %v1523 = vpop.f32.mrb[0].mxu0
  %1524 = vmatprep.mubr.f32.mxu0 0.0
  %1525 = vmatmul.mubr.f32.gmra.mrb[0].mxu0 %v256
  %v1526 = vpop.f32.mrb[0].mxu0
  %v1527 = vadd.f32 0.0, %v1526
  %v1528 = vpop.f32.mrb[0].mxu0
  %1529 = vmatprep.mubr.f32.mxu0 0.0
  %1530 = vmatmul.mubr.f32.gmra.mrb[0].mxu0 %v257
  %v1531 = vpop.f32.mrb[0].mxu0
  %v1532 = vadd.f32 0.0, %v1531
  %v1533 = vpop.f32.mrb[0].mxu0
  %1534 = vmatprep.mubr.f32.mxu0 0.0
  %1535 = vmatmul.mubr.f32.gmra.mrb[0].mxu0 %v258
  %v1536 = vpop.f32.mrb[0].mxu0
  %v1537 = vadd.f32 0.0, %v1536
  %v1538 = vpop.f32.mrb[0].mxu0
  %1539 = vmatprep.mubr.f32.mxu0 0.0
  %1540 = vmatmul.mubr.f32.gmra.mrb[0].mxu0 %v259
  %v1541 = vpop.f32.mrb[0].mxu0
  %v1542 = vadd.f32 0.0, %v1541
  %v1543 = vpop.f32.mrb[0].mxu0
  %1544 = vmatprep.mubr.f32.mxu0 0.0
  %1545 = vmatmul.mubr.f32.gmra.mrb[0].mxu0 %v260
  %v1546 = vpop.f32.mrb[0].mxu0
  %v1547 = vadd.f32 0.0, %v1546
  %v1548 = vpop.f32.mrb[0].mxu0
  %1549 = vmatprep.mubr.f32.mxu0 0.0
  %1550 = vmatmul.mubr.f32.gmra.mrb[0].mxu0 %v261
  %v1551 = vpop.f32.mrb[0].mxu0
  %v1552 = vadd.f32 0.0, %v1551
  %v1553 = vpop.f32.mrb[0].mxu0
  %1554 = vmatprep.mubr.f32.mxu0 0.0
  %1555 = vmatmul.mubr.f32.gmra.mrb[0].mxu0 %v262
  %v1556 = vpop.f32.mrb[0].mxu0
  %v1557 = vadd.f32 0.0, %v1556
  %v1558 = vpop.f32.mrb[0].mxu0
  %1559 = vmatprep.mubr.f32.mxu0 0.0
  %1560 = vmatmul.mubr.f32.gmra.mrb[0].mxu0 %v263
  %v1561 = vpop.f32.mrb[0].mxu0
  %v1562 = vadd.f32 0.0, %v1561
  %v1563 = vpop.f32.mrb[0].mxu0
  %1564 = vmatprep.mubr.f32.mxu0 0.0
  %1565 = vmatmul.mubr.f32.gmra.mrb[0].mxu0 %v264
  %v1566 = vpop.f32.mrb[0].mxu0
  %v1567 = vadd.f32 0.0, %v1566
  %v1568 = vpop.f32.mrb[0].mxu0
  %1569 = vmatprep.mubr.f32.mxu0 0.0
  %1570 = vmatmul.mubr.f32.gmra.mrb[0].mxu0 %v265
  %v1571 = vpop.f32.mrb[0].mxu0
  %v1572 = vadd.f32 0.0, %v1571
  %v1573 = vpop.f32.mrb[0].mxu0
  %1574 = vmatprep.mubr.f32.mxu0 0.0
  %1575 = vmatmul.mubr.f32.gmra.mrb[0].mxu0 %v266
  %v1576 = vpop.f32.mrb[0].mxu0
  %v1577 = vadd.f32 0.0, %v1576
  %v1578 = vpop.f32.mrb[0].mxu0
  %1579 = vmatprep.mubr.f32.mxu0 0.0
  %1580 = vmatmul.mubr.f32.gmra.mrb[0].mxu0 %v267
  %v1581 = vpop.f32.mrb[0].mxu0
  %v1582 = vadd.f32 0.0, %v1581
  %v1583 = vpop.f32.mrb[0].mxu0
  %1584 = vmatprep.mubr.f32.mxu0 0.0
  %1585 = vmatmul.mubr.f32.gmra.mrb[0].mxu0 %v268
  %v1586 = vpop.f32.mrb[0].mxu0
  %v1587 = vadd.f32 0.0, %v1586
  %v1588 = vpop.f32.mrb[0].mxu0
  %1589 = vmatprep.mubr.f32.mxu0 0.0
  %1590 = vmatmul.mubr.f32.gmra.mrb[0].mxu0 %v269
  %v1591 = vpop.f32.mrb[0].mxu0
  %v1592 = vadd.f32 0.0, %v1591
  %v1593 = vpop.f32.mrb[0].mxu0
  %1594 = vmatprep.mubr.f32.mxu0 0.0
  %1595 = vmatmul.mubr.f32.gmra.mrb[0].mxu0 %v270
  %v1596 = vpop.f32.mrb[0].mxu0
  %v1597 = vadd.f32 0.0, %v1596
  %v1598 = vpop.f32.mrb[0].mxu0
  %1599 = vmatprep.mubr.f32.mxu0 0.0
  %1600 = vmatmul.mubr.f32.gmra.mrb[0].mxu0 %v271
  %v1601 = vpop.f32.mrb[0].mxu0
  %v1602 = vadd.f32 0.0, %v1601
  %v1603 = vpop.f32.mrb[0].mxu0
  %1604 = vmatprep.mubr.f32.mxu0 0.0
  %1605 = vmatmul.mubr.f32.gmra.mrb[0].mxu0 %v272
  %v1606 = vpop.f32.mrb[0].mxu0
  %v1607 = vadd.f32 0.0, %v1606
  %v1608 = vpop.f32.mrb[0].mxu0
  %1609 = vmatprep.mubr.f32.mxu0 0.0
  %1610 = vmatmul.mubr.f32.gmra.mrb[0].mxu0 %v273
  %v1611 = vpop.f32.mrb[0].mxu0
  %v1612 = vadd.f32 0.0, %v1611
  %v1613 = vpop.f32.mrb[0].mxu0
  %1614 = vmatprep.mubr.f32.mxu0 0.0
  %1615 = vmatmul.mubr.f32.gmra.mrb[0].mxu0 %v274
  %v1616 = vpop.f32.mrb[0].mxu0
  %v1617 = vadd.f32 0.0, %v1616
  %v1618 = vpop.f32.mrb[0].mxu0
  %1619 = vmatprep.mubr.f32.mxu0 0.0
  %1620 = vmatmul.mubr.f32.gmra.mrb[0].mxu0 %v275
  %v1621 = vpop.f32.mrb[0].mxu0
  %v1622 = vadd.f32 0.0, %v1621
  %v1623 = vpop.f32.mrb[0].mxu0
  %1624 = vmatprep.mubr.f32.mxu0 0.0
  %1625 = vmatmul.mubr.f32.gmra.mrb[0].mxu0 %v276
  %v1626 = vpop.f32.mrb[0].mxu0
  %v1627 = vadd.f32 0.0, %v1626
  %v1628 = vpop.f32.mrb[0].mxu0
  %1629 = vmatprep.mubr.f32.mxu0 0.0
  %1630 = vmatmul.mubr.f32.gmra.mrb[0].mxu0 %v277
  %v1631 = vpop.f32.mrb[0].mxu0
  %v1632 = vadd.f32 0.0, %v1631
  %v1633 = vpop.f32.mrb[0].mxu0
  %1634 = vmatprep.mubr.f32.mxu0 0.0
  %1635 = vmatmul.mubr.f32.gmra.mrb[0].mxu0 %v278
  %v1636 = vpop.f32.mrb[0].mxu0
  %v1637 = vadd.f32 0.0, %v1636
  %v1638 = vpop.f32.mrb[0].mxu0
  %1639 = vdwg.mxu0
  %v1640 = vmax.f32 %v362, 0.0
  %v1641 = vmax.f32 %v367, 0.0
  %v1642 = vmax.f32 %v372, 0.0
  %v1643 = vmax.f32 %v377, 0.0
  %v1644 = vmax.f32 %v382, 0.0
  %v1645 = vmax.f32 %v387, 0.0
  %v1646 = vmax.f32 %v392, 0.0
  %v1647 = vmax.f32 %v397, 0.0
  %v1648 = vmax.f32 %v402, 0.0
  %v1649 = vmax.f32 %v407, 0.0
  %v1650 = vmax.f32 %v412, 0.0
  %v1651 = vmax.f32 %v417, 0.0
  %v1652 = vmax.f32 %v422, 0.0
  %v1653 = vmax.f32 %v427, 0.0
  %v1654 = vmax.f32 %v432, 0.0
  %v1655 = vmax.f32 %v437, 0.0
  %v1656 = vmax.f32 %v442, 0.0
  %v1657 = vmax.f32 %v447, 0.0
  %v1658 = vmax.f32 %v452, 0.0
  %v1659 = vmax.f32 %v457, 0.0
  %v1660 = vmax.f32 %v462, 0.0
  %v1661 = vmax.f32 %v467, 0.0
  %v1662 = vmax.f32 %v472, 0.0
  %v1663 = vmax.f32 %v477, 0.0
  %v1664 = vmax.f32 %v482, 0.0
  %v1665 = vmax.f32 %v487, 0.0
  %v1666 = vmax.f32 %v492, 0.0
  %v1667 = vmax.f32 %v497, 0.0
  %v1668 = vmax.f32 %v502, 0.0
  %v1669 = vmax.f32 %v507, 0.0
  %v1670 = vmax.f32 %v512, 0.0
  %v1671 = vmax.f32 %v517, 0.0
  %v1672 = vmax.f32 %v522, 0.0
  %v1673 = vmax.f32 %v527, 0.0
  %v1674 = vmax.f32 %v532, 0.0
  %v1675 = vmax.f32 %v537, 0.0
  %v1676 = vmax.f32 %v542, 0.0
  %v1677 = vmax.f32 %v547, 0.0
  %v1678 = vmax.f32 %v552, 0.0
  %v1679 = vmax.f32 %v557, 0.0
  %v1680 = vmax.f32 %v562, 0.0
  %v1681 = vmax.f32 %v567, 0.0
  %v1682 = vmax.f32 %v572, 0.0
  %v1683 = vmax.f32 %v577, 0.0
  %v1684 = vmax.f32 %v582, 0.0
  %v1685 = vmax.f32 %v587, 0.0
  %v1686 = vmax.f32 %v592, 0.0
  %v1687 = vmax.f32 %v597, 0.0
  %v1688 = vmax.f32 %v602, 0.0
  %v1689 = vmax.f32 %v607, 0.0
  %v1690 = vmax.f32 %v612, 0.0
  %v1691 = vmax.f32 %v617, 0.0
  %v1692 = vmax.f32 %v622, 0.0
  %v1693 = vmax.f32 %v627, 0.0
  %v1694 = vmax.f32 %v632, 0.0
  %v1695 = vmax.f32 %v637, 0.0
  %v1696 = vmax.f32 %v642, 0.0
  %v1697 = vmax.f32 %v647, 0.0
  %v1698 = vmax.f32 %v652, 0.0
  %v1699 = vmax.f32 %v657, 0.0
  %v1700 = vmax.f32 %v662, 0.0
  %v1701 = vmax.f32 %v667, 0.0
  %v1702 = vmax.f32 %v672, 0.0
  %v1703 = vmax.f32 %v677, 0.0
  %v1704 = vmax.f32 %v682, 0.0
  %v1705 = vmax.f32 %v687, 0.0
  %v1706 = vmax.f32 %v692, 0.0
  %v1707 = vmax.f32 %v697, 0.0
  %v1708 = vmax.f32 %v702, 0.0
  %v1709 = vmax.f32 %v707, 0.0
  %v1710 = vmax.f32 %v712, 0.0
  %v1711 = vmax.f32 %v717, 0.0
  %v1712 = vmax.f32 %v722, 0.0
  %v1713 = vmax.f32 %v727, 0.0
  %v1714 = vmax.f32 %v732, 0.0
  %v1715 = vmax.f32 %v737, 0.0
  %v1716 = vmax.f32 %v742, 0.0
  %v1717 = vmax.f32 %v747, 0.0
  %v1718 = vmax.f32 %v752, 0.0
  %v1719 = vmax.f32 %v757, 0.0
  %v1720 = vmax.f32 %v762, 0.0
  %v1721 = vmax.f32 %v767, 0.0
  %v1722 = vmax.f32 %v772, 0.0
  %v1723 = vmax.f32 %v777, 0.0
  %v1724 = vmax.f32 %v782, 0.0
  %v1725 = vmax.f32 %v787, 0.0
  %v1726 = vmax.f32 %v792, 0.0
  %v1727 = vmax.f32 %v797, 0.0
  %v1728 = vmax.f32 %v802, 0.0
  %v1729 = vmax.f32 %v807, 0.0
  %v1730 = vmax.f32 %v812, 0.0
  %v1731 = vmax.f32 %v817, 0.0
  %v1732 = vmax.f32 %v822, 0.0
  %v1733 = vmax.f32 %v827, 0.0
  %v1734 = vmax.f32 %v832, 0.0
  %v1735 = vmax.f32 %v837, 0.0
  %v1736 = vmax.f32 %v842, 0.0
  %v1737 = vmax.f32 %v847, 0.0
  %v1738 = vmax.f32 %v852, 0.0
  %v1739 = vmax.f32 %v857, 0.0
  %v1740 = vmax.f32 %v862, 0.0
  %v1741 = vmax.f32 %v867, 0.0
  %v1742 = vmax.f32 %v872, 0.0
  %v1743 = vmax.f32 %v877, 0.0
  %v1744 = vmax.f32 %v882, 0.0
  %v1745 = vmax.f32 %v887, 0.0
  %v1746 = vmax.f32 %v892, 0.0
  %v1747 = vmax.f32 %v897, 0.0
  %v1748 = vmax.f32 %v902, 0.0
  %v1749 = vmax.f32 %v907, 0.0
  %v1750 = vmax.f32 %v912, 0.0
  %v1751 = vmax.f32 %v917, 0.0
  %v1752 = vmax.f32 %v922, 0.0
  %v1753 = vmax.f32 %v927, 0.0
  %v1754 = vmax.f32 %v932, 0.0
  %v1755 = vmax.f32 %v937, 0.0
  %v1756 = vmax.f32 %v942, 0.0
  %v1757 = vmax.f32 %v947, 0.0
  %v1758 = vmax.f32 %v952, 0.0
  %v1759 = vmax.f32 %v957, 0.0
  %v1760 = vmax.f32 %v962, 0.0
  %v1761 = vmax.f32 %v967, 0.0
  %v1762 = vmax.f32 %v972, 0.0
  %v1763 = vmax.f32 %v977, 0.0
  %v1764 = vmax.f32 %v982, 0.0
  %v1765 = vmax.f32 %v987, 0.0
  %v1766 = vmax.f32 %v992, 0.0
  %v1767 = vmax.f32 %v997, 0.0
  %v1768 = vmax.f32 %v1002, 0.0
  %v1769 = vmax.f32 %v1007, 0.0
  %v1770 = vmax.f32 %v1012, 0.0
  %v1771 = vmax.f32 %v1017, 0.0
  %v1772 = vmax.f32 %v1022, 0.0
  %v1773 = vmax.f32 %v1027, 0.0
  %v1774 = vmax.f32 %v1032, 0.0
  %v1775 = vmax.f32 %v1037, 0.0
  %v1776 = vmax.f32 %v1042, 0.0
  %v1777 = vmax.f32 %v1047, 0.0
  %v1778 = vmax.f32 %v1052, 0.0
  %v1779 = vmax.f32 %v1057, 0.0
  %v1780 = vmax.f32 %v1062, 0.0
  %v1781 = vmax.f32 %v1067, 0.0
  %v1782 = vmax.f32 %v1072, 0.0
  %v1783 = vmax.f32 %v1077, 0.0
  %v1784 = vmax.f32 %v1082, 0.0
  %v1785 = vmax.f32 %v1087, 0.0
  %v1786 = vmax.f32 %v1092, 0.0
  %v1787 = vmax.f32 %v1097, 0.0
  %v1788 = vmax.f32 %v1102, 0.0
  %v1789 = vmax.f32 %v1107, 0.0
  %v1790 = vmax.f32 %v1112, 0.0
  %v1791 = vmax.f32 %v1117, 0.0
  %v1792 = vmax.f32 %v1122, 0.0
  %v1793 = vmax.f32 %v1127, 0.0
  %v1794 = vmax.f32 %v1132, 0.0
  %v1795 = vmax.f32 %v1137, 0.0
  %v1796 = vmax.f32 %v1142, 0.0
  %v1797 = vmax.f32 %v1147, 0.0
  %v1798 = vmax.f32 %v1152, 0.0
  %v1799 = vmax.f32 %v1157, 0.0
  %v1800 = vmax.f32 %v1162, 0.0
  %v1801 = vmax.f32 %v1167, 0.0
  %v1802 = vmax.f32 %v1172, 0.0
  %v1803 = vmax.f32 %v1177, 0.0
  %v1804 = vmax.f32 %v1182, 0.0
  %v1805 = vmax.f32 %v1187, 0.0
  %v1806 = vmax.f32 %v1192, 0.0
  %v1807 = vmax.f32 %v1197, 0.0
  %v1808 = vmax.f32 %v1202, 0.0
  %v1809 = vmax.f32 %v1207, 0.0
  %v1810 = vmax.f32 %v1212, 0.0
  %v1811 = vmax.f32 %v1217, 0.0
  %v1812 = vmax.f32 %v1222, 0.0
  %v1813 = vmax.f32 %v1227, 0.0
  %v1814 = vmax.f32 %v1232, 0.0
  %v1815 = vmax.f32 %v1237, 0.0
  %v1816 = vmax.f32 %v1242, 0.0
  %v1817 = vmax.f32 %v1247, 0.0
  %v1818 = vmax.f32 %v1252, 0.0
  %v1819 = vmax.f32 %v1257, 0.0
  %v1820 = vmax.f32 %v1262, 0.0
  %v1821 = vmax.f32 %v1267, 0.0
  %v1822 = vmax.f32 %v1272, 0.0
  %v1823 = vmax.f32 %v1277, 0.0
  %v1824 = vmax.f32 %v1282, 0.0
  %v1825 = vmax.f32 %v1287, 0.0
  %v1826 = vmax.f32 %v1292, 0.0
  %v1827 = vmax.f32 %v1297, 0.0
  %v1828 = vmax.f32 %v1302, 0.0
  %v1829 = vmax.f32 %v1307, 0.0
  %v1830 = vmax.f32 %v1312, 0.0
  %v1831 = vmax.f32 %v1317, 0.0
  %v1832 = vmax.f32 %v1322, 0.0
  %v1833 = vmax.f32 %v1327, 0.0
  %v1834 = vmax.f32 %v1332, 0.0
  %v1835 = vmax.f32 %v1337, 0.0
  %v1836 = vmax.f32 %v1342, 0.0
  %v1837 = vmax.f32 %v1347, 0.0
  %v1838 = vmax.f32 %v1352, 0.0
  %v1839 = vmax.f32 %v1357, 0.0
  %v1840 = vmax.f32 %v1362, 0.0
  %v1841 = vmax.f32 %v1367, 0.0
  %v1842 = vmax.f32 %v1372, 0.0
  %v1843 = vmax.f32 %v1377, 0.0
  %v1844 = vmax.f32 %v1382, 0.0
  %v1845 = vmax.f32 %v1387, 0.0
  %v1846 = vmax.f32 %v1392, 0.0
  %v1847 = vmax.f32 %v1397, 0.0
  %v1848 = vmax.f32 %v1402, 0.0
  %v1849 = vmax.f32 %v1407, 0.0
  %v1850 = vmax.f32 %v1412, 0.0
  %v1851 = vmax.f32 %v1417, 0.0
  %v1852 = vmax.f32 %v1422, 0.0
  %v1853 = vmax.f32 %v1427, 0.0
  %v1854 = vmax.f32 %v1432, 0.0
  %v1855 = vmax.f32 %v1437, 0.0
  %v1856 = vmax.f32 %v1442, 0.0
  %v1857 = vmax.f32 %v1447, 0.0
  %v1858 = vmax.f32 %v1452, 0.0
  %v1859 = vmax.f32 %v1457, 0.0
  %v1860 = vmax.f32 %v1462, 0.0
  %v1861 = vmax.f32 %v1467, 0.0
  %v1862 = vmax.f32 %v1472, 0.0
  %v1863 = vmax.f32 %v1477, 0.0
  %v1864 = vmax.f32 %v1482, 0.0
  %v1865 = vmax.f32 %v1487, 0.0
  %v1866 = vmax.f32 %v1492, 0.0
  %v1867 = vmax.f32 %v1497, 0.0
  %v1868 = vmax.f32 %v1502, 0.0
  %v1869 = vmax.f32 %v1507, 0.0
  %v1870 = vmax.f32 %v1512, 0.0
  %v1871 = vmax.f32 %v1517, 0.0
  %v1872 = vmax.f32 %v1522, 0.0
  %v1873 = vmax.f32 %v1527, 0.0
  %v1874 = vmax.f32 %v1532, 0.0
  %v1875 = vmax.f32 %v1537, 0.0
  %v1876 = vmax.f32 %v1542, 0.0
  %v1877 = vmax.f32 %v1547, 0.0
  %v1878 = vmax.f32 %v1552, 0.0
  %v1879 = vmax.f32 %v1557, 0.0
  %v1880 = vmax.f32 %v1562, 0.0
  %v1881 = vmax.f32 %v1567, 0.0
  %v1882 = vmax.f32 %v1572, 0.0
  %v1883 = vmax.f32 %v1577, 0.0
  %v1884 = vmax.f32 %v1582, 0.0
  %v1885 = vmax.f32 %v1587, 0.0
  %v1886 = vmax.f32 %v1592, 0.0
  %v1887 = vmax.f32 %v1597, 0.0
  %v1888 = vmax.f32 %v1602, 0.0
  %v1889 = vmax.f32 %v1607, 0.0
  %v1890 = vmax.f32 %v1612, 0.0
  %v1891 = vmax.f32 %v1617, 0.0
  %v1892 = vmax.f32 %v1622, 0.0
  %v1893 = vmax.f32 %v1627, 0.0
  %v1894 = vmax.f32 %v1632, 0.0
  %v1895 = vmax.f32 %v1637, 0.0
  %v2152 = vcombine.high %v1640, %v1640
  %v2153 = vcombine.high %v1641, %v1641
  %v2154 = vcombine.high %v1642, %v1642
  %v2155 = vcombine.high %v1643, %v1643
  %v2156 = vcombine.high %v1644, %v1644
  %v2157 = vcombine.high %v1645, %v1645
  %v2158 = vcombine.high %v1646, %v1646
  %v2159 = vcombine.high %v1647, %v1647
  %v2160 = vcombine.high %v1648, %v1648
  %v2161 = vcombine.high %v1649, %v1649
  %v2162 = vcombine.high %v1650, %v1650
  %v2163 = vcombine.high %v1651, %v1651
  %v2164 = vcombine.high %v1652, %v1652
  %v2165 = vcombine.high %v1653, %v1653
  %v2166 = vcombine.high %v1654, %v1654
  %v2167 = vcombine.high %v1655, %v1655
  %v2168 = vcombine.high %v1656, %v1656
  %v2169 = vcombine.high %v1657, %v1657
  %v2170 = vcombine.high %v1658, %v1658
  %v2171 = vcombine.high %v1659, %v1659
  %v2172 = vcombine.high %v1660, %v1660
  %v2173 = vcombine.high %v1661, %v1661
  %v2174 = vcombine.high %v1662, %v1662
  %v2175 = vcombine.high %v1663, %v1663
  %v2176 = vcombine.high %v1664, %v1664
  %v2177 = vcombine.high %v1665, %v1665
  %v2178 = vcombine.high %v1666, %v1666
  %v2179 = vcombine.high %v1667, %v1667
  %v2180 = vcombine.high %v1668, %v1668
  %v2181 = vcombine.high %v1669, %v1669
  %v2182 = vcombine.high %v1670, %v1670
  %v2183 = vcombine.high %v1671, %v1671
  %v2184 = vcombine.high %v1672, %v1672
  %v2185 = vcombine.high %v1673, %v1673
  %v2186 = vcombine.high %v1674, %v1674
  %v2187 = vcombine.high %v1675, %v1675
  %v2188 = vcombine.high %v1676, %v1676
  %v2189 = vcombine.high %v1677, %v1677
  %v2190 = vcombine.high %v1678, %v1678
  %v2191 = vcombine.high %v1679, %v1679
  %v2192 = vcombine.high %v1680, %v1680
  %v2193 = vcombine.high %v1681, %v1681
  %v2194 = vcombine.high %v1682, %v1682
  %v2195 = vcombine.high %v1683, %v1683
  %v2196 = vcombine.high %v1684, %v1684
  %v2197 = vcombine.high %v1685, %v1685
  %v2198 = vcombine.high %v1686, %v1686
  %v2199 = vcombine.high %v1687, %v1687
  %v2200 = vcombine.high %v1688, %v1688
  %v2201 = vcombine.high %v1689, %v1689
  %v2202 = vcombine.high %v1690, %v1690
  %v2203 = vcombine.high %v1691, %v1691
  %v2204 = vcombine.high %v1692, %v1692
  %v2205 = vcombine.high %v1693, %v1693
  %v2206 = vcombine.high %v1694, %v1694
  %v2207 = vcombine.high %v1695, %v1695
  %v2208 = vcombine.high %v1696, %v1696
  %v2209 = vcombine.high %v1697, %v1697
  %v2210 = vcombine.high %v1698, %v1698
  %v2211 = vcombine.high %v1699, %v1699
  %v2212 = vcombine.high %v1700, %v1700
  %v2213 = vcombine.high %v1701, %v1701
  %v2214 = vcombine.high %v1702, %v1702
  %v2215 = vcombine.high %v1703, %v1703
  %v2216 = vcombine.high %v1704, %v1704
  %v2217 = vcombine.high %v1705, %v1705
  %v2218 = vcombine.high %v1706, %v1706
  %v2219 = vcombine.high %v1707, %v1707
  %v2220 = vcombine.high %v1708, %v1708
  %v2221 = vcombine.high %v1709, %v1709
  %v2222 = vcombine.high %v1710, %v1710
  %v2223 = vcombine.high %v1711, %v1711
  %v2224 = vcombine.high %v1712, %v1712
  %v2225 = vcombine.high %v1713, %v1713
  %v2226 = vcombine.high %v1714, %v1714
  %v2227 = vcombine.high %v1715, %v1715
  %v2228 = vcombine.high %v1716, %v1716
  %v2229 = vcombine.high %v1717, %v1717
  %v2230 = vcombine.high %v1718, %v1718
  %v2231 = vcombine.high %v1719, %v1719
  %v2232 = vcombine.high %v1720, %v1720
  %v2233 = vcombine.high %v1721, %v1721
  %v2234 = vcombine.high %v1722, %v1722
  %v2235 = vcombine.high %v1723, %v1723
  %v2236 = vcombine.high %v1724, %v1724
  %v2237 = vcombine.high %v1725, %v1725
  %v2238 = vcombine.high %v1726, %v1726
  %v2239 = vcombine.high %v1727, %v1727
  %v2240 = vcombine.high %v1728, %v1728
  %v2241 = vcombine.high %v1729, %v1729
  %v2242 = vcombine.high %v1730, %v1730
  %v2243 = vcombine.high %v1731, %v1731
  %v2244 = vcombine.high %v1732, %v1732
  %v2245 = vcombine.high %v1733, %v1733
  %v2246 = vcombine.high %v1734, %v1734
  %v2247 = vcombine.high %v1735, %v1735
  %v2248 = vcombine.high %v1736, %v1736
  %v2249 = vcombine.high %v1737, %v1737
  %v2250 = vcombine.high %v1738, %v1738
  %v2251 = vcombine.high %v1739, %v1739
  %v2252 = vcombine.high %v1740, %v1740
  %v2253 = vcombine.high %v1741, %v1741
  %v2254 = vcombine.high %v1742, %v1742
  %v2255 = vcombine.high %v1743, %v1743
  %v2256 = vcombine.high %v1744, %v1744
  %v2257 = vcombine.high %v1745, %v1745
  %v2258 = vcombine.high %v1746, %v1746
  %v2259 = vcombine.high %v1747, %v1747
  %v2260 = vcombine.high %v1748, %v1748
  %v2261 = vcombine.high %v1749, %v1749
  %v2262 = vcombine.high %v1750, %v1750
  %v2263 = vcombine.high %v1751, %v1751
  %v2264 = vcombine.high %v1752, %v1752
  %v2265 = vcombine.high %v1753, %v1753
  %v2266 = vcombine.high %v1754, %v1754
  %v2267 = vcombine.high %v1755, %v1755
  %v2268 = vcombine.high %v1756, %v1756
  %v2269 = vcombine.high %v1757, %v1757
  %v2270 = vcombine.high %v1758, %v1758
  %v2271 = vcombine.high %v1759, %v1759
  %v2272 = vcombine.high %v1760, %v1760
  %v2273 = vcombine.high %v1761, %v1761
  %v2274 = vcombine.high %v1762, %v1762
  %v2275 = vcombine.high %v1763, %v1763
  %v2276 = vcombine.high %v1764, %v1764
  %v2277 = vcombine.high %v1765, %v1765
  %v2278 = vcombine.high %v1766, %v1766
  %v2279 = vcombine.high %v1767, %v1767
  %v2280 = vcombine.high %v1768, %v1768
  %v2281 = vcombine.high %v1769, %v1769
  %v2282 = vcombine.high %v1770, %v1770
  %v2283 = vcombine.high %v1771, %v1771
  %v2284 = vcombine.high %v1772, %v1772
  %v2285 = vcombine.high %v1773, %v1773
  %v2286 = vcombine.high %v1774, %v1774
  %v2287 = vcombine.high %v1775, %v1775
  %v2288 = vcombine.high %v1776, %v1776
  %v2289 = vcombine.high %v1777, %v1777
  %v2290 = vcombine.high %v1778, %v1778
  %v2291 = vcombine.high %v1779, %v1779
  %v2292 = vcombine.high %v1780, %v1780
  %v2293 = vcombine.high %v1781, %v1781
  %v2294 = vcombine.high %v1782, %v1782
  %v2295 = vcombine.high %v1783, %v1783
  %v2296 = vcombine.high %v1784, %v1784
  %v2297 = vcombine.high %v1785, %v1785
  %v2298 = vcombine.high %v1786, %v1786
  %v2299 = vcombine.high %v1787, %v1787
  %v2300 = vcombine.high %v1788, %v1788
  %v2301 = vcombine.high %v1789, %v1789
  %v2302 = vcombine.high %v1790, %v1790
  %v2303 = vcombine.high %v1791, %v1791
  %v2304 = vcombine.high %v1792, %v1792
  %v2305 = vcombine.high %v1793, %v1793
  %v2306 = vcombine.high %v1794, %v1794
  %v2307 = vcombine.high %v1795, %v1795
  %v2308 = vcombine.high %v1796, %v1796
  %v2309 = vcombine.high %v1797, %v1797
  %v2310 = vcombine.high %v1798, %v1798
  %v2311 = vcombine.high %v1799, %v1799
  %v2312 = vcombine.high %v1800, %v1800
  %v2313 = vcombine.high %v1801, %v1801
  %v2314 = vcombine.high %v1802, %v1802
  %v2315 = vcombine.high %v1803, %v1803
  %v2316 = vcombine.high %v1804, %v1804
  %v2317 = vcombine.high %v1805, %v1805
  %v2318 = vcombine.high %v1806, %v1806
  %v2319 = vcombine.high %v1807, %v1807
  %v2320 = vcombine.high %v1808, %v1808
  %v2321 = vcombine.high %v1809, %v1809
  %v2322 = vcombine.high %v1810, %v1810
  %v2323 = vcombine.high %v1811, %v1811
  %v2324 = vcombine.high %v1812, %v1812
  %v2325 = vcombine.high %v1813, %v1813
  %v2326 = vcombine.high %v1814, %v1814
  %v2327 = vcombine.high %v1815, %v1815
  %v2328 = vcombine.high %v1816, %v1816
  %v2329 = vcombine.high %v1817, %v1817
  %v2330 = vcombine.high %v1818, %v1818
  %v2331 = vcombine.high %v1819, %v1819
  %v2332 = vcombine.high %v1820, %v1820
  %v2333 = vcombine.high %v1821, %v1821
  %v2334 = vcombine.high %v1822, %v1822
  %v2335 = vcombine.high %v1823, %v1823
  %v2336 = vcombine.high %v1824, %v1824
  %v2337 = vcombine.high %v1825, %v1825
  %v2338 = vcombine.high %v1826, %v1826
  %v2339 = vcombine.high %v1827, %v1827
  %v2340 = vcombine.high %v1828, %v1828
  %v2341 = vcombine.high %v1829, %v1829
  %v2342 = vcombine.high %v1830, %v1830
  %v2343 = vcombine.high %v1831, %v1831
  %v2344 = vcombine.high %v1832, %v1832
  %v2345 = vcombine.high %v1833, %v1833
  %v2346 = vcombine.high %v1834, %v1834
  %v2347 = vcombine.high %v1835, %v1835
  %v2348 = vcombine.high %v1836, %v1836
  %v2349 = vcombine.high %v1837, %v1837
  %v2350 = vcombine.high %v1838, %v1838
  %v2351 = vcombine.high %v1839, %v1839
  %v2352 = vcombine.high %v1840, %v1840
  %v2353 = vcombine.high %v1841, %v1841
  %v2354 = vcombine.high %v1842, %v1842
  %v2355 = vcombine.high %v1843, %v1843
  %v2356 = vcombine.high %v1844, %v1844
  %v2357 = vcombine.high %v1845, %v1845
  %v2358 = vcombine.high %v1846, %v1846
  %v2359 = vcombine.high %v1847, %v1847
  %v2360 = vcombine.high %v1848, %v1848
  %v2361 = vcombine.high %v1849, %v1849
  %v2362 = vcombine.high %v1850, %v1850
  %v2363 = vcombine.high %v1851, %v1851
  %v2364 = vcombine.high %v1852, %v1852
  %v2365 = vcombine.high %v1853, %v1853
  %v2366 = vcombine.high %v1854, %v1854
  %v2367 = vcombine.high %v1855, %v1855
  %v2368 = vcombine.high %v1856, %v1856
  %v2369 = vcombine.high %v1857, %v1857
  %v2370 = vcombine.high %v1858, %v1858
  %v2371 = vcombine.high %v1859, %v1859
  %v2372 = vcombine.high %v1860, %v1860
  %v2373 = vcombine.high %v1861, %v1861
  %v2374 = vcombine.high %v1862, %v1862
  %v2375 = vcombine.high %v1863, %v1863
  %v2376 = vcombine.high %v1864, %v1864
  %v2377 = vcombine.high %v1865, %v1865
  %v2378 = vcombine.high %v1866, %v1866
  %v2379 = vcombine.high %v1867, %v1867
  %v2380 = vcombine.high %v1868, %v1868
  %v2381 = vcombine.high %v1869, %v1869
  %v2382 = vcombine.high %v1870, %v1870
  %v2383 = vcombine.high %v1871, %v1871
  %v2384 = vcombine.high %v1872, %v1872
  %v2385 = vcombine.high %v1873, %v1873
  %v2386 = vcombine.high %v1874, %v1874
  %v2387 = vcombine.high %v1875, %v1875
  %v2388 = vcombine.high %v1876, %v1876
  %v2389 = vcombine.high %v1877, %v1877
  %v2390 = vcombine.high %v1878, %v1878
  %v2391 = vcombine.high %v1879, %v1879
  %v2392 = vcombine.high %v1880, %v1880
  %v2393 = vcombine.high %v1881, %v1881
  %v2394 = vcombine.high %v1882, %v1882
  %v2395 = vcombine.high %v1883, %v1883
  %v2396 = vcombine.high %v1884, %v1884
  %v2397 = vcombine.high %v1885, %v1885
  %v2398 = vcombine.high %v1886, %v1886
  %v2399 = vcombine.high %v1887, %v1887
  %v2400 = vcombine.high %v1888, %v1888
  %v2401 = vcombine.high %v1889, %v1889
  %v2402 = vcombine.high %v1890, %v1890
  %v2403 = vcombine.high %v1891, %v1891
  %v2404 = vcombine.high %v1892, %v1892
  %v2405 = vcombine.high %v1893, %v1893
  %v2406 = vcombine.high %v1894, %v1894
  %v2407 = vcombine.high %v1895, %v1895
  %vm2664 = vcmask 125952
  %v2665 = vsel %vm2664, %v1640, -inf
  %v2666 = vrot.slane %v2665, 4
  %v2667 = vmax.f32 %v2665, %v2666
  %v2668 = vrot.slane %v2667, 2
  %v2669 = vmax.f32 %v2667, %v2668
  %v2670 = vrot.slane %v2669, 1
  %v2671 = vmax.f32 %v2669, %v2670
  %v2672 = vsel %vm2664, %v2152, -inf
  %v2673 = vrot.slane %v2672, 4
  %v2674 = vmax.f32 %v2672, %v2673
  %v2675 = vrot.slane %v2674, 2
  %v2676 = vmax.f32 %v2674, %v2675
  %v2677 = vrot.slane %v2676, 1
  %v2678 = vmax.f32 %v2676, %v2677
  %v2679 = vsel %vm2664, %v1641, -inf
  %v2680 = vrot.slane %v2679, 4
  %v2681 = vmax.f32 %v2679, %v2680
  %v2682 = vrot.slane %v2681, 2
  %v2683 = vmax.f32 %v2681, %v2682
  %v2684 = vrot.slane %v2683, 1
  %v2685 = vmax.f32 %v2683, %v2684
  %v2686 = vsel %vm2664, %v2153, -inf
  %v2687 = vrot.slane %v2686, 4
  %v2688 = vmax.f32 %v2686, %v2687
  %v2689 = vrot.slane %v2688, 2
  %v2690 = vmax.f32 %v2688, %v2689
  %v2691 = vrot.slane %v2690, 1
  %v2692 = vmax.f32 %v2690, %v2691
  %v2693 = vsel %vm2664, %v1642, -inf
  %v2694 = vrot.slane %v2693, 4
  %v2695 = vmax.f32 %v2693, %v2694
  %v2696 = vrot.slane %v2695, 2
  %v2697 = vmax.f32 %v2695, %v2696
  %v2698 = vrot.slane %v2697, 1
  %v2699 = vmax.f32 %v2697, %v2698
  %v2700 = vsel %vm2664, %v2154, -inf
  %v2701 = vrot.slane %v2700, 4
  %v2702 = vmax.f32 %v2700, %v2701
  %v2703 = vrot.slane %v2702, 2
  %v2704 = vmax.f32 %v2702, %v2703
  %v2705 = vrot.slane %v2704, 1
  %v2706 = vmax.f32 %v2704, %v2705
  %v2707 = vsel %vm2664, %v1643, -inf
  %v2708 = vrot.slane %v2707, 4
  %v2709 = vmax.f32 %v2707, %v2708
  %v2710 = vrot.slane %v2709, 2
  %v2711 = vmax.f32 %v2709, %v2710
  %v2712 = vrot.slane %v2711, 1
  %v2713 = vmax.f32 %v2711, %v2712
  %v2714 = vsel %vm2664, %v2155, -inf
  %v2715 = vrot.slane %v2714, 4
  %v2716 = vmax.f32 %v2714, %v2715
  %v2717 = vrot.slane %v2716, 2
  %v2718 = vmax.f32 %v2716, %v2717
  %v2719 = vrot.slane %v2718, 1
  %v2720 = vmax.f32 %v2718, %v2719
  %v2721 = vsel %vm2664, %v1644, -inf
  %v2722 = vrot.slane %v2721, 4
  %v2723 = vmax.f32 %v2721, %v2722
  %v2724 = vrot.slane %v2723, 2
  %v2725 = vmax.f32 %v2723, %v2724
  %v2726 = vrot.slane %v2725, 1
  %v2727 = vmax.f32 %v2725, %v2726
  %v2728 = vsel %vm2664, %v2156, -inf
  %v2729 = vrot.slane %v2728, 4
  %v2730 = vmax.f32 %v2728, %v2729
  %v2731 = vrot.slane %v2730, 2
  %v2732 = vmax.f32 %v2730, %v2731
  %v2733 = vrot.slane %v2732, 1
  %v2734 = vmax.f32 %v2732, %v2733
  %v2735 = vsel %vm2664, %v1645, -inf
  %v2736 = vrot.slane %v2735, 4
  %v2737 = vmax.f32 %v2735, %v2736
  %v2738 = vrot.slane %v2737, 2
  %v2739 = vmax.f32 %v2737, %v2738
  %v2740 = vrot.slane %v2739, 1
  %v2741 = vmax.f32 %v2739, %v2740
  %v2742 = vsel %vm2664, %v2157, -inf
  %v2743 = vrot.slane %v2742, 4
  %v2744 = vmax.f32 %v2742, %v2743
  %v2745 = vrot.slane %v2744, 2
  %v2746 = vmax.f32 %v2744, %v2745
  %v2747 = vrot.slane %v2746, 1
  %v2748 = vmax.f32 %v2746, %v2747
  %v2749 = vsel %vm2664, %v1646, -inf
  %v2750 = vrot.slane %v2749, 4
  %v2751 = vmax.f32 %v2749, %v2750
  %v2752 = vrot.slane %v2751, 2
  %v2753 = vmax.f32 %v2751, %v2752
  %v2754 = vrot.slane %v2753, 1
  %v2755 = vmax.f32 %v2753, %v2754
  %v2756 = vsel %vm2664, %v2158, -inf
  %v2757 = vrot.slane %v2756, 4
  %v2758 = vmax.f32 %v2756, %v2757
  %v2759 = vrot.slane %v2758, 2
  %v2760 = vmax.f32 %v2758, %v2759
  %v2761 = vrot.slane %v2760, 1
  %v2762 = vmax.f32 %v2760, %v2761
  %v2763 = vsel %vm2664, %v1647, -inf
  %v2764 = vrot.slane %v2763, 4
  %v2765 = vmax.f32 %v2763, %v2764
  %v2766 = vrot.slane %v2765, 2
  %v2767 = vmax.f32 %v2765, %v2766
  %v2768 = vrot.slane %v2767, 1
  %v2769 = vmax.f32 %v2767, %v2768
  %v2770 = vsel %vm2664, %v2159, -inf
  %v2771 = vrot.slane %v2770, 4
  %v2772 = vmax.f32 %v2770, %v2771
  %v2773 = vrot.slane %v2772, 2
  %v2774 = vmax.f32 %v2772, %v2773
  %v2775 = vrot.slane %v2774, 1
  %v2776 = vmax.f32 %v2774, %v2775
  %v2777 = vsel %vm2664, %v1648, -inf
  %v2778 = vrot.slane %v2777, 4
  %v2779 = vmax.f32 %v2777, %v2778
  %v2780 = vrot.slane %v2779, 2
  %v2781 = vmax.f32 %v2779, %v2780
  %v2782 = vrot.slane %v2781, 1
  %v2783 = vmax.f32 %v2781, %v2782
  %v2784 = vsel %vm2664, %v2160, -inf
  %v2785 = vrot.slane %v2784, 4
  %v2786 = vmax.f32 %v2784, %v2785
  %v2787 = vrot.slane %v2786, 2
  %v2788 = vmax.f32 %v2786, %v2787
  %v2789 = vrot.slane %v2788, 1
  %v2790 = vmax.f32 %v2788, %v2789
  %v2791 = vsel %vm2664, %v1649, -inf
  %v2792 = vrot.slane %v2791, 4
  %v2793 = vmax.f32 %v2791, %v2792
  %v2794 = vrot.slane %v2793, 2
  %v2795 = vmax.f32 %v2793, %v2794
  %v2796 = vrot.slane %v2795, 1
  %v2797 = vmax.f32 %v2795, %v2796
  %v2798 = vsel %vm2664, %v2161, -inf
  %v2799 = vrot.slane %v2798, 4
  %v2800 = vmax.f32 %v2798, %v2799
  %v2801 = vrot.slane %v2800, 2
  %v2802 = vmax.f32 %v2800, %v2801
  %v2803 = vrot.slane %v2802, 1
  %v2804 = vmax.f32 %v2802, %v2803
  %v2805 = vsel %vm2664, %v1650, -inf
  %v2806 = vrot.slane %v2805, 4
  %v2807 = vmax.f32 %v2805, %v2806
  %v2808 = vrot.slane %v2807, 2
  %v2809 = vmax.f32 %v2807, %v2808
  %v2810 = vrot.slane %v2809, 1
  %v2811 = vmax.f32 %v2809, %v2810
  %v2812 = vsel %vm2664, %v2162, -inf
  %v2813 = vrot.slane %v2812, 4
  %v2814 = vmax.f32 %v2812, %v2813
  %v2815 = vrot.slane %v2814, 2
  %v2816 = vmax.f32 %v2814, %v2815
  %v2817 = vrot.slane %v2816, 1
  %v2818 = vmax.f32 %v2816, %v2817
  %v2819 = vsel %vm2664, %v1651, -inf
  %v2820 = vrot.slane %v2819, 4
  %v2821 = vmax.f32 %v2819, %v2820
  %v2822 = vrot.slane %v2821, 2
  %v2823 = vmax.f32 %v2821, %v2822
  %v2824 = vrot.slane %v2823, 1
  %v2825 = vmax.f32 %v2823, %v2824
  %v2826 = vsel %vm2664, %v2163, -inf
  %v2827 = vrot.slane %v2826, 4
  %v2828 = vmax.f32 %v2826, %v2827
  %v2829 = vrot.slane %v2828, 2
  %v2830 = vmax.f32 %v2828, %v2829
  %v2831 = vrot.slane %v2830, 1
  %v2832 = vmax.f32 %v2830, %v2831
  %v2833 = vsel %vm2664, %v1652, -inf
  %v2834 = vrot.slane %v2833, 4
  %v2835 = vmax.f32 %v2833, %v2834
  %v2836 = vrot.slane %v2835, 2
  %v2837 = vmax.f32 %v2835, %v2836
  %v2838 = vrot.slane %v2837, 1
  %v2839 = vmax.f32 %v2837, %v2838
  %v2840 = vsel %vm2664, %v2164, -inf
  %v2841 = vrot.slane %v2840, 4
  %v2842 = vmax.f32 %v2840, %v2841
  %v2843 = vrot.slane %v2842, 2
  %v2844 = vmax.f32 %v2842, %v2843
  %v2845 = vrot.slane %v2844, 1
  %v2846 = vmax.f32 %v2844, %v2845
  %v2847 = vsel %vm2664, %v1653, -inf
  %v2848 = vrot.slane %v2847, 4
  %v2849 = vmax.f32 %v2847, %v2848
  %v2850 = vrot.slane %v2849, 2
  %v2851 = vmax.f32 %v2849, %v2850
  %v2852 = vrot.slane %v2851, 1
  %v2853 = vmax.f32 %v2851, %v2852
  %v2854 = vsel %vm2664, %v2165, -inf
  %v2855 = vrot.slane %v2854, 4
  %v2856 = vmax.f32 %v2854, %v2855
  %v2857 = vrot.slane %v2856, 2
  %v2858 = vmax.f32 %v2856, %v2857
  %v2859 = vrot.slane %v2858, 1
  %v2860 = vmax.f32 %v2858, %v2859
  %v2861 = vsel %vm2664, %v1654, -inf
  %v2862 = vrot.slane %v2861, 4
  %v2863 = vmax.f32 %v2861, %v2862
  %v2864 = vrot.slane %v2863, 2
  %v2865 = vmax.f32 %v2863, %v2864
  %v2866 = vrot.slane %v2865, 1
  %v2867 = vmax.f32 %v2865, %v2866
  %v2868 = vsel %vm2664, %v2166, -inf
  %v2869 = vrot.slane %v2868, 4
  %v2870 = vmax.f32 %v2868, %v2869
  %v2871 = vrot.slane %v2870, 2
  %v2872 = vmax.f32 %v2870, %v2871
  %v2873 = vrot.slane %v2872, 1
  %v2874 = vmax.f32 %v2872, %v2873
  %v2875 = vsel %vm2664, %v1655, -inf
  %v2876 = vrot.slane %v2875, 4
  %v2877 = vmax.f32 %v2875, %v2876
  %v2878 = vrot.slane %v2877, 2
  %v2879 = vmax.f32 %v2877, %v2878
  %v2880 = vrot.slane %v2879, 1
  %v2881 = vmax.f32 %v2879, %v2880
  %v2882 = vsel %vm2664, %v2167, -inf
  %v2883 = vrot.slane %v2882, 4
  %v2884 = vmax.f32 %v2882, %v2883
  %v2885 = vrot.slane %v2884, 2
  %v2886 = vmax.f32 %v2884, %v2885
  %v2887 = vrot.slane %v2886, 1
  %v2888 = vmax.f32 %v2886, %v2887
  %v2889 = vsel %vm2664, %v1656, -inf
  %v2890 = vrot.slane %v2889, 4
  %v2891 = vmax.f32 %v2889, %v2890
  %v2892 = vrot.slane %v2891, 2
  %v2893 = vmax.f32 %v2891, %v2892
  %v2894 = vrot.slane %v2893, 1
  %v2895 = vmax.f32 %v2893, %v2894
  %v2896 = vsel %vm2664, %v2168, -inf
  %v2897 = vrot.slane %v2896, 4
  %v2898 = vmax.f32 %v2896, %v2897
  %v2899 = vrot.slane %v2898, 2
  %v2900 = vmax.f32 %v2898, %v2899
  %v2901 = vrot.slane %v2900, 1
  %v2902 = vmax.f32 %v2900, %v2901
  %v2903 = vsel %vm2664, %v1657, -inf
  %v2904 = vrot.slane %v2903, 4
  %v2905 = vmax.f32 %v2903, %v2904
  %v2906 = vrot.slane %v2905, 2
  %v2907 = vmax.f32 %v2905, %v2906
  %v2908 = vrot.slane %v2907, 1
  %v2909 = vmax.f32 %v2907, %v2908
  %v2910 = vsel %vm2664, %v2169, -inf
  %v2911 = vrot.slane %v2910, 4
  %v2912 = vmax.f32 %v2910, %v2911
  %v2913 = vrot.slane %v2912, 2
  %v2914 = vmax.f32 %v2912, %v2913
  %v2915 = vrot.slane %v2914, 1
  %v2916 = vmax.f32 %v2914, %v2915
  %v2917 = vsel %vm2664, %v1658, -inf
  %v2918 = vrot.slane %v2917, 4
  %v2919 = vmax.f32 %v2917, %v2918
  %v2920 = vrot.slane %v2919, 2
  %v2921 = vmax.f32 %v2919, %v2920
  %v2922 = vrot.slane %v2921, 1
  %v2923 = vmax.f32 %v2921, %v2922
  %v2924 = vsel %vm2664, %v2170, -inf
  %v2925 = vrot.slane %v2924, 4
  %v2926 = vmax.f32 %v2924, %v2925
  %v2927 = vrot.slane %v2926, 2
  %v2928 = vmax.f32 %v2926, %v2927
  %v2929 = vrot.slane %v2928, 1
  %v2930 = vmax.f32 %v2928, %v2929
  %v2931 = vsel %vm2664, %v1659, -inf
  %v2932 = vrot.slane %v2931, 4
  %v2933 = vmax.f32 %v2931, %v2932
  %v2934 = vrot.slane %v2933, 2
  %v2935 = vmax.f32 %v2933, %v2934
  %v2936 = vrot.slane %v2935, 1
  %v2937 = vmax.f32 %v2935, %v2936
  %v2938 = vsel %vm2664, %v2171, -inf
  %v2939 = vrot.slane %v2938, 4
  %v2940 = vmax.f32 %v2938, %v2939
  %v2941 = vrot.slane %v2940, 2
  %v2942 = vmax.f32 %v2940, %v2941
  %v2943 = vrot.slane %v2942, 1
  %v2944 = vmax.f32 %v2942, %v2943
  %v2945 = vsel %vm2664, %v1660, -inf
  %v2946 = vrot.slane %v2945, 4
  %v2947 = vmax.f32 %v2945, %v2946
  %v2948 = vrot.slane %v2947, 2
  %v2949 = vmax.f32 %v2947, %v2948
  %v2950 = vrot.slane %v2949, 1
  %v2951 = vmax.f32 %v2949, %v2950
  %v2952 = vsel %vm2664, %v2172, -inf
  %v2953 = vrot.slane %v2952, 4
  %v2954 = vmax.f32 %v2952, %v2953
  %v2955 = vrot.slane %v2954, 2
  %v2956 = vmax.f32 %v2954, %v2955
  %v2957 = vrot.slane %v2956, 1
  %v2958 = vmax.f32 %v2956, %v2957
  %v2959 = vsel %vm2664, %v1661, -inf
  %v2960 = vrot.slane %v2959, 4
  %v2961 = vmax.f32 %v2959, %v2960
  %v2962 = vrot.slane %v2961, 2
  %v2963 = vmax.f32 %v2961, %v2962
  %v2964 = vrot.slane %v2963, 1
  %v2965 = vmax.f32 %v2963, %v2964
  %v2966 = vsel %vm2664, %v2173, -inf
  %v2967 = vrot.slane %v2966, 4
  %v2968 = vmax.f32 %v2966, %v2967
  %v2969 = vrot.slane %v2968, 2
  %v2970 = vmax.f32 %v2968, %v2969
  %v2971 = vrot.slane %v2970, 1
  %v2972 = vmax.f32 %v2970, %v2971
  %v2973 = vsel %vm2664, %v1662, -inf
  %v2974 = vrot.slane %v2973, 4
  %v2975 = vmax.f32 %v2973, %v2974
  %v2976 = vrot.slane %v2975, 2
  %v2977 = vmax.f32 %v2975, %v2976
  %v2978 = vrot.slane %v2977, 1
  %v2979 = vmax.f32 %v2977, %v2978
  %v2980 = vsel %vm2664, %v2174, -inf
  %v2981 = vrot.slane %v2980, 4
  %v2982 = vmax.f32 %v2980, %v2981
  %v2983 = vrot.slane %v2982, 2
  %v2984 = vmax.f32 %v2982, %v2983
  %v2985 = vrot.slane %v2984, 1
  %v2986 = vmax.f32 %v2984, %v2985
  %v2987 = vsel %vm2664, %v1663, -inf
  %v2988 = vrot.slane %v2987, 4
  %v2989 = vmax.f32 %v2987, %v2988
  %v2990 = vrot.slane %v2989, 2
  %v2991 = vmax.f32 %v2989, %v2990
  %v2992 = vrot.slane %v2991, 1
  %v2993 = vmax.f32 %v2991, %v2992
  %v2994 = vsel %vm2664, %v2175, -inf
  %v2995 = vrot.slane %v2994, 4
  %v2996 = vmax.f32 %v2994, %v2995
  %v2997 = vrot.slane %v2996, 2
  %v2998 = vmax.f32 %v2996, %v2997
  %v2999 = vrot.slane %v2998, 1
  %v3000 = vmax.f32 %v2998, %v2999
  %v3001 = vsel %vm2664, %v1664, -inf
  %v3002 = vrot.slane %v3001, 4
  %v3003 = vmax.f32 %v3001, %v3002
  %v3004 = vrot.slane %v3003, 2
  %v3005 = vmax.f32 %v3003, %v3004
  %v3006 = vrot.slane %v3005, 1
  %v3007 = vmax.f32 %v3005, %v3006
  %v3008 = vsel %vm2664, %v2176, -inf
  %v3009 = vrot.slane %v3008, 4
  %v3010 = vmax.f32 %v3008, %v3009
  %v3011 = vrot.slane %v3010, 2
  %v3012 = vmax.f32 %v3010, %v3011
  %v3013 = vrot.slane %v3012, 1
  %v3014 = vmax.f32 %v3012, %v3013
  %v3015 = vsel %vm2664, %v1665, -inf
  %v3016 = vrot.slane %v3015, 4
  %v3017 = vmax.f32 %v3015, %v3016
  %v3018 = vrot.slane %v3017, 2
  %v3019 = vmax.f32 %v3017, %v3018
  %v3020 = vrot.slane %v3019, 1
  %v3021 = vmax.f32 %v3019, %v3020
  %v3022 = vsel %vm2664, %v2177, -inf
  %v3023 = vrot.slane %v3022, 4
  %v3024 = vmax.f32 %v3022, %v3023
  %v3025 = vrot.slane %v3024, 2
  %v3026 = vmax.f32 %v3024, %v3025
  %v3027 = vrot.slane %v3026, 1
  %v3028 = vmax.f32 %v3026, %v3027
  %v3029 = vsel %vm2664, %v1666, -inf
  %v3030 = vrot.slane %v3029, 4
  %v3031 = vmax.f32 %v3029, %v3030
  %v3032 = vrot.slane %v3031, 2
  %v3033 = vmax.f32 %v3031, %v3032
  %v3034 = vrot.slane %v3033, 1
  %v3035 = vmax.f32 %v3033, %v3034
  %v3036 = vsel %vm2664, %v2178, -inf
  %v3037 = vrot.slane %v3036, 4
  %v3038 = vmax.f32 %v3036, %v3037
  %v3039 = vrot.slane %v3038, 2
  %v3040 = vmax.f32 %v3038, %v3039
  %v3041 = vrot.slane %v3040, 1
  %v3042 = vmax.f32 %v3040, %v3041
  %v3043 = vsel %vm2664, %v1667, -inf
  %v3044 = vrot.slane %v3043, 4
  %v3045 = vmax.f32 %v3043, %v3044
  %v3046 = vrot.slane %v3045, 2
  %v3047 = vmax.f32 %v3045, %v3046
  %v3048 = vrot.slane %v3047, 1
  %v3049 = vmax.f32 %v3047, %v3048
  %v3050 = vsel %vm2664, %v2179, -inf
  %v3051 = vrot.slane %v3050, 4
  %v3052 = vmax.f32 %v3050, %v3051
  %v3053 = vrot.slane %v3052, 2
  %v3054 = vmax.f32 %v3052, %v3053
  %v3055 = vrot.slane %v3054, 1
  %v3056 = vmax.f32 %v3054, %v3055
  %v3057 = vsel %vm2664, %v1668, -inf
  %v3058 = vrot.slane %v3057, 4
  %v3059 = vmax.f32 %v3057, %v3058
  %v3060 = vrot.slane %v3059, 2
  %v3061 = vmax.f32 %v3059, %v3060
  %v3062 = vrot.slane %v3061, 1
  %v3063 = vmax.f32 %v3061, %v3062
  %v3064 = vsel %vm2664, %v2180, -inf
  %v3065 = vrot.slane %v3064, 4
  %v3066 = vmax.f32 %v3064, %v3065
  %v3067 = vrot.slane %v3066, 2
  %v3068 = vmax.f32 %v3066, %v3067
  %v3069 = vrot.slane %v3068, 1
  %v3070 = vmax.f32 %v3068, %v3069
  %v3071 = vsel %vm2664, %v1669, -inf
  %v3072 = vrot.slane %v3071, 4
  %v3073 = vmax.f32 %v3071, %v3072
  %v3074 = vrot.slane %v3073, 2
  %v3075 = vmax.f32 %v3073, %v3074
  %v3076 = vrot.slane %v3075, 1
  %v3077 = vmax.f32 %v3075, %v3076
  %v3078 = vsel %vm2664, %v2181, -inf
  %v3079 = vrot.slane %v3078, 4
  %v3080 = vmax.f32 %v3078, %v3079
  %v3081 = vrot.slane %v3080, 2
  %v3082 = vmax.f32 %v3080, %v3081
  %v3083 = vrot.slane %v3082, 1
  %v3084 = vmax.f32 %v3082, %v3083
  %v3085 = vsel %vm2664, %v1670, -inf
  %v3086 = vrot.slane %v3085, 4
  %v3087 = vmax.f32 %v3085, %v3086
  %v3088 = vrot.slane %v3087, 2
  %v3089 = vmax.f32 %v3087, %v3088
  %v3090 = vrot.slane %v3089, 1
  %v3091 = vmax.f32 %v3089, %v3090
  %v3092 = vsel %vm2664, %v2182, -inf
  %v3093 = vrot.slane %v3092, 4
  %v3094 = vmax.f32 %v3092, %v3093
  %v3095 = vrot.slane %v3094, 2
  %v3096 = vmax.f32 %v3094, %v3095
  %v3097 = vrot.slane %v3096, 1
  %v3098 = vmax.f32 %v3096, %v3097
  %v3099 = vsel %vm2664, %v1671, -inf
  %v3100 = vrot.slane %v3099, 4
  %v3101 = vmax.f32 %v3099, %v3100
  %v3102 = vrot.slane %v3101, 2
  %v3103 = vmax.f32 %v3101, %v3102
  %v3104 = vrot.slane %v3103, 1
  %v3105 = vmax.f32 %v3103, %v3104
  %v3106 = vsel %vm2664, %v2183, -inf
  %v3107 = vrot.slane %v3106, 4
  %v3108 = vmax.f32 %v3106, %v3107
  %v3109 = vrot.slane %v3108, 2
  %v3110 = vmax.f32 %v3108, %v3109
  %v3111 = vrot.slane %v3110, 1
  %v3112 = vmax.f32 %v3110, %v3111
  %v3113 = vsel %vm2664, %v1672, -inf
  %v3114 = vrot.slane %v3113, 4
  %v3115 = vmax.f32 %v3113, %v3114
  %v3116 = vrot.slane %v3115, 2
  %v3117 = vmax.f32 %v3115, %v3116
  %v3118 = vrot.slane %v3117, 1
  %v3119 = vmax.f32 %v3117, %v3118
  %v3120 = vsel %vm2664, %v2184, -inf
  %v3121 = vrot.slane %v3120, 4
  %v3122 = vmax.f32 %v3120, %v3121
  %v3123 = vrot.slane %v3122, 2
  %v3124 = vmax.f32 %v3122, %v3123
  %v3125 = vrot.slane %v3124, 1
  %v3126 = vmax.f32 %v3124, %v3125
  %v3127 = vsel %vm2664, %v1673, -inf
  %v3128 = vrot.slane %v3127, 4
  %v3129 = vmax.f32 %v3127, %v3128
  %v3130 = vrot.slane %v3129, 2
  %v3131 = vmax.f32 %v3129, %v3130
  %v3132 = vrot.slane %v3131, 1
  %v3133 = vmax.f32 %v3131, %v3132
  %v3134 = vsel %vm2664, %v2185, -inf
  %v3135 = vrot.slane %v3134, 4
  %v3136 = vmax.f32 %v3134, %v3135
  %v3137 = vrot.slane %v3136, 2
  %v3138 = vmax.f32 %v3136, %v3137
  %v3139 = vrot.slane %v3138, 1
  %v3140 = vmax.f32 %v3138, %v3139
  %v3141 = vsel %vm2664, %v1674, -inf
  %v3142 = vrot.slane %v3141, 4
  %v3143 = vmax.f32 %v3141, %v3142
  %v3144 = vrot.slane %v3143, 2
  %v3145 = vmax.f32 %v3143, %v3144
  %v3146 = vrot.slane %v3145, 1
  %v3147 = vmax.f32 %v3145, %v3146
  %v3148 = vsel %vm2664, %v2186, -inf
  %v3149 = vrot.slane %v3148, 4
  %v3150 = vmax.f32 %v3148, %v3149
  %v3151 = vrot.slane %v3150, 2
  %v3152 = vmax.f32 %v3150, %v3151
  %v3153 = vrot.slane %v3152, 1
  %v3154 = vmax.f32 %v3152, %v3153
  %v3155 = vsel %vm2664, %v1675, -inf
  %v3156 = vrot.slane %v3155, 4
  %v3157 = vmax.f32 %v3155, %v3156
  %v3158 = vrot.slane %v3157, 2
  %v3159 = vmax.f32 %v3157, %v3158
  %v3160 = vrot.slane %v3159, 1
  %v3161 = vmax.f32 %v3159, %v3160
  %v3162 = vsel %vm2664, %v2187, -inf
  %v3163 = vrot.slane %v3162, 4
  %v3164 = vmax.f32 %v3162, %v3163
  %v3165 = vrot.slane %v3164, 2
  %v3166 = vmax.f32 %v3164, %v3165
  %v3167 = vrot.slane %v3166, 1
  %v3168 = vmax.f32 %v3166, %v3167
  %v3169 = vsel %vm2664, %v1676, -inf
  %v3170 = vrot.slane %v3169, 4
  %v3171 = vmax.f32 %v3169, %v3170
  %v3172 = vrot.slane %v3171, 2
  %v3173 = vmax.f32 %v3171, %v3172
  %v3174 = vrot.slane %v3173, 1
  %v3175 = vmax.f32 %v3173, %v3174
  %v3176 = vsel %vm2664, %v2188, -inf
  %v3177 = vrot.slane %v3176, 4
  %v3178 = vmax.f32 %v3176, %v3177
  %v3179 = vrot.slane %v3178, 2
  %v3180 = vmax.f32 %v3178, %v3179
  %v3181 = vrot.slane %v3180, 1
  %v3182 = vmax.f32 %v3180, %v3181
  %v3183 = vsel %vm2664, %v1677, -inf
  %v3184 = vrot.slane %v3183, 4
  %v3185 = vmax.f32 %v3183, %v3184
  %v3186 = vrot.slane %v3185, 2
  %v3187 = vmax.f32 %v3185, %v3186
  %v3188 = vrot.slane %v3187, 1
  %v3189 = vmax.f32 %v3187, %v3188
  %v3190 = vsel %vm2664, %v2189, -inf
  %v3191 = vrot.slane %v3190, 4
  %v3192 = vmax.f32 %v3190, %v3191
  %v3193 = vrot.slane %v3192, 2
  %v3194 = vmax.f32 %v3192, %v3193
  %v3195 = vrot.slane %v3194, 1
  %v3196 = vmax.f32 %v3194, %v3195
  %v3197 = vsel %vm2664, %v1678, -inf
  %v3198 = vrot.slane %v3197, 4
  %v3199 = vmax.f32 %v3197, %v3198
  %v3200 = vrot.slane %v3199, 2
  %v3201 = vmax.f32 %v3199, %v3200
  %v3202 = vrot.slane %v3201, 1
  %v3203 = vmax.f32 %v3201, %v3202
  %v3204 = vsel %vm2664, %v2190, -inf
  %v3205 = vrot.slane %v3204, 4
  %v3206 = vmax.f32 %v3204, %v3205
  %v3207 = vrot.slane %v3206, 2
  %v3208 = vmax.f32 %v3206, %v3207
  %v3209 = vrot.slane %v3208, 1
  %v3210 = vmax.f32 %v3208, %v3209
  %v3211 = vsel %vm2664, %v1679, -inf
  %v3212 = vrot.slane %v3211, 4
  %v3213 = vmax.f32 %v3211, %v3212
  %v3214 = vrot.slane %v3213, 2
  %v3215 = vmax.f32 %v3213, %v3214
  %v3216 = vrot.slane %v3215, 1
  %v3217 = vmax.f32 %v3215, %v3216
  %v3218 = vsel %vm2664, %v2191, -inf
  %v3219 = vrot.slane %v3218, 4
  %v3220 = vmax.f32 %v3218, %v3219
  %v3221 = vrot.slane %v3220, 2
  %v3222 = vmax.f32 %v3220, %v3221
  %v3223 = vrot.slane %v3222, 1
  %v3224 = vmax.f32 %v3222, %v3223
  %v3225 = vsel %vm2664, %v1680, -inf
  %v3226 = vrot.slane %v3225, 4
  %v3227 = vmax.f32 %v3225, %v3226
  %v3228 = vrot.slane %v3227, 2
  %v3229 = vmax.f32 %v3227, %v3228
  %v3230 = vrot.slane %v3229, 1
  %v3231 = vmax.f32 %v3229, %v3230
  %v3232 = vsel %vm2664, %v2192, -inf
  %v3233 = vrot.slane %v3232, 4
  %v3234 = vmax.f32 %v3232, %v3233
  %v3235 = vrot.slane %v3234, 2
  %v3236 = vmax.f32 %v3234, %v3235
  %v3237 = vrot.slane %v3236, 1
  %v3238 = vmax.f32 %v3236, %v3237
  %v3239 = vsel %vm2664, %v1681, -inf
  %v3240 = vrot.slane %v3239, 4
  %v3241 = vmax.f32 %v3239, %v3240
  %v3242 = vrot.slane %v3241, 2
  %v3243 = vmax.f32 %v3241, %v3242
  %v3244 = vrot.slane %v3243, 1
  %v3245 = vmax.f32 %v3243, %v3244
  %v3246 = vsel %vm2664, %v2193, -inf
  %v3247 = vrot.slane %v3246, 4
  %v3248 = vmax.f32 %v3246, %v3247
  %v3249 = vrot.slane %v3248, 2
  %v3250 = vmax.f32 %v3248, %v3249
  %v3251 = vrot.slane %v3250, 1
  %v3252 = vmax.f32 %v3250, %v3251
  %v3253 = vsel %vm2664, %v1682, -inf
  %v3254 = vrot.slane %v3253, 4
  %v3255 = vmax.f32 %v3253, %v3254
  %v3256 = vrot.slane %v3255, 2
  %v3257 = vmax.f32 %v3255, %v3256
  %v3258 = vrot.slane %v3257, 1
  %v3259 = vmax.f32 %v3257, %v3258
  %v3260 = vsel %vm2664, %v2194, -inf
  %v3261 = vrot.slane %v3260, 4
  %v3262 = vmax.f32 %v3260, %v3261
  %v3263 = vrot.slane %v3262, 2
  %v3264 = vmax.f32 %v3262, %v3263
  %v3265 = vrot.slane %v3264, 1
  %v3266 = vmax.f32 %v3264, %v3265
  %v3267 = vsel %vm2664, %v1683, -inf
  %v3268 = vrot.slane %v3267, 4
  %v3269 = vmax.f32 %v3267, %v3268
  %v3270 = vrot.slane %v3269, 2
  %v3271 = vmax.f32 %v3269, %v3270
  %v3272 = vrot.slane %v3271, 1
  %v3273 = vmax.f32 %v3271, %v3272
  %v3274 = vsel %vm2664, %v2195, -inf
  %v3275 = vrot.slane %v3274, 4
  %v3276 = vmax.f32 %v3274, %v3275
  %v3277 = vrot.slane %v3276, 2
  %v3278 = vmax.f32 %v3276, %v3277
  %v3279 = vrot.slane %v3278, 1
  %v3280 = vmax.f32 %v3278, %v3279
  %v3281 = vsel %vm2664, %v1684, -inf
  %v3282 = vrot.slane %v3281, 4
  %v3283 = vmax.f32 %v3281, %v3282
  %v3284 = vrot.slane %v3283, 2
  %v3285 = vmax.f32 %v3283, %v3284
  %v3286 = vrot.slane %v3285, 1
  %v3287 = vmax.f32 %v3285, %v3286
  %v3288 = vsel %vm2664, %v2196, -inf
  %v3289 = vrot.slane %v3288, 4
  %v3290 = vmax.f32 %v3288, %v3289
  %v3291 = vrot.slane %v3290, 2
  %v3292 = vmax.f32 %v3290, %v3291
  %v3293 = vrot.slane %v3292, 1
  %v3294 = vmax.f32 %v3292, %v3293
  %v3295 = vsel %vm2664, %v1685, -inf
  %v3296 = vrot.slane %v3295, 4
  %v3297 = vmax.f32 %v3295, %v3296
  %v3298 = vrot.slane %v3297, 2
  %v3299 = vmax.f32 %v3297, %v3298
  %v3300 = vrot.slane %v3299, 1
  %v3301 = vmax.f32 %v3299, %v3300
  %v3302 = vsel %vm2664, %v2197, -inf
  %v3303 = vrot.slane %v3302, 4
  %v3304 = vmax.f32 %v3302, %v3303
  %v3305 = vrot.slane %v3304, 2
  %v3306 = vmax.f32 %v3304, %v3305
  %v3307 = vrot.slane %v3306, 1
  %v3308 = vmax.f32 %v3306, %v3307
  %v3309 = vsel %vm2664, %v1686, -inf
  %v3310 = vrot.slane %v3309, 4
  %v3311 = vmax.f32 %v3309, %v3310
  %v3312 = vrot.slane %v3311, 2
  %v3313 = vmax.f32 %v3311, %v3312
  %v3314 = vrot.slane %v3313, 1
  %v3315 = vmax.f32 %v3313, %v3314
  %v3316 = vsel %vm2664, %v2198, -inf
  %v3317 = vrot.slane %v3316, 4
  %v3318 = vmax.f32 %v3316, %v3317
  %v3319 = vrot.slane %v3318, 2
  %v3320 = vmax.f32 %v3318, %v3319
  %v3321 = vrot.slane %v3320, 1
  %v3322 = vmax.f32 %v3320, %v3321
  %v3323 = vsel %vm2664, %v1687, -inf
  %v3324 = vrot.slane %v3323, 4
  %v3325 = vmax.f32 %v3323, %v3324
  %v3326 = vrot.slane %v3325, 2
  %v3327 = vmax.f32 %v3325, %v3326
  %v3328 = vrot.slane %v3327, 1
  %v3329 = vmax.f32 %v3327, %v3328
  %v3330 = vsel %vm2664, %v2199, -inf
  %v3331 = vrot.slane %v3330, 4
  %v3332 = vmax.f32 %v3330, %v3331
  %v3333 = vrot.slane %v3332, 2
  %v3334 = vmax.f32 %v3332, %v3333
  %v3335 = vrot.slane %v3334, 1
  %v3336 = vmax.f32 %v3334, %v3335
  %v3337 = vsel %vm2664, %v1688, -inf
  %v3338 = vrot.slane %v3337, 4
  %v3339 = vmax.f32 %v3337, %v3338
  %v3340 = vrot.slane %v3339, 2
  %v3341 = vmax.f32 %v3339, %v3340
  %v3342 = vrot.slane %v3341, 1
  %v3343 = vmax.f32 %v3341, %v3342
  %v3344 = vsel %vm2664, %v2200, -inf
  %v3345 = vrot.slane %v3344, 4
  %v3346 = vmax.f32 %v3344, %v3345
  %v3347 = vrot.slane %v3346, 2
  %v3348 = vmax.f32 %v3346, %v3347
  %v3349 = vrot.slane %v3348, 1
  %v3350 = vmax.f32 %v3348, %v3349
  %v3351 = vsel %vm2664, %v1689, -inf
  %v3352 = vrot.slane %v3351, 4
  %v3353 = vmax.f32 %v3351, %v3352
  %v3354 = vrot.slane %v3353, 2
  %v3355 = vmax.f32 %v3353, %v3354
  %v3356 = vrot.slane %v3355, 1
  %v3357 = vmax.f32 %v3355, %v3356
  %v3358 = vsel %vm2664, %v2201, -inf
  %v3359 = vrot.slane %v3358, 4
  %v3360 = vmax.f32 %v3358, %v3359
  %v3361 = vrot.slane %v3360, 2
  %v3362 = vmax.f32 %v3360, %v3361
  %v3363 = vrot.slane %v3362, 1
  %v3364 = vmax.f32 %v3362, %v3363
  %v3365 = vsel %vm2664, %v1690, -inf
  %v3366 = vrot.slane %v3365, 4
  %v3367 = vmax.f32 %v3365, %v3366
  %v3368 = vrot.slane %v3367, 2
  %v3369 = vmax.f32 %v3367, %v3368
  %v3370 = vrot.slane %v3369, 1
  %v3371 = vmax.f32 %v3369, %v3370
  %v3372 = vsel %vm2664, %v2202, -inf
  %v3373 = vrot.slane %v3372, 4
  %v3374 = vmax.f32 %v3372, %v3373
  %v3375 = vrot.slane %v3374, 2
  %v3376 = vmax.f32 %v3374, %v3375
  %v3377 = vrot.slane %v3376, 1
  %v3378 = vmax.f32 %v3376, %v3377
  %v3379 = vsel %vm2664, %v1691, -inf
  %v3380 = vrot.slane %v3379, 4
  %v3381 = vmax.f32 %v3379, %v3380
  %v3382 = vrot.slane %v3381, 2
  %v3383 = vmax.f32 %v3381, %v3382
  %v3384 = vrot.slane %v3383, 1
  %v3385 = vmax.f32 %v3383, %v3384
  %v3386 = vsel %vm2664, %v2203, -inf
  %v3387 = vrot.slane %v3386, 4
  %v3388 = vmax.f32 %v3386, %v3387
  %v3389 = vrot.slane %v3388, 2
  %v3390 = vmax.f32 %v3388, %v3389
  %v3391 = vrot.slane %v3390, 1
  %v3392 = vmax.f32 %v3390, %v3391
  %v3393 = vsel %vm2664, %v1692, -inf
  %v3394 = vrot.slane %v3393, 4
  %v3395 = vmax.f32 %v3393, %v3394
  %v3396 = vrot.slane %v3395, 2
  %v3397 = vmax.f32 %v3395, %v3396
  %v3398 = vrot.slane %v3397, 1
  %v3399 = vmax.f32 %v3397, %v3398
  %v3400 = vsel %vm2664, %v2204, -inf
  %v3401 = vrot.slane %v3400, 4
  %v3402 = vmax.f32 %v3400, %v3401
  %v3403 = vrot.slane %v3402, 2
  %v3404 = vmax.f32 %v3402, %v3403
  %v3405 = vrot.slane %v3404, 1
  %v3406 = vmax.f32 %v3404, %v3405
  %v3407 = vsel %vm2664, %v1693, -inf
  %v3408 = vrot.slane %v3407, 4
  %v3409 = vmax.f32 %v3407, %v3408
  %v3410 = vrot.slane %v3409, 2
  %v3411 = vmax.f32 %v3409, %v3410
  %v3412 = vrot.slane %v3411, 1
  %v3413 = vmax.f32 %v3411, %v3412
  %v3414 = vsel %vm2664, %v2205, -inf
  %v3415 = vrot.slane %v3414, 4
  %v3416 = vmax.f32 %v3414, %v3415
  %v3417 = vrot.slane %v3416, 2
  %v3418 = vmax.f32 %v3416, %v3417
  %v3419 = vrot.slane %v3418, 1
  %v3420 = vmax.f32 %v3418, %v3419
  %v3421 = vsel %vm2664, %v1694, -inf
  %v3422 = vrot.slane %v3421, 4
  %v3423 = vmax.f32 %v3421, %v3422
  %v3424 = vrot.slane %v3423, 2
  %v3425 = vmax.f32 %v3423, %v3424
  %v3426 = vrot.slane %v3425, 1
  %v3427 = vmax.f32 %v3425, %v3426
  %v3428 = vsel %vm2664, %v2206, -inf
  %v3429 = vrot.slane %v3428, 4
  %v3430 = vmax.f32 %v3428, %v3429
  %v3431 = vrot.slane %v3430, 2
  %v3432 = vmax.f32 %v3430, %v3431
  %v3433 = vrot.slane %v3432, 1
  %v3434 = vmax.f32 %v3432, %v3433
  %v3435 = vsel %vm2664, %v1695, -inf
  %v3436 = vrot.slane %v3435, 4
  %v3437 = vmax.f32 %v3435, %v3436
  %v3438 = vrot.slane %v3437, 2
  %v3439 = vmax.f32 %v3437, %v3438
  %v3440 = vrot.slane %v3439, 1
  %v3441 = vmax.f32 %v3439, %v3440
  %v3442 = vsel %vm2664, %v2207, -inf
  %v3443 = vrot.slane %v3442, 4
  %v3444 = vmax.f32 %v3442, %v3443
  %v3445 = vrot.slane %v3444, 2
  %v3446 = vmax.f32 %v3444, %v3445
  %v3447 = vrot.slane %v3446, 1
  %v3448 = vmax.f32 %v3446, %v3447
  %v3449 = vsel %vm2664, %v1696, -inf
  %v3450 = vrot.slane %v3449, 4
  %v3451 = vmax.f32 %v3449, %v3450
  %v3452 = vrot.slane %v3451, 2
  %v3453 = vmax.f32 %v3451, %v3452
  %v3454 = vrot.slane %v3453, 1
  %v3455 = vmax.f32 %v3453, %v3454
  %v3456 = vsel %vm2664, %v2208, -inf
  %v3457 = vrot.slane %v3456, 4
  %v3458 = vmax.f32 %v3456, %v3457
  %v3459 = vrot.slane %v3458, 2
  %v3460 = vmax.f32 %v3458, %v3459
  %v3461 = vrot.slane %v3460, 1
  %v3462 = vmax.f32 %v3460, %v3461
  %v3463 = vsel %vm2664, %v1697, -inf
  %v3464 = vrot.slane %v3463, 4
  %v3465 = vmax.f32 %v3463, %v3464
  %v3466 = vrot.slane %v3465, 2
  %v3467 = vmax.f32 %v3465, %v3466
  %v3468 = vrot.slane %v3467, 1
  %v3469 = vmax.f32 %v3467, %v3468
  %v3470 = vsel %vm2664, %v2209, -inf
  %v3471 = vrot.slane %v3470, 4
  %v3472 = vmax.f32 %v3470, %v3471
  %v3473 = vrot.slane %v3472, 2
  %v3474 = vmax.f32 %v3472, %v3473
  %v3475 = vrot.slane %v3474, 1
  %v3476 = vmax.f32 %v3474, %v3475
  %v3477 = vsel %vm2664, %v1698, -inf
  %v3478 = vrot.slane %v3477, 4
  %v3479 = vmax.f32 %v3477, %v3478
  %v3480 = vrot.slane %v3479, 2
  %v3481 = vmax.f32 %v3479, %v3480
  %v3482 = vrot.slane %v3481, 1
  %v3483 = vmax.f32 %v3481, %v3482
  %v3484 = vsel %vm2664, %v2210, -inf
  %v3485 = vrot.slane %v3484, 4
  %v3486 = vmax.f32 %v3484, %v3485
  %v3487 = vrot.slane %v3486, 2
  %v3488 = vmax.f32 %v3486, %v3487
  %v3489 = vrot.slane %v3488, 1
  %v3490 = vmax.f32 %v3488, %v3489
  %v3491 = vsel %vm2664, %v1699, -inf
  %v3492 = vrot.slane %v3491, 4
  %v3493 = vmax.f32 %v3491, %v3492
  %v3494 = vrot.slane %v3493, 2
  %v3495 = vmax.f32 %v3493, %v3494
  %v3496 = vrot.slane %v3495, 1
  %v3497 = vmax.f32 %v3495, %v3496
  %v3498 = vsel %vm2664, %v2211, -inf
  %v3499 = vrot.slane %v3498, 4
  %v3500 = vmax.f32 %v3498, %v3499
  %v3501 = vrot.slane %v3500, 2
  %v3502 = vmax.f32 %v3500, %v3501
  %v3503 = vrot.slane %v3502, 1
  %v3504 = vmax.f32 %v3502, %v3503
  %v3505 = vsel %vm2664, %v1700, -inf
  %v3506 = vrot.slane %v3505, 4
  %v3507 = vmax.f32 %v3505, %v3506
  %v3508 = vrot.slane %v3507, 2
  %v3509 = vmax.f32 %v3507, %v3508
  %v3510 = vrot.slane %v3509, 1
  %v3511 = vmax.f32 %v3509, %v3510
  %v3512 = vsel %vm2664, %v2212, -inf
  %v3513 = vrot.slane %v3512, 4
  %v3514 = vmax.f32 %v3512, %v3513
  %v3515 = vrot.slane %v3514, 2
  %v3516 = vmax.f32 %v3514, %v3515
  %v3517 = vrot.slane %v3516, 1
  %v3518 = vmax.f32 %v3516, %v3517
  %v3519 = vsel %vm2664, %v1701, -inf
  %v3520 = vrot.slane %v3519, 4
  %v3521 = vmax.f32 %v3519, %v3520
  %v3522 = vrot.slane %v3521, 2
  %v3523 = vmax.f32 %v3521, %v3522
  %v3524 = vrot.slane %v3523, 1
  %v3525 = vmax.f32 %v3523, %v3524
  %v3526 = vsel %vm2664, %v2213, -inf
  %v3527 = vrot.slane %v3526, 4
  %v3528 = vmax.f32 %v3526, %v3527
  %v3529 = vrot.slane %v3528, 2
  %v3530 = vmax.f32 %v3528, %v3529
  %v3531 = vrot.slane %v3530, 1
  %v3532 = vmax.f32 %v3530, %v3531
  %v3533 = vsel %vm2664, %v1702, -inf
  %v3534 = vrot.slane %v3533, 4
  %v3535 = vmax.f32 %v3533, %v3534
  %v3536 = vrot.slane %v3535, 2
  %v3537 = vmax.f32 %v3535, %v3536
  %v3538 = vrot.slane %v3537, 1
  %v3539 = vmax.f32 %v3537, %v3538
  %v3540 = vsel %vm2664, %v2214, -inf
  %v3541 = vrot.slane %v3540, 4
  %v3542 = vmax.f32 %v3540, %v3541
  %v3543 = vrot.slane %v3542, 2
  %v3544 = vmax.f32 %v3542, %v3543
  %v3545 = vrot.slane %v3544, 1
  %v3546 = vmax.f32 %v3544, %v3545
  %v3547 = vsel %vm2664, %v1703, -inf
  %v3548 = vrot.slane %v3547, 4
  %v3549 = vmax.f32 %v3547, %v3548
  %v3550 = vrot.slane %v3549, 2
  %v3551 = vmax.f32 %v3549, %v3550
  %v3552 = vrot.slane %v3551, 1
  %v3553 = vmax.f32 %v3551, %v3552
  %v3554 = vsel %vm2664, %v2215, -inf
  %v3555 = vrot.slane %v3554, 4
  %v3556 = vmax.f32 %v3554, %v3555
  %v3557 = vrot.slane %v3556, 2
  %v3558 = vmax.f32 %v3556, %v3557
  %v3559 = vrot.slane %v3558, 1
  %v3560 = vmax.f32 %v3558, %v3559
  %v3561 = vsel %vm2664, %v1704, -inf
  %v3562 = vrot.slane %v3561, 4
  %v3563 = vmax.f32 %v3561, %v3562
  %v3564 = vrot.slane %v3563, 2
  %v3565 = vmax.f32 %v3563, %v3564
  %v3566 = vrot.slane %v3565, 1
  %v3567 = vmax.f32 %v3565, %v3566
  %v3568 = vsel %vm2664, %v2216, -inf
  %v3569 = vrot.slane %v3568, 4
  %v3570 = vmax.f32 %v3568, %v3569
  %v3571 = vrot.slane %v3570, 2
  %v3572 = vmax.f32 %v3570, %v3571
  %v3573 = vrot.slane %v3572, 1
  %v3574 = vmax.f32 %v3572, %v3573
  %v3575 = vsel %vm2664, %v1705, -inf
  %v3576 = vrot.slane %v3575, 4
  %v3577 = vmax.f32 %v3575, %v3576
  %v3578 = vrot.slane %v3577, 2
  %v3579 = vmax.f32 %v3577, %v3578
  %v3580 = vrot.slane %v3579, 1
  %v3581 = vmax.f32 %v3579, %v3580
  %v3582 = vsel %vm2664, %v2217, -inf
  %v3583 = vrot.slane %v3582, 4
  %v3584 = vmax.f32 %v3582, %v3583
  %v3585 = vrot.slane %v3584, 2
  %v3586 = vmax.f32 %v3584, %v3585
  %v3587 = vrot.slane %v3586, 1
  %v3588 = vmax.f32 %v3586, %v3587
  %v3589 = vsel %vm2664, %v1706, -inf
  %v3590 = vrot.slane %v3589, 4
  %v3591 = vmax.f32 %v3589, %v3590
  %v3592 = vrot.slane %v3591, 2
  %v3593 = vmax.f32 %v3591, %v3592
  %v3594 = vrot.slane %v3593, 1
  %v3595 = vmax.f32 %v3593, %v3594
  %v3596 = vsel %vm2664, %v2218, -inf
  %v3597 = vrot.slane %v3596, 4
  %v3598 = vmax.f32 %v3596, %v3597
  %v3599 = vrot.slane %v3598, 2
  %v3600 = vmax.f32 %v3598, %v3599
  %v3601 = vrot.slane %v3600, 1
  %v3602 = vmax.f32 %v3600, %v3601
  %v3603 = vsel %vm2664, %v1707, -inf
  %v3604 = vrot.slane %v3603, 4
  %v3605 = vmax.f32 %v3603, %v3604
  %v3606 = vrot.slane %v3605, 2
  %v3607 = vmax.f32 %v3605, %v3606
  %v3608 = vrot.slane %v3607, 1
  %v3609 = vmax.f32 %v3607, %v3608
  %v3610 = vsel %vm2664, %v2219, -inf
  %v3611 = vrot.slane %v3610, 4
  %v3612 = vmax.f32 %v3610, %v3611
  %v3613 = vrot.slane %v3612, 2
  %v3614 = vmax.f32 %v3612, %v3613
  %v3615 = vrot.slane %v3614, 1
  %v3616 = vmax.f32 %v3614, %v3615
  %v3617 = vsel %vm2664, %v1708, -inf
  %v3618 = vrot.slane %v3617, 4
  %v3619 = vmax.f32 %v3617, %v3618
  %v3620 = vrot.slane %v3619, 2
  %v3621 = vmax.f32 %v3619, %v3620
  %v3622 = vrot.slane %v3621, 1
  %v3623 = vmax.f32 %v3621, %v3622
  %v3624 = vsel %vm2664, %v2220, -inf
  %v3625 = vrot.slane %v3624, 4
  %v3626 = vmax.f32 %v3624, %v3625
  %v3627 = vrot.slane %v3626, 2
  %v3628 = vmax.f32 %v3626, %v3627
  %v3629 = vrot.slane %v3628, 1
  %v3630 = vmax.f32 %v3628, %v3629
  %v3631 = vsel %vm2664, %v1709, -inf
  %v3632 = vrot.slane %v3631, 4
  %v3633 = vmax.f32 %v3631, %v3632
  %v3634 = vrot.slane %v3633, 2
  %v3635 = vmax.f32 %v3633, %v3634
  %v3636 = vrot.slane %v3635, 1
  %v3637 = vmax.f32 %v3635, %v3636
  %v3638 = vsel %vm2664, %v2221, -inf
  %v3639 = vrot.slane %v3638, 4
  %v3640 = vmax.f32 %v3638, %v3639
  %v3641 = vrot.slane %v3640, 2
  %v3642 = vmax.f32 %v3640, %v3641
  %v3643 = vrot.slane %v3642, 1
  %v3644 = vmax.f32 %v3642, %v3643
  %v3645 = vsel %vm2664, %v1710, -inf
  %v3646 = vrot.slane %v3645, 4
  %v3647 = vmax.f32 %v3645, %v3646
  %v3648 = vrot.slane %v3647, 2
  %v3649 = vmax.f32 %v3647, %v3648
  %v3650 = vrot.slane %v3649, 1
  %v3651 = vmax.f32 %v3649, %v3650
  %v3652 = vsel %vm2664, %v2222, -inf
  %v3653 = vrot.slane %v3652, 4
  %v3654 = vmax.f32 %v3652, %v3653
  %v3655 = vrot.slane %v3654, 2
  %v3656 = vmax.f32 %v3654, %v3655
  %v3657 = vrot.slane %v3656, 1
  %v3658 = vmax.f32 %v3656, %v3657
  %v3659 = vsel %vm2664, %v1711, -inf
  %v3660 = vrot.slane %v3659, 4
  %v3661 = vmax.f32 %v3659, %v3660
  %v3662 = vrot.slane %v3661, 2
  %v3663 = vmax.f32 %v3661, %v3662
  %v3664 = vrot.slane %v3663, 1
  %v3665 = vmax.f32 %v3663, %v3664
  %v3666 = vsel %vm2664, %v2223, -inf
  %v3667 = vrot.slane %v3666, 4
  %v3668 = vmax.f32 %v3666, %v3667
  %v3669 = vrot.slane %v3668, 2
  %v3670 = vmax.f32 %v3668, %v3669
  %v3671 = vrot.slane %v3670, 1
  %v3672 = vmax.f32 %v3670, %v3671
  %v3673 = vsel %vm2664, %v1712, -inf
  %v3674 = vrot.slane %v3673, 4
  %v3675 = vmax.f32 %v3673, %v3674
  %v3676 = vrot.slane %v3675, 2
  %v3677 = vmax.f32 %v3675, %v3676
  %v3678 = vrot.slane %v3677, 1
  %v3679 = vmax.f32 %v3677, %v3678
  %v3680 = vsel %vm2664, %v2224, -inf
  %v3681 = vrot.slane %v3680, 4
  %v3682 = vmax.f32 %v3680, %v3681
  %v3683 = vrot.slane %v3682, 2
  %v3684 = vmax.f32 %v3682, %v3683
  %v3685 = vrot.slane %v3684, 1
  %v3686 = vmax.f32 %v3684, %v3685
  %v3687 = vsel %vm2664, %v1713, -inf
  %v3688 = vrot.slane %v3687, 4
  %v3689 = vmax.f32 %v3687, %v3688
  %v3690 = vrot.slane %v3689, 2
  %v3691 = vmax.f32 %v3689, %v3690
  %v3692 = vrot.slane %v3691, 1
  %v3693 = vmax.f32 %v3691, %v3692
  %v3694 = vsel %vm2664, %v2225, -inf
  %v3695 = vrot.slane %v3694, 4
  %v3696 = vmax.f32 %v3694, %v3695
  %v3697 = vrot.slane %v3696, 2
  %v3698 = vmax.f32 %v3696, %v3697
  %v3699 = vrot.slane %v3698, 1
  %v3700 = vmax.f32 %v3698, %v3699
  %v3701 = vsel %vm2664, %v1714, -inf
  %v3702 = vrot.slane %v3701, 4
  %v3703 = vmax.f32 %v3701, %v3702
  %v3704 = vrot.slane %v3703, 2
  %v3705 = vmax.f32 %v3703, %v3704
  %v3706 = vrot.slane %v3705, 1
  %v3707 = vmax.f32 %v3705, %v3706
  %v3708 = vsel %vm2664, %v2226, -inf
  %v3709 = vrot.slane %v3708, 4
  %v3710 = vmax.f32 %v3708, %v3709
  %v3711 = vrot.slane %v3710, 2
  %v3712 = vmax.f32 %v3710, %v3711
  %v3713 = vrot.slane %v3712, 1
  %v3714 = vmax.f32 %v3712, %v3713
  %v3715 = vsel %vm2664, %v1715, -inf
  %v3716 = vrot.slane %v3715, 4
  %v3717 = vmax.f32 %v3715, %v3716
  %v3718 = vrot.slane %v3717, 2
  %v3719 = vmax.f32 %v3717, %v3718
  %v3720 = vrot.slane %v3719, 1
  %v3721 = vmax.f32 %v3719, %v3720
  %v3722 = vsel %vm2664, %v2227, -inf
  %v3723 = vrot.slane %v3722, 4
  %v3724 = vmax.f32 %v3722, %v3723
  %v3725 = vrot.slane %v3724, 2
  %v3726 = vmax.f32 %v3724, %v3725
  %v3727 = vrot.slane %v3726, 1
  %v3728 = vmax.f32 %v3726, %v3727
  %v3729 = vsel %vm2664, %v1716, -inf
  %v3730 = vrot.slane %v3729, 4
  %v3731 = vmax.f32 %v3729, %v3730
  %v3732 = vrot.slane %v3731, 2
  %v3733 = vmax.f32 %v3731, %v3732
  %v3734 = vrot.slane %v3733, 1
  %v3735 = vmax.f32 %v3733, %v3734
  %v3736 = vsel %vm2664, %v2228, -inf
  %v3737 = vrot.slane %v3736, 4
  %v3738 = vmax.f32 %v3736, %v3737
  %v3739 = vrot.slane %v3738, 2
  %v3740 = vmax.f32 %v3738, %v3739
  %v3741 = vrot.slane %v3740, 1
  %v3742 = vmax.f32 %v3740, %v3741
  %v3743 = vsel %vm2664, %v1717, -inf
  %v3744 = vrot.slane %v3743, 4
  %v3745 = vmax.f32 %v3743, %v3744
  %v3746 = vrot.slane %v3745, 2
  %v3747 = vmax.f32 %v3745, %v3746
  %v3748 = vrot.slane %v3747, 1
  %v3749 = vmax.f32 %v3747, %v3748
  %v3750 = vsel %vm2664, %v2229, -inf
  %v3751 = vrot.slane %v3750, 4
  %v3752 = vmax.f32 %v3750, %v3751
  %v3753 = vrot.slane %v3752, 2
  %v3754 = vmax.f32 %v3752, %v3753
  %v3755 = vrot.slane %v3754, 1
  %v3756 = vmax.f32 %v3754, %v3755
  %v3757 = vsel %vm2664, %v1718, -inf
  %v3758 = vrot.slane %v3757, 4
  %v3759 = vmax.f32 %v3757, %v3758
  %v3760 = vrot.slane %v3759, 2
  %v3761 = vmax.f32 %v3759, %v3760
  %v3762 = vrot.slane %v3761, 1
  %v3763 = vmax.f32 %v3761, %v3762
  %v3764 = vsel %vm2664, %v2230, -inf
  %v3765 = vrot.slane %v3764, 4
  %v3766 = vmax.f32 %v3764, %v3765
  %v3767 = vrot.slane %v3766, 2
  %v3768 = vmax.f32 %v3766, %v3767
  %v3769 = vrot.slane %v3768, 1
  %v3770 = vmax.f32 %v3768, %v3769
  %v3771 = vsel %vm2664, %v1719, -inf
  %v3772 = vrot.slane %v3771, 4
  %v3773 = vmax.f32 %v3771, %v3772
  %v3774 = vrot.slane %v3773, 2
  %v3775 = vmax.f32 %v3773, %v3774
  %v3776 = vrot.slane %v3775, 1
  %v3777 = vmax.f32 %v3775, %v3776
  %v3778 = vsel %vm2664, %v2231, -inf
  %v3779 = vrot.slane %v3778, 4
  %v3780 = vmax.f32 %v3778, %v3779
  %v3781 = vrot.slane %v3780, 2
  %v3782 = vmax.f32 %v3780, %v3781
  %v3783 = vrot.slane %v3782, 1
  %v3784 = vmax.f32 %v3782, %v3783
  %v3785 = vsel %vm2664, %v1720, -inf
  %v3786 = vrot.slane %v3785, 4
  %v3787 = vmax.f32 %v3785, %v3786
  %v3788 = vrot.slane %v3787, 2
  %v3789 = vmax.f32 %v3787, %v3788
  %v3790 = vrot.slane %v3789, 1
  %v3791 = vmax.f32 %v3789, %v3790
  %v3792 = vsel %vm2664, %v2232, -inf
  %v3793 = vrot.slane %v3792, 4
  %v3794 = vmax.f32 %v3792, %v3793
  %v3795 = vrot.slane %v3794, 2
  %v3796 = vmax.f32 %v3794, %v3795
  %v3797 = vrot.slane %v3796, 1
  %v3798 = vmax.f32 %v3796, %v3797
  %v3799 = vsel %vm2664, %v1721, -inf
  %v3800 = vrot.slane %v3799, 4
  %v3801 = vmax.f32 %v3799, %v3800
  %v3802 = vrot.slane %v3801, 2
  %v3803 = vmax.f32 %v3801, %v3802
  %v3804 = vrot.slane %v3803, 1
  %v3805 = vmax.f32 %v3803, %v3804
  %v3806 = vsel %vm2664, %v2233, -inf
  %v3807 = vrot.slane %v3806, 4
  %v3808 = vmax.f32 %v3806, %v3807
  %v3809 = vrot.slane %v3808, 2
  %v3810 = vmax.f32 %v3808, %v3809
  %v3811 = vrot.slane %v3810, 1
  %v3812 = vmax.f32 %v3810, %v3811
  %v3813 = vsel %vm2664, %v1722, -inf
  %v3814 = vrot.slane %v3813, 4
  %v3815 = vmax.f32 %v3813, %v3814
  %v3816 = vrot.slane %v3815, 2
  %v3817 = vmax.f32 %v3815, %v3816
  %v3818 = vrot.slane %v3817, 1
  %v3819 = vmax.f32 %v3817, %v3818
  %v3820 = vsel %vm2664, %v2234, -inf
  %v3821 = vrot.slane %v3820, 4
  %v3822 = vmax.f32 %v3820, %v3821
  %v3823 = vrot.slane %v3822, 2
  %v3824 = vmax.f32 %v3822, %v3823
  %v3825 = vrot.slane %v3824, 1
  %v3826 = vmax.f32 %v3824, %v3825
  %v3827 = vsel %vm2664, %v1723, -inf
  %v3828 = vrot.slane %v3827, 4
  %v3829 = vmax.f32 %v3827, %v3828
  %v3830 = vrot.slane %v3829, 2
  %v3831 = vmax.f32 %v3829, %v3830
  %v3832 = vrot.slane %v3831, 1
  %v3833 = vmax.f32 %v3831, %v3832
  %v3834 = vsel %vm2664, %v2235, -inf
  %v3835 = vrot.slane %v3834, 4
  %v3836 = vmax.f32 %v3834, %v3835
  %v3837 = vrot.slane %v3836, 2
  %v3838 = vmax.f32 %v3836, %v3837
  %v3839 = vrot.slane %v3838, 1
  %v3840 = vmax.f32 %v3838, %v3839
  %v3841 = vsel %vm2664, %v1724, -inf
  %v3842 = vrot.slane %v3841, 4
  %v3843 = vmax.f32 %v3841, %v3842
  %v3844 = vrot.slane %v3843, 2
  %v3845 = vmax.f32 %v3843, %v3844
  %v3846 = vrot.slane %v3845, 1
  %v3847 = vmax.f32 %v3845, %v3846
  %v3848 = vsel %vm2664, %v2236, -inf
  %v3849 = vrot.slane %v3848, 4
  %v3850 = vmax.f32 %v3848, %v3849
  %v3851 = vrot.slane %v3850, 2
  %v3852 = vmax.f32 %v3850, %v3851
  %v3853 = vrot.slane %v3852, 1
  %v3854 = vmax.f32 %v3852, %v3853
  %v3855 = vsel %vm2664, %v1725, -inf
  %v3856 = vrot.slane %v3855, 4
  %v3857 = vmax.f32 %v3855, %v3856
  %v3858 = vrot.slane %v3857, 2
  %v3859 = vmax.f32 %v3857, %v3858
  %v3860 = vrot.slane %v3859, 1
  %v3861 = vmax.f32 %v3859, %v3860
  %v3862 = vsel %vm2664, %v2237, -inf
  %v3863 = vrot.slane %v3862, 4
  %v3864 = vmax.f32 %v3862, %v3863
  %v3865 = vrot.slane %v3864, 2
  %v3866 = vmax.f32 %v3864, %v3865
  %v3867 = vrot.slane %v3866, 1
  %v3868 = vmax.f32 %v3866, %v3867
  %v3869 = vsel %vm2664, %v1726, -inf
  %v3870 = vrot.slane %v3869, 4
  %v3871 = vmax.f32 %v3869, %v3870
  %v3872 = vrot.slane %v3871, 2
  %v3873 = vmax.f32 %v3871, %v3872
  %v3874 = vrot.slane %v3873, 1
  %v3875 = vmax.f32 %v3873, %v3874
  %v3876 = vsel %vm2664, %v2238, -inf
  %v3877 = vrot.slane %v3876, 4
  %v3878 = vmax.f32 %v3876, %v3877
  %v3879 = vrot.slane %v3878, 2
  %v3880 = vmax.f32 %v3878, %v3879
  %v3881 = vrot.slane %v3880, 1
  %v3882 = vmax.f32 %v3880, %v3881
  %v3883 = vsel %vm2664, %v1727, -inf
  %v3884 = vrot.slane %v3883, 4
  %v3885 = vmax.f32 %v3883, %v3884
  %v3886 = vrot.slane %v3885, 2
  %v3887 = vmax.f32 %v3885, %v3886
  %v3888 = vrot.slane %v3887, 1
  %v3889 = vmax.f32 %v3887, %v3888
  %v3890 = vsel %vm2664, %v2239, -inf
  %v3891 = vrot.slane %v3890, 4
  %v3892 = vmax.f32 %v3890, %v3891
  %v3893 = vrot.slane %v3892, 2
  %v3894 = vmax.f32 %v3892, %v3893
  %v3895 = vrot.slane %v3894, 1
  %v3896 = vmax.f32 %v3894, %v3895
  %v3897 = vsel %vm2664, %v1728, -inf
  %v3898 = vrot.slane %v3897, 4
  %v3899 = vmax.f32 %v3897, %v3898
  %v3900 = vrot.slane %v3899, 2
  %v3901 = vmax.f32 %v3899, %v3900
  %v3902 = vrot.slane %v3901, 1
  %v3903 = vmax.f32 %v3901, %v3902
  %v3904 = vsel %vm2664, %v2240, -inf
  %v3905 = vrot.slane %v3904, 4
  %v3906 = vmax.f32 %v3904, %v3905
  %v3907 = vrot.slane %v3906, 2
  %v3908 = vmax.f32 %v3906, %v3907
  %v3909 = vrot.slane %v3908, 1
  %v3910 = vmax.f32 %v3908, %v3909
  %v3911 = vsel %vm2664, %v1729, -inf
  %v3912 = vrot.slane %v3911, 4
  %v3913 = vmax.f32 %v3911, %v3912
  %v3914 = vrot.slane %v3913, 2
  %v3915 = vmax.f32 %v3913, %v3914
  %v3916 = vrot.slane %v3915, 1
  %v3917 = vmax.f32 %v3915, %v3916
  %v3918 = vsel %vm2664, %v2241, -inf
  %v3919 = vrot.slane %v3918, 4
  %v3920 = vmax.f32 %v3918, %v3919
  %v3921 = vrot.slane %v3920, 2
  %v3922 = vmax.f32 %v3920, %v3921
  %v3923 = vrot.slane %v3922, 1
  %v3924 = vmax.f32 %v3922, %v3923
  %v3925 = vsel %vm2664, %v1730, -inf
  %v3926 = vrot.slane %v3925, 4
  %v3927 = vmax.f32 %v3925, %v3926
  %v3928 = vrot.slane %v3927, 2
  %v3929 = vmax.f32 %v3927, %v3928
  %v3930 = vrot.slane %v3929, 1
  %v3931 = vmax.f32 %v3929, %v3930
  %v3932 = vsel %vm2664, %v2242, -inf
  %v3933 = vrot.slane %v3932, 4
  %v3934 = vmax.f32 %v3932, %v3933
  %v3935 = vrot.slane %v3934, 2
  %v3936 = vmax.f32 %v3934, %v3935
  %v3937 = vrot.slane %v3936, 1
  %v3938 = vmax.f32 %v3936, %v3937
  %v3939 = vsel %vm2664, %v1731, -inf
  %v3940 = vrot.slane %v3939, 4
  %v3941 = vmax.f32 %v3939, %v3940
  %v3942 = vrot.slane %v3941, 2
  %v3943 = vmax.f32 %v3941, %v3942
  %v3944 = vrot.slane %v3943, 1
  %v3945 = vmax.f32 %v3943, %v3944
  %v3946 = vsel %vm2664, %v2243, -inf
  %v3947 = vrot.slane %v3946, 4
  %v3948 = vmax.f32 %v3946, %v3947
  %v3949 = vrot.slane %v3948, 2
  %v3950 = vmax.f32 %v3948, %v3949
  %v3951 = vrot.slane %v3950, 1
  %v3952 = vmax.f32 %v3950, %v3951
  %v3953 = vsel %vm2664, %v1732, -inf
  %v3954 = vrot.slane %v3953, 4
  %v3955 = vmax.f32 %v3953, %v3954
  %v3956 = vrot.slane %v3955, 2
  %v3957 = vmax.f32 %v3955, %v3956
  %v3958 = vrot.slane %v3957, 1
  %v3959 = vmax.f32 %v3957, %v3958
  %v3960 = vsel %vm2664, %v2244, -inf
  %v3961 = vrot.slane %v3960, 4
  %v3962 = vmax.f32 %v3960, %v3961
  %v3963 = vrot.slane %v3962, 2
  %v3964 = vmax.f32 %v3962, %v3963
  %v3965 = vrot.slane %v3964, 1
  %v3966 = vmax.f32 %v3964, %v3965
  %v3967 = vsel %vm2664, %v1733, -inf
  %v3968 = vrot.slane %v3967, 4
  %v3969 = vmax.f32 %v3967, %v3968
  %v3970 = vrot.slane %v3969, 2
  %v3971 = vmax.f32 %v3969, %v3970
  %v3972 = vrot.slane %v3971, 1
  %v3973 = vmax.f32 %v3971, %v3972
  %v3974 = vsel %vm2664, %v2245, -inf
  %v3975 = vrot.slane %v3974, 4
  %v3976 = vmax.f32 %v3974, %v3975
  %v3977 = vrot.slane %v3976, 2
  %v3978 = vmax.f32 %v3976, %v3977
  %v3979 = vrot.slane %v3978, 1
  %v3980 = vmax.f32 %v3978, %v3979
  %v3981 = vsel %vm2664, %v1734, -inf
  %v3982 = vrot.slane %v3981, 4
  %v3983 = vmax.f32 %v3981, %v3982
  %v3984 = vrot.slane %v3983, 2
  %v3985 = vmax.f32 %v3983, %v3984
  %v3986 = vrot.slane %v3985, 1
  %v3987 = vmax.f32 %v3985, %v3986
  %v3988 = vsel %vm2664, %v2246, -inf
  %v3989 = vrot.slane %v3988, 4
  %v3990 = vmax.f32 %v3988, %v3989
  %v3991 = vrot.slane %v3990, 2
  %v3992 = vmax.f32 %v3990, %v3991
  %v3993 = vrot.slane %v3992, 1
  %v3994 = vmax.f32 %v3992, %v3993
  %v3995 = vsel %vm2664, %v1735, -inf
  %v3996 = vrot.slane %v3995, 4
  %v3997 = vmax.f32 %v3995, %v3996
  %v3998 = vrot.slane %v3997, 2
  %v3999 = vmax.f32 %v3997, %v3998
  %v4000 = vrot.slane %v3999, 1
  %v4001 = vmax.f32 %v3999, %v4000
  %v4002 = vsel %vm2664, %v2247, -inf
  %v4003 = vrot.slane %v4002, 4
  %v4004 = vmax.f32 %v4002, %v4003
  %v4005 = vrot.slane %v4004, 2
  %v4006 = vmax.f32 %v4004, %v4005
  %v4007 = vrot.slane %v4006, 1
  %v4008 = vmax.f32 %v4006, %v4007
  %v4009 = vsel %vm2664, %v1736, -inf
  %v4010 = vrot.slane %v4009, 4
  %v4011 = vmax.f32 %v4009, %v4010
  %v4012 = vrot.slane %v4011, 2
  %v4013 = vmax.f32 %v4011, %v4012
  %v4014 = vrot.slane %v4013, 1
  %v4015 = vmax.f32 %v4013, %v4014
  %v4016 = vsel %vm2664, %v2248, -inf
  %v4017 = vrot.slane %v4016, 4
  %v4018 = vmax.f32 %v4016, %v4017
  %v4019 = vrot.slane %v4018, 2
  %v4020 = vmax.f32 %v4018, %v4019
  %v4021 = vrot.slane %v4020, 1
  %v4022 = vmax.f32 %v4020, %v4021
  %v4023 = vsel %vm2664, %v1737, -inf
  %v4024 = vrot.slane %v4023, 4
  %v4025 = vmax.f32 %v4023, %v4024
  %v4026 = vrot.slane %v4025, 2
  %v4027 = vmax.f32 %v4025, %v4026
  %v4028 = vrot.slane %v4027, 1
  %v4029 = vmax.f32 %v4027, %v4028
  %v4030 = vsel %vm2664, %v2249, -inf
  %v4031 = vrot.slane %v4030, 4
  %v4032 = vmax.f32 %v4030, %v4031
  %v4033 = vrot.slane %v4032, 2
  %v4034 = vmax.f32 %v4032, %v4033
  %v4035 = vrot.slane %v4034, 1
  %v4036 = vmax.f32 %v4034, %v4035
  %v4037 = vsel %vm2664, %v1738, -inf
  %v4038 = vrot.slane %v4037, 4
  %v4039 = vmax.f32 %v4037, %v4038
  %v4040 = vrot.slane %v4039, 2
  %v4041 = vmax.f32 %v4039, %v4040
  %v4042 = vrot.slane %v4041, 1
  %v4043 = vmax.f32 %v4041, %v4042
  %v4044 = vsel %vm2664, %v2250, -inf
  %v4045 = vrot.slane %v4044, 4
  %v4046 = vmax.f32 %v4044, %v4045
  %v4047 = vrot.slane %v4046, 2
  %v4048 = vmax.f32 %v4046, %v4047
  %v4049 = vrot.slane %v4048, 1
  %v4050 = vmax.f32 %v4048, %v4049
  %v4051 = vsel %vm2664, %v1739, -inf
  %v4052 = vrot.slane %v4051, 4
  %v4053 = vmax.f32 %v4051, %v4052
  %v4054 = vrot.slane %v4053, 2
  %v4055 = vmax.f32 %v4053, %v4054
  %v4056 = vrot.slane %v4055, 1
  %v4057 = vmax.f32 %v4055, %v4056
  %v4058 = vsel %vm2664, %v2251, -inf
  %v4059 = vrot.slane %v4058, 4
  %v4060 = vmax.f32 %v4058, %v4059
  %v4061 = vrot.slane %v4060, 2
  %v4062 = vmax.f32 %v4060, %v4061
  %v4063 = vrot.slane %v4062, 1
  %v4064 = vmax.f32 %v4062, %v4063
  %v4065 = vsel %vm2664, %v1740, -inf
  %v4066 = vrot.slane %v4065, 4
  %v4067 = vmax.f32 %v4065, %v4066
  %v4068 = vrot.slane %v4067, 2
  %v4069 = vmax.f32 %v4067, %v4068
  %v4070 = vrot.slane %v4069, 1
  %v4071 = vmax.f32 %v4069, %v4070
  %v4072 = vsel %vm2664, %v2252, -inf
  %v4073 = vrot.slane %v4072, 4
  %v4074 = vmax.f32 %v4072, %v4073
  %v4075 = vrot.slane %v4074, 2
  %v4076 = vmax.f32 %v4074, %v4075
  %v4077 = vrot.slane %v4076, 1
  %v4078 = vmax.f32 %v4076, %v4077
  %v4079 = vsel %vm2664, %v1741, -inf
  %v4080 = vrot.slane %v4079, 4
  %v4081 = vmax.f32 %v4079, %v4080
  %v4082 = vrot.slane %v4081, 2
  %v4083 = vmax.f32 %v4081, %v4082
  %v4084 = vrot.slane %v4083, 1
  %v4085 = vmax.f32 %v4083, %v4084
  %v4086 = vsel %vm2664, %v2253, -inf
  %v4087 = vrot.slane %v4086, 4
  %v4088 = vmax.f32 %v4086, %v4087
  %v4089 = vrot.slane %v4088, 2
  %v4090 = vmax.f32 %v4088, %v4089
  %v4091 = vrot.slane %v4090, 1
  %v4092 = vmax.f32 %v4090, %v4091
  %v4093 = vsel %vm2664, %v1742, -inf
  %v4094 = vrot.slane %v4093, 4
  %v4095 = vmax.f32 %v4093, %v4094
  %v4096 = vrot.slane %v4095, 2
  %v4097 = vmax.f32 %v4095, %v4096
  %v4098 = vrot.slane %v4097, 1
  %v4099 = vmax.f32 %v4097, %v4098
  %v4100 = vsel %vm2664, %v2254, -inf
  %v4101 = vrot.slane %v4100, 4
  %v4102 = vmax.f32 %v4100, %v4101
  %v4103 = vrot.slane %v4102, 2
  %v4104 = vmax.f32 %v4102, %v4103
  %v4105 = vrot.slane %v4104, 1
  %v4106 = vmax.f32 %v4104, %v4105
  %v4107 = vsel %vm2664, %v1743, -inf
  %v4108 = vrot.slane %v4107, 4
  %v4109 = vmax.f32 %v4107, %v4108
  %v4110 = vrot.slane %v4109, 2
  %v4111 = vmax.f32 %v4109, %v4110
  %v4112 = vrot.slane %v4111, 1
  %v4113 = vmax.f32 %v4111, %v4112
  %v4114 = vsel %vm2664, %v2255, -inf
  %v4115 = vrot.slane %v4114, 4
  %v4116 = vmax.f32 %v4114, %v4115
  %v4117 = vrot.slane %v4116, 2
  %v4118 = vmax.f32 %v4116, %v4117
  %v4119 = vrot.slane %v4118, 1
  %v4120 = vmax.f32 %v4118, %v4119
  %v4121 = vsel %vm2664, %v1744, -inf
  %v4122 = vrot.slane %v4121, 4
  %v4123 = vmax.f32 %v4121, %v4122
  %v4124 = vrot.slane %v4123, 2
  %v4125 = vmax.f32 %v4123, %v4124
  %v4126 = vrot.slane %v4125, 1
  %v4127 = vmax.f32 %v4125, %v4126
  %v4128 = vsel %vm2664, %v2256, -inf
  %v4129 = vrot.slane %v4128, 4
  %v4130 = vmax.f32 %v4128, %v4129
  %v4131 = vrot.slane %v4130, 2
  %v4132 = vmax.f32 %v4130, %v4131
  %v4133 = vrot.slane %v4132, 1
  %v4134 = vmax.f32 %v4132, %v4133
  %v4135 = vsel %vm2664, %v1745, -inf
  %v4136 = vrot.slane %v4135, 4
  %v4137 = vmax.f32 %v4135, %v4136
  %v4138 = vrot.slane %v4137, 2
  %v4139 = vmax.f32 %v4137, %v4138
  %v4140 = vrot.slane %v4139, 1
  %v4141 = vmax.f32 %v4139, %v4140
  %v4142 = vsel %vm2664, %v2257, -inf
  %v4143 = vrot.slane %v4142, 4
  %v4144 = vmax.f32 %v4142, %v4143
  %v4145 = vrot.slane %v4144, 2
  %v4146 = vmax.f32 %v4144, %v4145
  %v4147 = vrot.slane %v4146, 1
  %v4148 = vmax.f32 %v4146, %v4147
  %v4149 = vsel %vm2664, %v1746, -inf
  %v4150 = vrot.slane %v4149, 4
  %v4151 = vmax.f32 %v4149, %v4150
  %v4152 = vrot.slane %v4151, 2
  %v4153 = vmax.f32 %v4151, %v4152
  %v4154 = vrot.slane %v4153, 1
  %v4155 = vmax.f32 %v4153, %v4154
  %v4156 = vsel %vm2664, %v2258, -inf
  %v4157 = vrot.slane %v4156, 4
  %v4158 = vmax.f32 %v4156, %v4157
  %v4159 = vrot.slane %v4158, 2
  %v4160 = vmax.f32 %v4158, %v4159
  %v4161 = vrot.slane %v4160, 1
  %v4162 = vmax.f32 %v4160, %v4161
  %v4163 = vsel %vm2664, %v1747, -inf
  %v4164 = vrot.slane %v4163, 4
  %v4165 = vmax.f32 %v4163, %v4164
  %v4166 = vrot.slane %v4165, 2
  %v4167 = vmax.f32 %v4165, %v4166
  %v4168 = vrot.slane %v4167, 1
  %v4169 = vmax.f32 %v4167, %v4168
  %v4170 = vsel %vm2664, %v2259, -inf
  %v4171 = vrot.slane %v4170, 4
  %v4172 = vmax.f32 %v4170, %v4171
  %v4173 = vrot.slane %v4172, 2
  %v4174 = vmax.f32 %v4172, %v4173
  %v4175 = vrot.slane %v4174, 1
  %v4176 = vmax.f32 %v4174, %v4175
  %v4177 = vsel %vm2664, %v1748, -inf
  %v4178 = vrot.slane %v4177, 4
  %v4179 = vmax.f32 %v4177, %v4178
  %v4180 = vrot.slane %v4179, 2
  %v4181 = vmax.f32 %v4179, %v4180
  %v4182 = vrot.slane %v4181, 1
  %v4183 = vmax.f32 %v4181, %v4182
  %v4184 = vsel %vm2664, %v2260, -inf
  %v4185 = vrot.slane %v4184, 4
  %v4186 = vmax.f32 %v4184, %v4185
  %v4187 = vrot.slane %v4186, 2
  %v4188 = vmax.f32 %v4186, %v4187
  %v4189 = vrot.slane %v4188, 1
  %v4190 = vmax.f32 %v4188, %v4189
  %v4191 = vsel %vm2664, %v1749, -inf
  %v4192 = vrot.slane %v4191, 4
  %v4193 = vmax.f32 %v4191, %v4192
  %v4194 = vrot.slane %v4193, 2
  %v4195 = vmax.f32 %v4193, %v4194
  %v4196 = vrot.slane %v4195, 1
  %v4197 = vmax.f32 %v4195, %v4196
  %v4198 = vsel %vm2664, %v2261, -inf
  %v4199 = vrot.slane %v4198, 4
  %v4200 = vmax.f32 %v4198, %v4199
  %v4201 = vrot.slane %v4200, 2
  %v4202 = vmax.f32 %v4200, %v4201
  %v4203 = vrot.slane %v4202, 1
  %v4204 = vmax.f32 %v4202, %v4203
  %v4205 = vsel %vm2664, %v1750, -inf
  %v4206 = vrot.slane %v4205, 4
  %v4207 = vmax.f32 %v4205, %v4206
  %v4208 = vrot.slane %v4207, 2
  %v4209 = vmax.f32 %v4207, %v4208
  %v4210 = vrot.slane %v4209, 1
  %v4211 = vmax.f32 %v4209, %v4210
  %v4212 = vsel %vm2664, %v2262, -inf
  %v4213 = vrot.slane %v4212, 4
  %v4214 = vmax.f32 %v4212, %v4213
  %v4215 = vrot.slane %v4214, 2
  %v4216 = vmax.f32 %v4214, %v4215
  %v4217 = vrot.slane %v4216, 1
  %v4218 = vmax.f32 %v4216, %v4217
  %v4219 = vsel %vm2664, %v1751, -inf
  %v4220 = vrot.slane %v4219, 4
  %v4221 = vmax.f32 %v4219, %v4220
  %v4222 = vrot.slane %v4221, 2
  %v4223 = vmax.f32 %v4221, %v4222
  %v4224 = vrot.slane %v4223, 1
  %v4225 = vmax.f32 %v4223, %v4224
  %v4226 = vsel %vm2664, %v2263, -inf
  %v4227 = vrot.slane %v4226, 4
  %v4228 = vmax.f32 %v4226, %v4227
  %v4229 = vrot.slane %v4228, 2
  %v4230 = vmax.f32 %v4228, %v4229
  %v4231 = vrot.slane %v4230, 1
  %v4232 = vmax.f32 %v4230, %v4231
  %v4233 = vsel %vm2664, %v1752, -inf
  %v4234 = vrot.slane %v4233, 4
  %v4235 = vmax.f32 %v4233, %v4234
  %v4236 = vrot.slane %v4235, 2
  %v4237 = vmax.f32 %v4235, %v4236
  %v4238 = vrot.slane %v4237, 1
  %v4239 = vmax.f32 %v4237, %v4238
  %v4240 = vsel %vm2664, %v2264, -inf
  %v4241 = vrot.slane %v4240, 4
  %v4242 = vmax.f32 %v4240, %v4241
  %v4243 = vrot.slane %v4242, 2
  %v4244 = vmax.f32 %v4242, %v4243
  %v4245 = vrot.slane %v4244, 1
  %v4246 = vmax.f32 %v4244, %v4245
  %v4247 = vsel %vm2664, %v1753, -inf
  %v4248 = vrot.slane %v4247, 4
  %v4249 = vmax.f32 %v4247, %v4248
  %v4250 = vrot.slane %v4249, 2
  %v4251 = vmax.f32 %v4249, %v4250
  %v4252 = vrot.slane %v4251, 1
  %v4253 = vmax.f32 %v4251, %v4252
  %v4254 = vsel %vm2664, %v2265, -inf
  %v4255 = vrot.slane %v4254, 4
  %v4256 = vmax.f32 %v4254, %v4255
  %v4257 = vrot.slane %v4256, 2
  %v4258 = vmax.f32 %v4256, %v4257
  %v4259 = vrot.slane %v4258, 1
  %v4260 = vmax.f32 %v4258, %v4259
  %v4261 = vsel %vm2664, %v1754, -inf
  %v4262 = vrot.slane %v4261, 4
  %v4263 = vmax.f32 %v4261, %v4262
  %v4264 = vrot.slane %v4263, 2
  %v4265 = vmax.f32 %v4263, %v4264
  %v4266 = vrot.slane %v4265, 1
  %v4267 = vmax.f32 %v4265, %v4266
  %v4268 = vsel %vm2664, %v2266, -inf
  %v4269 = vrot.slane %v4268, 4
  %v4270 = vmax.f32 %v4268, %v4269
  %v4271 = vrot.slane %v4270, 2
  %v4272 = vmax.f32 %v4270, %v4271
  %v4273 = vrot.slane %v4272, 1
  %v4274 = vmax.f32 %v4272, %v4273
  %v4275 = vsel %vm2664, %v1755, -inf
  %v4276 = vrot.slane %v4275, 4
  %v4277 = vmax.f32 %v4275, %v4276
  %v4278 = vrot.slane %v4277, 2
  %v4279 = vmax.f32 %v4277, %v4278
  %v4280 = vrot.slane %v4279, 1
  %v4281 = vmax.f32 %v4279, %v4280
  %v4282 = vsel %vm2664, %v2267, -inf
  %v4283 = vrot.slane %v4282, 4
  %v4284 = vmax.f32 %v4282, %v4283
  %v4285 = vrot.slane %v4284, 2
  %v4286 = vmax.f32 %v4284, %v4285
  %v4287 = vrot.slane %v4286, 1
  %v4288 = vmax.f32 %v4286, %v4287
  %v4289 = vsel %vm2664, %v1756, -inf
  %v4290 = vrot.slane %v4289, 4
  %v4291 = vmax.f32 %v4289, %v4290
  %v4292 = vrot.slane %v4291, 2
  %v4293 = vmax.f32 %v4291, %v4292
  %v4294 = vrot.slane %v4293, 1
  %v4295 = vmax.f32 %v4293, %v4294
  %v4296 = vsel %vm2664, %v2268, -inf
  %v4297 = vrot.slane %v4296, 4
  %v4298 = vmax.f32 %v4296, %v4297
  %v4299 = vrot.slane %v4298, 2
  %v4300 = vmax.f32 %v4298, %v4299
  %v4301 = vrot.slane %v4300, 1
  %v4302 = vmax.f32 %v4300, %v4301
  %v4303 = vsel %vm2664, %v1757, -inf
  %v4304 = vrot.slane %v4303, 4
  %v4305 = vmax.f32 %v4303, %v4304
  %v4306 = vrot.slane %v4305, 2
  %v4307 = vmax.f32 %v4305, %v4306
  %v4308 = vrot.slane %v4307, 1
  %v4309 = vmax.f32 %v4307, %v4308
  %v4310 = vsel %vm2664, %v2269, -inf
  %v4311 = vrot.slane %v4310, 4
  %v4312 = vmax.f32 %v4310, %v4311
  %v4313 = vrot.slane %v4312, 2
  %v4314 = vmax.f32 %v4312, %v4313
  %v4315 = vrot.slane %v4314, 1
  %v4316 = vmax.f32 %v4314, %v4315
  %v4317 = vsel %vm2664, %v1758, -inf
  %v4318 = vrot.slane %v4317, 4
  %v4319 = vmax.f32 %v4317, %v4318
  %v4320 = vrot.slane %v4319, 2
  %v4321 = vmax.f32 %v4319, %v4320
  %v4322 = vrot.slane %v4321, 1
  %v4323 = vmax.f32 %v4321, %v4322
  %v4324 = vsel %vm2664, %v2270, -inf
  %v4325 = vrot.slane %v4324, 4
  %v4326 = vmax.f32 %v4324, %v4325
  %v4327 = vrot.slane %v4326, 2
  %v4328 = vmax.f32 %v4326, %v4327
  %v4329 = vrot.slane %v4328, 1
  %v4330 = vmax.f32 %v4328, %v4329
  %v4331 = vsel %vm2664, %v1759, -inf
  %v4332 = vrot.slane %v4331, 4
  %v4333 = vmax.f32 %v4331, %v4332
  %v4334 = vrot.slane %v4333, 2
  %v4335 = vmax.f32 %v4333, %v4334
  %v4336 = vrot.slane %v4335, 1
  %v4337 = vmax.f32 %v4335, %v4336
  %v4338 = vsel %vm2664, %v2271, -inf
  %v4339 = vrot.slane %v4338, 4
  %v4340 = vmax.f32 %v4338, %v4339
  %v4341 = vrot.slane %v4340, 2
  %v4342 = vmax.f32 %v4340, %v4341
  %v4343 = vrot.slane %v4342, 1
  %v4344 = vmax.f32 %v4342, %v4343
  %v4345 = vsel %vm2664, %v1760, -inf
  %v4346 = vrot.slane %v4345, 4
  %v4347 = vmax.f32 %v4345, %v4346
  %v4348 = vrot.slane %v4347, 2
  %v4349 = vmax.f32 %v4347, %v4348
  %v4350 = vrot.slane %v4349, 1
  %v4351 = vmax.f32 %v4349, %v4350
  %v4352 = vsel %vm2664, %v2272, -inf
  %v4353 = vrot.slane %v4352, 4
  %v4354 = vmax.f32 %v4352, %v4353
  %v4355 = vrot.slane %v4354, 2
  %v4356 = vmax.f32 %v4354, %v4355
  %v4357 = vrot.slane %v4356, 1
  %v4358 = vmax.f32 %v4356, %v4357
  %v4359 = vsel %vm2664, %v1761, -inf
  %v4360 = vrot.slane %v4359, 4
  %v4361 = vmax.f32 %v4359, %v4360
  %v4362 = vrot.slane %v4361, 2
  %v4363 = vmax.f32 %v4361, %v4362
  %v4364 = vrot.slane %v4363, 1
  %v4365 = vmax.f32 %v4363, %v4364
  %v4366 = vsel %vm2664, %v2273, -inf
  %v4367 = vrot.slane %v4366, 4
  %v4368 = vmax.f32 %v4366, %v4367
  %v4369 = vrot.slane %v4368, 2
  %v4370 = vmax.f32 %v4368, %v4369
  %v4371 = vrot.slane %v4370, 1
  %v4372 = vmax.f32 %v4370, %v4371
  %v4373 = vsel %vm2664, %v1762, -inf
  %v4374 = vrot.slane %v4373, 4
  %v4375 = vmax.f32 %v4373, %v4374
  %v4376 = vrot.slane %v4375, 2
  %v4377 = vmax.f32 %v4375, %v4376
  %v4378 = vrot.slane %v4377, 1
  %v4379 = vmax.f32 %v4377, %v4378
  %v4380 = vsel %vm2664, %v2274, -inf
  %v4381 = vrot.slane %v4380, 4
  %v4382 = vmax.f32 %v4380, %v4381
  %v4383 = vrot.slane %v4382, 2
  %v4384 = vmax.f32 %v4382, %v4383
  %v4385 = vrot.slane %v4384, 1
  %v4386 = vmax.f32 %v4384, %v4385
  %v4387 = vsel %vm2664, %v1763, -inf
  %v4388 = vrot.slane %v4387, 4
  %v4389 = vmax.f32 %v4387, %v4388
  %v4390 = vrot.slane %v4389, 2
  %v4391 = vmax.f32 %v4389, %v4390
  %v4392 = vrot.slane %v4391, 1
  %v4393 = vmax.f32 %v4391, %v4392
  %v4394 = vsel %vm2664, %v2275, -inf
  %v4395 = vrot.slane %v4394, 4
  %v4396 = vmax.f32 %v4394, %v4395
  %v4397 = vrot.slane %v4396, 2
  %v4398 = vmax.f32 %v4396, %v4397
  %v4399 = vrot.slane %v4398, 1
  %v4400 = vmax.f32 %v4398, %v4399
  %v4401 = vsel %vm2664, %v1764, -inf
  %v4402 = vrot.slane %v4401, 4
  %v4403 = vmax.f32 %v4401, %v4402
  %v4404 = vrot.slane %v4403, 2
  %v4405 = vmax.f32 %v4403, %v4404
  %v4406 = vrot.slane %v4405, 1
  %v4407 = vmax.f32 %v4405, %v4406
  %v4408 = vsel %vm2664, %v2276, -inf
  %v4409 = vrot.slane %v4408, 4
  %v4410 = vmax.f32 %v4408, %v4409
  %v4411 = vrot.slane %v4410, 2
  %v4412 = vmax.f32 %v4410, %v4411
  %v4413 = vrot.slane %v4412, 1
  %v4414 = vmax.f32 %v4412, %v4413
  %v4415 = vsel %vm2664, %v1765, -inf
  %v4416 = vrot.slane %v4415, 4
  %v4417 = vmax.f32 %v4415, %v4416
  %v4418 = vrot.slane %v4417, 2
  %v4419 = vmax.f32 %v4417, %v4418
  %v4420 = vrot.slane %v4419, 1
  %v4421 = vmax.f32 %v4419, %v4420
  %v4422 = vsel %vm2664, %v2277, -inf
  %v4423 = vrot.slane %v4422, 4
  %v4424 = vmax.f32 %v4422, %v4423
  %v4425 = vrot.slane %v4424, 2
  %v4426 = vmax.f32 %v4424, %v4425
  %v4427 = vrot.slane %v4426, 1
  %v4428 = vmax.f32 %v4426, %v4427
  %v4429 = vsel %vm2664, %v1766, -inf
  %v4430 = vrot.slane %v4429, 4
  %v4431 = vmax.f32 %v4429, %v4430
  %v4432 = vrot.slane %v4431, 2
  %v4433 = vmax.f32 %v4431, %v4432
  %v4434 = vrot.slane %v4433, 1
  %v4435 = vmax.f32 %v4433, %v4434
  %v4436 = vsel %vm2664, %v2278, -inf
  %v4437 = vrot.slane %v4436, 4
  %v4438 = vmax.f32 %v4436, %v4437
  %v4439 = vrot.slane %v4438, 2
  %v4440 = vmax.f32 %v4438, %v4439
  %v4441 = vrot.slane %v4440, 1
  %v4442 = vmax.f32 %v4440, %v4441
  %v4443 = vsel %vm2664, %v1767, -inf
  %v4444 = vrot.slane %v4443, 4
  %v4445 = vmax.f32 %v4443, %v4444
  %v4446 = vrot.slane %v4445, 2
  %v4447 = vmax.f32 %v4445, %v4446
  %v4448 = vrot.slane %v4447, 1
  %v4449 = vmax.f32 %v4447, %v4448
  %v4450 = vsel %vm2664, %v2279, -inf
  %v4451 = vrot.slane %v4450, 4
  %v4452 = vmax.f32 %v4450, %v4451
  %v4453 = vrot.slane %v4452, 2
  %v4454 = vmax.f32 %v4452, %v4453
  %v4455 = vrot.slane %v4454, 1
  %v4456 = vmax.f32 %v4454, %v4455
  %v4457 = vsel %vm2664, %v1768, -inf
  %v4458 = vrot.slane %v4457, 4
  %v4459 = vmax.f32 %v4457, %v4458
  %v4460 = vrot.slane %v4459, 2
  %v4461 = vmax.f32 %v4459, %v4460
  %v4462 = vrot.slane %v4461, 1
  %v4463 = vmax.f32 %v4461, %v4462
  %v4464 = vsel %vm2664, %v2280, -inf
  %v4465 = vrot.slane %v4464, 4
  %v4466 = vmax.f32 %v4464, %v4465
  %v4467 = vrot.slane %v4466, 2
  %v4468 = vmax.f32 %v4466, %v4467
  %v4469 = vrot.slane %v4468, 1
  %v4470 = vmax.f32 %v4468, %v4469
  %v4471 = vsel %vm2664, %v1769, -inf
  %v4472 = vrot.slane %v4471, 4
  %v4473 = vmax.f32 %v4471, %v4472
  %v4474 = vrot.slane %v4473, 2
  %v4475 = vmax.f32 %v4473, %v4474
  %v4476 = vrot.slane %v4475, 1
  %v4477 = vmax.f32 %v4475, %v4476
  %v4478 = vsel %vm2664, %v2281, -inf
  %v4479 = vrot.slane %v4478, 4
  %v4480 = vmax.f32 %v4478, %v4479
  %v4481 = vrot.slane %v4480, 2
  %v4482 = vmax.f32 %v4480, %v4481
  %v4483 = vrot.slane %v4482, 1
  %v4484 = vmax.f32 %v4482, %v4483
  %v4485 = vsel %vm2664, %v1770, -inf
  %v4486 = vrot.slane %v4485, 4
  %v4487 = vmax.f32 %v4485, %v4486
  %v4488 = vrot.slane %v4487, 2
  %v4489 = vmax.f32 %v4487, %v4488
  %v4490 = vrot.slane %v4489, 1
  %v4491 = vmax.f32 %v4489, %v4490
  %v4492 = vsel %vm2664, %v2282, -inf
  %v4493 = vrot.slane %v4492, 4
  %v4494 = vmax.f32 %v4492, %v4493
  %v4495 = vrot.slane %v4494, 2
  %v4496 = vmax.f32 %v4494, %v4495
  %v4497 = vrot.slane %v4496, 1
  %v4498 = vmax.f32 %v4496, %v4497
  %v4499 = vsel %vm2664, %v1771, -inf
  %v4500 = vrot.slane %v4499, 4
  %v4501 = vmax.f32 %v4499, %v4500
  %v4502 = vrot.slane %v4501, 2
  %v4503 = vmax.f32 %v4501, %v4502
  %v4504 = vrot.slane %v4503, 1
  %v4505 = vmax.f32 %v4503, %v4504
  %v4506 = vsel %vm2664, %v2283, -inf
  %v4507 = vrot.slane %v4506, 4
  %v4508 = vmax.f32 %v4506, %v4507
  %v4509 = vrot.slane %v4508, 2
  %v4510 = vmax.f32 %v4508, %v4509
  %v4511 = vrot.slane %v4510, 1
  %v4512 = vmax.f32 %v4510, %v4511
  %v4513 = vsel %vm2664, %v1772, -inf
  %v4514 = vrot.slane %v4513, 4
  %v4515 = vmax.f32 %v4513, %v4514
  %v4516 = vrot.slane %v4515, 2
  %v4517 = vmax.f32 %v4515, %v4516
  %v4518 = vrot.slane %v4517, 1
  %v4519 = vmax.f32 %v4517, %v4518
  %v4520 = vsel %vm2664, %v2284, -inf
  %v4521 = vrot.slane %v4520, 4
  %v4522 = vmax.f32 %v4520, %v4521
  %v4523 = vrot.slane %v4522, 2
  %v4524 = vmax.f32 %v4522, %v4523
  %v4525 = vrot.slane %v4524, 1
  %v4526 = vmax.f32 %v4524, %v4525
  %v4527 = vsel %vm2664, %v1773, -inf
  %v4528 = vrot.slane %v4527, 4
  %v4529 = vmax.f32 %v4527, %v4528
  %v4530 = vrot.slane %v4529, 2
  %v4531 = vmax.f32 %v4529, %v4530
  %v4532 = vrot.slane %v4531, 1
  %v4533 = vmax.f32 %v4531, %v4532
  %v4534 = vsel %vm2664, %v2285, -inf
  %v4535 = vrot.slane %v4534, 4
  %v4536 = vmax.f32 %v4534, %v4535
  %v4537 = vrot.slane %v4536, 2
  %v4538 = vmax.f32 %v4536, %v4537
  %v4539 = vrot.slane %v4538, 1
  %v4540 = vmax.f32 %v4538, %v4539
  %v4541 = vsel %vm2664, %v1774, -inf
  %v4542 = vrot.slane %v4541, 4
  %v4543 = vmax.f32 %v4541, %v4542
  %v4544 = vrot.slane %v4543, 2
  %v4545 = vmax.f32 %v4543, %v4544
  %v4546 = vrot.slane %v4545, 1
  %v4547 = vmax.f32 %v4545, %v4546
  %v4548 = vsel %vm2664, %v2286, -inf
  %v4549 = vrot.slane %v4548, 4
  %v4550 = vmax.f32 %v4548, %v4549
  %v4551 = vrot.slane %v4550, 2
  %v4552 = vmax.f32 %v4550, %v4551
  %v4553 = vrot.slane %v4552, 1
  %v4554 = vmax.f32 %v4552, %v4553
  %v4555 = vsel %vm2664, %v1775, -inf
  %v4556 = vrot.slane %v4555, 4
  %v4557 = vmax.f32 %v4555, %v4556
  %v4558 = vrot.slane %v4557, 2
  %v4559 = vmax.f32 %v4557, %v4558
  %v4560 = vrot.slane %v4559, 1
  %v4561 = vmax.f32 %v4559, %v4560
  %v4562 = vsel %vm2664, %v2287, -inf
  %v4563 = vrot.slane %v4562, 4
  %v4564 = vmax.f32 %v4562, %v4563
  %v4565 = vrot.slane %v4564, 2
  %v4566 = vmax.f32 %v4564, %v4565
  %v4567 = vrot.slane %v4566, 1
  %v4568 = vmax.f32 %v4566, %v4567
  %v4569 = vsel %vm2664, %v1776, -inf
  %v4570 = vrot.slane %v4569, 4
  %v4571 = vmax.f32 %v4569, %v4570
  %v4572 = vrot.slane %v4571, 2
  %v4573 = vmax.f32 %v4571, %v4572
  %v4574 = vrot.slane %v4573, 1
  %v4575 = vmax.f32 %v4573, %v4574
  %v4576 = vsel %vm2664, %v2288, -inf
  %v4577 = vrot.slane %v4576, 4
  %v4578 = vmax.f32 %v4576, %v4577
  %v4579 = vrot.slane %v4578, 2
  %v4580 = vmax.f32 %v4578, %v4579
  %v4581 = vrot.slane %v4580, 1
  %v4582 = vmax.f32 %v4580, %v4581
  %v4583 = vsel %vm2664, %v1777, -inf
  %v4584 = vrot.slane %v4583, 4
  %v4585 = vmax.f32 %v4583, %v4584
  %v4586 = vrot.slane %v4585, 2
  %v4587 = vmax.f32 %v4585, %v4586
  %v4588 = vrot.slane %v4587, 1
  %v4589 = vmax.f32 %v4587, %v4588
  %v4590 = vsel %vm2664, %v2289, -inf
  %v4591 = vrot.slane %v4590, 4
  %v4592 = vmax.f32 %v4590, %v4591
  %v4593 = vrot.slane %v4592, 2
  %v4594 = vmax.f32 %v4592, %v4593
  %v4595 = vrot.slane %v4594, 1
  %v4596 = vmax.f32 %v4594, %v4595
  %v4597 = vsel %vm2664, %v1778, -inf
  %v4598 = vrot.slane %v4597, 4
  %v4599 = vmax.f32 %v4597, %v4598
  %v4600 = vrot.slane %v4599, 2
  %v4601 = vmax.f32 %v4599, %v4600
  %v4602 = vrot.slane %v4601, 1
  %v4603 = vmax.f32 %v4601, %v4602
  %v4604 = vsel %vm2664, %v2290, -inf
  %v4605 = vrot.slane %v4604, 4
  %v4606 = vmax.f32 %v4604, %v4605
  %v4607 = vrot.slane %v4606, 2
  %v4608 = vmax.f32 %v4606, %v4607
  %v4609 = vrot.slane %v4608, 1
  %v4610 = vmax.f32 %v4608, %v4609
  %v4611 = vsel %vm2664, %v1779, -inf
  %v4612 = vrot.slane %v4611, 4
  %v4613 = vmax.f32 %v4611, %v4612
  %v4614 = vrot.slane %v4613, 2
  %v4615 = vmax.f32 %v4613, %v4614
  %v4616 = vrot.slane %v4615, 1
  %v4617 = vmax.f32 %v4615, %v4616
  %v4618 = vsel %vm2664, %v2291, -inf
  %v4619 = vrot.slane %v4618, 4
  %v4620 = vmax.f32 %v4618, %v4619
  %v4621 = vrot.slane %v4620, 2
  %v4622 = vmax.f32 %v4620, %v4621
  %v4623 = vrot.slane %v4622, 1
  %v4624 = vmax.f32 %v4622, %v4623
  %v4625 = vsel %vm2664, %v1780, -inf
  %v4626 = vrot.slane %v4625, 4
  %v4627 = vmax.f32 %v4625, %v4626
  %v4628 = vrot.slane %v4627, 2
  %v4629 = vmax.f32 %v4627, %v4628
  %v4630 = vrot.slane %v4629, 1
  %v4631 = vmax.f32 %v4629, %v4630
  %v4632 = vsel %vm2664, %v2292, -inf
  %v4633 = vrot.slane %v4632, 4
  %v4634 = vmax.f32 %v4632, %v4633
  %v4635 = vrot.slane %v4634, 2
  %v4636 = vmax.f32 %v4634, %v4635
  %v4637 = vrot.slane %v4636, 1
  %v4638 = vmax.f32 %v4636, %v4637
  %v4639 = vsel %vm2664, %v1781, -inf
  %v4640 = vrot.slane %v4639, 4
  %v4641 = vmax.f32 %v4639, %v4640
  %v4642 = vrot.slane %v4641, 2
  %v4643 = vmax.f32 %v4641, %v4642
  %v4644 = vrot.slane %v4643, 1
  %v4645 = vmax.f32 %v4643, %v4644
  %v4646 = vsel %vm2664, %v2293, -inf
  %v4647 = vrot.slane %v4646, 4
  %v4648 = vmax.f32 %v4646, %v4647
  %v4649 = vrot.slane %v4648, 2
  %v4650 = vmax.f32 %v4648, %v4649
  %v4651 = vrot.slane %v4650, 1
  %v4652 = vmax.f32 %v4650, %v4651
  %v4653 = vsel %vm2664, %v1782, -inf
  %v4654 = vrot.slane %v4653, 4
  %v4655 = vmax.f32 %v4653, %v4654
  %v4656 = vrot.slane %v4655, 2
  %v4657 = vmax.f32 %v4655, %v4656
  %v4658 = vrot.slane %v4657, 1
  %v4659 = vmax.f32 %v4657, %v4658
  %v4660 = vsel %vm2664, %v2294, -inf
  %v4661 = vrot.slane %v4660, 4
  %v4662 = vmax.f32 %v4660, %v4661
  %v4663 = vrot.slane %v4662, 2
  %v4664 = vmax.f32 %v4662, %v4663
  %v4665 = vrot.slane %v4664, 1
  %v4666 = vmax.f32 %v4664, %v4665
  %v4667 = vsel %vm2664, %v1783, -inf
  %v4668 = vrot.slane %v4667, 4
  %v4669 = vmax.f32 %v4667, %v4668
  %v4670 = vrot.slane %v4669, 2
  %v4671 = vmax.f32 %v4669, %v4670
  %v4672 = vrot.slane %v4671, 1
  %v4673 = vmax.f32 %v4671, %v4672
  %v4674 = vsel %vm2664, %v2295, -inf
  %v4675 = vrot.slane %v4674, 4
  %v4676 = vmax.f32 %v4674, %v4675
  %v4677 = vrot.slane %v4676, 2
  %v4678 = vmax.f32 %v4676, %v4677
  %v4679 = vrot.slane %v4678, 1
  %v4680 = vmax.f32 %v4678, %v4679
  %v4681 = vsel %vm2664, %v1784, -inf
  %v4682 = vrot.slane %v4681, 4
  %v4683 = vmax.f32 %v4681, %v4682
  %v4684 = vrot.slane %v4683, 2
  %v4685 = vmax.f32 %v4683, %v4684
  %v4686 = vrot.slane %v4685, 1
  %v4687 = vmax.f32 %v4685, %v4686
  %v4688 = vsel %vm2664, %v2296, -inf
  %v4689 = vrot.slane %v4688, 4
  %v4690 = vmax.f32 %v4688, %v4689
  %v4691 = vrot.slane %v4690, 2
  %v4692 = vmax.f32 %v4690, %v4691
  %v4693 = vrot.slane %v4692, 1
  %v4694 = vmax.f32 %v4692, %v4693
  %v4695 = vsel %vm2664, %v1785, -inf
  %v4696 = vrot.slane %v4695, 4
  %v4697 = vmax.f32 %v4695, %v4696
  %v4698 = vrot.slane %v4697, 2
  %v4699 = vmax.f32 %v4697, %v4698
  %v4700 = vrot.slane %v4699, 1
  %v4701 = vmax.f32 %v4699, %v4700
  %v4702 = vsel %vm2664, %v2297, -inf
  %v4703 = vrot.slane %v4702, 4
  %v4704 = vmax.f32 %v4702, %v4703
  %v4705 = vrot.slane %v4704, 2
  %v4706 = vmax.f32 %v4704, %v4705
  %v4707 = vrot.slane %v4706, 1
  %v4708 = vmax.f32 %v4706, %v4707
  %v4709 = vsel %vm2664, %v1786, -inf
  %v4710 = vrot.slane %v4709, 4
  %v4711 = vmax.f32 %v4709, %v4710
  %v4712 = vrot.slane %v4711, 2
  %v4713 = vmax.f32 %v4711, %v4712
  %v4714 = vrot.slane %v4713, 1
  %v4715 = vmax.f32 %v4713, %v4714
  %v4716 = vsel %vm2664, %v2298, -inf
  %v4717 = vrot.slane %v4716, 4
  %v4718 = vmax.f32 %v4716, %v4717
  %v4719 = vrot.slane %v4718, 2
  %v4720 = vmax.f32 %v4718, %v4719
  %v4721 = vrot.slane %v4720, 1
  %v4722 = vmax.f32 %v4720, %v4721
  %v4723 = vsel %vm2664, %v1787, -inf
  %v4724 = vrot.slane %v4723, 4
  %v4725 = vmax.f32 %v4723, %v4724
  %v4726 = vrot.slane %v4725, 2
  %v4727 = vmax.f32 %v4725, %v4726
  %v4728 = vrot.slane %v4727, 1
  %v4729 = vmax.f32 %v4727, %v4728
  %v4730 = vsel %vm2664, %v2299, -inf
  %v4731 = vrot.slane %v4730, 4
  %v4732 = vmax.f32 %v4730, %v4731
  %v4733 = vrot.slane %v4732, 2
  %v4734 = vmax.f32 %v4732, %v4733
  %v4735 = vrot.slane %v4734, 1
  %v4736 = vmax.f32 %v4734, %v4735
  %v4737 = vsel %vm2664, %v1788, -inf
  %v4738 = vrot.slane %v4737, 4
  %v4739 = vmax.f32 %v4737, %v4738
  %v4740 = vrot.slane %v4739, 2
  %v4741 = vmax.f32 %v4739, %v4740
  %v4742 = vrot.slane %v4741, 1
  %v4743 = vmax.f32 %v4741, %v4742
  %v4744 = vsel %vm2664, %v2300, -inf
  %v4745 = vrot.slane %v4744, 4
  %v4746 = vmax.f32 %v4744, %v4745
  %v4747 = vrot.slane %v4746, 2
  %v4748 = vmax.f32 %v4746, %v4747
  %v4749 = vrot.slane %v4748, 1
  %v4750 = vmax.f32 %v4748, %v4749
  %v4751 = vsel %vm2664, %v1789, -inf
  %v4752 = vrot.slane %v4751, 4
  %v4753 = vmax.f32 %v4751, %v4752
  %v4754 = vrot.slane %v4753, 2
  %v4755 = vmax.f32 %v4753, %v4754
  %v4756 = vrot.slane %v4755, 1
  %v4757 = vmax.f32 %v4755, %v4756
  %v4758 = vsel %vm2664, %v2301, -inf
  %v4759 = vrot.slane %v4758, 4
  %v4760 = vmax.f32 %v4758, %v4759
  %v4761 = vrot.slane %v4760, 2
  %v4762 = vmax.f32 %v4760, %v4761
  %v4763 = vrot.slane %v4762, 1
  %v4764 = vmax.f32 %v4762, %v4763
  %v4765 = vsel %vm2664, %v1790, -inf
  %v4766 = vrot.slane %v4765, 4
  %v4767 = vmax.f32 %v4765, %v4766
  %v4768 = vrot.slane %v4767, 2
  %v4769 = vmax.f32 %v4767, %v4768
  %v4770 = vrot.slane %v4769, 1
  %v4771 = vmax.f32 %v4769, %v4770
  %v4772 = vsel %vm2664, %v2302, -inf
  %v4773 = vrot.slane %v4772, 4
  %v4774 = vmax.f32 %v4772, %v4773
  %v4775 = vrot.slane %v4774, 2
  %v4776 = vmax.f32 %v4774, %v4775
  %v4777 = vrot.slane %v4776, 1
  %v4778 = vmax.f32 %v4776, %v4777
  %v4779 = vsel %vm2664, %v1791, -inf
  %v4780 = vrot.slane %v4779, 4
  %v4781 = vmax.f32 %v4779, %v4780
  %v4782 = vrot.slane %v4781, 2
  %v4783 = vmax.f32 %v4781, %v4782
  %v4784 = vrot.slane %v4783, 1
  %v4785 = vmax.f32 %v4783, %v4784
  %v4786 = vsel %vm2664, %v2303, -inf
  %v4787 = vrot.slane %v4786, 4
  %v4788 = vmax.f32 %v4786, %v4787
  %v4789 = vrot.slane %v4788, 2
  %v4790 = vmax.f32 %v4788, %v4789
  %v4791 = vrot.slane %v4790, 1
  %v4792 = vmax.f32 %v4790, %v4791
  %v4793 = vsel %vm2664, %v1792, -inf
  %v4794 = vrot.slane %v4793, 4
  %v4795 = vmax.f32 %v4793, %v4794
  %v4796 = vrot.slane %v4795, 2
  %v4797 = vmax.f32 %v4795, %v4796
  %v4798 = vrot.slane %v4797, 1
  %v4799 = vmax.f32 %v4797, %v4798
  %v4800 = vsel %vm2664, %v2304, -inf
  %v4801 = vrot.slane %v4800, 4
  %v4802 = vmax.f32 %v4800, %v4801
  %v4803 = vrot.slane %v4802, 2
  %v4804 = vmax.f32 %v4802, %v4803
  %v4805 = vrot.slane %v4804, 1
  %v4806 = vmax.f32 %v4804, %v4805
  %v4807 = vsel %vm2664, %v1793, -inf
  %v4808 = vrot.slane %v4807, 4
  %v4809 = vmax.f32 %v4807, %v4808
  %v4810 = vrot.slane %v4809, 2
  %v4811 = vmax.f32 %v4809, %v4810
  %v4812 = vrot.slane %v4811, 1
  %v4813 = vmax.f32 %v4811, %v4812
  %v4814 = vsel %vm2664, %v2305, -inf
  %v4815 = vrot.slane %v4814, 4
  %v4816 = vmax.f32 %v4814, %v4815
  %v4817 = vrot.slane %v4816, 2
  %v4818 = vmax.f32 %v4816, %v4817
  %v4819 = vrot.slane %v4818, 1
  %v4820 = vmax.f32 %v4818, %v4819
  %v4821 = vsel %vm2664, %v1794, -inf
  %v4822 = vrot.slane %v4821, 4
  %v4823 = vmax.f32 %v4821, %v4822
  %v4824 = vrot.slane %v4823, 2
  %v4825 = vmax.f32 %v4823, %v4824
  %v4826 = vrot.slane %v4825, 1
  %v4827 = vmax.f32 %v4825, %v4826
  %v4828 = vsel %vm2664, %v2306, -inf
  %v4829 = vrot.slane %v4828, 4
  %v4830 = vmax.f32 %v4828, %v4829
  %v4831 = vrot.slane %v4830, 2
  %v4832 = vmax.f32 %v4830, %v4831
  %v4833 = vrot.slane %v4832, 1
  %v4834 = vmax.f32 %v4832, %v4833
  %v4835 = vsel %vm2664, %v1795, -inf
  %v4836 = vrot.slane %v4835, 4
  %v4837 = vmax.f32 %v4835, %v4836
  %v4838 = vrot.slane %v4837, 2
  %v4839 = vmax.f32 %v4837, %v4838
  %v4840 = vrot.slane %v4839, 1
  %v4841 = vmax.f32 %v4839, %v4840
  %v4842 = vsel %vm2664, %v2307, -inf
  %v4843 = vrot.slane %v4842, 4
  %v4844 = vmax.f32 %v4842, %v4843
  %v4845 = vrot.slane %v4844, 2
  %v4846 = vmax.f32 %v4844, %v4845
  %v4847 = vrot.slane %v4846, 1
  %v4848 = vmax.f32 %v4846, %v4847
  %v4849 = vsel %vm2664, %v1796, -inf
  %v4850 = vrot.slane %v4849, 4
  %v4851 = vmax.f32 %v4849, %v4850
  %v4852 = vrot.slane %v4851, 2
  %v4853 = vmax.f32 %v4851, %v4852
  %v4854 = vrot.slane %v4853, 1
  %v4855 = vmax.f32 %v4853, %v4854
  %v4856 = vsel %vm2664, %v2308, -inf
  %v4857 = vrot.slane %v4856, 4
  %v4858 = vmax.f32 %v4856, %v4857
  %v4859 = vrot.slane %v4858, 2
  %v4860 = vmax.f32 %v4858, %v4859
  %v4861 = vrot.slane %v4860, 1
  %v4862 = vmax.f32 %v4860, %v4861
  %v4863 = vsel %vm2664, %v1797, -inf
  %v4864 = vrot.slane %v4863, 4
  %v4865 = vmax.f32 %v4863, %v4864
  %v4866 = vrot.slane %v4865, 2
  %v4867 = vmax.f32 %v4865, %v4866
  %v4868 = vrot.slane %v4867, 1
  %v4869 = vmax.f32 %v4867, %v4868
  %v4870 = vsel %vm2664, %v2309, -inf
  %v4871 = vrot.slane %v4870, 4
  %v4872 = vmax.f32 %v4870, %v4871
  %v4873 = vrot.slane %v4872, 2
  %v4874 = vmax.f32 %v4872, %v4873
  %v4875 = vrot.slane %v4874, 1
  %v4876 = vmax.f32 %v4874, %v4875
  %v4877 = vsel %vm2664, %v1798, -inf
  %v4878 = vrot.slane %v4877, 4
  %v4879 = vmax.f32 %v4877, %v4878
  %v4880 = vrot.slane %v4879, 2
  %v4881 = vmax.f32 %v4879, %v4880
  %v4882 = vrot.slane %v4881, 1
  %v4883 = vmax.f32 %v4881, %v4882
  %v4884 = vsel %vm2664, %v2310, -inf
  %v4885 = vrot.slane %v4884, 4
  %v4886 = vmax.f32 %v4884, %v4885
  %v4887 = vrot.slane %v4886, 2
  %v4888 = vmax.f32 %v4886, %v4887
  %v4889 = vrot.slane %v4888, 1
  %v4890 = vmax.f32 %v4888, %v4889
  %v4891 = vsel %vm2664, %v1799, -inf
  %v4892 = vrot.slane %v4891, 4
  %v4893 = vmax.f32 %v4891, %v4892
  %v4894 = vrot.slane %v4893, 2
  %v4895 = vmax.f32 %v4893, %v4894
  %v4896 = vrot.slane %v4895, 1
  %v4897 = vmax.f32 %v4895, %v4896
  %v4898 = vsel %vm2664, %v2311, -inf
  %v4899 = vrot.slane %v4898, 4
  %v4900 = vmax.f32 %v4898, %v4899
  %v4901 = vrot.slane %v4900, 2
  %v4902 = vmax.f32 %v4900, %v4901
  %v4903 = vrot.slane %v4902, 1
  %v4904 = vmax.f32 %v4902, %v4903
  %v4905 = vsel %vm2664, %v1800, -inf
  %v4906 = vrot.slane %v4905, 4
  %v4907 = vmax.f32 %v4905, %v4906
  %v4908 = vrot.slane %v4907, 2
  %v4909 = vmax.f32 %v4907, %v4908
  %v4910 = vrot.slane %v4909, 1
  %v4911 = vmax.f32 %v4909, %v4910
  %v4912 = vsel %vm2664, %v2312, -inf
  %v4913 = vrot.slane %v4912, 4
  %v4914 = vmax.f32 %v4912, %v4913
  %v4915 = vrot.slane %v4914, 2
  %v4916 = vmax.f32 %v4914, %v4915
  %v4917 = vrot.slane %v4916, 1
  %v4918 = vmax.f32 %v4916, %v4917
  %v4919 = vsel %vm2664, %v1801, -inf
  %v4920 = vrot.slane %v4919, 4
  %v4921 = vmax.f32 %v4919, %v4920
  %v4922 = vrot.slane %v4921, 2
  %v4923 = vmax.f32 %v4921, %v4922
  %v4924 = vrot.slane %v4923, 1
  %v4925 = vmax.f32 %v4923, %v4924
  %v4926 = vsel %vm2664, %v2313, -inf
  %v4927 = vrot.slane %v4926, 4
  %v4928 = vmax.f32 %v4926, %v4927
  %v4929 = vrot.slane %v4928, 2
  %v4930 = vmax.f32 %v4928, %v4929
  %v4931 = vrot.slane %v4930, 1
  %v4932 = vmax.f32 %v4930, %v4931
  %v4933 = vsel %vm2664, %v1802, -inf
  %v4934 = vrot.slane %v4933, 4
  %v4935 = vmax.f32 %v4933, %v4934
  %v4936 = vrot.slane %v4935, 2
  %v4937 = vmax.f32 %v4935, %v4936
  %v4938 = vrot.slane %v4937, 1
  %v4939 = vmax.f32 %v4937, %v4938
  %v4940 = vsel %vm2664, %v2314, -inf
  %v4941 = vrot.slane %v4940, 4
  %v4942 = vmax.f32 %v4940, %v4941
  %v4943 = vrot.slane %v4942, 2
  %v4944 = vmax.f32 %v4942, %v4943
  %v4945 = vrot.slane %v4944, 1
  %v4946 = vmax.f32 %v4944, %v4945
  %v4947 = vsel %vm2664, %v1803, -inf
  %v4948 = vrot.slane %v4947, 4
  %v4949 = vmax.f32 %v4947, %v4948
  %v4950 = vrot.slane %v4949, 2
  %v4951 = vmax.f32 %v4949, %v4950
  %v4952 = vrot.slane %v4951, 1
  %v4953 = vmax.f32 %v4951, %v4952
  %v4954 = vsel %vm2664, %v2315, -inf
  %v4955 = vrot.slane %v4954, 4
  %v4956 = vmax.f32 %v4954, %v4955
  %v4957 = vrot.slane %v4956, 2
  %v4958 = vmax.f32 %v4956, %v4957
  %v4959 = vrot.slane %v4958, 1
  %v4960 = vmax.f32 %v4958, %v4959
  %v4961 = vsel %vm2664, %v1804, -inf
  %v4962 = vrot.slane %v4961, 4
  %v4963 = vmax.f32 %v4961, %v4962
  %v4964 = vrot.slane %v4963, 2
  %v4965 = vmax.f32 %v4963, %v4964
  %v4966 = vrot.slane %v4965, 1
  %v4967 = vmax.f32 %v4965, %v4966
  %v4968 = vsel %vm2664, %v2316, -inf
  %v4969 = vrot.slane %v4968, 4
  %v4970 = vmax.f32 %v4968, %v4969
  %v4971 = vrot.slane %v4970, 2
  %v4972 = vmax.f32 %v4970, %v4971
  %v4973 = vrot.slane %v4972, 1
  %v4974 = vmax.f32 %v4972, %v4973
  %v4975 = vsel %vm2664, %v1805, -inf
  %v4976 = vrot.slane %v4975, 4
  %v4977 = vmax.f32 %v4975, %v4976
  %v4978 = vrot.slane %v4977, 2
  %v4979 = vmax.f32 %v4977, %v4978
  %v4980 = vrot.slane %v4979, 1
  %v4981 = vmax.f32 %v4979, %v4980
  %v4982 = vsel %vm2664, %v2317, -inf
  %v4983 = vrot.slane %v4982, 4
  %v4984 = vmax.f32 %v4982, %v4983
  %v4985 = vrot.slane %v4984, 2
  %v4986 = vmax.f32 %v4984, %v4985
  %v4987 = vrot.slane %v4986, 1
  %v4988 = vmax.f32 %v4986, %v4987
  %v4989 = vsel %vm2664, %v1806, -inf
  %v4990 = vrot.slane %v4989, 4
  %v4991 = vmax.f32 %v4989, %v4990
  %v4992 = vrot.slane %v4991, 2
  %v4993 = vmax.f32 %v4991, %v4992
  %v4994 = vrot.slane %v4993, 1
  %v4995 = vmax.f32 %v4993, %v4994
  %v4996 = vsel %vm2664, %v2318, -inf
  %v4997 = vrot.slane %v4996, 4
  %v4998 = vmax.f32 %v4996, %v4997
  %v4999 = vrot.slane %v4998, 2
  %v5000 = vmax.f32 %v4998, %v4999
  %v5001 = vrot.slane %v5000, 1
  %v5002 = vmax.f32 %v5000, %v5001
  %v5003 = vsel %vm2664, %v1807, -inf
  %v5004 = vrot.slane %v5003, 4
  %v5005 = vmax.f32 %v5003, %v5004
  %v5006 = vrot.slane %v5005, 2
  %v5007 = vmax.f32 %v5005, %v5006
  %v5008 = vrot.slane %v5007, 1
  %v5009 = vmax.f32 %v5007, %v5008
  %v5010 = vsel %vm2664, %v2319, -inf
  %v5011 = vrot.slane %v5010, 4
  %v5012 = vmax.f32 %v5010, %v5011
  %v5013 = vrot.slane %v5012, 2
  %v5014 = vmax.f32 %v5012, %v5013
  %v5015 = vrot.slane %v5014, 1
  %v5016 = vmax.f32 %v5014, %v5015
  %v5017 = vsel %vm2664, %v1808, -inf
  %v5018 = vrot.slane %v5017, 4
  %v5019 = vmax.f32 %v5017, %v5018
  %v5020 = vrot.slane %v5019, 2
  %v5021 = vmax.f32 %v5019, %v5020
  %v5022 = vrot.slane %v5021, 1
  %v5023 = vmax.f32 %v5021, %v5022
  %v5024 = vsel %vm2664, %v2320, -inf
  %v5025 = vrot.slane %v5024, 4
  %v5026 = vmax.f32 %v5024, %v5025
  %v5027 = vrot.slane %v5026, 2
  %v5028 = vmax.f32 %v5026, %v5027
  %v5029 = vrot.slane %v5028, 1
  %v5030 = vmax.f32 %v5028, %v5029
  %v5031 = vsel %vm2664, %v1809, -inf
  %v5032 = vrot.slane %v5031, 4
  %v5033 = vmax.f32 %v5031, %v5032
  %v5034 = vrot.slane %v5033, 2
  %v5035 = vmax.f32 %v5033, %v5034
  %v5036 = vrot.slane %v5035, 1
  %v5037 = vmax.f32 %v5035, %v5036
  %v5038 = vsel %vm2664, %v2321, -inf
  %v5039 = vrot.slane %v5038, 4
  %v5040 = vmax.f32 %v5038, %v5039
  %v5041 = vrot.slane %v5040, 2
  %v5042 = vmax.f32 %v5040, %v5041
  %v5043 = vrot.slane %v5042, 1
  %v5044 = vmax.f32 %v5042, %v5043
  %v5045 = vsel %vm2664, %v1810, -inf
  %v5046 = vrot.slane %v5045, 4
  %v5047 = vmax.f32 %v5045, %v5046
  %v5048 = vrot.slane %v5047, 2
  %v5049 = vmax.f32 %v5047, %v5048
  %v5050 = vrot.slane %v5049, 1
  %v5051 = vmax.f32 %v5049, %v5050
  %v5052 = vsel %vm2664, %v2322, -inf
  %v5053 = vrot.slane %v5052, 4
  %v5054 = vmax.f32 %v5052, %v5053
  %v5055 = vrot.slane %v5054, 2
  %v5056 = vmax.f32 %v5054, %v5055
  %v5057 = vrot.slane %v5056, 1
  %v5058 = vmax.f32 %v5056, %v5057
  %v5059 = vsel %vm2664, %v1811, -inf
  %v5060 = vrot.slane %v5059, 4
  %v5061 = vmax.f32 %v5059, %v5060
  %v5062 = vrot.slane %v5061, 2
  %v5063 = vmax.f32 %v5061, %v5062
  %v5064 = vrot.slane %v5063, 1
  %v5065 = vmax.f32 %v5063, %v5064
  %v5066 = vsel %vm2664, %v2323, -inf
  %v5067 = vrot.slane %v5066, 4
  %v5068 = vmax.f32 %v5066, %v5067
  %v5069 = vrot.slane %v5068, 2
  %v5070 = vmax.f32 %v5068, %v5069
  %v5071 = vrot.slane %v5070, 1
  %v5072 = vmax.f32 %v5070, %v5071
  %v5073 = vsel %vm2664, %v1812, -inf
  %v5074 = vrot.slane %v5073, 4
  %v5075 = vmax.f32 %v5073, %v5074
  %v5076 = vrot.slane %v5075, 2
  %v5077 = vmax.f32 %v5075, %v5076
  %v5078 = vrot.slane %v5077, 1
  %v5079 = vmax.f32 %v5077, %v5078
  %v5080 = vsel %vm2664, %v2324, -inf
  %v5081 = vrot.slane %v5080, 4
  %v5082 = vmax.f32 %v5080, %v5081
  %v5083 = vrot.slane %v5082, 2
  %v5084 = vmax.f32 %v5082, %v5083
  %v5085 = vrot.slane %v5084, 1
  %v5086 = vmax.f32 %v5084, %v5085
  %v5087 = vsel %vm2664, %v1813, -inf
  %v5088 = vrot.slane %v5087, 4
  %v5089 = vmax.f32 %v5087, %v5088
  %v5090 = vrot.slane %v5089, 2
  %v5091 = vmax.f32 %v5089, %v5090
  %v5092 = vrot.slane %v5091, 1
  %v5093 = vmax.f32 %v5091, %v5092
  %v5094 = vsel %vm2664, %v2325, -inf
  %v5095 = vrot.slane %v5094, 4
  %v5096 = vmax.f32 %v5094, %v5095
  %v5097 = vrot.slane %v5096, 2
  %v5098 = vmax.f32 %v5096, %v5097
  %v5099 = vrot.slane %v5098, 1
  %v5100 = vmax.f32 %v5098, %v5099
  %v5101 = vsel %vm2664, %v1814, -inf
  %v5102 = vrot.slane %v5101, 4
  %v5103 = vmax.f32 %v5101, %v5102
  %v5104 = vrot.slane %v5103, 2
  %v5105 = vmax.f32 %v5103, %v5104
  %v5106 = vrot.slane %v5105, 1
  %v5107 = vmax.f32 %v5105, %v5106
  %v5108 = vsel %vm2664, %v2326, -inf
  %v5109 = vrot.slane %v5108, 4
  %v5110 = vmax.f32 %v5108, %v5109
  %v5111 = vrot.slane %v5110, 2
  %v5112 = vmax.f32 %v5110, %v5111
  %v5113 = vrot.slane %v5112, 1
  %v5114 = vmax.f32 %v5112, %v5113
  %v5115 = vsel %vm2664, %v1815, -inf
  %v5116 = vrot.slane %v5115, 4
  %v5117 = vmax.f32 %v5115, %v5116
  %v5118 = vrot.slane %v5117, 2
  %v5119 = vmax.f32 %v5117, %v5118
  %v5120 = vrot.slane %v5119, 1
  %v5121 = vmax.f32 %v5119, %v5120
  %v5122 = vsel %vm2664, %v2327, -inf
  %v5123 = vrot.slane %v5122, 4
  %v5124 = vmax.f32 %v5122, %v5123
  %v5125 = vrot.slane %v5124, 2
  %v5126 = vmax.f32 %v5124, %v5125
  %v5127 = vrot.slane %v5126, 1
  %v5128 = vmax.f32 %v5126, %v5127
  %v5129 = vsel %vm2664, %v1816, -inf
  %v5130 = vrot.slane %v5129, 4
  %v5131 = vmax.f32 %v5129, %v5130
  %v5132 = vrot.slane %v5131, 2
  %v5133 = vmax.f32 %v5131, %v5132
  %v5134 = vrot.slane %v5133, 1
  %v5135 = vmax.f32 %v5133, %v5134
  %v5136 = vsel %vm2664, %v2328, -inf
  %v5137 = vrot.slane %v5136, 4
  %v5138 = vmax.f32 %v5136, %v5137
  %v5139 = vrot.slane %v5138, 2
  %v5140 = vmax.f32 %v5138, %v5139
  %v5141 = vrot.slane %v5140, 1
  %v5142 = vmax.f32 %v5140, %v5141
  %v5143 = vsel %vm2664, %v1817, -inf
  %v5144 = vrot.slane %v5143, 4
  %v5145 = vmax.f32 %v5143, %v5144
  %v5146 = vrot.slane %v5145, 2
  %v5147 = vmax.f32 %v5145, %v5146
  %v5148 = vrot.slane %v5147, 1
  %v5149 = vmax.f32 %v5147, %v5148
  %v5150 = vsel %vm2664, %v2329, -inf
  %v5151 = vrot.slane %v5150, 4
  %v5152 = vmax.f32 %v5150, %v5151
  %v5153 = vrot.slane %v5152, 2
  %v5154 = vmax.f32 %v5152, %v5153
  %v5155 = vrot.slane %v5154, 1
  %v5156 = vmax.f32 %v5154, %v5155
  %v5157 = vsel %vm2664, %v1818, -inf
  %v5158 = vrot.slane %v5157, 4
  %v5159 = vmax.f32 %v5157, %v5158
  %v5160 = vrot.slane %v5159, 2
  %v5161 = vmax.f32 %v5159, %v5160
  %v5162 = vrot.slane %v5161, 1
  %v5163 = vmax.f32 %v5161, %v5162
  %v5164 = vsel %vm2664, %v2330, -inf
  %v5165 = vrot.slane %v5164, 4
  %v5166 = vmax.f32 %v5164, %v5165
  %v5167 = vrot.slane %v5166, 2
  %v5168 = vmax.f32 %v5166, %v5167
  %v5169 = vrot.slane %v5168, 1
  %v5170 = vmax.f32 %v5168, %v5169
  %v5171 = vsel %vm2664, %v1819, -inf
  %v5172 = vrot.slane %v5171, 4
  %v5173 = vmax.f32 %v5171, %v5172
  %v5174 = vrot.slane %v5173, 2
  %v5175 = vmax.f32 %v5173, %v5174
  %v5176 = vrot.slane %v5175, 1
  %v5177 = vmax.f32 %v5175, %v5176
  %v5178 = vsel %vm2664, %v2331, -inf
  %v5179 = vrot.slane %v5178, 4
  %v5180 = vmax.f32 %v5178, %v5179
  %v5181 = vrot.slane %v5180, 2
  %v5182 = vmax.f32 %v5180, %v5181
  %v5183 = vrot.slane %v5182, 1
  %v5184 = vmax.f32 %v5182, %v5183
  %v5185 = vsel %vm2664, %v1820, -inf
  %v5186 = vrot.slane %v5185, 4
  %v5187 = vmax.f32 %v5185, %v5186
  %v5188 = vrot.slane %v5187, 2
  %v5189 = vmax.f32 %v5187, %v5188
  %v5190 = vrot.slane %v5189, 1
  %v5191 = vmax.f32 %v5189, %v5190
  %v5192 = vsel %vm2664, %v2332, -inf
  %v5193 = vrot.slane %v5192, 4
  %v5194 = vmax.f32 %v5192, %v5193
  %v5195 = vrot.slane %v5194, 2
  %v5196 = vmax.f32 %v5194, %v5195
  %v5197 = vrot.slane %v5196, 1
  %v5198 = vmax.f32 %v5196, %v5197
  %v5199 = vsel %vm2664, %v1821, -inf
  %v5200 = vrot.slane %v5199, 4
  %v5201 = vmax.f32 %v5199, %v5200
  %v5202 = vrot.slane %v5201, 2
  %v5203 = vmax.f32 %v5201, %v5202
  %v5204 = vrot.slane %v5203, 1
  %v5205 = vmax.f32 %v5203, %v5204
  %v5206 = vsel %vm2664, %v2333, -inf
  %v5207 = vrot.slane %v5206, 4
  %v5208 = vmax.f32 %v5206, %v5207
  %v5209 = vrot.slane %v5208, 2
  %v5210 = vmax.f32 %v5208, %v5209
  %v5211 = vrot.slane %v5210, 1
  %v5212 = vmax.f32 %v5210, %v5211
  %v5213 = vsel %vm2664, %v1822, -inf
  %v5214 = vrot.slane %v5213, 4
  %v5215 = vmax.f32 %v5213, %v5214
  %v5216 = vrot.slane %v5215, 2
  %v5217 = vmax.f32 %v5215, %v5216
  %v5218 = vrot.slane %v5217, 1
  %v5219 = vmax.f32 %v5217, %v5218
  %v5220 = vsel %vm2664, %v2334, -inf
  %v5221 = vrot.slane %v5220, 4
  %v5222 = vmax.f32 %v5220, %v5221
  %v5223 = vrot.slane %v5222, 2
  %v5224 = vmax.f32 %v5222, %v5223
  %v5225 = vrot.slane %v5224, 1
  %v5226 = vmax.f32 %v5224, %v5225
  %v5227 = vsel %vm2664, %v1823, -inf
  %v5228 = vrot.slane %v5227, 4
  %v5229 = vmax.f32 %v5227, %v5228
  %v5230 = vrot.slane %v5229, 2
  %v5231 = vmax.f32 %v5229, %v5230
  %v5232 = vrot.slane %v5231, 1
  %v5233 = vmax.f32 %v5231, %v5232
  %v5234 = vsel %vm2664, %v2335, -inf
  %v5235 = vrot.slane %v5234, 4
  %v5236 = vmax.f32 %v5234, %v5235
  %v5237 = vrot.slane %v5236, 2
  %v5238 = vmax.f32 %v5236, %v5237
  %v5239 = vrot.slane %v5238, 1
  %v5240 = vmax.f32 %v5238, %v5239
  %v5241 = vsel %vm2664, %v1824, -inf
  %v5242 = vrot.slane %v5241, 4
  %v5243 = vmax.f32 %v5241, %v5242
  %v5244 = vrot.slane %v5243, 2
  %v5245 = vmax.f32 %v5243, %v5244
  %v5246 = vrot.slane %v5245, 1
  %v5247 = vmax.f32 %v5245, %v5246
  %v5248 = vsel %vm2664, %v2336, -inf
  %v5249 = vrot.slane %v5248, 4
  %v5250 = vmax.f32 %v5248, %v5249
  %v5251 = vrot.slane %v5250, 2
  %v5252 = vmax.f32 %v5250, %v5251
  %v5253 = vrot.slane %v5252, 1
  %v5254 = vmax.f32 %v5252, %v5253
  %v5255 = vsel %vm2664, %v1825, -inf
  %v5256 = vrot.slane %v5255, 4
  %v5257 = vmax.f32 %v5255, %v5256
  %v5258 = vrot.slane %v5257, 2
  %v5259 = vmax.f32 %v5257, %v5258
  %v5260 = vrot.slane %v5259, 1
  %v5261 = vmax.f32 %v5259, %v5260
  %v5262 = vsel %vm2664, %v2337, -inf
  %v5263 = vrot.slane %v5262, 4
  %v5264 = vmax.f32 %v5262, %v5263
  %v5265 = vrot.slane %v5264, 2
  %v5266 = vmax.f32 %v5264, %v5265
  %v5267 = vrot.slane %v5266, 1
  %v5268 = vmax.f32 %v5266, %v5267
  %v5269 = vsel %vm2664, %v1826, -inf
  %v5270 = vrot.slane %v5269, 4
  %v5271 = vmax.f32 %v5269, %v5270
  %v5272 = vrot.slane %v5271, 2
  %v5273 = vmax.f32 %v5271, %v5272
  %v5274 = vrot.slane %v5273, 1
  %v5275 = vmax.f32 %v5273, %v5274
  %v5276 = vsel %vm2664, %v2338, -inf
  %v5277 = vrot.slane %v5276, 4
  %v5278 = vmax.f32 %v5276, %v5277
  %v5279 = vrot.slane %v5278, 2
  %v5280 = vmax.f32 %v5278, %v5279
  %v5281 = vrot.slane %v5280, 1
  %v5282 = vmax.f32 %v5280, %v5281
  %v5283 = vsel %vm2664, %v1827, -inf
  %v5284 = vrot.slane %v5283, 4
  %v5285 = vmax.f32 %v5283, %v5284
  %v5286 = vrot.slane %v5285, 2
  %v5287 = vmax.f32 %v5285, %v5286
  %v5288 = vrot.slane %v5287, 1
  %v5289 = vmax.f32 %v5287, %v5288
  %v5290 = vsel %vm2664, %v2339, -inf
  %v5291 = vrot.slane %v5290, 4
  %v5292 = vmax.f32 %v5290, %v5291
  %v5293 = vrot.slane %v5292, 2
  %v5294 = vmax.f32 %v5292, %v5293
  %v5295 = vrot.slane %v5294, 1
  %v5296 = vmax.f32 %v5294, %v5295
  %v5297 = vsel %vm2664, %v1828, -inf
  %v5298 = vrot.slane %v5297, 4
  %v5299 = vmax.f32 %v5297, %v5298
  %v5300 = vrot.slane %v5299, 2
  %v5301 = vmax.f32 %v5299, %v5300
  %v5302 = vrot.slane %v5301, 1
  %v5303 = vmax.f32 %v5301, %v5302
  %v5304 = vsel %vm2664, %v2340, -inf
  %v5305 = vrot.slane %v5304, 4
  %v5306 = vmax.f32 %v5304, %v5305
  %v5307 = vrot.slane %v5306, 2
  %v5308 = vmax.f32 %v5306, %v5307
  %v5309 = vrot.slane %v5308, 1
  %v5310 = vmax.f32 %v5308, %v5309
  %v5311 = vsel %vm2664, %v1829, -inf
  %v5312 = vrot.slane %v5311, 4
  %v5313 = vmax.f32 %v5311, %v5312
  %v5314 = vrot.slane %v5313, 2
  %v5315 = vmax.f32 %v5313, %v5314
  %v5316 = vrot.slane %v5315, 1
  %v5317 = vmax.f32 %v5315, %v5316
  %v5318 = vsel %vm2664, %v2341, -inf
  %v5319 = vrot.slane %v5318, 4
  %v5320 = vmax.f32 %v5318, %v5319
  %v5321 = vrot.slane %v5320, 2
  %v5322 = vmax.f32 %v5320, %v5321
  %v5323 = vrot.slane %v5322, 1
  %v5324 = vmax.f32 %v5322, %v5323
  %v5325 = vsel %vm2664, %v1830, -inf
  %v5326 = vrot.slane %v5325, 4
  %v5327 = vmax.f32 %v5325, %v5326
  %v5328 = vrot.slane %v5327, 2
  %v5329 = vmax.f32 %v5327, %v5328
  %v5330 = vrot.slane %v5329, 1
  %v5331 = vmax.f32 %v5329, %v5330
  %v5332 = vsel %vm2664, %v2342, -inf
  %v5333 = vrot.slane %v5332, 4
  %v5334 = vmax.f32 %v5332, %v5333
  %v5335 = vrot.slane %v5334, 2
  %v5336 = vmax.f32 %v5334, %v5335
  %v5337 = vrot.slane %v5336, 1
  %v5338 = vmax.f32 %v5336, %v5337
  %v5339 = vsel %vm2664, %v1831, -inf
  %v5340 = vrot.slane %v5339, 4
  %v5341 = vmax.f32 %v5339, %v5340
  %v5342 = vrot.slane %v5341, 2
  %v5343 = vmax.f32 %v5341, %v5342
  %v5344 = vrot.slane %v5343, 1
  %v5345 = vmax.f32 %v5343, %v5344
  %v5346 = vsel %vm2664, %v2343, -inf
  %v5347 = vrot.slane %v5346, 4
  %v5348 = vmax.f32 %v5346, %v5347
  %v5349 = vrot.slane %v5348, 2
  %v5350 = vmax.f32 %v5348, %v5349
  %v5351 = vrot.slane %v5350, 1
  %v5352 = vmax.f32 %v5350, %v5351
  %v5353 = vsel %vm2664, %v1832, -inf
  %v5354 = vrot.slane %v5353, 4
  %v5355 = vmax.f32 %v5353, %v5354
  %v5356 = vrot.slane %v5355, 2
  %v5357 = vmax.f32 %v5355, %v5356
  %v5358 = vrot.slane %v5357, 1
  %v5359 = vmax.f32 %v5357, %v5358
  %v5360 = vsel %vm2664, %v2344, -inf
  %v5361 = vrot.slane %v5360, 4
  %v5362 = vmax.f32 %v5360, %v5361
  %v5363 = vrot.slane %v5362, 2
  %v5364 = vmax.f32 %v5362, %v5363
  %v5365 = vrot.slane %v5364, 1
  %v5366 = vmax.f32 %v5364, %v5365
  %v5367 = vsel %vm2664, %v1833, -inf
  %v5368 = vrot.slane %v5367, 4
  %v5369 = vmax.f32 %v5367, %v5368
  %v5370 = vrot.slane %v5369, 2
  %v5371 = vmax.f32 %v5369, %v5370
  %v5372 = vrot.slane %v5371, 1
  %v5373 = vmax.f32 %v5371, %v5372
  %v5374 = vsel %vm2664, %v2345, -inf
  %v5375 = vrot.slane %v5374, 4
  %v5376 = vmax.f32 %v5374, %v5375
  %v5377 = vrot.slane %v5376, 2
  %v5378 = vmax.f32 %v5376, %v5377
  %v5379 = vrot.slane %v5378, 1
  %v5380 = vmax.f32 %v5378, %v5379
  %v5381 = vsel %vm2664, %v1834, -inf
  %v5382 = vrot.slane %v5381, 4
  %v5383 = vmax.f32 %v5381, %v5382
  %v5384 = vrot.slane %v5383, 2
  %v5385 = vmax.f32 %v5383, %v5384
  %v5386 = vrot.slane %v5385, 1
  %v5387 = vmax.f32 %v5385, %v5386
  %v5388 = vsel %vm2664, %v2346, -inf
  %v5389 = vrot.slane %v5388, 4
  %v5390 = vmax.f32 %v5388, %v5389
  %v5391 = vrot.slane %v5390, 2
  %v5392 = vmax.f32 %v5390, %v5391
  %v5393 = vrot.slane %v5392, 1
  %v5394 = vmax.f32 %v5392, %v5393
  %v5395 = vsel %vm2664, %v1835, -inf
  %v5396 = vrot.slane %v5395, 4
  %v5397 = vmax.f32 %v5395, %v5396
  %v5398 = vrot.slane %v5397, 2
  %v5399 = vmax.f32 %v5397, %v5398
  %v5400 = vrot.slane %v5399, 1
  %v5401 = vmax.f32 %v5399, %v5400
  %v5402 = vsel %vm2664, %v2347, -inf
  %v5403 = vrot.slane %v5402, 4
  %v5404 = vmax.f32 %v5402, %v5403
  %v5405 = vrot.slane %v5404, 2
  %v5406 = vmax.f32 %v5404, %v5405
  %v5407 = vrot.slane %v5406, 1
  %v5408 = vmax.f32 %v5406, %v5407
  %v5409 = vsel %vm2664, %v1836, -inf
  %v5410 = vrot.slane %v5409, 4
  %v5411 = vmax.f32 %v5409, %v5410
  %v5412 = vrot.slane %v5411, 2
  %v5413 = vmax.f32 %v5411, %v5412
  %v5414 = vrot.slane %v5413, 1
  %v5415 = vmax.f32 %v5413, %v5414
  %v5416 = vsel %vm2664, %v2348, -inf
  %v5417 = vrot.slane %v5416, 4
  %v5418 = vmax.f32 %v5416, %v5417
  %v5419 = vrot.slane %v5418, 2
  %v5420 = vmax.f32 %v5418, %v5419
  %v5421 = vrot.slane %v5420, 1
  %v5422 = vmax.f32 %v5420, %v5421
  %v5423 = vsel %vm2664, %v1837, -inf
  %v5424 = vrot.slane %v5423, 4
  %v5425 = vmax.f32 %v5423, %v5424
  %v5426 = vrot.slane %v5425, 2
  %v5427 = vmax.f32 %v5425, %v5426
  %v5428 = vrot.slane %v5427, 1
  %v5429 = vmax.f32 %v5427, %v5428
  %v5430 = vsel %vm2664, %v2349, -inf
  %v5431 = vrot.slane %v5430, 4
  %v5432 = vmax.f32 %v5430, %v5431
  %v5433 = vrot.slane %v5432, 2
  %v5434 = vmax.f32 %v5432, %v5433
  %v5435 = vrot.slane %v5434, 1
  %v5436 = vmax.f32 %v5434, %v5435
  %v5437 = vsel %vm2664, %v1838, -inf
  %v5438 = vrot.slane %v5437, 4
  %v5439 = vmax.f32 %v5437, %v5438
  %v5440 = vrot.slane %v5439, 2
  %v5441 = vmax.f32 %v5439, %v5440
  %v5442 = vrot.slane %v5441, 1
  %v5443 = vmax.f32 %v5441, %v5442
  %v5444 = vsel %vm2664, %v2350, -inf
  %v5445 = vrot.slane %v5444, 4
  %v5446 = vmax.f32 %v5444, %v5445
  %v5447 = vrot.slane %v5446, 2
  %v5448 = vmax.f32 %v5446, %v5447
  %v5449 = vrot.slane %v5448, 1
  %v5450 = vmax.f32 %v5448, %v5449
  %v5451 = vsel %vm2664, %v1839, -inf
  %v5452 = vrot.slane %v5451, 4
  %v5453 = vmax.f32 %v5451, %v5452
  %v5454 = vrot.slane %v5453, 2
  %v5455 = vmax.f32 %v5453, %v5454
  %v5456 = vrot.slane %v5455, 1
  %v5457 = vmax.f32 %v5455, %v5456
  %v5458 = vsel %vm2664, %v2351, -inf
  %v5459 = vrot.slane %v5458, 4
  %v5460 = vmax.f32 %v5458, %v5459
  %v5461 = vrot.slane %v5460, 2
  %v5462 = vmax.f32 %v5460, %v5461
  %v5463 = vrot.slane %v5462, 1
  %v5464 = vmax.f32 %v5462, %v5463
  %v5465 = vsel %vm2664, %v1840, -inf
  %v5466 = vrot.slane %v5465, 4
  %v5467 = vmax.f32 %v5465, %v5466
  %v5468 = vrot.slane %v5467, 2
  %v5469 = vmax.f32 %v5467, %v5468
  %v5470 = vrot.slane %v5469, 1
  %v5471 = vmax.f32 %v5469, %v5470
  %v5472 = vsel %vm2664, %v2352, -inf
  %v5473 = vrot.slane %v5472, 4
  %v5474 = vmax.f32 %v5472, %v5473
  %v5475 = vrot.slane %v5474, 2
  %v5476 = vmax.f32 %v5474, %v5475
  %v5477 = vrot.slane %v5476, 1
  %v5478 = vmax.f32 %v5476, %v5477
  %v5479 = vsel %vm2664, %v1841, -inf
  %v5480 = vrot.slane %v5479, 4
  %v5481 = vmax.f32 %v5479, %v5480
  %v5482 = vrot.slane %v5481, 2
  %v5483 = vmax.f32 %v5481, %v5482
  %v5484 = vrot.slane %v5483, 1
  %v5485 = vmax.f32 %v5483, %v5484
  %v5486 = vsel %vm2664, %v2353, -inf
  %v5487 = vrot.slane %v5486, 4
  %v5488 = vmax.f32 %v5486, %v5487
  %v5489 = vrot.slane %v5488, 2
  %v5490 = vmax.f32 %v5488, %v5489
  %v5491 = vrot.slane %v5490, 1
  %v5492 = vmax.f32 %v5490, %v5491
  %v5493 = vsel %vm2664, %v1842, -inf
  %v5494 = vrot.slane %v5493, 4
  %v5495 = vmax.f32 %v5493, %v5494
  %v5496 = vrot.slane %v5495, 2
  %v5497 = vmax.f32 %v5495, %v5496
  %v5498 = vrot.slane %v5497, 1
  %v5499 = vmax.f32 %v5497, %v5498
  %v5500 = vsel %vm2664, %v2354, -inf
  %v5501 = vrot.slane %v5500, 4
  %v5502 = vmax.f32 %v5500, %v5501
  %v5503 = vrot.slane %v5502, 2
  %v5504 = vmax.f32 %v5502, %v5503
  %v5505 = vrot.slane %v5504, 1
  %v5506 = vmax.f32 %v5504, %v5505
  %v5507 = vsel %vm2664, %v1843, -inf
  %v5508 = vrot.slane %v5507, 4
  %v5509 = vmax.f32 %v5507, %v5508
  %v5510 = vrot.slane %v5509, 2
  %v5511 = vmax.f32 %v5509, %v5510
  %v5512 = vrot.slane %v5511, 1
  %v5513 = vmax.f32 %v5511, %v5512
  %v5514 = vsel %vm2664, %v2355, -inf
  %v5515 = vrot.slane %v5514, 4
  %v5516 = vmax.f32 %v5514, %v5515
  %v5517 = vrot.slane %v5516, 2
  %v5518 = vmax.f32 %v5516, %v5517
  %v5519 = vrot.slane %v5518, 1
  %v5520 = vmax.f32 %v5518, %v5519
  %v5521 = vsel %vm2664, %v1844, -inf
  %v5522 = vrot.slane %v5521, 4
  %v5523 = vmax.f32 %v5521, %v5522
  %v5524 = vrot.slane %v5523, 2
  %v5525 = vmax.f32 %v5523, %v5524
  %v5526 = vrot.slane %v5525, 1
  %v5527 = vmax.f32 %v5525, %v5526
  %v5528 = vsel %vm2664, %v2356, -inf
  %v5529 = vrot.slane %v5528, 4
  %v5530 = vmax.f32 %v5528, %v5529
  %v5531 = vrot.slane %v5530, 2
  %v5532 = vmax.f32 %v5530, %v5531
  %v5533 = vrot.slane %v5532, 1
  %v5534 = vmax.f32 %v5532, %v5533
  %v5535 = vsel %vm2664, %v1845, -inf
  %v5536 = vrot.slane %v5535, 4
  %v5537 = vmax.f32 %v5535, %v5536
  %v5538 = vrot.slane %v5537, 2
  %v5539 = vmax.f32 %v5537, %v5538
  %v5540 = vrot.slane %v5539, 1
  %v5541 = vmax.f32 %v5539, %v5540
  %v5542 = vsel %vm2664, %v2357, -inf
  %v5543 = vrot.slane %v5542, 4
  %v5544 = vmax.f32 %v5542, %v5543
  %v5545 = vrot.slane %v5544, 2
  %v5546 = vmax.f32 %v5544, %v5545
  %v5547 = vrot.slane %v5546, 1
  %v5548 = vmax.f32 %v5546, %v5547
  %v5549 = vsel %vm2664, %v1846, -inf
  %v5550 = vrot.slane %v5549, 4
  %v5551 = vmax.f32 %v5549, %v5550
  %v5552 = vrot.slane %v5551, 2
  %v5553 = vmax.f32 %v5551, %v5552
  %v5554 = vrot.slane %v5553, 1
  %v5555 = vmax.f32 %v5553, %v5554
  %v5556 = vsel %vm2664, %v2358, -inf
  %v5557 = vrot.slane %v5556, 4
  %v5558 = vmax.f32 %v5556, %v5557
  %v5559 = vrot.slane %v5558, 2
  %v5560 = vmax.f32 %v5558, %v5559
  %v5561 = vrot.slane %v5560, 1
  %v5562 = vmax.f32 %v5560, %v5561
  %v5563 = vsel %vm2664, %v1847, -inf
  %v5564 = vrot.slane %v5563, 4
  %v5565 = vmax.f32 %v5563, %v5564
  %v5566 = vrot.slane %v5565, 2
  %v5567 = vmax.f32 %v5565, %v5566
  %v5568 = vrot.slane %v5567, 1
  %v5569 = vmax.f32 %v5567, %v5568
  %v5570 = vsel %vm2664, %v2359, -inf
  %v5571 = vrot.slane %v5570, 4
  %v5572 = vmax.f32 %v5570, %v5571
  %v5573 = vrot.slane %v5572, 2
  %v5574 = vmax.f32 %v5572, %v5573
  %v5575 = vrot.slane %v5574, 1
  %v5576 = vmax.f32 %v5574, %v5575
  %v5577 = vsel %vm2664, %v1848, -inf
  %v5578 = vrot.slane %v5577, 4
  %v5579 = vmax.f32 %v5577, %v5578
  %v5580 = vrot.slane %v5579, 2
  %v5581 = vmax.f32 %v5579, %v5580
  %v5582 = vrot.slane %v5581, 1
  %v5583 = vmax.f32 %v5581, %v5582
  %v5584 = vsel %vm2664, %v2360, -inf
  %v5585 = vrot.slane %v5584, 4
  %v5586 = vmax.f32 %v5584, %v5585
  %v5587 = vrot.slane %v5586, 2
  %v5588 = vmax.f32 %v5586, %v5587
  %v5589 = vrot.slane %v5588, 1
  %v5590 = vmax.f32 %v5588, %v5589
  %v5591 = vsel %vm2664, %v1849, -inf
  %v5592 = vrot.slane %v5591, 4
  %v5593 = vmax.f32 %v5591, %v5592
  %v5594 = vrot.slane %v5593, 2
  %v5595 = vmax.f32 %v5593, %v5594
  %v5596 = vrot.slane %v5595, 1
  %v5597 = vmax.f32 %v5595, %v5596
  %v5598 = vsel %vm2664, %v2361, -inf
  %v5599 = vrot.slane %v5598, 4
  %v5600 = vmax.f32 %v5598, %v5599
  %v5601 = vrot.slane %v5600, 2
  %v5602 = vmax.f32 %v5600, %v5601
  %v5603 = vrot.slane %v5602, 1
  %v5604 = vmax.f32 %v5602, %v5603
  %v5605 = vsel %vm2664, %v1850, -inf
  %v5606 = vrot.slane %v5605, 4
  %v5607 = vmax.f32 %v5605, %v5606
  %v5608 = vrot.slane %v5607, 2
  %v5609 = vmax.f32 %v5607, %v5608
  %v5610 = vrot.slane %v5609, 1
  %v5611 = vmax.f32 %v5609, %v5610
  %v5612 = vsel %vm2664, %v2362, -inf
  %v5613 = vrot.slane %v5612, 4
  %v5614 = vmax.f32 %v5612, %v5613
  %v5615 = vrot.slane %v5614, 2
  %v5616 = vmax.f32 %v5614, %v5615
  %v5617 = vrot.slane %v5616, 1
  %v5618 = vmax.f32 %v5616, %v5617
  %v5619 = vsel %vm2664, %v1851, -inf
  %v5620 = vrot.slane %v5619, 4
  %v5621 = vmax.f32 %v5619, %v5620
  %v5622 = vrot.slane %v5621, 2
  %v5623 = vmax.f32 %v5621, %v5622
  %v5624 = vrot.slane %v5623, 1
  %v5625 = vmax.f32 %v5623, %v5624
  %v5626 = vsel %vm2664, %v2363, -inf
  %v5627 = vrot.slane %v5626, 4
  %v5628 = vmax.f32 %v5626, %v5627
  %v5629 = vrot.slane %v5628, 2
  %v5630 = vmax.f32 %v5628, %v5629
  %v5631 = vrot.slane %v5630, 1
  %v5632 = vmax.f32 %v5630, %v5631
  %v5633 = vsel %vm2664, %v1852, -inf
  %v5634 = vrot.slane %v5633, 4
  %v5635 = vmax.f32 %v5633, %v5634
  %v5636 = vrot.slane %v5635, 2
  %v5637 = vmax.f32 %v5635, %v5636
  %v5638 = vrot.slane %v5637, 1
  %v5639 = vmax.f32 %v5637, %v5638
  %v5640 = vsel %vm2664, %v2364, -inf
  %v5641 = vrot.slane %v5640, 4
  %v5642 = vmax.f32 %v5640, %v5641
  %v5643 = vrot.slane %v5642, 2
  %v5644 = vmax.f32 %v5642, %v5643
  %v5645 = vrot.slane %v5644, 1
  %v5646 = vmax.f32 %v5644, %v5645
  %v5647 = vsel %vm2664, %v1853, -inf
  %v5648 = vrot.slane %v5647, 4
  %v5649 = vmax.f32 %v5647, %v5648
  %v5650 = vrot.slane %v5649, 2
  %v5651 = vmax.f32 %v5649, %v5650
  %v5652 = vrot.slane %v5651, 1
  %v5653 = vmax.f32 %v5651, %v5652
  %v5654 = vsel %vm2664, %v2365, -inf
  %v5655 = vrot.slane %v5654, 4
  %v5656 = vmax.f32 %v5654, %v5655
  %v5657 = vrot.slane %v5656, 2
  %v5658 = vmax.f32 %v5656, %v5657
  %v5659 = vrot.slane %v5658, 1
  %v5660 = vmax.f32 %v5658, %v5659
  %v5661 = vsel %vm2664, %v1854, -inf
  %v5662 = vrot.slane %v5661, 4
  %v5663 = vmax.f32 %v5661, %v5662
  %v5664 = vrot.slane %v5663, 2
  %v5665 = vmax.f32 %v5663, %v5664
  %v5666 = vrot.slane %v5665, 1
  %v5667 = vmax.f32 %v5665, %v5666
  %v5668 = vsel %vm2664, %v2366, -inf
  %v5669 = vrot.slane %v5668, 4
  %v5670 = vmax.f32 %v5668, %v5669
  %v5671 = vrot.slane %v5670, 2
  %v5672 = vmax.f32 %v5670, %v5671
  %v5673 = vrot.slane %v5672, 1
  %v5674 = vmax.f32 %v5672, %v5673
  %v5675 = vsel %vm2664, %v1855, -inf
  %v5676 = vrot.slane %v5675, 4
  %v5677 = vmax.f32 %v5675, %v5676
  %v5678 = vrot.slane %v5677, 2
  %v5679 = vmax.f32 %v5677, %v5678
  %v5680 = vrot.slane %v5679, 1
  %v5681 = vmax.f32 %v5679, %v5680
  %v5682 = vsel %vm2664, %v2367, -inf
  %v5683 = vrot.slane %v5682, 4
  %v5684 = vmax.f32 %v5682, %v5683
  %v5685 = vrot.slane %v5684, 2
  %v5686 = vmax.f32 %v5684, %v5685
  %v5687 = vrot.slane %v5686, 1
  %v5688 = vmax.f32 %v5686, %v5687
  %v5689 = vsel %vm2664, %v1856, -inf
  %v5690 = vrot.slane %v5689, 4
  %v5691 = vmax.f32 %v5689, %v5690
  %v5692 = vrot.slane %v5691, 2
  %v5693 = vmax.f32 %v5691, %v5692
  %v5694 = vrot.slane %v5693, 1
  %v5695 = vmax.f32 %v5693, %v5694
  %v5696 = vsel %vm2664, %v2368, -inf
  %v5697 = vrot.slane %v5696, 4
  %v5698 = vmax.f32 %v5696, %v5697
  %v5699 = vrot.slane %v5698, 2
  %v5700 = vmax.f32 %v5698, %v5699
  %v5701 = vrot.slane %v5700, 1
  %v5702 = vmax.f32 %v5700, %v5701
  %v5703 = vsel %vm2664, %v1857, -inf
  %v5704 = vrot.slane %v5703, 4
  %v5705 = vmax.f32 %v5703, %v5704
  %v5706 = vrot.slane %v5705, 2
  %v5707 = vmax.f32 %v5705, %v5706
  %v5708 = vrot.slane %v5707, 1
  %v5709 = vmax.f32 %v5707, %v5708
  %v5710 = vsel %vm2664, %v2369, -inf
  %v5711 = vrot.slane %v5710, 4
  %v5712 = vmax.f32 %v5710, %v5711
  %v5713 = vrot.slane %v5712, 2
  %v5714 = vmax.f32 %v5712, %v5713
  %v5715 = vrot.slane %v5714, 1
  %v5716 = vmax.f32 %v5714, %v5715
  %v5717 = vsel %vm2664, %v1858, -inf
  %v5718 = vrot.slane %v5717, 4
  %v5719 = vmax.f32 %v5717, %v5718
  %v5720 = vrot.slane %v5719, 2
  %v5721 = vmax.f32 %v5719, %v5720
  %v5722 = vrot.slane %v5721, 1
  %v5723 = vmax.f32 %v5721, %v5722
  %v5724 = vsel %vm2664, %v2370, -inf
  %v5725 = vrot.slane %v5724, 4
  %v5726 = vmax.f32 %v5724, %v5725
  %v5727 = vrot.slane %v5726, 2
  %v5728 = vmax.f32 %v5726, %v5727
  %v5729 = vrot.slane %v5728, 1
  %v5730 = vmax.f32 %v5728, %v5729
  %v5731 = vsel %vm2664, %v1859, -inf
  %v5732 = vrot.slane %v5731, 4
  %v5733 = vmax.f32 %v5731, %v5732
  %v5734 = vrot.slane %v5733, 2
  %v5735 = vmax.f32 %v5733, %v5734
  %v5736 = vrot.slane %v5735, 1
  %v5737 = vmax.f32 %v5735, %v5736
  %v5738 = vsel %vm2664, %v2371, -inf
  %v5739 = vrot.slane %v5738, 4
  %v5740 = vmax.f32 %v5738, %v5739
  %v5741 = vrot.slane %v5740, 2
  %v5742 = vmax.f32 %v5740, %v5741
  %v5743 = vrot.slane %v5742, 1
  %v5744 = vmax.f32 %v5742, %v5743
  %v5745 = vsel %vm2664, %v1860, -inf
  %v5746 = vrot.slane %v5745, 4
  %v5747 = vmax.f32 %v5745, %v5746
  %v5748 = vrot.slane %v5747, 2
  %v5749 = vmax.f32 %v5747, %v5748
  %v5750 = vrot.slane %v5749, 1
  %v5751 = vmax.f32 %v5749, %v5750
  %v5752 = vsel %vm2664, %v2372, -inf
  %v5753 = vrot.slane %v5752, 4
  %v5754 = vmax.f32 %v5752, %v5753
  %v5755 = vrot.slane %v5754, 2
  %v5756 = vmax.f32 %v5754, %v5755
  %v5757 = vrot.slane %v5756, 1
  %v5758 = vmax.f32 %v5756, %v5757
  %v5759 = vsel %vm2664, %v1861, -inf
  %v5760 = vrot.slane %v5759, 4
  %v5761 = vmax.f32 %v5759, %v5760
  %v5762 = vrot.slane %v5761, 2
  %v5763 = vmax.f32 %v5761, %v5762
  %v5764 = vrot.slane %v5763, 1
  %v5765 = vmax.f32 %v5763, %v5764
  %v5766 = vsel %vm2664, %v2373, -inf
  %v5767 = vrot.slane %v5766, 4
  %v5768 = vmax.f32 %v5766, %v5767
  %v5769 = vrot.slane %v5768, 2
  %v5770 = vmax.f32 %v5768, %v5769
  %v5771 = vrot.slane %v5770, 1
  %v5772 = vmax.f32 %v5770, %v5771
  %v5773 = vsel %vm2664, %v1862, -inf
  %v5774 = vrot.slane %v5773, 4
  %v5775 = vmax.f32 %v5773, %v5774
  %v5776 = vrot.slane %v5775, 2
  %v5777 = vmax.f32 %v5775, %v5776
  %v5778 = vrot.slane %v5777, 1
  %v5779 = vmax.f32 %v5777, %v5778
  %v5780 = vsel %vm2664, %v2374, -inf
  %v5781 = vrot.slane %v5780, 4
  %v5782 = vmax.f32 %v5780, %v5781
  %v5783 = vrot.slane %v5782, 2
  %v5784 = vmax.f32 %v5782, %v5783
  %v5785 = vrot.slane %v5784, 1
  %v5786 = vmax.f32 %v5784, %v5785
  %v5787 = vsel %vm2664, %v1863, -inf
  %v5788 = vrot.slane %v5787, 4
  %v5789 = vmax.f32 %v5787, %v5788
  %v5790 = vrot.slane %v5789, 2
  %v5791 = vmax.f32 %v5789, %v5790
  %v5792 = vrot.slane %v5791, 1
  %v5793 = vmax.f32 %v5791, %v5792
  %v5794 = vsel %vm2664, %v2375, -inf
  %v5795 = vrot.slane %v5794, 4
  %v5796 = vmax.f32 %v5794, %v5795
  %v5797 = vrot.slane %v5796, 2
  %v5798 = vmax.f32 %v5796, %v5797
  %v5799 = vrot.slane %v5798, 1
  %v5800 = vmax.f32 %v5798, %v5799
  %v5801 = vsel %vm2664, %v1864, -inf
  %v5802 = vrot.slane %v5801, 4
  %v5803 = vmax.f32 %v5801, %v5802
  %v5804 = vrot.slane %v5803, 2
  %v5805 = vmax.f32 %v5803, %v5804
  %v5806 = vrot.slane %v5805, 1
  %v5807 = vmax.f32 %v5805, %v5806
  %v5808 = vsel %vm2664, %v2376, -inf
  %v5809 = vrot.slane %v5808, 4
  %v5810 = vmax.f32 %v5808, %v5809
  %v5811 = vrot.slane %v5810, 2
  %v5812 = vmax.f32 %v5810, %v5811
  %v5813 = vrot.slane %v5812, 1
  %v5814 = vmax.f32 %v5812, %v5813
  %v5815 = vsel %vm2664, %v1865, -inf
  %v5816 = vrot.slane %v5815, 4
  %v5817 = vmax.f32 %v5815, %v5816
  %v5818 = vrot.slane %v5817, 2
  %v5819 = vmax.f32 %v5817, %v5818
  %v5820 = vrot.slane %v5819, 1
  %v5821 = vmax.f32 %v5819, %v5820
  %v5822 = vsel %vm2664, %v2377, -inf
  %v5823 = vrot.slane %v5822, 4
  %v5824 = vmax.f32 %v5822, %v5823
  %v5825 = vrot.slane %v5824, 2
  %v5826 = vmax.f32 %v5824, %v5825
  %v5827 = vrot.slane %v5826, 1
  %v5828 = vmax.f32 %v5826, %v5827
  %v5829 = vsel %vm2664, %v1866, -inf
  %v5830 = vrot.slane %v5829, 4
  %v5831 = vmax.f32 %v5829, %v5830
  %v5832 = vrot.slane %v5831, 2
  %v5833 = vmax.f32 %v5831, %v5832
  %v5834 = vrot.slane %v5833, 1
  %v5835 = vmax.f32 %v5833, %v5834
  %v5836 = vsel %vm2664, %v2378, -inf
  %v5837 = vrot.slane %v5836, 4
  %v5838 = vmax.f32 %v5836, %v5837
  %v5839 = vrot.slane %v5838, 2
  %v5840 = vmax.f32 %v5838, %v5839
  %v5841 = vrot.slane %v5840, 1
  %v5842 = vmax.f32 %v5840, %v5841
  %v5843 = vsel %vm2664, %v1867, -inf
  %v5844 = vrot.slane %v5843, 4
  %v5845 = vmax.f32 %v5843, %v5844
  %v5846 = vrot.slane %v5845, 2
  %v5847 = vmax.f32 %v5845, %v5846
  %v5848 = vrot.slane %v5847, 1
  %v5849 = vmax.f32 %v5847, %v5848
  %v5850 = vsel %vm2664, %v2379, -inf
  %v5851 = vrot.slane %v5850, 4
  %v5852 = vmax.f32 %v5850, %v5851
  %v5853 = vrot.slane %v5852, 2
  %v5854 = vmax.f32 %v5852, %v5853
  %v5855 = vrot.slane %v5854, 1
  %v5856 = vmax.f32 %v5854, %v5855
  %v5857 = vsel %vm2664, %v1868, -inf
  %v5858 = vrot.slane %v5857, 4
  %v5859 = vmax.f32 %v5857, %v5858
  %v5860 = vrot.slane %v5859, 2
  %v5861 = vmax.f32 %v5859, %v5860
  %v5862 = vrot.slane %v5861, 1
  %v5863 = vmax.f32 %v5861, %v5862
  %v5864 = vsel %vm2664, %v2380, -inf
  %v5865 = vrot.slane %v5864, 4
  %v5866 = vmax.f32 %v5864, %v5865
  %v5867 = vrot.slane %v5866, 2
  %v5868 = vmax.f32 %v5866, %v5867
  %v5869 = vrot.slane %v5868, 1
  %v5870 = vmax.f32 %v5868, %v5869
  %v5871 = vsel %vm2664, %v1869, -inf
  %v5872 = vrot.slane %v5871, 4
  %v5873 = vmax.f32 %v5871, %v5872
  %v5874 = vrot.slane %v5873, 2
  %v5875 = vmax.f32 %v5873, %v5874
  %v5876 = vrot.slane %v5875, 1
  %v5877 = vmax.f32 %v5875, %v5876
  %v5878 = vsel %vm2664, %v2381, -inf
  %v5879 = vrot.slane %v5878, 4
  %v5880 = vmax.f32 %v5878, %v5879
  %v5881 = vrot.slane %v5880, 2
  %v5882 = vmax.f32 %v5880, %v5881
  %v5883 = vrot.slane %v5882, 1
  %v5884 = vmax.f32 %v5882, %v5883
  %v5885 = vsel %vm2664, %v1870, -inf
  %v5886 = vrot.slane %v5885, 4
  %v5887 = vmax.f32 %v5885, %v5886
  %v5888 = vrot.slane %v5887, 2
  %v5889 = vmax.f32 %v5887, %v5888
  %v5890 = vrot.slane %v5889, 1
  %v5891 = vmax.f32 %v5889, %v5890
  %v5892 = vsel %vm2664, %v2382, -inf
  %v5893 = vrot.slane %v5892, 4
  %v5894 = vmax.f32 %v5892, %v5893
  %v5895 = vrot.slane %v5894, 2
  %v5896 = vmax.f32 %v5894, %v5895
  %v5897 = vrot.slane %v5896, 1
  %v5898 = vmax.f32 %v5896, %v5897
  %v5899 = vsel %vm2664, %v1871, -inf
  %v5900 = vrot.slane %v5899, 4
  %v5901 = vmax.f32 %v5899, %v5900
  %v5902 = vrot.slane %v5901, 2
  %v5903 = vmax.f32 %v5901, %v5902
  %v5904 = vrot.slane %v5903, 1
  %v5905 = vmax.f32 %v5903, %v5904
  %v5906 = vsel %vm2664, %v2383, -inf
  %v5907 = vrot.slane %v5906, 4
  %v5908 = vmax.f32 %v5906, %v5907
  %v5909 = vrot.slane %v5908, 2
  %v5910 = vmax.f32 %v5908, %v5909
  %v5911 = vrot.slane %v5910, 1
  %v5912 = vmax.f32 %v5910, %v5911
  %v5913 = vsel %vm2664, %v1872, -inf
  %v5914 = vrot.slane %v5913, 4
  %v5915 = vmax.f32 %v5913, %v5914
  %v5916 = vrot.slane %v5915, 2
  %v5917 = vmax.f32 %v5915, %v5916
  %v5918 = vrot.slane %v5917, 1
  %v5919 = vmax.f32 %v5917, %v5918
  %v5920 = vsel %vm2664, %v2384, -inf
  %v5921 = vrot.slane %v5920, 4
  %v5922 = vmax.f32 %v5920, %v5921
  %v5923 = vrot.slane %v5922, 2
  %v5924 = vmax.f32 %v5922, %v5923
  %v5925 = vrot.slane %v5924, 1
  %v5926 = vmax.f32 %v5924, %v5925
  %v5927 = vsel %vm2664, %v1873, -inf
  %v5928 = vrot.slane %v5927, 4
  %v5929 = vmax.f32 %v5927, %v5928
  %v5930 = vrot.slane %v5929, 2
  %v5931 = vmax.f32 %v5929, %v5930
  %v5932 = vrot.slane %v5931, 1
  %v5933 = vmax.f32 %v5931, %v5932
  %v5934 = vsel %vm2664, %v2385, -inf
  %v5935 = vrot.slane %v5934, 4
  %v5936 = vmax.f32 %v5934, %v5935
  %v5937 = vrot.slane %v5936, 2
  %v5938 = vmax.f32 %v5936, %v5937
  %v5939 = vrot.slane %v5938, 1
  %v5940 = vmax.f32 %v5938, %v5939
  %v5941 = vsel %vm2664, %v1874, -inf
  %v5942 = vrot.slane %v5941, 4
  %v5943 = vmax.f32 %v5941, %v5942
  %v5944 = vrot.slane %v5943, 2
  %v5945 = vmax.f32 %v5943, %v5944
  %v5946 = vrot.slane %v5945, 1
  %v5947 = vmax.f32 %v5945, %v5946
  %v5948 = vsel %vm2664, %v2386, -inf
  %v5949 = vrot.slane %v5948, 4
  %v5950 = vmax.f32 %v5948, %v5949
  %v5951 = vrot.slane %v5950, 2
  %v5952 = vmax.f32 %v5950, %v5951
  %v5953 = vrot.slane %v5952, 1
  %v5954 = vmax.f32 %v5952, %v5953
  %v5955 = vsel %vm2664, %v1875, -inf
  %v5956 = vrot.slane %v5955, 4
  %v5957 = vmax.f32 %v5955, %v5956
  %v5958 = vrot.slane %v5957, 2
  %v5959 = vmax.f32 %v5957, %v5958
  %v5960 = vrot.slane %v5959, 1
  %v5961 = vmax.f32 %v5959, %v5960
  %v5962 = vsel %vm2664, %v2387, -inf
  %v5963 = vrot.slane %v5962, 4
  %v5964 = vmax.f32 %v5962, %v5963
  %v5965 = vrot.slane %v5964, 2
  %v5966 = vmax.f32 %v5964, %v5965
  %v5967 = vrot.slane %v5966, 1
  %v5968 = vmax.f32 %v5966, %v5967
  %v5969 = vsel %vm2664, %v1876, -inf
  %v5970 = vrot.slane %v5969, 4
  %v5971 = vmax.f32 %v5969, %v5970
  %v5972 = vrot.slane %v5971, 2
  %v5973 = vmax.f32 %v5971, %v5972
  %v5974 = vrot.slane %v5973, 1
  %v5975 = vmax.f32 %v5973, %v5974
  %v5976 = vsel %vm2664, %v2388, -inf
  %v5977 = vrot.slane %v5976, 4
  %v5978 = vmax.f32 %v5976, %v5977
  %v5979 = vrot.slane %v5978, 2
  %v5980 = vmax.f32 %v5978, %v5979
  %v5981 = vrot.slane %v5980, 1
  %v5982 = vmax.f32 %v5980, %v5981
  %v5983 = vsel %vm2664, %v1877, -inf
  %v5984 = vrot.slane %v5983, 4
  %v5985 = vmax.f32 %v5983, %v5984
  %v5986 = vrot.slane %v5985, 2
  %v5987 = vmax.f32 %v5985, %v5986
  %v5988 = vrot.slane %v5987, 1
  %v5989 = vmax.f32 %v5987, %v5988
  %v5990 = vsel %vm2664, %v2389, -inf
  %v5991 = vrot.slane %v5990, 4
  %v5992 = vmax.f32 %v5990, %v5991
  %v5993 = vrot.slane %v5992, 2
  %v5994 = vmax.f32 %v5992, %v5993
  %v5995 = vrot.slane %v5994, 1
  %v5996 = vmax.f32 %v5994, %v5995
  %v5997 = vsel %vm2664, %v1878, -inf
  %v5998 = vrot.slane %v5997, 4
  %v5999 = vmax.f32 %v5997, %v5998
  %v6000 = vrot.slane %v5999, 2
  %v6001 = vmax.f32 %v5999, %v6000
  %v6002 = vrot.slane %v6001, 1
  %v6003 = vmax.f32 %v6001, %v6002
  %v6004 = vsel %vm2664, %v2390, -inf
  %v6005 = vrot.slane %v6004, 4
  %v6006 = vmax.f32 %v6004, %v6005
  %v6007 = vrot.slane %v6006, 2
  %v6008 = vmax.f32 %v6006, %v6007
  %v6009 = vrot.slane %v6008, 1
  %v6010 = vmax.f32 %v6008, %v6009
  %v6011 = vsel %vm2664, %v1879, -inf
  %v6012 = vrot.slane %v6011, 4
  %v6013 = vmax.f32 %v6011, %v6012
  %v6014 = vrot.slane %v6013, 2
  %v6015 = vmax.f32 %v6013, %v6014
  %v6016 = vrot.slane %v6015, 1
  %v6017 = vmax.f32 %v6015, %v6016
  %v6018 = vsel %vm2664, %v2391, -inf
  %v6019 = vrot.slane %v6018, 4
  %v6020 = vmax.f32 %v6018, %v6019
  %v6021 = vrot.slane %v6020, 2
  %v6022 = vmax.f32 %v6020, %v6021
  %v6023 = vrot.slane %v6022, 1
  %v6024 = vmax.f32 %v6022, %v6023
  %v6025 = vsel %vm2664, %v1880, -inf
  %v6026 = vrot.slane %v6025, 4
  %v6027 = vmax.f32 %v6025, %v6026
  %v6028 = vrot.slane %v6027, 2
  %v6029 = vmax.f32 %v6027, %v6028
  %v6030 = vrot.slane %v6029, 1
  %v6031 = vmax.f32 %v6029, %v6030
  %v6032 = vsel %vm2664, %v2392, -inf
  %v6033 = vrot.slane %v6032, 4
  %v6034 = vmax.f32 %v6032, %v6033
  %v6035 = vrot.slane %v6034, 2
  %v6036 = vmax.f32 %v6034, %v6035
  %v6037 = vrot.slane %v6036, 1
  %v6038 = vmax.f32 %v6036, %v6037
  %v6039 = vsel %vm2664, %v1881, -inf
  %v6040 = vrot.slane %v6039, 4
  %v6041 = vmax.f32 %v6039, %v6040
  %v6042 = vrot.slane %v6041, 2
  %v6043 = vmax.f32 %v6041, %v6042
  %v6044 = vrot.slane %v6043, 1
  %v6045 = vmax.f32 %v6043, %v6044
  %v6046 = vsel %vm2664, %v2393, -inf
  %v6047 = vrot.slane %v6046, 4
  %v6048 = vmax.f32 %v6046, %v6047
  %v6049 = vrot.slane %v6048, 2
  %v6050 = vmax.f32 %v6048, %v6049
  %v6051 = vrot.slane %v6050, 1
  %v6052 = vmax.f32 %v6050, %v6051
  %v6053 = vsel %vm2664, %v1882, -inf
  %v6054 = vrot.slane %v6053, 4
  %v6055 = vmax.f32 %v6053, %v6054
  %v6056 = vrot.slane %v6055, 2
  %v6057 = vmax.f32 %v6055, %v6056
  %v6058 = vrot.slane %v6057, 1
  %v6059 = vmax.f32 %v6057, %v6058
  %v6060 = vsel %vm2664, %v2394, -inf
  %v6061 = vrot.slane %v6060, 4
  %v6062 = vmax.f32 %v6060, %v6061
  %v6063 = vrot.slane %v6062, 2
  %v6064 = vmax.f32 %v6062, %v6063
  %v6065 = vrot.slane %v6064, 1
  %v6066 = vmax.f32 %v6064, %v6065
  %v6067 = vsel %vm2664, %v1883, -inf
  %v6068 = vrot.slane %v6067, 4
  %v6069 = vmax.f32 %v6067, %v6068
  %v6070 = vrot.slane %v6069, 2
  %v6071 = vmax.f32 %v6069, %v6070
  %v6072 = vrot.slane %v6071, 1
  %v6073 = vmax.f32 %v6071, %v6072
  %v6074 = vsel %vm2664, %v2395, -inf
  %v6075 = vrot.slane %v6074, 4
  %v6076 = vmax.f32 %v6074, %v6075
  %v6077 = vrot.slane %v6076, 2
  %v6078 = vmax.f32 %v6076, %v6077
  %v6079 = vrot.slane %v6078, 1
  %v6080 = vmax.f32 %v6078, %v6079
  %v6081 = vsel %vm2664, %v1884, -inf
  %v6082 = vrot.slane %v6081, 4
  %v6083 = vmax.f32 %v6081, %v6082
  %v6084 = vrot.slane %v6083, 2
  %v6085 = vmax.f32 %v6083, %v6084
  %v6086 = vrot.slane %v6085, 1
  %v6087 = vmax.f32 %v6085, %v6086
  %v6088 = vsel %vm2664, %v2396, -inf
  %v6089 = vrot.slane %v6088, 4
  %v6090 = vmax.f32 %v6088, %v6089
  %v6091 = vrot.slane %v6090, 2
  %v6092 = vmax.f32 %v6090, %v6091
  %v6093 = vrot.slane %v6092, 1
  %v6094 = vmax.f32 %v6092, %v6093
  %v6095 = vsel %vm2664, %v1885, -inf
  %v6096 = vrot.slane %v6095, 4
  %v6097 = vmax.f32 %v6095, %v6096
  %v6098 = vrot.slane %v6097, 2
  %v6099 = vmax.f32 %v6097, %v6098
  %v6100 = vrot.slane %v6099, 1
  %v6101 = vmax.f32 %v6099, %v6100
  %v6102 = vsel %vm2664, %v2397, -inf
  %v6103 = vrot.slane %v6102, 4
  %v6104 = vmax.f32 %v6102, %v6103
  %v6105 = vrot.slane %v6104, 2
  %v6106 = vmax.f32 %v6104, %v6105
  %v6107 = vrot.slane %v6106, 1
  %v6108 = vmax.f32 %v6106, %v6107
  %v6109 = vsel %vm2664, %v1886, -inf
  %v6110 = vrot.slane %v6109, 4
  %v6111 = vmax.f32 %v6109, %v6110
  %v6112 = vrot.slane %v6111, 2
  %v6113 = vmax.f32 %v6111, %v6112
  %v6114 = vrot.slane %v6113, 1
  %v6115 = vmax.f32 %v6113, %v6114
  %v6116 = vsel %vm2664, %v2398, -inf
  %v6117 = vrot.slane %v6116, 4
  %v6118 = vmax.f32 %v6116, %v6117
  %v6119 = vrot.slane %v6118, 2
  %v6120 = vmax.f32 %v6118, %v6119
  %v6121 = vrot.slane %v6120, 1
  %v6122 = vmax.f32 %v6120, %v6121
  %v6123 = vsel %vm2664, %v1887, -inf
  %v6124 = vrot.slane %v6123, 4
  %v6125 = vmax.f32 %v6123, %v6124
  %v6126 = vrot.slane %v6125, 2
  %v6127 = vmax.f32 %v6125, %v6126
  %v6128 = vrot.slane %v6127, 1
  %v6129 = vmax.f32 %v6127, %v6128
  %v6130 = vsel %vm2664, %v2399, -inf
  %v6131 = vrot.slane %v6130, 4
  %v6132 = vmax.f32 %v6130, %v6131
  %v6133 = vrot.slane %v6132, 2
  %v6134 = vmax.f32 %v6132, %v6133
  %v6135 = vrot.slane %v6134, 1
  %v6136 = vmax.f32 %v6134, %v6135
  %v6137 = vsel %vm2664, %v1888, -inf
  %v6138 = vrot.slane %v6137, 4
  %v6139 = vmax.f32 %v6137, %v6138
  %v6140 = vrot.slane %v6139, 2
  %v6141 = vmax.f32 %v6139, %v6140
  %v6142 = vrot.slane %v6141, 1
  %v6143 = vmax.f32 %v6141, %v6142
  %v6144 = vsel %vm2664, %v2400, -inf
  %v6145 = vrot.slane %v6144, 4
  %v6146 = vmax.f32 %v6144, %v6145
  %v6147 = vrot.slane %v6146, 2
  %v6148 = vmax.f32 %v6146, %v6147
  %v6149 = vrot.slane %v6148, 1
  %v6150 = vmax.f32 %v6148, %v6149
  %v6151 = vsel %vm2664, %v1889, -inf
  %v6152 = vrot.slane %v6151, 4
  %v6153 = vmax.f32 %v6151, %v6152
  %v6154 = vrot.slane %v6153, 2
  %v6155 = vmax.f32 %v6153, %v6154
  %v6156 = vrot.slane %v6155, 1
  %v6157 = vmax.f32 %v6155, %v6156
  %v6158 = vsel %vm2664, %v2401, -inf
  %v6159 = vrot.slane %v6158, 4
  %v6160 = vmax.f32 %v6158, %v6159
  %v6161 = vrot.slane %v6160, 2
  %v6162 = vmax.f32 %v6160, %v6161
  %v6163 = vrot.slane %v6162, 1
  %v6164 = vmax.f32 %v6162, %v6163
  %v6165 = vsel %vm2664, %v1890, -inf
  %v6166 = vrot.slane %v6165, 4
  %v6167 = vmax.f32 %v6165, %v6166
  %v6168 = vrot.slane %v6167, 2
  %v6169 = vmax.f32 %v6167, %v6168
  %v6170 = vrot.slane %v6169, 1
  %v6171 = vmax.f32 %v6169, %v6170
  %v6172 = vsel %vm2664, %v2402, -inf
  %v6173 = vrot.slane %v6172, 4
  %v6174 = vmax.f32 %v6172, %v6173
  %v6175 = vrot.slane %v6174, 2
  %v6176 = vmax.f32 %v6174, %v6175
  %v6177 = vrot.slane %v6176, 1
  %v6178 = vmax.f32 %v6176, %v6177
  %v6179 = vsel %vm2664, %v1891, -inf
  %v6180 = vrot.slane %v6179, 4
  %v6181 = vmax.f32 %v6179, %v6180
  %v6182 = vrot.slane %v6181, 2
  %v6183 = vmax.f32 %v6181, %v6182
  %v6184 = vrot.slane %v6183, 1
  %v6185 = vmax.f32 %v6183, %v6184
  %v6186 = vsel %vm2664, %v2403, -inf
  %v6187 = vrot.slane %v6186, 4
  %v6188 = vmax.f32 %v6186, %v6187
  %v6189 = vrot.slane %v6188, 2
  %v6190 = vmax.f32 %v6188, %v6189
  %v6191 = vrot.slane %v6190, 1
  %v6192 = vmax.f32 %v6190, %v6191
  %v6193 = vsel %vm2664, %v1892, -inf
  %v6194 = vrot.slane %v6193, 4
  %v6195 = vmax.f32 %v6193, %v6194
  %v6196 = vrot.slane %v6195, 2
  %v6197 = vmax.f32 %v6195, %v6196
  %v6198 = vrot.slane %v6197, 1
  %v6199 = vmax.f32 %v6197, %v6198
  %v6200 = vsel %vm2664, %v2404, -inf
  %v6201 = vrot.slane %v6200, 4
  %v6202 = vmax.f32 %v6200, %v6201
  %v6203 = vrot.slane %v6202, 2
  %v6204 = vmax.f32 %v6202, %v6203
  %v6205 = vrot.slane %v6204, 1
  %v6206 = vmax.f32 %v6204, %v6205
  %v6207 = vsel %vm2664, %v1893, -inf
  %v6208 = vrot.slane %v6207, 4
  %v6209 = vmax.f32 %v6207, %v6208
  %v6210 = vrot.slane %v6209, 2
  %v6211 = vmax.f32 %v6209, %v6210
  %v6212 = vrot.slane %v6211, 1
  %v6213 = vmax.f32 %v6211, %v6212
  %v6214 = vsel %vm2664, %v2405, -inf
  %v6215 = vrot.slane %v6214, 4
  %v6216 = vmax.f32 %v6214, %v6215
  %v6217 = vrot.slane %v6216, 2
  %v6218 = vmax.f32 %v6216, %v6217
  %v6219 = vrot.slane %v6218, 1
  %v6220 = vmax.f32 %v6218, %v6219
  %v6221 = vsel %vm2664, %v1894, -inf
  %v6222 = vrot.slane %v6221, 4
  %v6223 = vmax.f32 %v6221, %v6222
  %v6224 = vrot.slane %v6223, 2
  %v6225 = vmax.f32 %v6223, %v6224
  %v6226 = vrot.slane %v6225, 1
  %v6227 = vmax.f32 %v6225, %v6226
  %v6228 = vsel %vm2664, %v2406, -inf
  %v6229 = vrot.slane %v6228, 4
  %v6230 = vmax.f32 %v6228, %v6229
  %v6231 = vrot.slane %v6230, 2
  %v6232 = vmax.f32 %v6230, %v6231
  %v6233 = vrot.slane %v6232, 1
  %v6234 = vmax.f32 %v6232, %v6233
  %v6235 = vsel %vm2664, %v1895, -inf
  %v6236 = vrot.slane %v6235, 4
  %v6237 = vmax.f32 %v6235, %v6236
  %v6238 = vrot.slane %v6237, 2
  %v6239 = vmax.f32 %v6237, %v6238
  %v6240 = vrot.slane %v6239, 1
  %v6241 = vmax.f32 %v6239, %v6240
  %v6242 = vsel %vm2664, %v2407, -inf
  %v6243 = vrot.slane %v6242, 4
  %v6244 = vmax.f32 %v6242, %v6243
  %v6245 = vrot.slane %v6244, 2
  %v6246 = vmax.f32 %v6244, %v6245
  %v6247 = vrot.slane %v6246, 1
  %v6248 = vmax.f32 %v6246, %v6247
  %v6249 = vld [vmem:[%s2] sm:$0xff]
  %v6250 = vld [vmem:[%s2 + $0x8] sm:$0xff]
  %v6251 = vld [vmem:[%s2 + $0x10] sm:$0xff]
  %v6252 = vld [vmem:[%s2 + $0x18] sm:$0xff]
  %v6253 = vld [vmem:[%s2 + $0x20] sm:$0xff]
  %v6254 = vld [vmem:[%s2 + $0x28] sm:$0xff]
  %v6255 = vld [vmem:[%s2 + $0x30] sm:$0xff]
  %v6256 = vld [vmem:[%s2 + $0x38] sm:$0xff]
  %v6257 = vld [vmem:[%s2 + $0x40] sm:$0xff]
  %v6258 = vld [vmem:[%s2 + $0x48] sm:$0xff]
  %v6259 = vld [vmem:[%s2 + $0x50] sm:$0xff]
  %v6260 = vld [vmem:[%s2 + $0x58] sm:$0xff]
  %v6261 = vld [vmem:[%s2 + $0x60] sm:$0xff]
  %v6262 = vld [vmem:[%s2 + $0x68] sm:$0xff]
  %v6263 = vld [vmem:[%s2 + $0x70] sm:$0xff]
  %v6264 = vld [vmem:[%s2 + $0x78] sm:$0xff]
  %v6265 = vld [vmem:[%s2 + $0x80] sm:$0xff]
  %v6266 = vld [vmem:[%s2 + $0x88] sm:$0xff]
  %v6267 = vld [vmem:[%s2 + $0x90] sm:$0xff]
  %v6268 = vld [vmem:[%s2 + $0x98] sm:$0xff]
  %v6269 = vld [vmem:[%s2 + $0xa0] sm:$0xff]
  %v6270 = vld [vmem:[%s2 + $0xa8] sm:$0xff]
  %v6271 = vld [vmem:[%s2 + $0xb0] sm:$0xff]
  %v6272 = vld [vmem:[%s2 + $0xb8] sm:$0xff]
  %v6273 = vld [vmem:[%s2 + $0xc0] sm:$0xff]
  %v6274 = vld [vmem:[%s2 + $0xc8] sm:$0xff]
  %v6275 = vld [vmem:[%s2 + $0xd0] sm:$0xff]
  %v6276 = vld [vmem:[%s2 + $0xd8] sm:$0xff]
  %v6277 = vld [vmem:[%s2 + $0xe0] sm:$0xff]
  %v6278 = vld [vmem:[%s2 + $0xe8] sm:$0xff]
  %v6279 = vld [vmem:[%s2 + $0xf0] sm:$0xff]
  %v6280 = vld [vmem:[%s2 + $0xf8] sm:$0xff]
  %v6281 = vld [vmem:[%s2 + $0x100] sm:$0xff]
  %v6282 = vld [vmem:[%s2 + $0x108] sm:$0xff]
  %v6283 = vld [vmem:[%s2 + $0x110] sm:$0xff]
  %v6284 = vld [vmem:[%s2 + $0x118] sm:$0xff]
  %v6285 = vld [vmem:[%s2 + $0x120] sm:$0xff]
  %v6286 = vld [vmem:[%s2 + $0x128] sm:$0xff]
  %v6287 = vld [vmem:[%s2 + $0x130] sm:$0xff]
  %v6288 = vld [vmem:[%s2 + $0x138] sm:$0xff]
  %vm6545 = vcmask 1041409
  %v6546 = vsel %vm6545, %v2678, %v2671
  %vm6547 = vcmask 1042434
  %v6548 = vsel %vm6547, %v2685, %v6546
  %vm6549 = vcmask 1043459
  %v6550 = vsel %vm6549, %v2692, %v6548
  %vm6551 = vcmask 1044484
  %v6552 = vsel %vm6551, %v2699, %v6550
  %vm6553 = vcmask 1045509
  %v6554 = vsel %vm6553, %v2706, %v6552
  %vm6555 = vcmask 1046534
  %v6556 = vsel %vm6555, %v2713, %v6554
  %vm6557 = vcmask 1047559
  %v6558 = vsel %vm6557, %v2720, %v6556
  %v6559 = vsel %vm6545, %v2734, %v2727
  %v6560 = vsel %vm6547, %v2741, %v6559
  %v6561 = vsel %vm6549, %v2748, %v6560
  %v6562 = vsel %vm6551, %v2755, %v6561
  %v6563 = vsel %vm6553, %v2762, %v6562
  %v6564 = vsel %vm6555, %v2769, %v6563
  %v6565 = vsel %vm6557, %v2776, %v6564
  %v6566 = vsel %vm6545, %v2790, %v2783
  %v6567 = vsel %vm6547, %v2797, %v6566
  %v6568 = vsel %vm6549, %v2804, %v6567
  %v6569 = vsel %vm6551, %v2811, %v6568
  %v6570 = vsel %vm6553, %v2818, %v6569
  %v6571 = vsel %vm6555, %v2825, %v6570
  %v6572 = vsel %vm6557, %v2832, %v6571
  %v6573 = vsel %vm6545, %v2846, %v2839
  %v6574 = vsel %vm6547, %v2853, %v6573
  %v6575 = vsel %vm6549, %v2860, %v6574
  %v6576 = vsel %vm6551, %v2867, %v6575
  %v6577 = vsel %vm6553, %v2874, %v6576
  %v6578 = vsel %vm6555, %v2881, %v6577
  %v6579 = vsel %vm6557, %v2888, %v6578
  %v6580 = vsel %vm6545, %v2902, %v2895
  %v6581 = vsel %vm6547, %v2909, %v6580
  %v6582 = vsel %vm6549, %v2916, %v6581
  %v6583 = vsel %vm6551, %v2923, %v6582
  %v6584 = vsel %vm6553, %v2930, %v6583
  %v6585 = vsel %vm6555, %v2937, %v6584
  %v6586 = vsel %vm6557, %v2944, %v6585
  %v6587 = vsel %vm6545, %v2958, %v2951
  %v6588 = vsel %vm6547, %v2965, %v6587
  %v6589 = vsel %vm6549, %v2972, %v6588
  %v6590 = vsel %vm6551, %v2979, %v6589
  %v6591 = vsel %vm6553, %v2986, %v6590
  %v6592 = vsel %vm6555, %v2993, %v6591
  %v6593 = vsel %vm6557, %v3000, %v6592
  %v6594 = vsel %vm6545, %v3014, %v3007
  %v6595 = vsel %vm6547, %v3021, %v6594
  %v6596 = vsel %vm6549, %v3028, %v6595
  %v6597 = vsel %vm6551, %v3035, %v6596
  %v6598 = vsel %vm6553, %v3042, %v6597
  %v6599 = vsel %vm6555, %v3049, %v6598
  %v6600 = vsel %vm6557, %v3056, %v6599
  %v6601 = vsel %vm6545, %v3070, %v3063
  %v6602 = vsel %vm6547, %v3077, %v6601
  %v6603 = vsel %vm6549, %v3084, %v6602
  %v6604 = vsel %vm6551, %v3091, %v6603
  %v6605 = vsel %vm6553, %v3098, %v6604
  %v6606 = vsel %vm6555, %v3105, %v6605
  %v6607 = vsel %vm6557, %v3112, %v6606
  %v6608 = vsel %vm6545, %v3126, %v3119
  %v6609 = vsel %vm6547, %v3133, %v6608
  %v6610 = vsel %vm6549, %v3140, %v6609
  %v6611 = vsel %vm6551, %v3147, %v6610
  %v6612 = vsel %vm6553, %v3154, %v6611
  %v6613 = vsel %vm6555, %v3161, %v6612
  %v6614 = vsel %vm6557, %v3168, %v6613
  %v6615 = vsel %vm6545, %v3182, %v3175
  %v6616 = vsel %vm6547, %v3189, %v6615
  %v6617 = vsel %vm6549, %v3196, %v6616
  %v6618 = vsel %vm6551, %v3203, %v6617
  %v6619 = vsel %vm6553, %v3210, %v6618
  %v6620 = vsel %vm6555, %v3217, %v6619
  %v6621 = vsel %vm6557, %v3224, %v6620
  %v6622 = vsel %vm6545, %v3238, %v3231
  %v6623 = vsel %vm6547, %v3245, %v6622
  %v6624 = vsel %vm6549, %v3252, %v6623
  %v6625 = vsel %vm6551, %v3259, %v6624
  %v6626 = vsel %vm6553, %v3266, %v6625
  %v6627 = vsel %vm6555, %v3273, %v6626
  %v6628 = vsel %vm6557, %v3280, %v6627
  %v6629 = vsel %vm6545, %v3294, %v3287
  %v6630 = vsel %vm6547, %v3301, %v6629
  %v6631 = vsel %vm6549, %v3308, %v6630
  %v6632 = vsel %vm6551, %v3315, %v6631
  %v6633 = vsel %vm6553, %v3322, %v6632
  %v6634 = vsel %vm6555, %v3329, %v6633
  %v6635 = vsel %vm6557, %v3336, %v6634
  %v6636 = vsel %vm6545, %v3350, %v3343
  %v6637 = vsel %vm6547, %v3357, %v6636
  %v6638 = vsel %vm6549, %v3364, %v6637
  %v6639 = vsel %vm6551, %v3371, %v6638
  %v6640 = vsel %vm6553, %v3378, %v6639
  %v6641 = vsel %vm6555, %v3385, %v6640
  %v6642 = vsel %vm6557, %v3392, %v6641
  %v6643 = vsel %vm6545, %v3406, %v3399
  %v6644 = vsel %vm6547, %v3413, %v6643
  %v6645 = vsel %vm6549, %v3420, %v6644
  %v6646 = vsel %vm6551, %v3427, %v6645
  %v6647 = vsel %vm6553, %v3434, %v6646
  %v6648 = vsel %vm6555, %v3441, %v6647
  %v6649 = vsel %vm6557, %v3448, %v6648
  %v6650 = vsel %vm6545, %v3462, %v3455
  %v6651 = vsel %vm6547, %v3469, %v6650
  %v6652 = vsel %vm6549, %v3476, %v6651
  %v6653 = vsel %vm6551, %v3483, %v6652
  %v6654 = vsel %vm6553, %v3490, %v6653
  %v6655 = vsel %vm6555, %v3497, %v6654
  %v6656 = vsel %vm6557, %v3504, %v6655
  %v6657 = vsel %vm6545, %v3518, %v3511
  %v6658 = vsel %vm6547, %v3525, %v6657
  %v6659 = vsel %vm6549, %v3532, %v6658
  %v6660 = vsel %vm6551, %v3539, %v6659
  %v6661 = vsel %vm6553, %v3546, %v6660
  %v6662 = vsel %vm6555, %v3553, %v6661
  %v6663 = vsel %vm6557, %v3560, %v6662
  %v6664 = vsel %vm6545, %v3574, %v3567
  %v6665 = vsel %vm6547, %v3581, %v6664
  %v6666 = vsel %vm6549, %v3588, %v6665
  %v6667 = vsel %vm6551, %v3595, %v6666
  %v6668 = vsel %vm6553, %v3602, %v6667
  %v6669 = vsel %vm6555, %v3609, %v6668
  %v6670 = vsel %vm6557, %v3616, %v6669
  %v6671 = vsel %vm6545, %v3630, %v3623
  %v6672 = vsel %vm6547, %v3637, %v6671
  %v6673 = vsel %vm6549, %v3644, %v6672
  %v6674 = vsel %vm6551, %v3651, %v6673
  %v6675 = vsel %vm6553, %v3658, %v6674
  %v6676 = vsel %vm6555, %v3665, %v6675
  %v6677 = vsel %vm6557, %v3672, %v6676
  %v6678 = vsel %vm6545, %v3686, %v3679
  %v6679 = vsel %vm6547, %v3693, %v6678
  %v6680 = vsel %vm6549, %v3700, %v6679
  %v6681 = vsel %vm6551, %v3707, %v6680
  %v6682 = vsel %vm6553, %v3714, %v6681
  %v6683 = vsel %vm6555, %v3721, %v6682
  %v6684 = vsel %vm6557, %v3728, %v6683
  %v6685 = vsel %vm6545, %v3742, %v3735
  %v6686 = vsel %vm6547, %v3749, %v6685
  %v6687 = vsel %vm6549, %v3756, %v6686
  %v6688 = vsel %vm6551, %v3763, %v6687
  %v6689 = vsel %vm6553, %v3770, %v6688
  %v6690 = vsel %vm6555, %v3777, %v6689
  %v6691 = vsel %vm6557, %v3784, %v6690
  %v6692 = vsel %vm6545, %v3798, %v3791
  %v6693 = vsel %vm6547, %v3805, %v6692
  %v6694 = vsel %vm6549, %v3812, %v6693
  %v6695 = vsel %vm6551, %v3819, %v6694
  %v6696 = vsel %vm6553, %v3826, %v6695
  %v6697 = vsel %vm6555, %v3833, %v6696
  %v6698 = vsel %vm6557, %v3840, %v6697
  %v6699 = vsel %vm6545, %v3854, %v3847
  %v6700 = vsel %vm6547, %v3861, %v6699
  %v6701 = vsel %vm6549, %v3868, %v6700
  %v6702 = vsel %vm6551, %v3875, %v6701
  %v6703 = vsel %vm6553, %v3882, %v6702
  %v6704 = vsel %vm6555, %v3889, %v6703
  %v6705 = vsel %vm6557, %v3896, %v6704
  %v6706 = vsel %vm6545, %v3910, %v3903
  %v6707 = vsel %vm6547, %v3917, %v6706
  %v6708 = vsel %vm6549, %v3924, %v6707
  %v6709 = vsel %vm6551, %v3931, %v6708
  %v6710 = vsel %vm6553, %v3938, %v6709
  %v6711 = vsel %vm6555, %v3945, %v6710
  %v6712 = vsel %vm6557, %v3952, %v6711
  %v6713 = vsel %vm6545, %v3966, %v3959
  %v6714 = vsel %vm6547, %v3973, %v6713
  %v6715 = vsel %vm6549, %v3980, %v6714
  %v6716 = vsel %vm6551, %v3987, %v6715
  %v6717 = vsel %vm6553, %v3994, %v6716
  %v6718 = vsel %vm6555, %v4001, %v6717
  %v6719 = vsel %vm6557, %v4008, %v6718
  %v6720 = vsel %vm6545, %v4022, %v4015
  %v6721 = vsel %vm6547, %v4029, %v6720
  %v6722 = vsel %vm6549, %v4036, %v6721
  %v6723 = vsel %vm6551, %v4043, %v6722
  %v6724 = vsel %vm6553, %v4050, %v6723
  %v6725 = vsel %vm6555, %v4057, %v6724
  %v6726 = vsel %vm6557, %v4064, %v6725
  %v6727 = vsel %vm6545, %v4078, %v4071
  %v6728 = vsel %vm6547, %v4085, %v6727
  %v6729 = vsel %vm6549, %v4092, %v6728
  %v6730 = vsel %vm6551, %v4099, %v6729
  %v6731 = vsel %vm6553, %v4106, %v6730
  %v6732 = vsel %vm6555, %v4113, %v6731
  %v6733 = vsel %vm6557, %v4120, %v6732
  %v6734 = vsel %vm6545, %v4134, %v4127
  %v6735 = vsel %vm6547, %v4141, %v6734
  %v6736 = vsel %vm6549, %v4148, %v6735
  %v6737 = vsel %vm6551, %v4155, %v6736
  %v6738 = vsel %vm6553, %v4162, %v6737
  %v6739 = vsel %vm6555, %v4169, %v6738
  %v6740 = vsel %vm6557, %v4176, %v6739
  %v6741 = vsel %vm6545, %v4190, %v4183
  %v6742 = vsel %vm6547, %v4197, %v6741
  %v6743 = vsel %vm6549, %v4204, %v6742
  %v6744 = vsel %vm6551, %v4211, %v6743
  %v6745 = vsel %vm6553, %v4218, %v6744
  %v6746 = vsel %vm6555, %v4225, %v6745
  %v6747 = vsel %vm6557, %v4232, %v6746
  %v6748 = vsel %vm6545, %v4246, %v4239
  %v6749 = vsel %vm6547, %v4253, %v6748
  %v6750 = vsel %vm6549, %v4260, %v6749
  %v6751 = vsel %vm6551, %v4267, %v6750
  %v6752 = vsel %vm6553, %v4274, %v6751
  %v6753 = vsel %vm6555, %v4281, %v6752
  %v6754 = vsel %vm6557, %v4288, %v6753
  %v6755 = vsel %vm6545, %v4302, %v4295
  %v6756 = vsel %vm6547, %v4309, %v6755
  %v6757 = vsel %vm6549, %v4316, %v6756
  %v6758 = vsel %vm6551, %v4323, %v6757
  %v6759 = vsel %vm6553, %v4330, %v6758
  %v6760 = vsel %vm6555, %v4337, %v6759
  %v6761 = vsel %vm6557, %v4344, %v6760
  %v6762 = vsel %vm6545, %v4358, %v4351
  %v6763 = vsel %vm6547, %v4365, %v6762
  %v6764 = vsel %vm6549, %v4372, %v6763
  %v6765 = vsel %vm6551, %v4379, %v6764
  %v6766 = vsel %vm6553, %v4386, %v6765
  %v6767 = vsel %vm6555, %v4393, %v6766
  %v6768 = vsel %vm6557, %v4400, %v6767
  %v6769 = vsel %vm6545, %v4414, %v4407
  %v6770 = vsel %vm6547, %v4421, %v6769
  %v6771 = vsel %vm6549, %v4428, %v6770
  %v6772 = vsel %vm6551, %v4435, %v6771
  %v6773 = vsel %vm6553, %v4442, %v6772
  %v6774 = vsel %vm6555, %v4449, %v6773
  %v6775 = vsel %vm6557, %v4456, %v6774
  %6808 = vmatprep.subr.mxu0 0.0
  %6809 = vmatpush1.msra.mxu0 %v6558
  %6810 = vmatprep.subr.mxu0 0.0
  %6811 = vmatpush1.msra.mxu0 %v6565
  %6812 = vmatprep.subr.mxu0 0.0
  %6813 = vmatpush1.msra.mxu0 %v6572
  %6814 = vmatprep.subr.mxu0 0.0
  %6815 = vmatpush1.msra.mxu0 %v6579
  %6816 = vmatprep.subr.mxu0 0.0
  %6817 = vmatpush1.msra.mxu0 %v6586
  %6818 = vmatprep.subr.mxu0 0.0
  %6819 = vmatpush1.msra.mxu0 %v6593
  %6820 = vmatprep.subr.mxu0 0.0
  %6821 = vmatpush1.msra.mxu0 %v6600
  %6822 = vmatprep.subr.mxu0 0.0
  %6823 = vmatpush1.msra.mxu0 %v6607
  %6824 = vmatprep.subr.mxu0 0.0
  %6825 = vmatpush1.msra.mxu0 %v6614
  %6826 = vmatprep.subr.mxu0 0.0
  %6827 = vmatpush1.msra.mxu0 %v6621
  %6828 = vmatprep.subr.mxu0 0.0
  %6829 = vmatpush1.msra.mxu0 %v6628
  %6830 = vmatprep.subr.mxu0 0.0
  %6831 = vmatpush1.msra.mxu0 %v6635
  %6832 = vmatprep.subr.mxu0 0.0
  %6833 = vmatpush1.msra.mxu0 %v6642
  %6834 = vmatprep.subr.mxu0 0.0
  %6835 = vmatpush1.msra.mxu0 %v6649
  %6836 = vmatprep.subr.mxu0 0.0
  %6837 = vmatpush1.msra.mxu0 %v6656
  %6838 = vmatprep.subr.mxu0 0.0
  %6839 = vmatpush1.msra.mxu0 %v6663
  %6840 = vmatprep.subr.mxu0 0.0
  %6841 = vmatpush1.msra.mxu0 %v6670
  %6842 = vmatprep.subr.mxu0 0.0
  %6843 = vmatpush1.msra.mxu0 %v6677
  %6844 = vmatprep.subr.mxu0 0.0
  %6845 = vmatpush1.msra.mxu0 %v6684
  %6846 = vmatprep.subr.mxu0 0.0
  %6847 = vmatpush1.msra.mxu0 %v6691
  %6848 = vmatprep.subr.mxu0 0.0
  %6849 = vmatpush1.msra.mxu0 %v6698
  %6850 = vmatprep.subr.mxu0 0.0
  %6851 = vmatpush1.msra.mxu0 %v6705
  %6852 = vmatprep.subr.mxu0 0.0
  %6853 = vmatpush1.msra.mxu0 %v6712
  %6854 = vmatprep.subr.mxu0 0.0
  %6855 = vmatpush1.msra.mxu0 %v6719
  %6856 = vmatprep.subr.mxu0 0.0
  %6857 = vmatpush1.msra.mxu0 %v6726
  %6858 = vmatprep.subr.mxu0 0.0
  %6859 = vmatpush1.msra.mxu0 %v6733
  %6860 = vmatprep.subr.mxu0 0.0
  %6861 = vmatpush1.msra.mxu0 %v6740
  %6862 = vmatprep.subr.mxu0 0.0
  %6863 = vmatpush1.msra.mxu0 %v6747
  %6864 = vmatprep.subr.mxu0 0.0
  %6865 = vmatpush1.msra.mxu0 %v6754
  %6866 = vmatprep.subr.mxu0 0.0
  %6867 = vmatpush1.msra.mxu0 %v6761
  %6868 = vmatprep.subr.mxu0 0.0
  %6869 = vmatpush1.msra.mxu0 %v6768
  %6870 = vmatprep.subr.mxu0 0.0
  %6871 = vmatpush1.msra.mxu0 %v6775
  %6872 = vmatprep.mubr.f32.mxu0 %v6250
  %6873 = vmatmul.mubr.f32.gmra.mrb[0].mxu0 %v6249
  %v6874 = vpop.f32.mrb[0].mxu0
  %v6875 = vadd.f32 0.0, %v6874
  %v6876 = vpop.f32.mrb[0].mxu0
  %6877 = vmatprep.mubr.f32.mxu0 %v6252
  %6878 = vmatmul.mubr.f32.gmra.mrb[0].mxu0 %v6251
  %v6879 = vpop.f32.mrb[0].mxu0
  %v6880 = vadd.f32 0.0, %v6879
  %v6881 = vpop.f32.mrb[0].mxu0
  %6882 = vmatprep.mubr.f32.mxu0 %v6254
  %6883 = vmatmul.mubr.f32.gmra.mrb[0].mxu0 %v6253
  %v6884 = vpop.f32.mrb[0].mxu0
  %v6885 = vadd.f32 0.0, %v6884
  %v6886 = vpop.f32.mrb[0].mxu0
  %6887 = vmatprep.mubr.f32.mxu0 %v6256
  %6888 = vmatmul.mubr.f32.gmra.mrb[0].mxu0 %v6255
  %v6889 = vpop.f32.mrb[0].mxu0
  %v6890 = vadd.f32 0.0, %v6889
  %v6891 = vpop.f32.mrb[0].mxu0
  %6892 = vmatprep.mubr.f32.mxu0 %v6258
  %6893 = vmatmul.mubr.f32.gmra.mrb[0].mxu0 %v6257
  %v6894 = vpop.f32.mrb[0].mxu0
  %v6895 = vadd.f32 0.0, %v6894
  %v6896 = vpop.f32.mrb[0].mxu0
  %6897 = vmatprep.mubr.f32.mxu0 %v6260
  %6898 = vmatmul.mubr.f32.gmra.mrb[0].mxu0 %v6259
  %v6899 = vpop.f32.mrb[0].mxu0
  %v6900 = vadd.f32 0.0, %v6899
  %v6901 = vpop.f32.mrb[0].mxu0
  %6902 = vmatprep.mubr.f32.mxu0 %v6262
  %6903 = vmatmul.mubr.f32.gmra.mrb[0].mxu0 %v6261
  %v6904 = vpop.f32.mrb[0].mxu0
  %v6905 = vadd.f32 0.0, %v6904
  %v6906 = vpop.f32.mrb[0].mxu0
  %6907 = vmatprep.mubr.f32.mxu0 %v6264
  %6908 = vmatmul.mubr.f32.gmra.mrb[0].mxu0 %v6263
  %v6909 = vpop.f32.mrb[0].mxu0
  %v6910 = vadd.f32 0.0, %v6909
  %v6911 = vpop.f32.mrb[0].mxu0
  %6912 = vmatprep.mubr.f32.mxu0 %v6266
  %6913 = vmatmul.mubr.f32.gmra.mrb[0].mxu0 %v6265
  %v6914 = vpop.f32.mrb[0].mxu0
  %v6915 = vadd.f32 0.0, %v6914
  %v6916 = vpop.f32.mrb[0].mxu0
  %6917 = vmatprep.mubr.f32.mxu0 %v6268
  %6918 = vmatmul.mubr.f32.gmra.mrb[0].mxu0 %v6267
  %v6919 = vpop.f32.mrb[0].mxu0
  %v6920 = vadd.f32 0.0, %v6919
  %v6921 = vpop.f32.mrb[0].mxu0
  %6922 = vmatprep.mubr.f32.mxu0 %v6270
  %6923 = vmatmul.mubr.f32.gmra.mrb[0].mxu0 %v6269
  %v6924 = vpop.f32.mrb[0].mxu0
  %v6925 = vadd.f32 0.0, %v6924
  %v6926 = vpop.f32.mrb[0].mxu0
  %6927 = vmatprep.mubr.f32.mxu0 %v6272
  %6928 = vmatmul.mubr.f32.gmra.mrb[0].mxu0 %v6271
  %v6929 = vpop.f32.mrb[0].mxu0
  %v6930 = vadd.f32 0.0, %v6929
  %v6931 = vpop.f32.mrb[0].mxu0
  %6932 = vmatprep.mubr.f32.mxu0 %v6274
  %6933 = vmatmul.mubr.f32.gmra.mrb[0].mxu0 %v6273
  %v6934 = vpop.f32.mrb[0].mxu0
  %v6935 = vadd.f32 0.0, %v6934
  %v6936 = vpop.f32.mrb[0].mxu0
  %6937 = vmatprep.mubr.f32.mxu0 %v6276
  %6938 = vmatmul.mubr.f32.gmra.mrb[0].mxu0 %v6275
  %v6939 = vpop.f32.mrb[0].mxu0
  %v6940 = vadd.f32 0.0, %v6939
  %v6941 = vpop.f32.mrb[0].mxu0
  %6942 = vmatprep.mubr.f32.mxu0 %v6278
  %6943 = vmatmul.mubr.f32.gmra.mrb[0].mxu0 %v6277
  %v6944 = vpop.f32.mrb[0].mxu0
  %v6945 = vadd.f32 0.0, %v6944
  %v6946 = vpop.f32.mrb[0].mxu0
  %6947 = vmatprep.mubr.f32.mxu0 %v6280
  %6948 = vmatmul.mubr.f32.gmra.mrb[0].mxu0 %v6279
  %v6949 = vpop.f32.mrb[0].mxu0
  %v6950 = vadd.f32 0.0, %v6949
  %v6951 = vpop.f32.mrb[0].mxu0
  %6952 = vmatprep.mubr.f32.mxu0 %v6282
  %6953 = vmatmul.mubr.f32.gmra.mrb[0].mxu0 %v6281
  %v6954 = vpop.f32.mrb[0].mxu0
  %v6955 = vadd.f32 0.0, %v6954
  %v6956 = vpop.f32.mrb[0].mxu0
  %6957 = vmatprep.mubr.f32.mxu0 %v6284
  %6958 = vmatmul.mubr.f32.gmra.mrb[0].mxu0 %v6283
  %v6959 = vpop.f32.mrb[0].mxu0
  %v6960 = vadd.f32 0.0, %v6959
  %v6961 = vpop.f32.mrb[0].mxu0
  %6962 = vmatprep.mubr.f32.mxu0 %v6286
  %6963 = vmatmul.mubr.f32.gmra.mrb[0].mxu0 %v6285
  %v6964 = vpop.f32.mrb[0].mxu0
  %v6965 = vadd.f32 0.0, %v6964
  %v6966 = vpop.f32.mrb[0].mxu0
  %6967 = vmatprep.mubr.f32.mxu0 %v6288
  %6968 = vmatmul.mubr.f32.gmra.mrb[0].mxu0 %v6287
  %v6969 = vpop.f32.mrb[0].mxu0
  %v6970 = vadd.f32 0.0, %v6969
  %v6971 = vpop.f32.mrb[0].mxu0
  %6972 = vdwg.mxu0
  %v6973 = vld [vmem:[%s3] sm:$0xff]
  %v6974 = vld [vmem:[%s3 + $0x8] sm:$0xff]
  %v6975 = vld [vmem:[%s3 + $0x10] sm:$0xff]
  %v6976 = vld [vmem:[%s3 + $0x18] sm:$0xff]
  %v6977 = vld [vmem:[%s3 + $0x20] sm:$0xff]
  %v6978 = vld [vmem:[%s3 + $0x28] sm:$0xff]
  %v6979 = vld [vmem:[%s3 + $0x30] sm:$0xff]
  %v6980 = vld [vmem:[%s3 + $0x38] sm:$0xff]
  %v6981 = vld [vmem:[%s3 + $0x40] sm:$0xff]
  %v6982 = vld [vmem:[%s3 + $0x48] sm:$0xff]
  %v6983 = vld [vmem:[%s3 + $0x50] sm:$0xff]
  %v6984 = vld [vmem:[%s3 + $0x58] sm:$0xff]
  %v6985 = vld [vmem:[%s3 + $0x60] sm:$0xff]
  %v6986 = vld [vmem:[%s3 + $0x68] sm:$0xff]
  %v6987 = vld [vmem:[%s3 + $0x70] sm:$0xff]
  %v6988 = vld [vmem:[%s3 + $0x78] sm:$0xff]
  %v6989 = vld [vmem:[%s3 + $0x80] sm:$0xff]
  %v6990 = vld [vmem:[%s3 + $0x88] sm:$0xff]
  %v6991 = vld [vmem:[%s3 + $0x90] sm:$0xff]
  %v6992 = vld [vmem:[%s3 + $0x98] sm:$0xff]
  %v6993 = vmul.f32 %v6875, %v6973
  %v6994 = vmul.f32 %v6880, %v6974
  %v6995 = vmul.f32 %v6885, %v6975
  %v6996 = vmul.f32 %v6890, %v6976
  %v6997 = vmul.f32 %v6895, %v6977
  %v6998 = vmul.f32 %v6900, %v6978
  %v6999 = vmul.f32 %v6905, %v6979
  %v7000 = vmul.f32 %v6910, %v6980
  %v7001 = vmul.f32 %v6915, %v6981
  %v7002 = vmul.f32 %v6920, %v6982
  %v7003 = vmul.f32 %v6925, %v6983
  %v7004 = vmul.f32 %v6930, %v6984
  %v7005 = vmul.f32 %v6935, %v6985
  %v7006 = vmul.f32 %v6940, %v6986
  %v7007 = vmul.f32 %v6945, %v6987
  %v7008 = vmul.f32 %v6950, %v6988
  %v7009 = vmul.f32 %v6955, %v6989
  %v7010 = vmul.f32 %v6960, %v6990
  %v7011 = vmul.f32 %v6965, %v6991
  %v7012 = vmul.f32 %v6970, %v6992
  %vm7013 = vcmask 130048
  %v7014 = vsel %vm7013, %v6993, 0.0
  %7015 = vadd.xlane.f32.xlu0 %v7014
  %v7016 = vpop.xlane.xlu0 %7015
  %v7017 = vsel %vm7013, %v6994, 0.0
  %7018 = vadd.xlane.f32.xlu0 %v7017
  %v7019 = vpop.xlane.xlu0 %7018
  %v7020 = vsel %vm7013, %v6995, 0.0
  %7021 = vadd.xlane.f32.xlu0 %v7020
  %v7022 = vpop.xlane.xlu0 %7021
  %v7023 = vsel %vm7013, %v6996, 0.0
  %7024 = vadd.xlane.f32.xlu0 %v7023
  %v7025 = vpop.xlane.xlu0 %7024
  %v7026 = vsel %vm7013, %v6997, 0.0
  %7027 = vadd.xlane.f32.xlu0 %v7026
  %v7028 = vpop.xlane.xlu0 %7027
  %v7029 = vsel %vm7013, %v6998, 0.0
  %7030 = vadd.xlane.f32.xlu0 %v7029
  %v7031 = vpop.xlane.xlu0 %7030
  %v7032 = vsel %vm7013, %v6999, 0.0
  %7033 = vadd.xlane.f32.xlu0 %v7032
  %v7034 = vpop.xlane.xlu0 %7033
  %v7035 = vsel %vm7013, %v7000, 0.0
  %7036 = vadd.xlane.f32.xlu0 %v7035
  %v7037 = vpop.xlane.xlu0 %7036
  %v7038 = vsel %vm7013, %v7001, 0.0
  %7039 = vadd.xlane.f32.xlu0 %v7038
  %v7040 = vpop.xlane.xlu0 %7039
  %v7041 = vsel %vm7013, %v7002, 0.0
  %7042 = vadd.xlane.f32.xlu0 %v7041
  %v7043 = vpop.xlane.xlu0 %7042
  %v7044 = vsel %vm7013, %v7003, 0.0
  %7045 = vadd.xlane.f32.xlu0 %v7044
  %v7046 = vpop.xlane.xlu0 %7045
  %v7047 = vsel %vm7013, %v7004, 0.0
  %7048 = vadd.xlane.f32.xlu0 %v7047
  %v7049 = vpop.xlane.xlu0 %7048
  %v7050 = vsel %vm7013, %v7005, 0.0
  %7051 = vadd.xlane.f32.xlu0 %v7050
  %v7052 = vpop.xlane.xlu0 %7051
  %v7053 = vsel %vm7013, %v7006, 0.0
  %7054 = vadd.xlane.f32.xlu0 %v7053
  %v7055 = vpop.xlane.xlu0 %7054
  %v7056 = vsel %vm7013, %v7007, 0.0
  %7057 = vadd.xlane.f32.xlu0 %v7056
  %v7058 = vpop.xlane.xlu0 %7057
  %v7059 = vsel %vm7013, %v7008, 0.0
  %7060 = vadd.xlane.f32.xlu0 %v7059
  %v7061 = vpop.xlane.xlu0 %7060
  %v7062 = vsel %vm7013, %v7009, 0.0
  %7063 = vadd.xlane.f32.xlu0 %v7062
  %v7064 = vpop.xlane.xlu0 %7063
  %v7065 = vsel %vm7013, %v7010, 0.0
  %7066 = vadd.xlane.f32.xlu0 %v7065
  %v7067 = vpop.xlane.xlu0 %7066
  %v7068 = vsel %vm7013, %v7011, 0.0
  %7069 = vadd.xlane.f32.xlu0 %v7068
  %v7070 = vpop.xlane.xlu0 %7069
  %v7071 = vsel %vm7013, %v7012, 0.0
  %7072 = vadd.xlane.f32.xlu0 %v7071
  %v7073 = vpop.xlane.xlu0 %7072
  %v7074 = vld [vmem:[%s4] sm:$0xff]
  %v7075 = vld [vmem:[%s4 + $0x8] sm:$0xff]
  %v7076 = vld [vmem:[%s4 + $0x10] sm:$0x3]
  %v7077 = vld [vmem:[%s4 + $0x18] sm:$0x3]
  %v7078 = vld [vmem:[%s5] sm:$0xff]
  %v7079 = vld [vmem:[%s5 + $0x8] sm:$0x3]
  %vm7080 = vcmask 261120
  %v7082 = vsel %vm7080, %v7075, 0
  %v7085 = vsel %vm7080, %v7077, 0
  %7087 = vmatprep.subr.mxu0 0.0
  %7088 = vmatpush1.msra.mxu0 %v7016
  %7089 = vmatprep.subr.mxu0 0.0
  %7090 = vmatpush1.msra.mxu0 %v7019
  %7091 = vmatprep.subr.mxu0 0.0
  %7092 = vmatpush1.msra.mxu0 %v7022
  %7093 = vmatprep.subr.mxu0 0.0
  %7094 = vmatpush1.msra.mxu0 %v7025
  %7095 = vmatprep.subr.mxu0 0.0
  %7096 = vmatpush1.msra.mxu0 %v7028
  %7097 = vmatprep.subr.mxu0 0.0
  %7098 = vmatpush1.msra.mxu0 %v7031
  %7099 = vmatprep.subr.mxu0 0.0
  %7100 = vmatpush1.msra.mxu0 %v7034
  %7101 = vmatprep.subr.mxu0 0.0
  %7102 = vmatpush1.msra.mxu0 %v7037
  %7103 = vmatprep.subr.mxu0 0.0
  %7104 = vmatpush1.msra.mxu0 %v7040
  %7105 = vmatprep.subr.mxu0 0.0
  %7106 = vmatpush1.msra.mxu0 %v7043
  %7107 = vmatprep.subr.mxu0 0.0
  %7108 = vmatpush1.msra.mxu0 %v7046
  %7109 = vmatprep.subr.mxu0 0.0
  %7110 = vmatpush1.msra.mxu0 %v7049
  %7111 = vmatprep.subr.mxu0 0.0
  %7112 = vmatpush1.msra.mxu0 %v7052
  %7113 = vmatprep.subr.mxu0 0.0
  %7114 = vmatpush1.msra.mxu0 %v7055
  %7115 = vmatprep.subr.mxu0 0.0
  %7116 = vmatpush1.msra.mxu0 %v7058
  %7117 = vmatprep.subr.mxu0 0.0
  %7118 = vmatpush1.msra.mxu0 %v7061
  %7119 = vmatprep.subr.mxu0 0.0
  %7120 = vmatpush1.msra.mxu0 %v7064
  %7121 = vmatprep.subr.mxu0 0.0
  %7122 = vmatpush1.msra.mxu0 %v7067
  %7123 = vmatprep.subr.mxu0 0.0
  %7124 = vmatpush1.msra.mxu0 %v7070
  %7125 = vmatprep.subr.mxu0 0.0
  %7126 = vmatpush1.msra.mxu0 %v7073
  %7127 = vmatprep.subr.mxu0 0.0
  %7128 = vmatpush1.msra.mxu0 0.0
  %7129 = vmatprep.subr.mxu0 0.0
  %7130 = vmatpush1.msra.mxu0 0.0
  %7131 = vmatprep.subr.mxu0 0.0
  %7132 = vmatpush1.msra.mxu0 0.0
  %7133 = vmatprep.subr.mxu0 0.0
  %7134 = vmatpush1.msra.mxu0 0.0
  %7135 = vmatprep.subr.mxu0 0.0
  %7136 = vmatpush1.msra.mxu0 0.0
  %7137 = vmatprep.subr.mxu0 0.0
  %7138 = vmatpush1.msra.mxu0 0.0
  %7139 = vmatprep.subr.mxu0 0.0
  %7140 = vmatpush1.msra.mxu0 0.0
  %7141 = vmatprep.subr.mxu0 0.0
  %7142 = vmatpush1.msra.mxu0 0.0
  %7143 = vmatprep.subr.mxu0 0.0
  %7144 = vmatpush1.msra.mxu0 0.0
  %7145 = vmatprep.subr.mxu0 0.0
  %7146 = vmatpush1.msra.mxu0 0.0
  %7147 = vmatprep.subr.mxu0 0.0
  %7148 = vmatpush1.msra.mxu0 0.0
  %7149 = vmatprep.subr.mxu0 0.0
  %7150 = vmatpush1.msra.mxu0 0.0
  %7151 = vmatprep.mubr.f32.mxu0 %v7082
  %7152 = vmatmul.mubr.f32.gmra.mrb[0].mxu0 %v7074
  %v7153 = vpop.f32.mrb[0].mxu0
  %v7154 = vadd.f32 %v7078, %v7153
  %v7155 = vpop.f32.mrb[0].mxu0
  %7156 = vmatprep.mubr.f32.mxu0 %v7085
  %7157 = vmatmul.mubr.f32.gmra.mrb[0].mxu0 %v7076
  %v7158 = vpop.f32.mrb[0].mxu0
  %v7159 = vadd.f32 %v7079, %v7158
  %v7160 = vpop.f32.mrb[0].mxu0
  %7161 = vdwg.mxu0
  %vm7162 = vcmask 7168
  %7163 = vst.msk [vmem:[%s6] sm:$0xff] %vm7162, %v7154
  %vm7164 = vcmask 1024
  %7165 = vst.msk [vmem:[%s6 + $0x8] sm:$0x3] %vm7164, %v7159
  %v7166 = vld [vmem:[%s2] sm:$0xff]
  %v7167 = vld [vmem:[%s2 + $0x8] sm:$0xff]
  %v7168 = vld [vmem:[%s2 + $0x10] sm:$0xff]
  %v7169 = vld [vmem:[%s2 + $0x18] sm:$0xff]
  %v7170 = vld [vmem:[%s2 + $0x20] sm:$0xff]
  %v7171 = vld [vmem:[%s2 + $0x28] sm:$0xff]
  %v7172 = vld [vmem:[%s2 + $0x30] sm:$0xff]
  %v7173 = vld [vmem:[%s2 + $0x38] sm:$0xff]
  %v7174 = vld [vmem:[%s2 + $0x40] sm:$0xff]
  %v7175 = vld [vmem:[%s2 + $0x48] sm:$0xff]
  %v7176 = vld [vmem:[%s2 + $0x50] sm:$0xff]
  %v7177 = vld [vmem:[%s2 + $0x58] sm:$0xff]
  %v7178 = vld [vmem:[%s2 + $0x60] sm:$0xff]
  %v7179 = vld [vmem:[%s2 + $0x68] sm:$0xff]
  %v7180 = vld [vmem:[%s2 + $0x70] sm:$0xff]
  %v7181 = vld [vmem:[%s2 + $0x78] sm:$0xff]
  %v7182 = vld [vmem:[%s2 + $0x80] sm:$0xff]
  %v7183 = vld [vmem:[%s2 + $0x88] sm:$0xff]
  %v7184 = vld [vmem:[%s2 + $0x90] sm:$0xff]
  %v7185 = vld [vmem:[%s2 + $0x98] sm:$0xff]
  %v7186 = vld [vmem:[%s2 + $0xa0] sm:$0xff]
  %v7187 = vld [vmem:[%s2 + $0xa8] sm:$0xff]
  %v7188 = vld [vmem:[%s2 + $0xb0] sm:$0xff]
  %v7189 = vld [vmem:[%s2 + $0xb8] sm:$0xff]
  %v7190 = vld [vmem:[%s2 + $0xc0] sm:$0xff]
  %v7191 = vld [vmem:[%s2 + $0xc8] sm:$0xff]
  %v7192 = vld [vmem:[%s2 + $0xd0] sm:$0xff]
  %v7193 = vld [vmem:[%s2 + $0xd8] sm:$0xff]
  %v7194 = vld [vmem:[%s2 + $0xe0] sm:$0xff]
  %v7195 = vld [vmem:[%s2 + $0xe8] sm:$0xff]
  %v7196 = vld [vmem:[%s2 + $0xf0] sm:$0xff]
  %v7197 = vld [vmem:[%s2 + $0xf8] sm:$0xff]
  %v7198 = vld [vmem:[%s2 + $0x100] sm:$0xff]
  %v7199 = vld [vmem:[%s2 + $0x108] sm:$0xff]
  %v7200 = vld [vmem:[%s2 + $0x110] sm:$0xff]
  %v7201 = vld [vmem:[%s2 + $0x118] sm:$0xff]
  %v7202 = vld [vmem:[%s2 + $0x120] sm:$0xff]
  %v7203 = vld [vmem:[%s2 + $0x128] sm:$0xff]
  %v7204 = vld [vmem:[%s2 + $0x130] sm:$0xff]
  %v7205 = vld [vmem:[%s2 + $0x138] sm:$0xff]
  %v7462 = vsel %vm6545, %v4470, %v4463
  %v7463 = vsel %vm6547, %v4477, %v7462
  %v7464 = vsel %vm6549, %v4484, %v7463
  %v7465 = vsel %vm6551, %v4491, %v7464
  %v7466 = vsel %vm6553, %v4498, %v7465
  %v7467 = vsel %vm6555, %v4505, %v7466
  %v7468 = vsel %vm6557, %v4512, %v7467
  %v7469 = vsel %vm6545, %v4526, %v4519
  %v7470 = vsel %vm6547, %v4533, %v7469
  %v7471 = vsel %vm6549, %v4540, %v7470
  %v7472 = vsel %vm6551, %v4547, %v7471
  %v7473 = vsel %vm6553, %v4554, %v7472
  %v7474 = vsel %vm6555, %v4561, %v7473
  %v7475 = vsel %vm6557, %v4568, %v7474
  %v7476 = vsel %vm6545, %v4582, %v4575
  %v7477 = vsel %vm6547, %v4589, %v7476
  %v7478 = vsel %vm6549, %v4596, %v7477
  %v7479 = vsel %vm6551, %v4603, %v7478
  %v7480 = vsel %vm6553, %v4610, %v7479
  %v7481 = vsel %vm6555, %v4617, %v7480
  %v7482 = vsel %vm6557, %v4624, %v7481
  %v7483 = vsel %vm6545, %v4638, %v4631
  %v7484 = vsel %vm6547, %v4645, %v7483
  %v7485 = vsel %vm6549, %v4652, %v7484
  %v7486 = vsel %vm6551, %v4659, %v7485
  %v7487 = vsel %vm6553, %v4666, %v7486
  %v7488 = vsel %vm6555, %v4673, %v7487
  %v7489 = vsel %vm6557, %v4680, %v7488
  %v7490 = vsel %vm6545, %v4694, %v4687
  %v7491 = vsel %vm6547, %v4701, %v7490
  %v7492 = vsel %vm6549, %v4708, %v7491
  %v7493 = vsel %vm6551, %v4715, %v7492
  %v7494 = vsel %vm6553, %v4722, %v7493
  %v7495 = vsel %vm6555, %v4729, %v7494
  %v7496 = vsel %vm6557, %v4736, %v7495
  %v7497 = vsel %vm6545, %v4750, %v4743
  %v7498 = vsel %vm6547, %v4757, %v7497
  %v7499 = vsel %vm6549, %v4764, %v7498
  %v7500 = vsel %vm6551, %v4771, %v7499
  %v7501 = vsel %vm6553, %v4778, %v7500
  %v7502 = vsel %vm6555, %v4785, %v7501
  %v7503 = vsel %vm6557, %v4792, %v7502
  %v7504 = vsel %vm6545, %v4806, %v4799
  %v7505 = vsel %vm6547, %v4813, %v7504
  %v7506 = vsel %vm6549, %v4820, %v7505
  %v7507 = vsel %vm6551, %v4827, %v7506
  %v7508 = vsel %vm6553, %v4834, %v7507
  %v7509 = vsel %vm6555, %v4841, %v7508
  %v7510 = vsel %vm6557, %v4848, %v7509
  %v7511 = vsel %vm6545, %v4862, %v4855
  %v7512 = vsel %vm6547, %v4869, %v7511
  %v7513 = vsel %vm6549, %v4876, %v7512
  %v7514 = vsel %vm6551, %v4883, %v7513
  %v7515 = vsel %vm6553, %v4890, %v7514
  %v7516 = vsel %vm6555, %v4897, %v7515
  %v7517 = vsel %vm6557, %v4904, %v7516
  %v7518 = vsel %vm6545, %v4918, %v4911
  %v7519 = vsel %vm6547, %v4925, %v7518
  %v7520 = vsel %vm6549, %v4932, %v7519
  %v7521 = vsel %vm6551, %v4939, %v7520
  %v7522 = vsel %vm6553, %v4946, %v7521
  %v7523 = vsel %vm6555, %v4953, %v7522
  %v7524 = vsel %vm6557, %v4960, %v7523
  %v7525 = vsel %vm6545, %v4974, %v4967
  %v7526 = vsel %vm6547, %v4981, %v7525
  %v7527 = vsel %vm6549, %v4988, %v7526
  %v7528 = vsel %vm6551, %v4995, %v7527
  %v7529 = vsel %vm6553, %v5002, %v7528
  %v7530 = vsel %vm6555, %v5009, %v7529
  %v7531 = vsel %vm6557, %v5016, %v7530
  %v7532 = vsel %vm6545, %v5030, %v5023
  %v7533 = vsel %vm6547, %v5037, %v7532
  %v7534 = vsel %vm6549, %v5044, %v7533
  %v7535 = vsel %vm6551, %v5051, %v7534
  %v7536 = vsel %vm6553, %v5058, %v7535
  %v7537 = vsel %vm6555, %v5065, %v7536
  %v7538 = vsel %vm6557, %v5072, %v7537
  %v7539 = vsel %vm6545, %v5086, %v5079
  %v7540 = vsel %vm6547, %v5093, %v7539
  %v7541 = vsel %vm6549, %v5100, %v7540
  %v7542 = vsel %vm6551, %v5107, %v7541
  %v7543 = vsel %vm6553, %v5114, %v7542
  %v7544 = vsel %vm6555, %v5121, %v7543
  %v7545 = vsel %vm6557, %v5128, %v7544
  %v7546 = vsel %vm6545, %v5142, %v5135
  %v7547 = vsel %vm6547, %v5149, %v7546
  %v7548 = vsel %vm6549, %v5156, %v7547
  %v7549 = vsel %vm6551, %v5163, %v7548
  %v7550 = vsel %vm6553, %v5170, %v7549
  %v7551 = vsel %vm6555, %v5177, %v7550
  %v7552 = vsel %vm6557, %v5184, %v7551
  %v7553 = vsel %vm6545, %v5198, %v5191
  %v7554 = vsel %vm6547, %v5205, %v7553
  %v7555 = vsel %vm6549, %v5212, %v7554
  %v7556 = vsel %vm6551, %v5219, %v7555
  %v7557 = vsel %vm6553, %v5226, %v7556
  %v7558 = vsel %vm6555, %v5233, %v7557
  %v7559 = vsel %vm6557, %v5240, %v7558
  %v7560 = vsel %vm6545, %v5254, %v5247
  %v7561 = vsel %vm6547, %v5261, %v7560
  %v7562 = vsel %vm6549, %v5268, %v7561
  %v7563 = vsel %vm6551, %v5275, %v7562
  %v7564 = vsel %vm6553, %v5282, %v7563
  %v7565 = vsel %vm6555, %v5289, %v7564
  %v7566 = vsel %vm6557, %v5296, %v7565
  %v7567 = vsel %vm6545, %v5310, %v5303
  %v7568 = vsel %vm6547, %v5317, %v7567
  %v7569 = vsel %vm6549, %v5324, %v7568
  %v7570 = vsel %vm6551, %v5331, %v7569
  %v7571 = vsel %vm6553, %v5338, %v7570
  %v7572 = vsel %vm6555, %v5345, %v7571
  %v7573 = vsel %vm6557, %v5352, %v7572
  %v7574 = vsel %vm6545, %v5366, %v5359
  %v7575 = vsel %vm6547, %v5373, %v7574
  %v7576 = vsel %vm6549, %v5380, %v7575
  %v7577 = vsel %vm6551, %v5387, %v7576
  %v7578 = vsel %vm6553, %v5394, %v7577
  %v7579 = vsel %vm6555, %v5401, %v7578
  %v7580 = vsel %vm6557, %v5408, %v7579
  %v7581 = vsel %vm6545, %v5422, %v5415
  %v7582 = vsel %vm6547, %v5429, %v7581
  %v7583 = vsel %vm6549, %v5436, %v7582
  %v7584 = vsel %vm6551, %v5443, %v7583
  %v7585 = vsel %vm6553, %v5450, %v7584
  %v7586 = vsel %vm6555, %v5457, %v7585
  %v7587 = vsel %vm6557, %v5464, %v7586
  %v7588 = vsel %vm6545, %v5478, %v5471
  %v7589 = vsel %vm6547, %v5485, %v7588
  %v7590 = vsel %vm6549, %v5492, %v7589
  %v7591 = vsel %vm6551, %v5499, %v7590
  %v7592 = vsel %vm6553, %v5506, %v7591
  %v7593 = vsel %vm6555, %v5513, %v7592
  %v7594 = vsel %vm6557, %v5520, %v7593
  %v7595 = vsel %vm6545, %v5534, %v5527
  %v7596 = vsel %vm6547, %v5541, %v7595
  %v7597 = vsel %vm6549, %v5548, %v7596
  %v7598 = vsel %vm6551, %v5555, %v7597
  %v7599 = vsel %vm6553, %v5562, %v7598
  %v7600 = vsel %vm6555, %v5569, %v7599
  %v7601 = vsel %vm6557, %v5576, %v7600
  %v7602 = vsel %vm6545, %v5590, %v5583
  %v7603 = vsel %vm6547, %v5597, %v7602
  %v7604 = vsel %vm6549, %v5604, %v7603
  %v7605 = vsel %vm6551, %v5611, %v7604
  %v7606 = vsel %vm6553, %v5618, %v7605
  %v7607 = vsel %vm6555, %v5625, %v7606
  %v7608 = vsel %vm6557, %v5632, %v7607
  %v7609 = vsel %vm6545, %v5646, %v5639
  %v7610 = vsel %vm6547, %v5653, %v7609
  %v7611 = vsel %vm6549, %v5660, %v7610
  %v7612 = vsel %vm6551, %v5667, %v7611
  %v7613 = vsel %vm6553, %v5674, %v7612
  %v7614 = vsel %vm6555, %v5681, %v7613
  %v7615 = vsel %vm6557, %v5688, %v7614
  %v7616 = vsel %vm6545, %v5702, %v5695
  %v7617 = vsel %vm6547, %v5709, %v7616
  %v7618 = vsel %vm6549, %v5716, %v7617
  %v7619 = vsel %vm6551, %v5723, %v7618
  %v7620 = vsel %vm6553, %v5730, %v7619
  %v7621 = vsel %vm6555, %v5737, %v7620
  %v7622 = vsel %vm6557, %v5744, %v7621
  %v7623 = vsel %vm6545, %v5758, %v5751
  %v7624 = vsel %vm6547, %v5765, %v7623
  %v7625 = vsel %vm6549, %v5772, %v7624
  %v7626 = vsel %vm6551, %v5779, %v7625
  %v7627 = vsel %vm6553, %v5786, %v7626
  %v7628 = vsel %vm6555, %v5793, %v7627
  %v7629 = vsel %vm6557, %v5800, %v7628
  %v7630 = vsel %vm6545, %v5814, %v5807
  %v7631 = vsel %vm6547, %v5821, %v7630
  %v7632 = vsel %vm6549, %v5828, %v7631
  %v7633 = vsel %vm6551, %v5835, %v7632
  %v7634 = vsel %vm6553, %v5842, %v7633
  %v7635 = vsel %vm6555, %v5849, %v7634
  %v7636 = vsel %vm6557, %v5856, %v7635
  %v7637 = vsel %vm6545, %v5870, %v5863
  %v7638 = vsel %vm6547, %v5877, %v7637
  %v7639 = vsel %vm6549, %v5884, %v7638
  %v7640 = vsel %vm6551, %v5891, %v7639
  %v7641 = vsel %vm6553, %v5898, %v7640
  %v7642 = vsel %vm6555, %v5905, %v7641
  %v7643 = vsel %vm6557, %v5912, %v7642
  %v7644 = vsel %vm6545, %v5926, %v5919
  %v7645 = vsel %vm6547, %v5933, %v7644
  %v7646 = vsel %vm6549, %v5940, %v7645
  %v7647 = vsel %vm6551, %v5947, %v7646
  %v7648 = vsel %vm6553, %v5954, %v7647
  %v7649 = vsel %vm6555, %v5961, %v7648
  %v7650 = vsel %vm6557, %v5968, %v7649
  %v7651 = vsel %vm6545, %v5982, %v5975
  %v7652 = vsel %vm6547, %v5989, %v7651
  %v7653 = vsel %vm6549, %v5996, %v7652
  %v7654 = vsel %vm6551, %v6003, %v7653
  %v7655 = vsel %vm6553, %v6010, %v7654
  %v7656 = vsel %vm6555, %v6017, %v7655
  %v7657 = vsel %vm6557, %v6024, %v7656
  %v7658 = vsel %vm6545, %v6038, %v6031
  %v7659 = vsel %vm6547, %v6045, %v7658
  %v7660 = vsel %vm6549, %v6052, %v7659
  %v7661 = vsel %vm6551, %v6059, %v7660
  %v7662 = vsel %vm6553, %v6066, %v7661
  %v7663 = vsel %vm6555, %v6073, %v7662
  %v7664 = vsel %vm6557, %v6080, %v7663
  %v7665 = vsel %vm6545, %v6094, %v6087
  %v7666 = vsel %vm6547, %v6101, %v7665
  %v7667 = vsel %vm6549, %v6108, %v7666
  %v7668 = vsel %vm6551, %v6115, %v7667
  %v7669 = vsel %vm6553, %v6122, %v7668
  %v7670 = vsel %vm6555, %v6129, %v7669
  %v7671 = vsel %vm6557, %v6136, %v7670
  %v7672 = vsel %vm6545, %v6150, %v6143
  %v7673 = vsel %vm6547, %v6157, %v7672
  %v7674 = vsel %vm6549, %v6164, %v7673
  %v7675 = vsel %vm6551, %v6171, %v7674
  %v7676 = vsel %vm6553, %v6178, %v7675
  %v7677 = vsel %vm6555, %v6185, %v7676
  %v7678 = vsel %vm6557, %v6192, %v7677
  %v7679 = vsel %vm6545, %v6206, %v6199
  %v7680 = vsel %vm6547, %v6213, %v7679
  %v7681 = vsel %vm6549, %v6220, %v7680
  %v7682 = vsel %vm6551, %v6227, %v7681
  %v7683 = vsel %vm6553, %v6234, %v7682
  %v7684 = vsel %vm6555, %v6241, %v7683
  %v7685 = vsel %vm6557, %v6248, %v7684
  %7718 = vmatprep.subr.mxu0 0.0
  %7719 = vmatpush1.msra.mxu0 %v7468
  %7720 = vmatprep.subr.mxu0 0.0
  %7721 = vmatpush1.msra.mxu0 %v7475
  %7722 = vmatprep.subr.mxu0 0.0
  %7723 = vmatpush1.msra.mxu0 %v7482
  %7724 = vmatprep.subr.mxu0 0.0
  %7725 = vmatpush1.msra.mxu0 %v7489
  %7726 = vmatprep.subr.mxu0 0.0
  %7727 = vmatpush1.msra.mxu0 %v7496
  %7728 = vmatprep.subr.mxu0 0.0
  %7729 = vmatpush1.msra.mxu0 %v7503
  %7730 = vmatprep.subr.mxu0 0.0
  %7731 = vmatpush1.msra.mxu0 %v7510
  %7732 = vmatprep.subr.mxu0 0.0
  %7733 = vmatpush1.msra.mxu0 %v7517
  %7734 = vmatprep.subr.mxu0 0.0
  %7735 = vmatpush1.msra.mxu0 %v7524
  %7736 = vmatprep.subr.mxu0 0.0
  %7737 = vmatpush1.msra.mxu0 %v7531
  %7738 = vmatprep.subr.mxu0 0.0
  %7739 = vmatpush1.msra.mxu0 %v7538
  %7740 = vmatprep.subr.mxu0 0.0
  %7741 = vmatpush1.msra.mxu0 %v7545
  %7742 = vmatprep.subr.mxu0 0.0
  %7743 = vmatpush1.msra.mxu0 %v7552
  %7744 = vmatprep.subr.mxu0 0.0
  %7745 = vmatpush1.msra.mxu0 %v7559
  %7746 = vmatprep.subr.mxu0 0.0
  %7747 = vmatpush1.msra.mxu0 %v7566
  %7748 = vmatprep.subr.mxu0 0.0
  %7749 = vmatpush1.msra.mxu0 %v7573
  %7750 = vmatprep.subr.mxu0 0.0
  %7751 = vmatpush1.msra.mxu0 %v7580
  %7752 = vmatprep.subr.mxu0 0.0
  %7753 = vmatpush1.msra.mxu0 %v7587
  %7754 = vmatprep.subr.mxu0 0.0
  %7755 = vmatpush1.msra.mxu0 %v7594
  %7756 = vmatprep.subr.mxu0 0.0
  %7757 = vmatpush1.msra.mxu0 %v7601
  %7758 = vmatprep.subr.mxu0 0.0
  %7759 = vmatpush1.msra.mxu0 %v7608
  %7760 = vmatprep.subr.mxu0 0.0
  %7761 = vmatpush1.msra.mxu0 %v7615
  %7762 = vmatprep.subr.mxu0 0.0
  %7763 = vmatpush1.msra.mxu0 %v7622
  %7764 = vmatprep.subr.mxu0 0.0
  %7765 = vmatpush1.msra.mxu0 %v7629
  %7766 = vmatprep.subr.mxu0 0.0
  %7767 = vmatpush1.msra.mxu0 %v7636
  %7768 = vmatprep.subr.mxu0 0.0
  %7769 = vmatpush1.msra.mxu0 %v7643
  %7770 = vmatprep.subr.mxu0 0.0
  %7771 = vmatpush1.msra.mxu0 %v7650
  %7772 = vmatprep.subr.mxu0 0.0
  %7773 = vmatpush1.msra.mxu0 %v7657
  %7774 = vmatprep.subr.mxu0 0.0
  %7775 = vmatpush1.msra.mxu0 %v7664
  %7776 = vmatprep.subr.mxu0 0.0
  %7777 = vmatpush1.msra.mxu0 %v7671
  %7778 = vmatprep.subr.mxu0 0.0
  %7779 = vmatpush1.msra.mxu0 %v7678
  %7780 = vmatprep.subr.mxu0 0.0
  %7781 = vmatpush1.msra.mxu0 %v7685
  %7782 = vmatprep.mubr.f32.mxu0 %v7167
  %7783 = vmatmul.mubr.f32.gmra.mrb[0].mxu0 %v7166
  %v7784 = vpop.f32.mrb[0].mxu0
  %v7785 = vadd.f32 0.0, %v7784
  %v7786 = vpop.f32.mrb[0].mxu0
  %7787 = vmatprep.mubr.f32.mxu0 %v7169
  %7788 = vmatmul.mubr.f32.gmra.mrb[0].mxu0 %v7168
  %v7789 = vpop.f32.mrb[0].mxu0
  %v7790 = vadd.f32 0.0, %v7789
  %v7791 = vpop.f32.mrb[0].mxu0
  %7792 = vmatprep.mubr.f32.mxu0 %v7171
  %7793 = vmatmul.mubr.f32.gmra.mrb[0].mxu0 %v7170
  %v7794 = vpop.f32.mrb[0].mxu0
  %v7795 = vadd.f32 0.0, %v7794
  %v7796 = vpop.f32.mrb[0].mxu0
  %7797 = vmatprep.mubr.f32.mxu0 %v7173
  %7798 = vmatmul.mubr.f32.gmra.mrb[0].mxu0 %v7172
  %v7799 = vpop.f32.mrb[0].mxu0
  %v7800 = vadd.f32 0.0, %v7799
  %v7801 = vpop.f32.mrb[0].mxu0
  %7802 = vmatprep.mubr.f32.mxu0 %v7175
  %7803 = vmatmul.mubr.f32.gmra.mrb[0].mxu0 %v7174
  %v7804 = vpop.f32.mrb[0].mxu0
  %v7805 = vadd.f32 0.0, %v7804
  %v7806 = vpop.f32.mrb[0].mxu0
  %7807 = vmatprep.mubr.f32.mxu0 %v7177
  %7808 = vmatmul.mubr.f32.gmra.mrb[0].mxu0 %v7176
  %v7809 = vpop.f32.mrb[0].mxu0
  %v7810 = vadd.f32 0.0, %v7809
  %v7811 = vpop.f32.mrb[0].mxu0
  %7812 = vmatprep.mubr.f32.mxu0 %v7179
  %7813 = vmatmul.mubr.f32.gmra.mrb[0].mxu0 %v7178
  %v7814 = vpop.f32.mrb[0].mxu0
  %v7815 = vadd.f32 0.0, %v7814
  %v7816 = vpop.f32.mrb[0].mxu0
  %7817 = vmatprep.mubr.f32.mxu0 %v7181
  %7818 = vmatmul.mubr.f32.gmra.mrb[0].mxu0 %v7180
  %v7819 = vpop.f32.mrb[0].mxu0
  %v7820 = vadd.f32 0.0, %v7819
  %v7821 = vpop.f32.mrb[0].mxu0
  %7822 = vmatprep.mubr.f32.mxu0 %v7183
  %7823 = vmatmul.mubr.f32.gmra.mrb[0].mxu0 %v7182
  %v7824 = vpop.f32.mrb[0].mxu0
  %v7825 = vadd.f32 0.0, %v7824
  %v7826 = vpop.f32.mrb[0].mxu0
  %7827 = vmatprep.mubr.f32.mxu0 %v7185
  %7828 = vmatmul.mubr.f32.gmra.mrb[0].mxu0 %v7184
  %v7829 = vpop.f32.mrb[0].mxu0
  %v7830 = vadd.f32 0.0, %v7829
  %v7831 = vpop.f32.mrb[0].mxu0
  %7832 = vmatprep.mubr.f32.mxu0 %v7187
  %7833 = vmatmul.mubr.f32.gmra.mrb[0].mxu0 %v7186
  %v7834 = vpop.f32.mrb[0].mxu0
  %v7835 = vadd.f32 0.0, %v7834
  %v7836 = vpop.f32.mrb[0].mxu0
  %7837 = vmatprep.mubr.f32.mxu0 %v7189
  %7838 = vmatmul.mubr.f32.gmra.mrb[0].mxu0 %v7188
  %v7839 = vpop.f32.mrb[0].mxu0
  %v7840 = vadd.f32 0.0, %v7839
  %v7841 = vpop.f32.mrb[0].mxu0
  %7842 = vmatprep.mubr.f32.mxu0 %v7191
  %7843 = vmatmul.mubr.f32.gmra.mrb[0].mxu0 %v7190
  %v7844 = vpop.f32.mrb[0].mxu0
  %v7845 = vadd.f32 0.0, %v7844
  %v7846 = vpop.f32.mrb[0].mxu0
  %7847 = vmatprep.mubr.f32.mxu0 %v7193
  %7848 = vmatmul.mubr.f32.gmra.mrb[0].mxu0 %v7192
  %v7849 = vpop.f32.mrb[0].mxu0
  %v7850 = vadd.f32 0.0, %v7849
  %v7851 = vpop.f32.mrb[0].mxu0
  %7852 = vmatprep.mubr.f32.mxu0 %v7195
  %7853 = vmatmul.mubr.f32.gmra.mrb[0].mxu0 %v7194
  %v7854 = vpop.f32.mrb[0].mxu0
  %v7855 = vadd.f32 0.0, %v7854
  %v7856 = vpop.f32.mrb[0].mxu0
  %7857 = vmatprep.mubr.f32.mxu0 %v7197
  %7858 = vmatmul.mubr.f32.gmra.mrb[0].mxu0 %v7196
  %v7859 = vpop.f32.mrb[0].mxu0
  %v7860 = vadd.f32 0.0, %v7859
  %v7861 = vpop.f32.mrb[0].mxu0
  %7862 = vmatprep.mubr.f32.mxu0 %v7199
  %7863 = vmatmul.mubr.f32.gmra.mrb[0].mxu0 %v7198
  %v7864 = vpop.f32.mrb[0].mxu0
  %v7865 = vadd.f32 0.0, %v7864
  %v7866 = vpop.f32.mrb[0].mxu0
  %7867 = vmatprep.mubr.f32.mxu0 %v7201
  %7868 = vmatmul.mubr.f32.gmra.mrb[0].mxu0 %v7200
  %v7869 = vpop.f32.mrb[0].mxu0
  %v7870 = vadd.f32 0.0, %v7869
  %v7871 = vpop.f32.mrb[0].mxu0
  %7872 = vmatprep.mubr.f32.mxu0 %v7203
  %7873 = vmatmul.mubr.f32.gmra.mrb[0].mxu0 %v7202
  %v7874 = vpop.f32.mrb[0].mxu0
  %v7875 = vadd.f32 0.0, %v7874
  %v7876 = vpop.f32.mrb[0].mxu0
  %7877 = vmatprep.mubr.f32.mxu0 %v7205
  %7878 = vmatmul.mubr.f32.gmra.mrb[0].mxu0 %v7204
  %v7879 = vpop.f32.mrb[0].mxu0
  %v7880 = vadd.f32 0.0, %v7879
  %v7881 = vpop.f32.mrb[0].mxu0
  %7882 = vdwg.mxu0
  %v7883 = vld [vmem:[%s3] sm:$0xff]
  %v7884 = vld [vmem:[%s3 + $0x8] sm:$0xff]
  %v7885 = vld [vmem:[%s3 + $0x10] sm:$0xff]
  %v7886 = vld [vmem:[%s3 + $0x18] sm:$0xff]
  %v7887 = vld [vmem:[%s3 + $0x20] sm:$0xff]
  %v7888 = vld [vmem:[%s3 + $0x28] sm:$0xff]
  %v7889 = vld [vmem:[%s3 + $0x30] sm:$0xff]
  %v7890 = vld [vmem:[%s3 + $0x38] sm:$0xff]
  %v7891 = vld [vmem:[%s3 + $0x40] sm:$0xff]
  %v7892 = vld [vmem:[%s3 + $0x48] sm:$0xff]
  %v7893 = vld [vmem:[%s3 + $0x50] sm:$0xff]
  %v7894 = vld [vmem:[%s3 + $0x58] sm:$0xff]
  %v7895 = vld [vmem:[%s3 + $0x60] sm:$0xff]
  %v7896 = vld [vmem:[%s3 + $0x68] sm:$0xff]
  %v7897 = vld [vmem:[%s3 + $0x70] sm:$0xff]
  %v7898 = vld [vmem:[%s3 + $0x78] sm:$0xff]
  %v7899 = vld [vmem:[%s3 + $0x80] sm:$0xff]
  %v7900 = vld [vmem:[%s3 + $0x88] sm:$0xff]
  %v7901 = vld [vmem:[%s3 + $0x90] sm:$0xff]
  %v7902 = vld [vmem:[%s3 + $0x98] sm:$0xff]
  %v7903 = vmul.f32 %v7785, %v7883
  %v7904 = vmul.f32 %v7790, %v7884
  %v7905 = vmul.f32 %v7795, %v7885
  %v7906 = vmul.f32 %v7800, %v7886
  %v7907 = vmul.f32 %v7805, %v7887
  %v7908 = vmul.f32 %v7810, %v7888
  %v7909 = vmul.f32 %v7815, %v7889
  %v7910 = vmul.f32 %v7820, %v7890
  %v7911 = vmul.f32 %v7825, %v7891
  %v7912 = vmul.f32 %v7830, %v7892
  %v7913 = vmul.f32 %v7835, %v7893
  %v7914 = vmul.f32 %v7840, %v7894
  %v7915 = vmul.f32 %v7845, %v7895
  %v7916 = vmul.f32 %v7850, %v7896
  %v7917 = vmul.f32 %v7855, %v7897
  %v7918 = vmul.f32 %v7860, %v7898
  %v7919 = vmul.f32 %v7865, %v7899
  %v7920 = vmul.f32 %v7870, %v7900
  %v7921 = vmul.f32 %v7875, %v7901
  %v7922 = vmul.f32 %v7880, %v7902
  %v7923 = vsel %vm7013, %v7903, 0.0
  %7924 = vadd.xlane.f32.xlu0 %v7923
  %v7925 = vpop.xlane.xlu0 %7924
  %v7926 = vsel %vm7013, %v7904, 0.0
  %7927 = vadd.xlane.f32.xlu0 %v7926
  %v7928 = vpop.xlane.xlu0 %7927
  %v7929 = vsel %vm7013, %v7905, 0.0
  %7930 = vadd.xlane.f32.xlu0 %v7929
  %v7931 = vpop.xlane.xlu0 %7930
  %v7932 = vsel %vm7013, %v7906, 0.0
  %7933 = vadd.xlane.f32.xlu0 %v7932
  %v7934 = vpop.xlane.xlu0 %7933
  %v7935 = vsel %vm7013, %v7907, 0.0
  %7936 = vadd.xlane.f32.xlu0 %v7935
  %v7937 = vpop.xlane.xlu0 %7936
  %v7938 = vsel %vm7013, %v7908, 0.0
  %7939 = vadd.xlane.f32.xlu0 %v7938
  %v7940 = vpop.xlane.xlu0 %7939
  %v7941 = vsel %vm7013, %v7909, 0.0
  %7942 = vadd.xlane.f32.xlu0 %v7941
  %v7943 = vpop.xlane.xlu0 %7942
  %v7944 = vsel %vm7013, %v7910, 0.0
  %7945 = vadd.xlane.f32.xlu0 %v7944
  %v7946 = vpop.xlane.xlu0 %7945
  %v7947 = vsel %vm7013, %v7911, 0.0
  %7948 = vadd.xlane.f32.xlu0 %v7947
  %v7949 = vpop.xlane.xlu0 %7948
  %v7950 = vsel %vm7013, %v7912, 0.0
  %7951 = vadd.xlane.f32.xlu0 %v7950
  %v7952 = vpop.xlane.xlu0 %7951
  %v7953 = vsel %vm7013, %v7913, 0.0
  %7954 = vadd.xlane.f32.xlu0 %v7953
  %v7955 = vpop.xlane.xlu0 %7954
  %v7956 = vsel %vm7013, %v7914, 0.0
  %7957 = vadd.xlane.f32.xlu0 %v7956
  %v7958 = vpop.xlane.xlu0 %7957
  %v7959 = vsel %vm7013, %v7915, 0.0
  %7960 = vadd.xlane.f32.xlu0 %v7959
  %v7961 = vpop.xlane.xlu0 %7960
  %v7962 = vsel %vm7013, %v7916, 0.0
  %7963 = vadd.xlane.f32.xlu0 %v7962
  %v7964 = vpop.xlane.xlu0 %7963
  %v7965 = vsel %vm7013, %v7917, 0.0
  %7966 = vadd.xlane.f32.xlu0 %v7965
  %v7967 = vpop.xlane.xlu0 %7966
  %v7968 = vsel %vm7013, %v7918, 0.0
  %7969 = vadd.xlane.f32.xlu0 %v7968
  %v7970 = vpop.xlane.xlu0 %7969
  %v7971 = vsel %vm7013, %v7919, 0.0
  %7972 = vadd.xlane.f32.xlu0 %v7971
  %v7973 = vpop.xlane.xlu0 %7972
  %v7974 = vsel %vm7013, %v7920, 0.0
  %7975 = vadd.xlane.f32.xlu0 %v7974
  %v7976 = vpop.xlane.xlu0 %7975
  %v7977 = vsel %vm7013, %v7921, 0.0
  %7978 = vadd.xlane.f32.xlu0 %v7977
  %v7979 = vpop.xlane.xlu0 %7978
  %v7980 = vsel %vm7013, %v7922, 0.0
  %7981 = vadd.xlane.f32.xlu0 %v7980
  %v7982 = vpop.xlane.xlu0 %7981
  %v7983 = vld [vmem:[%s4] sm:$0xff]
  %v7984 = vld [vmem:[%s4 + $0x8] sm:$0xff]
  %v7985 = vld [vmem:[%s4 + $0x10] sm:$0x3]
  %v7986 = vld [vmem:[%s4 + $0x18] sm:$0x3]
  %v7987 = vld [vmem:[%s5] sm:$0xff]
  %v7988 = vld [vmem:[%s5 + $0x8] sm:$0x3]
  %v7990 = vsel %vm7080, %v7984, 0
  %v7993 = vsel %vm7080, %v7986, 0
  %7995 = vmatprep.subr.mxu0 0.0
  %7996 = vmatpush1.msra.mxu0 %v7925
  %7997 = vmatprep.subr.mxu0 0.0
  %7998 = vmatpush1.msra.mxu0 %v7928
  %7999 = vmatprep.subr.mxu0 0.0
  %8000 = vmatpush1.msra.mxu0 %v7931
  %8001 = vmatprep.subr.mxu0 0.0
  %8002 = vmatpush1.msra.mxu0 %v7934
  %8003 = vmatprep.subr.mxu0 0.0
  %8004 = vmatpush1.msra.mxu0 %v7937
  %8005 = vmatprep.subr.mxu0 0.0
  %8006 = vmatpush1.msra.mxu0 %v7940
  %8007 = vmatprep.subr.mxu0 0.0
  %8008 = vmatpush1.msra.mxu0 %v7943
  %8009 = vmatprep.subr.mxu0 0.0
  %8010 = vmatpush1.msra.mxu0 %v7946
  %8011 = vmatprep.subr.mxu0 0.0
  %8012 = vmatpush1.msra.mxu0 %v7949
  %8013 = vmatprep.subr.mxu0 0.0
  %8014 = vmatpush1.msra.mxu0 %v7952
  %8015 = vmatprep.subr.mxu0 0.0
  %8016 = vmatpush1.msra.mxu0 %v7955
  %8017 = vmatprep.subr.mxu0 0.0
  %8018 = vmatpush1.msra.mxu0 %v7958
  %8019 = vmatprep.subr.mxu0 0.0
  %8020 = vmatpush1.msra.mxu0 %v7961
  %8021 = vmatprep.subr.mxu0 0.0
  %8022 = vmatpush1.msra.mxu0 %v7964
  %8023 = vmatprep.subr.mxu0 0.0
  %8024 = vmatpush1.msra.mxu0 %v7967
  %8025 = vmatprep.subr.mxu0 0.0
  %8026 = vmatpush1.msra.mxu0 %v7970
  %8027 = vmatprep.subr.mxu0 0.0
  %8028 = vmatpush1.msra.mxu0 %v7973
  %8029 = vmatprep.subr.mxu0 0.0
  %8030 = vmatpush1.msra.mxu0 %v7976
  %8031 = vmatprep.subr.mxu0 0.0
  %8032 = vmatpush1.msra.mxu0 %v7979
  %8033 = vmatprep.subr.mxu0 0.0
  %8034 = vmatpush1.msra.mxu0 %v7982
  %8035 = vmatprep.subr.mxu0 0.0
  %8036 = vmatpush1.msra.mxu0 0.0
  %8037 = vmatprep.subr.mxu0 0.0
  %8038 = vmatpush1.msra.mxu0 0.0
  %8039 = vmatprep.subr.mxu0 0.0
  %8040 = vmatpush1.msra.mxu0 0.0
  %8041 = vmatprep.subr.mxu0 0.0
  %8042 = vmatpush1.msra.mxu0 0.0
  %8043 = vmatprep.subr.mxu0 0.0
  %8044 = vmatpush1.msra.mxu0 0.0
  %8045 = vmatprep.subr.mxu0 0.0
  %8046 = vmatpush1.msra.mxu0 0.0
  %8047 = vmatprep.subr.mxu0 0.0
  %8048 = vmatpush1.msra.mxu0 0.0
  %8049 = vmatprep.subr.mxu0 0.0
  %8050 = vmatpush1.msra.mxu0 0.0
  %8051 = vmatprep.subr.mxu0 0.0
  %8052 = vmatpush1.msra.mxu0 0.0
  %8053 = vmatprep.subr.mxu0 0.0
  %8054 = vmatpush1.msra.mxu0 0.0
  %8055 = vmatprep.subr.mxu0 0.0
  %8056 = vmatpush1.msra.mxu0 0.0
  %8057 = vmatprep.subr.mxu0 0.0
  %8058 = vmatpush1.msra.mxu0 0.0
  %8059 = vmatprep.mubr.f32.mxu0 %v7990
  %8060 = vmatmul.mubr.f32.gmra.mrb[0].mxu0 %v7983
  %v8061 = vpop.f32.mrb[0].mxu0
  %v8062 = vadd.f32 %v7987, %v8061
  %v8063 = vpop.f32.mrb[0].mxu0
  %8064 = vmatprep.mubr.f32.mxu0 %v7993
  %8065 = vmatmul.mubr.f32.gmra.mrb[0].mxu0 %v7985
  %v8066 = vpop.f32.mrb[0].mxu0
  %v8067 = vadd.f32 %v7988, %v8066
  %v8068 = vpop.f32.mrb[0].mxu0
  %8069 = vdwg.mxu0
  %8072 = vrot.lane.b32.xlu0 %v8062, 1
  %v8073 = vpop.permute.xlu0 %8072
  %8074 = vrot.lane.b32.xlu0 %v8067, 1
  %v8075 = vpop.permute.xlu0 %8074
  %vm8078 = vcmask 15368
  %8079 = vst.msk [vmem:[%s6] sm:$0xff] %vm8078, %v8073
  %vm8080 = vcmask 9224
  %8081 = vst.msk [vmem:[%s6 + $0x8] sm:$0x3] %vm8080, %v8075
  // Predicated region
  $region26: #{convnet2_forward.1} parent=0 // pred_check
    _
  $region27: #{convnet2_forward.1} parent=0 // pred_check_branch
    %8083 = sbr.rel (0) target = $region29
  $region28: #{convnet2_forward.1} parent=0 // pred_region
    _
  $region29: #{convnet2_forward.1} parent=0 // pred_fallthru
    _
  // Predicated region
  $region30: #{convnet2_forward.1} parent=0 // pred_check
    _
  $region31: #{convnet2_forward.1} parent=0 // pred_check_branch
    %8085 = sbr.rel (0) target = $region33
  $region32: #{convnet2_forward.1} parent=0 // pred_region
    _
  $region33: #{convnet2_forward.1} parent=0 // pred_fallthru
    _

</llo_original>
